<compile_context>
chip_gen: v7x
topology: tpu7x:2x2x1
jax: 0.10.0
libtpu: 0.0.40
codegen_flags: <defaults>
</compile_context>

<pallas_src>
import numpy as np
import jax
import jax.numpy as jnp
from jax.experimental import pallas as pl
from jax.experimental.pallas import tpu as pltpu

LRELU_SLOPE = 0.2
LN_EPS = 1e-5
MATMUL_DTYPE = jnp.bfloat16      # MXU operand dtype (accumulation stays f32)


# ------------------------------- fused kernel ------------------------------ #

def _fused_wgan_kernel(x_ref,
                       b1, c1,
                       b2, c2, g2, t2,
                       b3, c3, g3, t3,
                       w4, c4,
                       o_ref):
    """One batch block end-to-end; all intermediates stay in VMEM/vregs."""

    def conv(h, b_ref, c_ref):
        # Folded conv: one MXU matmul (bf16 operands, f32 accumulate) + bias.
        return jnp.dot(h.astype(b_ref.dtype), b_ref[...],
                       preferred_element_type=jnp.float32) + c_ref[...]

    def layernorm(v, g_ref, t_ref):
        # PyTorch LayerNorm([C, H, W]) per sample == per row in this layout:
        # biased variance, eps inside sqrt, all f32.
        mean = jnp.mean(v, axis=1, keepdims=True)
        vc = v - mean
        var = jnp.mean(vc * vc, axis=1, keepdims=True)
        return vc * jax.lax.rsqrt(var + LN_EPS) * g_ref[...] + t_ref[...]

    def lrelu(v):
        return jnp.where(v >= 0, v, LRELU_SLOPE * v)

    x = x_ref[...]                                    # (Nb, H*W*Cin) f32
    h = lrelu(conv(x, b1, c1))                        # (Nb, 1024)
    # Dropout(0.3): identity in inference mode.
    h = lrelu(layernorm(conv(h, b2, c2), g2, t2))     # (Nb, 1024)
    h = lrelu(layernorm(conv(h, b3, c3), g3, t3))     # (Nb, 1024)
    # Output conv (Cout=1, 1x1 output): VPU multiply + single lane reduction.
    out = jnp.sum(h * w4[...], axis=1, keepdims=True) + c4[...]
    o_ref[...] = out.astype(o_ref.dtype)


# --------------------------- host-side preparation -------------------------- #

def _fold_conv(weight, h, w):
    """Fold a k=3 / stride-2 / pad-1 conv (PyTorch OIHW weight) into a dense
    matrix B of shape (h*w*cin, ho*wo*cout) so that  y_flat = x_flat @ B
    with (spatial-major, channel-minor) flattening on both sides."""
    w_np = np.asarray(weight, np.float32)             # (cout, cin, 3, 3)
    cout, cin = w_np.shape[0], w_np.shape[1]
    ho, wo = (h - 1) // 2 + 1, (w - 1) // 2 + 1
    B = np.zeros((h * w * cin, ho * wo * cout), np.float32)
    for oh in range(ho):
        for ow in range(wo):
            r0 = (oh * wo + ow) * cout
            for kh in range(3):
                ih = 2 * oh + kh - 1
                if not 0 <= ih < h:
                    continue
                for kw in range(3):
                    iw = 2 * ow + kw - 1
                    if not 0 <= iw < w:
                        continue
                    q0 = (ih * w + iw) * cin
                    B[q0:q0 + cin, r0:r0 + cout] = w_np[:, :, kh, kw].T
    return B, ho, wo


def init_params(key, image_shape=(16, 16, 3), channels=(16, 64, 256)):
    """Parameters stored in PyTorch layouts: conv OIHW, LayerNorm CHW."""
    h, w, cin = image_shape
    n_keys = 2 * len(channels) + 2 * (len(channels) - 1) + 2
    keys = iter(jax.random.split(key, n_keys))
    params = {"convs": [], "lns": [], "out": None}
    for idx, cout in enumerate(channels):
        wgt = 0.05 * jax.random.normal(next(keys), (cout, cin, 3, 3), jnp.float32)
        b = 0.05 * jax.random.normal(next(keys), (cout,), jnp.float32)
        params["convs"].append((wgt, b))
        h, w = (h - 1) // 2 + 1, (w - 1) // 2 + 1
        if idx != 0:
            # Non-trivial affine so the CHW -> (H*W, C) packing is actually tested.
            g = 1.0 + 0.1 * jax.random.normal(next(keys), (cout, h, w), jnp.float32)
            bt = 0.1 * jax.random.normal(next(keys), (cout, h, w), jnp.float32)
            params["lns"].append((g, bt))
        cin = cout
    wgt = 0.05 * jax.random.normal(next(keys), (1, cin, 3, 3), jnp.float32)
    b = 0.05 * jax.random.normal(next(keys), (1,), jnp.float32)
    params["out"] = (wgt, b)
    return params


def prepare_packed(params, image_shape):
    """One-time packing: dense folded conv operators (bf16), bias rows,
    LayerNorm affine rows -- all in (spatial-major, channel-minor) layout."""
    h, w, cin = image_shape
    consts = []
    for idx, (wgt, b) in enumerate(params["convs"]):
        cout = wgt.shape[0]
        B, ho, wo = _fold_conv(wgt, h, w)
        consts.append(jnp.asarray(B, MATMUL_DTYPE))                      # (HWC, HoWoCout) bf16
        bias_row = np.tile(np.asarray(b, np.float32), ho * wo)[None, :]  # (1, HoWoCout)
        consts.append(jnp.asarray(bias_row, jnp.float32))
        if idx != 0:
            g, bt = params["lns"][idx - 1]                               # (C, ho, wo) PyTorch CHW
            consts.append(jnp.transpose(g, (1, 2, 0))
                          .reshape(1, ho * wo * cout).astype(jnp.float32))
            consts.append(jnp.transpose(bt, (1, 2, 0))
                          .reshape(1, ho * wo * cout).astype(jnp.float32))
        h, w, cin = ho, wo, cout
    # Output conv: Cout=1 and (at demo scale) 1x1 output -> fold to a row
    # vector and do a VPU multiply + lane reduce in-kernel (kept in f32).
    wgt, b = params["out"]
    B, ho, wo = _fold_conv(wgt, h, w)                                    # (h*w*cin, ho*wo)
    assert ho == 1 and wo == 1, "demo-scale fold assumes 1x1 final spatial"
    consts.append(jnp.asarray(B.T, jnp.float32))                         # (1, h*w*cin)
    consts.append(jnp.asarray(np.asarray(b, np.float32).reshape(1, 1)))
    return tuple(consts)


# --------------------------------- forward ---------------------------------- #

def wgan_discriminator_forward(consts, x_nchw):
    n, c, h, w = x_nchw.shape
    ho, wo = h, w
    for _ in range(4):                     # 3 convs + output conv, all stride 2
        ho, wo = (ho - 1) // 2 + 1, (wo - 1) // 2 + 1

    # NCHW -> (N, H*W*C): spatial-major, channel-minor flattening.
    x2d = jnp.transpose(x_nchw, (0, 2, 3, 1)).reshape(n, h * w * c)

    # Batch blocking: stack Nb samples along the matmul M dimension.
    if n <= 16:
        nb = n
    elif n % 16 == 0:
        nb = 16
    elif n % 8 == 0:
        nb = 8
    else:
        nb = n
    grid = (n // nb,)

    const_specs = [pl.BlockSpec(a.shape, lambda i: (0, 0)) for a in consts]

    out = pl.pallas_call(
        _fused_wgan_kernel,
        out_shape=jax.ShapeDtypeStruct((n, ho * wo), jnp.float32),
        grid=grid,
        in_specs=[pl.BlockSpec((nb, h * w * c), lambda i: (i, 0))] + const_specs,
        out_specs=pl.BlockSpec((nb, ho * wo), lambda i: (i, 0)),
        compiler_params=pltpu.CompilerParams(
            dimension_semantics=("parallel",)),
    )(x2d, *consts)
    return out.reshape(n, 1, ho, wo)                                     # -> NCHW


# ------------------------------ pure-JAX reference -------------------------- #

def reference_forward(params, x_nchw):
    def conv(x, w, b):
        y = jax.lax.conv_general_dilated(
            x, w, (2, 2), ((1, 1), (1, 1)),
            dimension_numbers=("NCHW", "OIHW", "NCHW"))
        return y + b[None, :, None, None]

    x = x_nchw
    for idx, (w, b) in enumerate(params["convs"]):
        x = conv(x, w, b)
        if idx != 0:
            g, bt = params["lns"][idx - 1]                               # (C, H, W)
            mean = jnp.mean(x, axis=(1, 2, 3), keepdims=True)
            var = jnp.mean((x - mean) ** 2, axis=(1, 2, 3), keepdims=True)
            x = (x - mean) / jnp.sqrt(var + LN_EPS) * g[None] + bt[None]
        x = jnp.where(x >= 0, x, LRELU_SLOPE * x)
    w, b = params["out"]
    return conv(x, w, b)


# ----------------------------------- main ----------------------------------- #

if __name__ == "__main__":
    key = jax.random.PRNGKey(0)
    kx, kp = jax.random.split(key)

    image_shape = (16, 16, 3)                 # (H, W, C) -- small but consistent
    channels = (16, 64, 256)
    x = jax.random.normal(kx, (2, 3, 16, 16), jnp.float32)   # NCHW like PyTorch

    params = init_params(kp, image_shape, channels)
    consts = prepare_packed(params, image_shape)              # packed once

    fwd = jax.jit(wgan_discriminator_forward)
    out = jax.block_until_ready(fwd(consts, x))
    assert out.shape == (2, 1, 1, 1), out.shape

    ref = jax.block_until_ready(reference_forward(params, x))
    # Kernel uses bf16 MXU operands (f32 accumulation + f32 epilogue); the
    # reference is full f32, so tolerance reflects bf16 operand rounding.
    assert jnp.allclose(out, ref, rtol=5e-2, atol=5e-2), (out, ref)

    print("KERNEL_OK")
</pallas_src>

<mosaic_0001>
module attributes {stable_mosaic.version = 11 : i64} {
  func.func @_fused_wgan_kernel(%arg0: i32, %arg1: memref<2x768xf32, #tpu.memory_space<vmem>>, %arg2: memref<768x1024xbf16, #tpu.memory_space<vmem>>, %arg3: memref<1x1024xf32, #tpu.memory_space<vmem>>, %arg4: memref<1024x1024xbf16, #tpu.memory_space<vmem>>, %arg5: memref<1x1024xf32, #tpu.memory_space<vmem>>, %arg6: memref<1x1024xf32, #tpu.memory_space<vmem>>, %arg7: memref<1x1024xf32, #tpu.memory_space<vmem>>, %arg8: memref<1024x1024xbf16, #tpu.memory_space<vmem>>, %arg9: memref<1x1024xf32, #tpu.memory_space<vmem>>, %arg10: memref<1x1024xf32, #tpu.memory_space<vmem>>, %arg11: memref<1x1024xf32, #tpu.memory_space<vmem>>, %arg12: memref<1x1024xf32, #tpu.memory_space<vmem>>, %arg13: memref<1x1xf32, #tpu.memory_space<vmem>>, %arg14: memref<2x1xf32, #tpu.memory_space<vmem>>) attributes {dimension_semantics = [#tpu.dimension_semantics<parallel>], iteration_bounds = array<i64: 1>, scalar_prefetch = 0 : i64, scratch_operands = 0 : i64, tpu.core_type = #tpu.core_type<tc>, window_params = [{transform_indices = @transform_0, window_bounds = array<i64: 2, 768>}, {pipeline_mode = #tpu.pipeline_mode<synchronous>, transform_indices = @transform_1, window_bounds = array<i64: 768, 1024>}, {pipeline_mode = #tpu.pipeline_mode<synchronous>, transform_indices = @transform_2, window_bounds = array<i64: 1, 1024>}, {pipeline_mode = #tpu.pipeline_mode<synchronous>, transform_indices = @transform_3, window_bounds = array<i64: 1024, 1024>}, {pipeline_mode = #tpu.pipeline_mode<synchronous>, transform_indices = @transform_4, window_bounds = array<i64: 1, 1024>}, {pipeline_mode = #tpu.pipeline_mode<synchronous>, transform_indices = @transform_5, window_bounds = array<i64: 1, 1024>}, {pipeline_mode = #tpu.pipeline_mode<synchronous>, transform_indices = @transform_6, window_bounds = array<i64: 1, 1024>}, {pipeline_mode = #tpu.pipeline_mode<synchronous>, transform_indices = @transform_7, window_bounds = array<i64: 1024, 1024>}, {pipeline_mode = #tpu.pipeline_mode<synchronous>, transform_indices = @transform_8, window_bounds = array<i64: 1, 1024>}, {pipeline_mode = #tpu.pipeline_mode<synchronous>, transform_indices = @transform_9, window_bounds = array<i64: 1, 1024>}, {pipeline_mode = #tpu.pipeline_mode<synchronous>, transform_indices = @transform_10, window_bounds = array<i64: 1, 1024>}, {pipeline_mode = #tpu.pipeline_mode<synchronous>, transform_indices = @transform_11, window_bounds = array<i64: 1, 1024>}, {pipeline_mode = #tpu.pipeline_mode<synchronous>, transform_indices = @transform_12, window_bounds = array<i64: 1, 1>}, {transform_indices = @transform_13, window_bounds = array<i64: 2, 1>}]} {
    %c0 = arith.constant 0 : index
    %c0_0 = arith.constant 0 : index
    %0 = vector.load %arg1[%c0, %c0_0] : memref<2x768xf32, #tpu.memory_space<vmem>>, vector<2x768xf32>
    %1 = arith.truncf %0 : vector<2x768xf32> to vector<2x768xbf16>
    %c0_1 = arith.constant 0 : index
    %c0_2 = arith.constant 0 : index
    %2 = vector.load %arg2[%c0_1, %c0_2] : memref<768x1024xbf16, #tpu.memory_space<vmem>>, vector<768x1024xbf16>
    %cst = arith.constant dense<0.000000e+00> : vector<2x1024xf32>
    %3 = tpu.matmul %1, %2, %cst {dimension_numbers = #tpu.dot_dimension_numbers<[1], [0], [0], [1], [0, 0, 1, 1], [], []>} : vector<2x768xbf16>, vector<768x1024xbf16>, vector<2x1024xf32> -> vector<2x1024xf32>
    %c0_3 = arith.constant 0 : index
    %c0_4 = arith.constant 0 : index
    %4 = vector.load %arg3[%c0_3, %c0_4] : memref<1x1024xf32, #tpu.memory_space<vmem>>, vector<1x1024xf32>
    %5 = vector.broadcast %4 : vector<1x1024xf32> to vector<2x1024xf32>
    %6 = arith.addf %3, %5 : vector<2x1024xf32>
    %cst_5 = arith.constant 0.000000e+00 : f32
    %7 = vector.broadcast %cst_5 : f32 to vector<2x1024xf32>
    %8 = arith.cmpf oge, %6, %7 : vector<2x1024xf32>
    %cst_6 = arith.constant 2.000000e-01 : f32
    %9 = vector.broadcast %cst_6 : f32 to vector<2x1024xf32>
    %10 = arith.mulf %9, %6 : vector<2x1024xf32>
    %11 = arith.select %8, %6, %10 : vector<2x1024xi1>, vector<2x1024xf32>
    %12 = arith.truncf %11 : vector<2x1024xf32> to vector<2x1024xbf16>
    %c0_7 = arith.constant 0 : index
    %c0_8 = arith.constant 0 : index
    %13 = vector.load %arg4[%c0_7, %c0_8] : memref<1024x1024xbf16, #tpu.memory_space<vmem>>, vector<1024x1024xbf16>
    %cst_9 = arith.constant dense<0.000000e+00> : vector<2x1024xf32>
    %14 = tpu.matmul %12, %13, %cst_9 {dimension_numbers = #tpu.dot_dimension_numbers<[1], [0], [0], [1], [0, 0, 1, 1], [], []>} : vector<2x1024xbf16>, vector<1024x1024xbf16>, vector<2x1024xf32> -> vector<2x1024xf32>
    %c0_10 = arith.constant 0 : index
    %c0_11 = arith.constant 0 : index
    %15 = vector.load %arg5[%c0_10, %c0_11] : memref<1x1024xf32, #tpu.memory_space<vmem>>, vector<1x1024xf32>
    %16 = vector.broadcast %15 : vector<1x1024xf32> to vector<2x1024xf32>
    %17 = arith.addf %14, %16 : vector<2x1024xf32>
    %cst_12 = arith.constant dense<0.000000e+00> : vector<2xf32>
    %18 = vector.multi_reduction <add>, %17, %cst_12 [1] : vector<2x1024xf32> to vector<2xf32>
    %19 = vector.shape_cast %18 : vector<2xf32> to vector<2x1xf32>
    %cst_13 = arith.constant 1.024000e+03 : f32
    %20 = vector.broadcast %cst_13 : f32 to vector<2x1xf32>
    %21 = arith.divf %19, %20 : vector<2x1xf32>
    %22 = vector.broadcast %21 : vector<2x1xf32> to vector<2x1024xf32>
    %23 = arith.subf %17, %22 : vector<2x1024xf32>
    %24 = arith.mulf %23, %23 : vector<2x1024xf32>
    %cst_14 = arith.constant dense<0.000000e+00> : vector<2xf32>
    %25 = vector.multi_reduction <add>, %24, %cst_14 [1] : vector<2x1024xf32> to vector<2xf32>
    %26 = vector.shape_cast %25 : vector<2xf32> to vector<2x1xf32>
    %cst_15 = arith.constant 1.024000e+03 : f32
    %27 = vector.broadcast %cst_15 : f32 to vector<2x1xf32>
    %28 = arith.divf %26, %27 : vector<2x1xf32>
    %cst_16 = arith.constant 9.99999974E-6 : f32
    %29 = vector.broadcast %cst_16 : f32 to vector<2x1xf32>
    %30 = arith.addf %28, %29 : vector<2x1xf32>
    %31 = math.rsqrt %30 : vector<2x1xf32>
    %32 = vector.broadcast %31 : vector<2x1xf32> to vector<2x1024xf32>
    %33 = arith.mulf %23, %32 : vector<2x1024xf32>
    %c0_17 = arith.constant 0 : index
    %c0_18 = arith.constant 0 : index
    %34 = vector.load %arg6[%c0_17, %c0_18] : memref<1x1024xf32, #tpu.memory_space<vmem>>, vector<1x1024xf32>
    %35 = vector.broadcast %34 : vector<1x1024xf32> to vector<2x1024xf32>
    %36 = arith.mulf %33, %35 : vector<2x1024xf32>
    %c0_19 = arith.constant 0 : index
    %c0_20 = arith.constant 0 : index
    %37 = vector.load %arg7[%c0_19, %c0_20] : memref<1x1024xf32, #tpu.memory_space<vmem>>, vector<1x1024xf32>
    %38 = vector.broadcast %37 : vector<1x1024xf32> to vector<2x1024xf32>
    %39 = arith.addf %36, %38 : vector<2x1024xf32>
    %cst_21 = arith.constant 0.000000e+00 : f32
    %40 = vector.broadcast %cst_21 : f32 to vector<2x1024xf32>
    %41 = arith.cmpf oge, %39, %40 : vector<2x1024xf32>
    %cst_22 = arith.constant 2.000000e-01 : f32
    %42 = vector.broadcast %cst_22 : f32 to vector<2x1024xf32>
    %43 = arith.mulf %42, %39 : vector<2x1024xf32>
    %44 = arith.select %41, %39, %43 : vector<2x1024xi1>, vector<2x1024xf32>
    %45 = arith.truncf %44 : vector<2x1024xf32> to vector<2x1024xbf16>
    %c0_23 = arith.constant 0 : index
    %c0_24 = arith.constant 0 : index
    %46 = vector.load %arg8[%c0_23, %c0_24] : memref<1024x1024xbf16, #tpu.memory_space<vmem>>, vector<1024x1024xbf16>
    %cst_25 = arith.constant dense<0.000000e+00> : vector<2x1024xf32>
    %47 = tpu.matmul %45, %46, %cst_25 {dimension_numbers = #tpu.dot_dimension_numbers<[1], [0], [0], [1], [0, 0, 1, 1], [], []>} : vector<2x1024xbf16>, vector<1024x1024xbf16>, vector<2x1024xf32> -> vector<2x1024xf32>
    %c0_26 = arith.constant 0 : index
    %c0_27 = arith.constant 0 : index
    %48 = vector.load %arg9[%c0_26, %c0_27] : memref<1x1024xf32, #tpu.memory_space<vmem>>, vector<1x1024xf32>
    %49 = vector.broadcast %48 : vector<1x1024xf32> to vector<2x1024xf32>
    %50 = arith.addf %47, %49 : vector<2x1024xf32>
    %cst_28 = arith.constant dense<0.000000e+00> : vector<2xf32>
    %51 = vector.multi_reduction <add>, %50, %cst_28 [1] : vector<2x1024xf32> to vector<2xf32>
    %52 = vector.shape_cast %51 : vector<2xf32> to vector<2x1xf32>
    %cst_29 = arith.constant 1.024000e+03 : f32
    %53 = vector.broadcast %cst_29 : f32 to vector<2x1xf32>
    %54 = arith.divf %52, %53 : vector<2x1xf32>
    %55 = vector.broadcast %54 : vector<2x1xf32> to vector<2x1024xf32>
    %56 = arith.subf %50, %55 : vector<2x1024xf32>
    %57 = arith.mulf %56, %56 : vector<2x1024xf32>
    %cst_30 = arith.constant dense<0.000000e+00> : vector<2xf32>
    %58 = vector.multi_reduction <add>, %57, %cst_30 [1] : vector<2x1024xf32> to vector<2xf32>
    %59 = vector.shape_cast %58 : vector<2xf32> to vector<2x1xf32>
    %cst_31 = arith.constant 1.024000e+03 : f32
    %60 = vector.broadcast %cst_31 : f32 to vector<2x1xf32>
    %61 = arith.divf %59, %60 : vector<2x1xf32>
    %cst_32 = arith.constant 9.99999974E-6 : f32
    %62 = vector.broadcast %cst_32 : f32 to vector<2x1xf32>
    %63 = arith.addf %61, %62 : vector<2x1xf32>
    %64 = math.rsqrt %63 : vector<2x1xf32>
    %65 = vector.broadcast %64 : vector<2x1xf32> to vector<2x1024xf32>
    %66 = arith.mulf %56, %65 : vector<2x1024xf32>
    %c0_33 = arith.constant 0 : index
    %c0_34 = arith.constant 0 : index
    %67 = vector.load %arg10[%c0_33, %c0_34] : memref<1x1024xf32, #tpu.memory_space<vmem>>, vector<1x1024xf32>
    %68 = vector.broadcast %67 : vector<1x1024xf32> to vector<2x1024xf32>
    %69 = arith.mulf %66, %68 : vector<2x1024xf32>
    %c0_35 = arith.constant 0 : index
    %c0_36 = arith.constant 0 : index
    %70 = vector.load %arg11[%c0_35, %c0_36] : memref<1x1024xf32, #tpu.memory_space<vmem>>, vector<1x1024xf32>
    %71 = vector.broadcast %70 : vector<1x1024xf32> to vector<2x1024xf32>
    %72 = arith.addf %69, %71 : vector<2x1024xf32>
    %cst_37 = arith.constant 0.000000e+00 : f32
    %73 = vector.broadcast %cst_37 : f32 to vector<2x1024xf32>
    %74 = arith.cmpf oge, %72, %73 : vector<2x1024xf32>
    %cst_38 = arith.constant 2.000000e-01 : f32
    %75 = vector.broadcast %cst_38 : f32 to vector<2x1024xf32>
    %76 = arith.mulf %75, %72 : vector<2x1024xf32>
    %77 = arith.select %74, %72, %76 : vector<2x1024xi1>, vector<2x1024xf32>
    %c0_39 = arith.constant 0 : index
    %c0_40 = arith.constant 0 : index
    %78 = vector.load %arg12[%c0_39, %c0_40] : memref<1x1024xf32, #tpu.memory_space<vmem>>, vector<1x1024xf32>
    %79 = vector.broadcast %78 : vector<1x1024xf32> to vector<2x1024xf32>
    %80 = arith.mulf %77, %79 : vector<2x1024xf32>
    %cst_41 = arith.constant dense<0.000000e+00> : vector<2xf32>
    %81 = vector.multi_reduction <add>, %80, %cst_41 [1] : vector<2x1024xf32> to vector<2xf32>
    %82 = vector.shape_cast %81 : vector<2xf32> to vector<2x1xf32>
    %c0_42 = arith.constant 0 : index
    %c0_43 = arith.constant 0 : index
    %83 = vector.load %arg13[%c0_42, %c0_43] : memref<1x1xf32, #tpu.memory_space<vmem>>, vector<1x1xf32>
    %84 = vector.broadcast %83 : vector<1x1xf32> to vector<2x1xf32>
    %85 = arith.addf %82, %84 : vector<2x1xf32>
    %c0_44 = arith.constant 0 : index
    %c0_45 = arith.constant 0 : index
    %86 = vector.load %arg14[%c0_44, %c0_45] : memref<2x1xf32, #tpu.memory_space<vmem>>, vector<2x1xf32>
    tpu.vector_store %arg14[%c0_44, %c0_45], %85 {strides = array<i32>} : memref<2x1xf32, #tpu.memory_space<vmem>>, vector<2x1xf32>,
    return
  }
  func.func @transform_0(%arg0: i32) -> (i32, i32) {
    %c0_i32 = arith.constant 0 : i32
    %c0_i32_0 = arith.constant 0 : i32
    return %arg0, %c0_i32 : i32, i32
  }
  func.func @transform_1(%arg0: i32) -> (i32, i32) {
    %c0_i32 = arith.constant 0 : i32
    %c0_i32_0 = arith.constant 0 : i32
    %c0_i32_1 = arith.constant 0 : i32
    return %c0_i32, %c0_i32_0 : i32, i32
  }
  func.func @transform_2(%arg0: i32) -> (i32, i32) {
    %c0_i32 = arith.constant 0 : i32
    %c0_i32_0 = arith.constant 0 : i32
    %c0_i32_1 = arith.constant 0 : i32
    return %c0_i32, %c0_i32_0 : i32, i32
  }
  func.func @transform_3(%arg0: i32) -> (i32, i32) {
    %c0_i32 = arith.constant 0 : i32
    %c0_i32_0 = arith.constant 0 : i32
    %c0_i32_1 = arith.constant 0 : i32
    return %c0_i32, %c0_i32_0 : i32, i32
  }
  func.func @transform_4(%arg0: i32) -> (i32, i32) {
    %c0_i32 = arith.constant 0 : i32
    %c0_i32_0 = arith.constant 0 : i32
    %c0_i32_1 = arith.constant 0 : i32
    return %c0_i32, %c0_i32_0 : i32, i32
  }
  func.func @transform_5(%arg0: i32) -> (i32, i32) {
    %c0_i32 = arith.constant 0 : i32
    %c0_i32_0 = arith.constant 0 : i32
    %c0_i32_1 = arith.constant 0 : i32
    return %c0_i32, %c0_i32_0 : i32, i32
  }
  func.func @transform_6(%arg0: i32) -> (i32, i32) {
    %c0_i32 = arith.constant 0 : i32
    %c0_i32_0 = arith.constant 0 : i32
    %c0_i32_1 = arith.constant 0 : i32
    return %c0_i32, %c0_i32_0 : i32, i32
  }
  func.func @transform_7(%arg0: i32) -> (i32, i32) {
    %c0_i32 = arith.constant 0 : i32
    %c0_i32_0 = arith.constant 0 : i32
    %c0_i32_1 = arith.constant 0 : i32
    return %c0_i32, %c0_i32_0 : i32, i32
  }
  func.func @transform_8(%arg0: i32) -> (i32, i32) {
    %c0_i32 = arith.constant 0 : i32
    %c0_i32_0 = arith.constant 0 : i32
    %c0_i32_1 = arith.constant 0 : i32
    return %c0_i32, %c0_i32_0 : i32, i32
  }
  func.func @transform_9(%arg0: i32) -> (i32, i32) {
    %c0_i32 = arith.constant 0 : i32
    %c0_i32_0 = arith.constant 0 : i32
    %c0_i32_1 = arith.constant 0 : i32
    return %c0_i32, %c0_i32_0 : i32, i32
  }
  func.func @transform_10(%arg0: i32) -> (i32, i32) {
    %c0_i32 = arith.constant 0 : i32
    %c0_i32_0 = arith.constant 0 : i32
    %c0_i32_1 = arith.constant 0 : i32
    return %c0_i32, %c0_i32_0 : i32, i32
  }
  func.func @transform_11(%arg0: i32) -> (i32, i32) {
    %c0_i32 = arith.constant 0 : i32
    %c0_i32_0 = arith.constant 0 : i32
    %c0_i32_1 = arith.constant 0 : i32
    return %c0_i32, %c0_i32_0 : i32, i32
  }
  func.func @transform_12(%arg0: i32) -> (i32, i32) {
    %c0_i32 = arith.constant 0 : i32
    %c0_i32_0 = arith.constant 0 : i32
    %c0_i32_1 = arith.constant 0 : i32
    return %c0_i32, %c0_i32_0 : i32, i32
  }
  func.func @transform_13(%arg0: i32) -> (i32, i32) {
    %c0_i32 = arith.constant 0 : i32
    %c0_i32_0 = arith.constant 0 : i32
    return %arg0, %c0_i32 : i32, i32
  }
}

</mosaic_0001>

<llo_original>
// kernel: wgan_discriminator_forward.1
$region0: #{wgan_discriminator_forward.1}
  #allocation0 [shape = 'u32[]', space=smem, size = 0x4, offset = 0x4, fixed_abs, tag = 'smem constant byte address 0x4 - core index']
  #allocation1 [shape = 'u32[144,128]{1,0:T(1,128)}', space=vmem, size = 0x12000, scoped, tag = 'internal scratch']
  #allocation2 [shape = 'f32[1,1]{1,0:T(1,128)S(1)}', space=vmem, size = 0x200, scoped, tag = 'scoped memory for wgan_discriminator_forward.1']
  %s0 = inlined_call_operand.vmem [shape: f32[2,768], index: 0, kind: input, shape index: {}]
  %s1 = inlined_call_operand.hbm [shape: bf16[768,1024], index: 1, kind: input, shape index: {}]
  %s2 = inlined_call_operand.hbm [shape: f32[1,1024], index: 2, kind: input, shape index: {}]
  %s3 = inlined_call_operand.hbm [shape: bf16[1024,1024], index: 3, kind: input, shape index: {}]
  %s4 = inlined_call_operand.hbm [shape: f32[1,1024], index: 4, kind: input, shape index: {}]
  %s5 = inlined_call_operand.hbm [shape: f32[1,1024], index: 5, kind: input, shape index: {}]
  %s6 = inlined_call_operand.hbm [shape: f32[1,1024], index: 6, kind: input, shape index: {}]
  %s7 = inlined_call_operand.hbm [shape: bf16[1024,1024], index: 7, kind: input, shape index: {}]
  %s8 = inlined_call_operand.hbm [shape: f32[1,1024], index: 8, kind: input, shape index: {}]
  %s9 = inlined_call_operand.hbm [shape: f32[1,1024], index: 9, kind: input, shape index: {}]
  %s10 = inlined_call_operand.hbm [shape: f32[1,1024], index: 10, kind: input, shape index: {}]
  %s11 = inlined_call_operand.hbm [shape: f32[1,1024], index: 11, kind: input, shape index: {}]
  %s12 = inlined_call_operand.<no memory space> [shape: f32[1,1], index: 12, kind: input, shape index: {}]
  %s13 = inlined_call_operand.vmem [shape: f32[2,1], index: 13, kind: output, shape index: {}]
  %s14 = sld [smem:[#allocation0]]
  $region106: #{wgan_discriminator_forward.1} parent=0
    _
  %s16 = ssub.s32 1, %s14
  %s17 = scalar_select 0, %s16, %s14
  %v18 = vstv %s12
  %19 = vst [vmem:[#allocation2] sm:$0x1] %v18
  $region1: #{wgan_discriminator_forward.1} parent=0
    #allocation3 [shape = 'u8[1572864]{0}', space=vmem, size = 0x180000, scoped, tag = 'input window, operand 1, single buffered']
    #allocation4 [shape = 's32[1]{0}', space=sflag, size = 0x4, scoped, tag = 'scoped memory for wgan_discriminator_forward.1']
    #allocation5 [shape = 'u8[4096]{0}', space=vmem, size = 0x1000, scoped, tag = 'input window, operand 2, single buffered']
    #allocation6 [shape = 's32[1]{0}', space=sflag, size = 0x4, scoped, tag = 'scoped memory for wgan_discriminator_forward.1']
    #allocation7 [shape = 'u8[2097152]{0}', space=vmem, size = 0x200000, scoped, tag = 'input window, operand 3, single buffered']
    #allocation8 [shape = 'u8[4096]{0}', space=vmem, size = 0x1000, scoped, tag = 'input window, operand 4, single buffered']
    #allocation9 [shape = 's32[1]{0}', space=sflag, size = 0x4, scoped, tag = 'scoped memory for wgan_discriminator_forward.1']
    #allocation10 [shape = 'u8[4096]{0}', space=vmem, size = 0x1000, scoped, tag = 'input window, operand 5, single buffered']
    #allocation11 [shape = 'u8[4096]{0}', space=vmem, size = 0x1000, scoped, tag = 'input window, operand 6, single buffered']
    #allocation12 [shape = 's32[1]{0}', space=sflag, size = 0x4, scoped, tag = 'scoped memory for wgan_discriminator_forward.1']
    #allocation13 [shape = 'u8[2097152]{0}', space=vmem, size = 0x200000, scoped, tag = 'input window, operand 7, single buffered']
    #allocation14 [shape = 'u8[4096]{0}', space=vmem, size = 0x1000, scoped, tag = 'input window, operand 8, single buffered']
    #allocation15 [shape = 's32[1]{0}', space=sflag, size = 0x4, scoped, tag = 'scoped memory for wgan_discriminator_forward.1']
    #allocation16 [shape = 'u8[4096]{0}', space=vmem, size = 0x1000, scoped, tag = 'input window, operand 9, single buffered']
    #allocation17 [shape = 'u8[4096]{0}', space=vmem, size = 0x1000, scoped, tag = 'input window, operand 10, single buffered']
    #allocation18 [shape = 's32[1]{0}', space=sflag, size = 0x4, scoped, tag = 'scoped memory for wgan_discriminator_forward.1']
    #allocation19 [shape = 'u8[4096]{0}', space=vmem, size = 0x1000, scoped, tag = 'input window, operand 11, single buffered']
    %20 = vsyncpa [#allocation4], 0
    %21 = vsyncpa [#allocation6], 0
    %22 = vsyncpa [#allocation9], 0
    %23 = vsyncpa [#allocation12], 0
    %24 = vsyncpa [#allocation15], 0
    %25 = vsyncpa [#allocation18], 0
    // Predicated region
    $region2: #{wgan_discriminator_forward.1} parent=1 // pred_check
      _
    $region3: #{wgan_discriminator_forward.1} parent=1 // pred_check_branch
      %27 = sbr.rel (0) target = $region5
    $region4: #{wgan_discriminator_forward.1} parent=1 // pred_region
      _
    $region5: #{wgan_discriminator_forward.1} parent=1 // pred_fallthru
      _
    // Predicated region
    $region6: #{wgan_discriminator_forward.1} parent=1 // pred_check
      _
    $region7: #{wgan_discriminator_forward.1} parent=1 // pred_check_branch
      %29 = sbr.rel (0) target = $region9
    $region8: #{wgan_discriminator_forward.1} parent=1 // pred_region
      %s31 = ssub.s32 49152, 49152
      %32 = vsyncadd [#allocation4], %s31
      %s33 = sshll.u32 [#allocation3], 4
      %s34 = int_to_ptr.vmem [resolvable:$true] %s33
      %39 = dma.hbm_to_vmem [thread:$0]  %s1, 49152, %s34, [#allocation4], 512, 512, 32
    $region9: #{wgan_discriminator_forward.1} parent=1 // pred_fallthru
      _
    // Predicated region
    $region10: #{wgan_discriminator_forward.1} parent=1 // pred_check
      _
    $region11: #{wgan_discriminator_forward.1} parent=1 // pred_check_branch
      %41 = sbr.rel (0) target = $region13
    $region12: #{wgan_discriminator_forward.1} parent=1 // pred_region
      %s43 = ssub.s32 128, 128
      %44 = vsyncadd [#allocation6], %s43
      %s46 = sshll.u32 [#allocation5], 4
      %s47 = int_to_ptr.vmem [resolvable:$true] %s46
      %49 = dma.hbm_to_vmem [thread:$0]  %s2, 128, %s47, [#allocation6]
    $region13: #{wgan_discriminator_forward.1} parent=1 // pred_fallthru
      _
    // Predicated region
    $region14: #{wgan_discriminator_forward.1} parent=1 // pred_check
      _
    $region15: #{wgan_discriminator_forward.1} parent=1 // pred_check_branch
      %51 = sbr.rel (0) target = $region17
    $region16: #{wgan_discriminator_forward.1} parent=1 // pred_region
      %s53 = ssub.s32 65536, 65536
      %54 = vsyncadd [#allocation6], %s53
      %s55 = sshll.u32 [#allocation7], 4
      %s56 = int_to_ptr.vmem [resolvable:$true] %s55
      %61 = dma.hbm_to_vmem [thread:$0]  %s3, 65536, %s56, [#allocation6], 512, 512, 32
    $region17: #{wgan_discriminator_forward.1} parent=1 // pred_fallthru
      _
    // Predicated region
    $region18: #{wgan_discriminator_forward.1} parent=1 // pred_check
      _
    $region19: #{wgan_discriminator_forward.1} parent=1 // pred_check_branch
      %63 = sbr.rel (0) target = $region21
    $region20: #{wgan_discriminator_forward.1} parent=1 // pred_region
      %s65 = ssub.s32 128, 128
      %66 = vsyncadd [#allocation9], %s65
      %s68 = sshll.u32 [#allocation8], 4
      %s69 = int_to_ptr.vmem [resolvable:$true] %s68
      %71 = dma.hbm_to_vmem [thread:$0]  %s4, 128, %s69, [#allocation9]
    $region21: #{wgan_discriminator_forward.1} parent=1 // pred_fallthru
      _
    // Predicated region
    $region22: #{wgan_discriminator_forward.1} parent=1 // pred_check
      _
    $region23: #{wgan_discriminator_forward.1} parent=1 // pred_check_branch
      %73 = sbr.rel (0) target = $region25
    $region24: #{wgan_discriminator_forward.1} parent=1 // pred_region
      %s75 = ssub.s32 128, 128
      %76 = vsyncadd [#allocation9], %s75
      %s78 = sshll.u32 [#allocation10], 4
      %s79 = int_to_ptr.vmem [resolvable:$true] %s78
      %81 = dma.hbm_to_vmem [thread:$0]  %s5, 128, %s79, [#allocation9]
    $region25: #{wgan_discriminator_forward.1} parent=1 // pred_fallthru
      _
    // Predicated region
    $region26: #{wgan_discriminator_forward.1} parent=1 // pred_check
      _
    $region27: #{wgan_discriminator_forward.1} parent=1 // pred_check_branch
      %83 = sbr.rel (0) target = $region29
    $region28: #{wgan_discriminator_forward.1} parent=1 // pred_region
      %s85 = ssub.s32 128, 128
      %86 = vsyncadd [#allocation12], %s85
      %s88 = sshll.u32 [#allocation11], 4
      %s89 = int_to_ptr.vmem [resolvable:$true] %s88
      %91 = dma.hbm_to_vmem [thread:$0]  %s6, 128, %s89, [#allocation12]
    $region29: #{wgan_discriminator_forward.1} parent=1 // pred_fallthru
      _
    // Predicated region
    $region30: #{wgan_discriminator_forward.1} parent=1 // pred_check
      _
    $region31: #{wgan_discriminator_forward.1} parent=1 // pred_check_branch
      %93 = sbr.rel (0) target = $region33
    $region32: #{wgan_discriminator_forward.1} parent=1 // pred_region
      %s95 = ssub.s32 65536, 65536
      %96 = vsyncadd [#allocation12], %s95
      %s97 = sshll.u32 [#allocation13], 4
      %s98 = int_to_ptr.vmem [resolvable:$true] %s97
      %103 = dma.hbm_to_vmem [thread:$0]  %s7, 65536, %s98, [#allocation12], 512, 512, 32
    $region33: #{wgan_discriminator_forward.1} parent=1 // pred_fallthru
      _
    // Predicated region
    $region34: #{wgan_discriminator_forward.1} parent=1 // pred_check
      _
    $region35: #{wgan_discriminator_forward.1} parent=1 // pred_check_branch
      %105 = sbr.rel (0) target = $region37
    $region36: #{wgan_discriminator_forward.1} parent=1 // pred_region
      %s107 = ssub.s32 128, 128
      %108 = vsyncadd [#allocation15], %s107
      %s110 = sshll.u32 [#allocation14], 4
      %s111 = int_to_ptr.vmem [resolvable:$true] %s110
      %113 = dma.hbm_to_vmem [thread:$0]  %s8, 128, %s111, [#allocation15]
    $region37: #{wgan_discriminator_forward.1} parent=1 // pred_fallthru
      _
    // Predicated region
    $region38: #{wgan_discriminator_forward.1} parent=1 // pred_check
      _
    $region39: #{wgan_discriminator_forward.1} parent=1 // pred_check_branch
      %115 = sbr.rel (0) target = $region41
    $region40: #{wgan_discriminator_forward.1} parent=1 // pred_region
      %s117 = ssub.s32 128, 128
      %118 = vsyncadd [#allocation15], %s117
      %s120 = sshll.u32 [#allocation16], 4
      %s121 = int_to_ptr.vmem [resolvable:$true] %s120
      %123 = dma.hbm_to_vmem [thread:$0]  %s9, 128, %s121, [#allocation15]
    $region41: #{wgan_discriminator_forward.1} parent=1 // pred_fallthru
      _
    // Predicated region
    $region42: #{wgan_discriminator_forward.1} parent=1 // pred_check
      _
    $region43: #{wgan_discriminator_forward.1} parent=1 // pred_check_branch
      %125 = sbr.rel (0) target = $region45
    $region44: #{wgan_discriminator_forward.1} parent=1 // pred_region
      %s127 = ssub.s32 128, 128
      %128 = vsyncadd [#allocation18], %s127
      %s130 = sshll.u32 [#allocation17], 4
      %s131 = int_to_ptr.vmem [resolvable:$true] %s130
      %133 = dma.hbm_to_vmem [thread:$0]  %s10, 128, %s131, [#allocation18]
    $region45: #{wgan_discriminator_forward.1} parent=1 // pred_fallthru
      _
    // Predicated region
    $region46: #{wgan_discriminator_forward.1} parent=1 // pred_check
      _
    $region47: #{wgan_discriminator_forward.1} parent=1 // pred_check_branch
      %135 = sbr.rel (0) target = $region49
    $region48: #{wgan_discriminator_forward.1} parent=1 // pred_region
      %s137 = ssub.s32 128, 128
      %138 = vsyncadd [#allocation18], %s137
      %s140 = sshll.u32 [#allocation19], 4
      %s141 = int_to_ptr.vmem [resolvable:$true] %s140
      %143 = dma.hbm_to_vmem [thread:$0]  %s11, 128, %s141, [#allocation18]
    $region49: #{wgan_discriminator_forward.1} parent=1 // pred_fallthru
      _
    // Predicated region
    $region50: #{wgan_discriminator_forward.1} parent=1 // pred_check
      _
    $region51: #{wgan_discriminator_forward.1} parent=1 // pred_check_branch
      %145 = sbr.rel (0) target = $region53
    $region52: #{wgan_discriminator_forward.1} parent=1 // pred_region
      _
    $region53: #{wgan_discriminator_forward.1} parent=1 // pred_fallthru
      _
    // Predicated region
    $region54: #{wgan_discriminator_forward.1} parent=1 // pred_check
      _
    $region55: #{wgan_discriminator_forward.1} parent=1 // pred_check_branch
      %147 = sbr.rel (0) target = $region57
    $region56: #{wgan_discriminator_forward.1} parent=1 // pred_region
      %148 = dma.done [#allocation4], 49152
    $region57: #{wgan_discriminator_forward.1} parent=1 // pred_fallthru
      _
    // Predicated region
    $region58: #{wgan_discriminator_forward.1} parent=1 // pred_check
      _
    $region59: #{wgan_discriminator_forward.1} parent=1 // pred_check_branch
      %150 = sbr.rel (0) target = $region61
    $region60: #{wgan_discriminator_forward.1} parent=1 // pred_region
      %151 = dma.done [#allocation6], 128
    $region61: #{wgan_discriminator_forward.1} parent=1 // pred_fallthru
      _
    // Predicated region
    $region62: #{wgan_discriminator_forward.1} parent=1 // pred_check
      _
    $region63: #{wgan_discriminator_forward.1} parent=1 // pred_check_branch
      %153 = sbr.rel (0) target = $region65
    $region64: #{wgan_discriminator_forward.1} parent=1 // pred_region
      %154 = dma.done [#allocation6], 65536
    $region65: #{wgan_discriminator_forward.1} parent=1 // pred_fallthru
      _
    // Predicated region
    $region66: #{wgan_discriminator_forward.1} parent=1 // pred_check
      _
    $region67: #{wgan_discriminator_forward.1} parent=1 // pred_check_branch
      %156 = sbr.rel (0) target = $region69
    $region68: #{wgan_discriminator_forward.1} parent=1 // pred_region
      %157 = dma.done [#allocation9], 128
    $region69: #{wgan_discriminator_forward.1} parent=1 // pred_fallthru
      _
    // Predicated region
    $region70: #{wgan_discriminator_forward.1} parent=1 // pred_check
      _
    $region71: #{wgan_discriminator_forward.1} parent=1 // pred_check_branch
      %159 = sbr.rel (0) target = $region73
    $region72: #{wgan_discriminator_forward.1} parent=1 // pred_region
      %160 = dma.done [#allocation9], 128
    $region73: #{wgan_discriminator_forward.1} parent=1 // pred_fallthru
      _
    // Predicated region
    $region74: #{wgan_discriminator_forward.1} parent=1 // pred_check
      _
    $region75: #{wgan_discriminator_forward.1} parent=1 // pred_check_branch
      %162 = sbr.rel (0) target = $region77
    $region76: #{wgan_discriminator_forward.1} parent=1 // pred_region
      %163 = dma.done [#allocation12], 128
    $region77: #{wgan_discriminator_forward.1} parent=1 // pred_fallthru
      _
    // Predicated region
    $region78: #{wgan_discriminator_forward.1} parent=1 // pred_check
      _
    $region79: #{wgan_discriminator_forward.1} parent=1 // pred_check_branch
      %165 = sbr.rel (0) target = $region81
    $region80: #{wgan_discriminator_forward.1} parent=1 // pred_region
      %166 = dma.done [#allocation12], 65536
    $region81: #{wgan_discriminator_forward.1} parent=1 // pred_fallthru
      _
    // Predicated region
    $region82: #{wgan_discriminator_forward.1} parent=1 // pred_check
      _
    $region83: #{wgan_discriminator_forward.1} parent=1 // pred_check_branch
      %168 = sbr.rel (0) target = $region85
    $region84: #{wgan_discriminator_forward.1} parent=1 // pred_region
      %169 = dma.done [#allocation15], 128
    $region85: #{wgan_discriminator_forward.1} parent=1 // pred_fallthru
      _
    // Predicated region
    $region86: #{wgan_discriminator_forward.1} parent=1 // pred_check
      _
    $region87: #{wgan_discriminator_forward.1} parent=1 // pred_check_branch
      %171 = sbr.rel (0) target = $region89
    $region88: #{wgan_discriminator_forward.1} parent=1 // pred_region
      %172 = dma.done [#allocation15], 128
    $region89: #{wgan_discriminator_forward.1} parent=1 // pred_fallthru
      _
    // Predicated region
    $region90: #{wgan_discriminator_forward.1} parent=1 // pred_check
      _
    $region91: #{wgan_discriminator_forward.1} parent=1 // pred_check_branch
      %174 = sbr.rel (0) target = $region93
    $region92: #{wgan_discriminator_forward.1} parent=1 // pred_region
      %175 = dma.done [#allocation18], 128
    $region93: #{wgan_discriminator_forward.1} parent=1 // pred_fallthru
      _
    // Predicated region
    $region94: #{wgan_discriminator_forward.1} parent=1 // pred_check
      _
    $region95: #{wgan_discriminator_forward.1} parent=1 // pred_check_branch
      %177 = sbr.rel (0) target = $region97
    $region96: #{wgan_discriminator_forward.1} parent=1 // pred_region
      %178 = dma.done [#allocation18], 128
    $region97: #{wgan_discriminator_forward.1} parent=1 // pred_fallthru
      _
    %v179 = vld [vmem:[%s0] sm:$0xff]
    %v180 = vld [vmem:[%s0 + $0x8] sm:$0xf]
    %v183 = vcombine.high %v179, %v179
    %v185 = vunpack.c.l.s4 1983009808
    %v186 = vunpack.c.0.s8 %v185
    %v187 = vlaneseq
    %v188 = vshrl.u32 %v187, 7
    %v189 = vsub.s32 %v186, %v188
    %v190 = vrot.slane %v179, %v189
    %v192 = vunpack.c.l.s4 1983009808
    %v193 = vunpack.c.0.s8 %v192
    %v194 = vlaneseq
    %v195 = vshrl.u32 %v194, 7
    %v196 = vsub.s32 %v193, %v195
    %v197 = vrot.slane %v183, %v196
    %v198 = vcombine.high %v190, %v190
    %v199 = vcombine.high %v197, %v197
    %v201 = vunpack.c.l.s4 1983009808
    %v202 = vunpack.c.0.s8 %v201
    %v203 = vlaneseq
    %v204 = vshrl.u32 %v203, 7
    %v205 = vsub.s32 %v202, %v204
    %v206 = vrot.slane %v180, %v205
    %v207 = vcombine.high %v206, %v206
    %v214 = vpack.c.bf16 %v190, %v190
    %v215 = vpack.c.bf16 %v198, %v198
    %v216 = vpack.c.bf16 %v197, %v197
    %v217 = vpack.c.bf16 %v199, %v199
    %v218 = vpack.c.bf16 %v206, %v206
    %v219 = vpack.c.bf16 %v207, %v207
    %v220 = vld [vmem:[#allocation3] sm:$0xff]
    %v221 = vld [vmem:[#allocation3 + $0x8] sm:$0xff]
    %v222 = vld [vmem:[#allocation3 + $0x10] sm:$0xff]
    %v223 = vld [vmem:[#allocation3 + $0x18] sm:$0xff]
    %v224 = vld [vmem:[#allocation3 + $0x20] sm:$0xff]
    %v225 = vld [vmem:[#allocation3 + $0x28] sm:$0xff]
    %v226 = vld [vmem:[#allocation3 + $0x30] sm:$0xff]
    %v227 = vld [vmem:[#allocation3 + $0x38] sm:$0xff]
    %v228 = vld [vmem:[#allocation3 + $0x40] sm:$0xff]
    %v229 = vld [vmem:[#allocation3 + $0x48] sm:$0xff]
    %v230 = vld [vmem:[#allocation3 + $0x50] sm:$0xff]
    %v231 = vld [vmem:[#allocation3 + $0x58] sm:$0xff]
    %v232 = vld [vmem:[#allocation3 + $0x60] sm:$0xff]
    %v233 = vld [vmem:[#allocation3 + $0x68] sm:$0xff]
    %v234 = vld [vmem:[#allocation3 + $0x70] sm:$0xff]
    %v235 = vld [vmem:[#allocation3 + $0x78] sm:$0xff]
    %v236 = vld [vmem:[#allocation3 + $0x80] sm:$0xff]
    %v237 = vld [vmem:[#allocation3 + $0x88] sm:$0xff]
    %v238 = vld [vmem:[#allocation3 + $0x90] sm:$0xff]
    %v239 = vld [vmem:[#allocation3 + $0x98] sm:$0xff]
    %v240 = vld [vmem:[#allocation3 + $0xa0] sm:$0xff]
    %v241 = vld [vmem:[#allocation3 + $0xa8] sm:$0xff]
    %v242 = vld [vmem:[#allocation3 + $0xb0] sm:$0xff]
    %v243 = vld [vmem:[#allocation3 + $0xb8] sm:$0xff]
    %v244 = vld [vmem:[#allocation3 + $0xc0] sm:$0xff]
    %v245 = vld [vmem:[#allocation3 + $0xc8] sm:$0xff]
    %v246 = vld [vmem:[#allocation3 + $0xd0] sm:$0xff]
    %v247 = vld [vmem:[#allocation3 + $0xd8] sm:$0xff]
    %v248 = vld [vmem:[#allocation3 + $0xe0] sm:$0xff]
    %v249 = vld [vmem:[#allocation3 + $0xe8] sm:$0xff]
    %v250 = vld [vmem:[#allocation3 + $0xf0] sm:$0xff]
    %v251 = vld [vmem:[#allocation3 + $0xf8] sm:$0xff]
    %v252 = vld [vmem:[#allocation3 + $0x100] sm:$0xff]
    %v253 = vld [vmem:[#allocation3 + $0x108] sm:$0xff]
    %v254 = vld [vmem:[#allocation3 + $0x110] sm:$0xff]
    %v255 = vld [vmem:[#allocation3 + $0x118] sm:$0xff]
    %v256 = vld [vmem:[#allocation3 + $0x120] sm:$0xff]
    %v257 = vld [vmem:[#allocation3 + $0x128] sm:$0xff]
    %v258 = vld [vmem:[#allocation3 + $0x130] sm:$0xff]
    %v259 = vld [vmem:[#allocation3 + $0x138] sm:$0xff]
    %v260 = vld [vmem:[#allocation3 + $0x140] sm:$0xff]
    %v261 = vld [vmem:[#allocation3 + $0x148] sm:$0xff]
    %v262 = vld [vmem:[#allocation3 + $0x150] sm:$0xff]
    %v263 = vld [vmem:[#allocation3 + $0x158] sm:$0xff]
    %v264 = vld [vmem:[#allocation3 + $0x160] sm:$0xff]
    %v265 = vld [vmem:[#allocation3 + $0x168] sm:$0xff]
    %v266 = vld [vmem:[#allocation3 + $0x170] sm:$0xff]
    %v267 = vld [vmem:[#allocation3 + $0x178] sm:$0xff]
    %v268 = vld [vmem:[#allocation3 + $0x180] sm:$0xff]
    %v269 = vld [vmem:[#allocation3 + $0x188] sm:$0xff]
    %v270 = vld [vmem:[#allocation3 + $0x190] sm:$0xff]
    %v271 = vld [vmem:[#allocation3 + $0x198] sm:$0xff]
    %v272 = vld [vmem:[#allocation3 + $0x1a0] sm:$0xff]
    %v273 = vld [vmem:[#allocation3 + $0x1a8] sm:$0xff]
    %v274 = vld [vmem:[#allocation3 + $0x1b0] sm:$0xff]
    %v275 = vld [vmem:[#allocation3 + $0x1b8] sm:$0xff]
    %v276 = vld [vmem:[#allocation3 + $0x1c0] sm:$0xff]
    %v277 = vld [vmem:[#allocation3 + $0x1c8] sm:$0xff]
    %v278 = vld [vmem:[#allocation3 + $0x1d0] sm:$0xff]
    %v279 = vld [vmem:[#allocation3 + $0x1d8] sm:$0xff]
    %v280 = vld [vmem:[#allocation3 + $0x1e0] sm:$0xff]
    %v281 = vld [vmem:[#allocation3 + $0x1e8] sm:$0xff]
    %v282 = vld [vmem:[#allocation3 + $0x1f0] sm:$0xff]
    %v283 = vld [vmem:[#allocation3 + $0x1f8] sm:$0xff]
    %v284 = vld [vmem:[#allocation3 + $0x200] sm:$0xff]
    %v285 = vld [vmem:[#allocation3 + $0x208] sm:$0xff]
    %v286 = vld [vmem:[#allocation3 + $0x210] sm:$0xff]
    %v287 = vld [vmem:[#allocation3 + $0x218] sm:$0xff]
    %v288 = vld [vmem:[#allocation3 + $0x220] sm:$0xff]
    %v289 = vld [vmem:[#allocation3 + $0x228] sm:$0xff]
    %v290 = vld [vmem:[#allocation3 + $0x230] sm:$0xff]
    %v291 = vld [vmem:[#allocation3 + $0x238] sm:$0xff]
    %v292 = vld [vmem:[#allocation3 + $0x240] sm:$0xff]
    %v293 = vld [vmem:[#allocation3 + $0x248] sm:$0xff]
    %v294 = vld [vmem:[#allocation3 + $0x250] sm:$0xff]
    %v295 = vld [vmem:[#allocation3 + $0x258] sm:$0xff]
    %v296 = vld [vmem:[#allocation3 + $0x260] sm:$0xff]
    %v297 = vld [vmem:[#allocation3 + $0x268] sm:$0xff]
    %v298 = vld [vmem:[#allocation3 + $0x270] sm:$0xff]
    %v299 = vld [vmem:[#allocation3 + $0x278] sm:$0xff]
    %v300 = vld [vmem:[#allocation3 + $0x280] sm:$0xff]
    %v301 = vld [vmem:[#allocation3 + $0x288] sm:$0xff]
    %v302 = vld [vmem:[#allocation3 + $0x290] sm:$0xff]
    %v303 = vld [vmem:[#allocation3 + $0x298] sm:$0xff]
    %v304 = vld [vmem:[#allocation3 + $0x2a0] sm:$0xff]
    %v305 = vld [vmem:[#allocation3 + $0x2a8] sm:$0xff]
    %v306 = vld [vmem:[#allocation3 + $0x2b0] sm:$0xff]
    %v307 = vld [vmem:[#allocation3 + $0x2b8] sm:$0xff]
    %v308 = vld [vmem:[#allocation3 + $0x2c0] sm:$0xff]
    %v309 = vld [vmem:[#allocation3 + $0x2c8] sm:$0xff]
    %v310 = vld [vmem:[#allocation3 + $0x2d0] sm:$0xff]
    %v311 = vld [vmem:[#allocation3 + $0x2d8] sm:$0xff]
    %v312 = vld [vmem:[#allocation3 + $0x2e0] sm:$0xff]
    %v313 = vld [vmem:[#allocation3 + $0x2e8] sm:$0xff]
    %v314 = vld [vmem:[#allocation3 + $0x2f0] sm:$0xff]
    %v315 = vld [vmem:[#allocation3 + $0x2f8] sm:$0xff]
    %v316 = vld [vmem:[#allocation3 + $0x300] sm:$0xff]
    %v317 = vld [vmem:[#allocation3 + $0x308] sm:$0xff]
    %v318 = vld [vmem:[#allocation3 + $0x310] sm:$0xff]
    %v319 = vld [vmem:[#allocation3 + $0x318] sm:$0xff]
    %v320 = vld [vmem:[#allocation3 + $0x320] sm:$0xff]
    %v321 = vld [vmem:[#allocation3 + $0x328] sm:$0xff]
    %v322 = vld [vmem:[#allocation3 + $0x330] sm:$0xff]
    %v323 = vld [vmem:[#allocation3 + $0x338] sm:$0xff]
    %v324 = vld [vmem:[#allocation3 + $0x340] sm:$0xff]
    %v325 = vld [vmem:[#allocation3 + $0x348] sm:$0xff]
    %v326 = vld [vmem:[#allocation3 + $0x350] sm:$0xff]
    %v327 = vld [vmem:[#allocation3 + $0x358] sm:$0xff]
    %v328 = vld [vmem:[#allocation3 + $0x360] sm:$0xff]
    %v329 = vld [vmem:[#allocation3 + $0x368] sm:$0xff]
    %v330 = vld [vmem:[#allocation3 + $0x370] sm:$0xff]
    %v331 = vld [vmem:[#allocation3 + $0x378] sm:$0xff]
    %v332 = vld [vmem:[#allocation3 + $0x380] sm:$0xff]
    %v333 = vld [vmem:[#allocation3 + $0x388] sm:$0xff]
    %v334 = vld [vmem:[#allocation3 + $0x390] sm:$0xff]
    %v335 = vld [vmem:[#allocation3 + $0x398] sm:$0xff]
    %v336 = vld [vmem:[#allocation3 + $0x3a0] sm:$0xff]
    %v337 = vld [vmem:[#allocation3 + $0x3a8] sm:$0xff]
    %v338 = vld [vmem:[#allocation3 + $0x3b0] sm:$0xff]
    %v339 = vld [vmem:[#allocation3 + $0x3b8] sm:$0xff]
    %v340 = vld [vmem:[#allocation3 + $0x3c0] sm:$0xff]
    %v341 = vld [vmem:[#allocation3 + $0x3c8] sm:$0xff]
    %v342 = vld [vmem:[#allocation3 + $0x3d0] sm:$0xff]
    %v343 = vld [vmem:[#allocation3 + $0x3d8] sm:$0xff]
    %v344 = vld [vmem:[#allocation3 + $0x3e0] sm:$0xff]
    %v345 = vld [vmem:[#allocation3 + $0x3e8] sm:$0xff]
    %v346 = vld [vmem:[#allocation3 + $0x3f0] sm:$0xff]
    %v347 = vld [vmem:[#allocation3 + $0x3f8] sm:$0xff]
    %v348 = vld [vmem:[#allocation3 + $0x400] sm:$0xff]
    %v349 = vld [vmem:[#allocation3 + $0x408] sm:$0xff]
    %v350 = vld [vmem:[#allocation3 + $0x410] sm:$0xff]
    %v351 = vld [vmem:[#allocation3 + $0x418] sm:$0xff]
    %v352 = vld [vmem:[#allocation3 + $0x420] sm:$0xff]
    %v353 = vld [vmem:[#allocation3 + $0x428] sm:$0xff]
    %v354 = vld [vmem:[#allocation3 + $0x430] sm:$0xff]
    %v355 = vld [vmem:[#allocation3 + $0x438] sm:$0xff]
    %v356 = vld [vmem:[#allocation3 + $0x440] sm:$0xff]
    %v357 = vld [vmem:[#allocation3 + $0x448] sm:$0xff]
    %v358 = vld [vmem:[#allocation3 + $0x450] sm:$0xff]
    %v359 = vld [vmem:[#allocation3 + $0x458] sm:$0xff]
    %v360 = vld [vmem:[#allocation3 + $0x460] sm:$0xff]
    %v361 = vld [vmem:[#allocation3 + $0x468] sm:$0xff]
    %v362 = vld [vmem:[#allocation3 + $0x470] sm:$0xff]
    %v363 = vld [vmem:[#allocation3 + $0x478] sm:$0xff]
    %v364 = vld [vmem:[#allocation3 + $0x480] sm:$0xff]
    %v365 = vld [vmem:[#allocation3 + $0x488] sm:$0xff]
    %v366 = vld [vmem:[#allocation3 + $0x490] sm:$0xff]
    %v367 = vld [vmem:[#allocation3 + $0x498] sm:$0xff]
    %v368 = vld [vmem:[#allocation3 + $0x4a0] sm:$0xff]
    %v369 = vld [vmem:[#allocation3 + $0x4a8] sm:$0xff]
    %v370 = vld [vmem:[#allocation3 + $0x4b0] sm:$0xff]
    %v371 = vld [vmem:[#allocation3 + $0x4b8] sm:$0xff]
    %v372 = vld [vmem:[#allocation3 + $0x4c0] sm:$0xff]
    %v373 = vld [vmem:[#allocation3 + $0x4c8] sm:$0xff]
    %v374 = vld [vmem:[#allocation3 + $0x4d0] sm:$0xff]
    %v375 = vld [vmem:[#allocation3 + $0x4d8] sm:$0xff]
    %v376 = vld [vmem:[#allocation3 + $0x4e0] sm:$0xff]
    %v377 = vld [vmem:[#allocation3 + $0x4e8] sm:$0xff]
    %v378 = vld [vmem:[#allocation3 + $0x4f0] sm:$0xff]
    %v379 = vld [vmem:[#allocation3 + $0x4f8] sm:$0xff]
    %v380 = vld [vmem:[#allocation3 + $0x500] sm:$0xff]
    %v381 = vld [vmem:[#allocation3 + $0x508] sm:$0xff]
    %v382 = vld [vmem:[#allocation3 + $0x510] sm:$0xff]
    %v383 = vld [vmem:[#allocation3 + $0x518] sm:$0xff]
    %v384 = vld [vmem:[#allocation3 + $0x520] sm:$0xff]
    %v385 = vld [vmem:[#allocation3 + $0x528] sm:$0xff]
    %v386 = vld [vmem:[#allocation3 + $0x530] sm:$0xff]
    %v387 = vld [vmem:[#allocation3 + $0x538] sm:$0xff]
    %v388 = vld [vmem:[#allocation3 + $0x540] sm:$0xff]
    %v389 = vld [vmem:[#allocation3 + $0x548] sm:$0xff]
    %v390 = vld [vmem:[#allocation3 + $0x550] sm:$0xff]
    %v391 = vld [vmem:[#allocation3 + $0x558] sm:$0xff]
    %v392 = vld [vmem:[#allocation3 + $0x560] sm:$0xff]
    %v393 = vld [vmem:[#allocation3 + $0x568] sm:$0xff]
    %v394 = vld [vmem:[#allocation3 + $0x570] sm:$0xff]
    %v395 = vld [vmem:[#allocation3 + $0x578] sm:$0xff]
    %v396 = vld [vmem:[#allocation3 + $0x580] sm:$0xff]
    %v397 = vld [vmem:[#allocation3 + $0x588] sm:$0xff]
    %v398 = vld [vmem:[#allocation3 + $0x590] sm:$0xff]
    %v399 = vld [vmem:[#allocation3 + $0x598] sm:$0xff]
    %v400 = vld [vmem:[#allocation3 + $0x5a0] sm:$0xff]
    %v401 = vld [vmem:[#allocation3 + $0x5a8] sm:$0xff]
    %v402 = vld [vmem:[#allocation3 + $0x5b0] sm:$0xff]
    %v403 = vld [vmem:[#allocation3 + $0x5b8] sm:$0xff]
    %v404 = vld [vmem:[#allocation3 + $0x5c0] sm:$0xff]
    %v405 = vld [vmem:[#allocation3 + $0x5c8] sm:$0xff]
    %v406 = vld [vmem:[#allocation3 + $0x5d0] sm:$0xff]
    %v407 = vld [vmem:[#allocation3 + $0x5d8] sm:$0xff]
    %v408 = vld [vmem:[#allocation3 + $0x5e0] sm:$0xff]
    %v409 = vld [vmem:[#allocation3 + $0x5e8] sm:$0xff]
    %v410 = vld [vmem:[#allocation3 + $0x5f0] sm:$0xff]
    %v411 = vld [vmem:[#allocation3 + $0x5f8] sm:$0xff]
    %v412 = vld [vmem:[#allocation3 + $0x600] sm:$0xff]
    %v413 = vld [vmem:[#allocation3 + $0x608] sm:$0xff]
    %v414 = vld [vmem:[#allocation3 + $0x610] sm:$0xff]
    %v415 = vld [vmem:[#allocation3 + $0x618] sm:$0xff]
    %v416 = vld [vmem:[#allocation3 + $0x620] sm:$0xff]
    %v417 = vld [vmem:[#allocation3 + $0x628] sm:$0xff]
    %v418 = vld [vmem:[#allocation3 + $0x630] sm:$0xff]
    %v419 = vld [vmem:[#allocation3 + $0x638] sm:$0xff]
    %v420 = vld [vmem:[#allocation3 + $0x640] sm:$0xff]
    %v421 = vld [vmem:[#allocation3 + $0x648] sm:$0xff]
    %v422 = vld [vmem:[#allocation3 + $0x650] sm:$0xff]
    %v423 = vld [vmem:[#allocation3 + $0x658] sm:$0xff]
    %v424 = vld [vmem:[#allocation3 + $0x660] sm:$0xff]
    %v425 = vld [vmem:[#allocation3 + $0x668] sm:$0xff]
    %v426 = vld [vmem:[#allocation3 + $0x670] sm:$0xff]
    %v427 = vld [vmem:[#allocation3 + $0x678] sm:$0xff]
    %v428 = vld [vmem:[#allocation3 + $0x680] sm:$0xff]
    %v429 = vld [vmem:[#allocation3 + $0x688] sm:$0xff]
    %v430 = vld [vmem:[#allocation3 + $0x690] sm:$0xff]
    %v431 = vld [vmem:[#allocation3 + $0x698] sm:$0xff]
    %v432 = vld [vmem:[#allocation3 + $0x6a0] sm:$0xff]
    %v433 = vld [vmem:[#allocation3 + $0x6a8] sm:$0xff]
    %v434 = vld [vmem:[#allocation3 + $0x6b0] sm:$0xff]
    %v435 = vld [vmem:[#allocation3 + $0x6b8] sm:$0xff]
    %v436 = vld [vmem:[#allocation3 + $0x6c0] sm:$0xff]
    %v437 = vld [vmem:[#allocation3 + $0x6c8] sm:$0xff]
    %v438 = vld [vmem:[#allocation3 + $0x6d0] sm:$0xff]
    %v439 = vld [vmem:[#allocation3 + $0x6d8] sm:$0xff]
    %v440 = vld [vmem:[#allocation3 + $0x6e0] sm:$0xff]
    %v441 = vld [vmem:[#allocation3 + $0x6e8] sm:$0xff]
    %v442 = vld [vmem:[#allocation3 + $0x6f0] sm:$0xff]
    %v443 = vld [vmem:[#allocation3 + $0x6f8] sm:$0xff]
    %v444 = vld [vmem:[#allocation3 + $0x700] sm:$0xff]
    %v445 = vld [vmem:[#allocation3 + $0x708] sm:$0xff]
    %v446 = vld [vmem:[#allocation3 + $0x710] sm:$0xff]
    %v447 = vld [vmem:[#allocation3 + $0x718] sm:$0xff]
    %v448 = vld [vmem:[#allocation3 + $0x720] sm:$0xff]
    %v449 = vld [vmem:[#allocation3 + $0x728] sm:$0xff]
    %v450 = vld [vmem:[#allocation3 + $0x730] sm:$0xff]
    %v451 = vld [vmem:[#allocation3 + $0x738] sm:$0xff]
    %v452 = vld [vmem:[#allocation3 + $0x740] sm:$0xff]
    %v453 = vld [vmem:[#allocation3 + $0x748] sm:$0xff]
    %v454 = vld [vmem:[#allocation3 + $0x750] sm:$0xff]
    %v455 = vld [vmem:[#allocation3 + $0x758] sm:$0xff]
    %v456 = vld [vmem:[#allocation3 + $0x760] sm:$0xff]
    %v457 = vld [vmem:[#allocation3 + $0x768] sm:$0xff]
    %v458 = vld [vmem:[#allocation3 + $0x770] sm:$0xff]
    %v459 = vld [vmem:[#allocation3 + $0x778] sm:$0xff]
    %v460 = vld [vmem:[#allocation3 + $0x780] sm:$0xff]
    %v461 = vld [vmem:[#allocation3 + $0x788] sm:$0xff]
    %v462 = vld [vmem:[#allocation3 + $0x790] sm:$0xff]
    %v463 = vld [vmem:[#allocation3 + $0x798] sm:$0xff]
    %v464 = vld [vmem:[#allocation3 + $0x7a0] sm:$0xff]
    %v465 = vld [vmem:[#allocation3 + $0x7a8] sm:$0xff]
    %v466 = vld [vmem:[#allocation3 + $0x7b0] sm:$0xff]
    %v467 = vld [vmem:[#allocation3 + $0x7b8] sm:$0xff]
    %v468 = vld [vmem:[#allocation3 + $0x7c0] sm:$0xff]
    %v469 = vld [vmem:[#allocation3 + $0x7c8] sm:$0xff]
    %v470 = vld [vmem:[#allocation3 + $0x7d0] sm:$0xff]
    %v471 = vld [vmem:[#allocation3 + $0x7d8] sm:$0xff]
    %v472 = vld [vmem:[#allocation3 + $0x7e0] sm:$0xff]
    %v473 = vld [vmem:[#allocation3 + $0x7e8] sm:$0xff]
    %v474 = vld [vmem:[#allocation3 + $0x7f0] sm:$0xff]
    %v475 = vld [vmem:[#allocation3 + $0x7f8] sm:$0xff]
    %v476 = vld [vmem:[#allocation3 + $0x800] sm:$0xff]
    %v477 = vld [vmem:[#allocation3 + $0x808] sm:$0xff]
    %v478 = vld [vmem:[#allocation3 + $0x810] sm:$0xff]
    %v479 = vld [vmem:[#allocation3 + $0x818] sm:$0xff]
    %v480 = vld [vmem:[#allocation3 + $0x820] sm:$0xff]
    %v481 = vld [vmem:[#allocation3 + $0x828] sm:$0xff]
    %v482 = vld [vmem:[#allocation3 + $0x830] sm:$0xff]
    %v483 = vld [vmem:[#allocation3 + $0x838] sm:$0xff]
    %v484 = vld [vmem:[#allocation3 + $0x840] sm:$0xff]
    %v485 = vld [vmem:[#allocation3 + $0x848] sm:$0xff]
    %v486 = vld [vmem:[#allocation3 + $0x850] sm:$0xff]
    %v487 = vld [vmem:[#allocation3 + $0x858] sm:$0xff]
    %v488 = vld [vmem:[#allocation3 + $0x860] sm:$0xff]
    %v489 = vld [vmem:[#allocation3 + $0x868] sm:$0xff]
    %v490 = vld [vmem:[#allocation3 + $0x870] sm:$0xff]
    %v491 = vld [vmem:[#allocation3 + $0x878] sm:$0xff]
    %v492 = vld [vmem:[#allocation3 + $0x880] sm:$0xff]
    %v493 = vld [vmem:[#allocation3 + $0x888] sm:$0xff]
    %v494 = vld [vmem:[#allocation3 + $0x890] sm:$0xff]
    %v495 = vld [vmem:[#allocation3 + $0x898] sm:$0xff]
    %v496 = vld [vmem:[#allocation3 + $0x8a0] sm:$0xff]
    %v497 = vld [vmem:[#allocation3 + $0x8a8] sm:$0xff]
    %v498 = vld [vmem:[#allocation3 + $0x8b0] sm:$0xff]
    %v499 = vld [vmem:[#allocation3 + $0x8b8] sm:$0xff]
    %v500 = vld [vmem:[#allocation3 + $0x8c0] sm:$0xff]
    %v501 = vld [vmem:[#allocation3 + $0x8c8] sm:$0xff]
    %v502 = vld [vmem:[#allocation3 + $0x8d0] sm:$0xff]
    %v503 = vld [vmem:[#allocation3 + $0x8d8] sm:$0xff]
    %v504 = vld [vmem:[#allocation3 + $0x8e0] sm:$0xff]
    %v505 = vld [vmem:[#allocation3 + $0x8e8] sm:$0xff]
    %v506 = vld [vmem:[#allocation3 + $0x8f0] sm:$0xff]
    %v507 = vld [vmem:[#allocation3 + $0x8f8] sm:$0xff]
    %v508 = vld [vmem:[#allocation3 + $0x900] sm:$0xff]
    %v509 = vld [vmem:[#allocation3 + $0x908] sm:$0xff]
    %v510 = vld [vmem:[#allocation3 + $0x910] sm:$0xff]
    %v511 = vld [vmem:[#allocation3 + $0x918] sm:$0xff]
    %v512 = vld [vmem:[#allocation3 + $0x920] sm:$0xff]
    %v513 = vld [vmem:[#allocation3 + $0x928] sm:$0xff]
    %v514 = vld [vmem:[#allocation3 + $0x930] sm:$0xff]
    %v515 = vld [vmem:[#allocation3 + $0x938] sm:$0xff]
    %v516 = vld [vmem:[#allocation3 + $0x940] sm:$0xff]
    %v517 = vld [vmem:[#allocation3 + $0x948] sm:$0xff]
    %v518 = vld [vmem:[#allocation3 + $0x950] sm:$0xff]
    %v519 = vld [vmem:[#allocation3 + $0x958] sm:$0xff]
    %v520 = vld [vmem:[#allocation3 + $0x960] sm:$0xff]
    %v521 = vld [vmem:[#allocation3 + $0x968] sm:$0xff]
    %v522 = vld [vmem:[#allocation3 + $0x970] sm:$0xff]
    %v523 = vld [vmem:[#allocation3 + $0x978] sm:$0xff]
    %v524 = vld [vmem:[#allocation3 + $0x980] sm:$0xff]
    %v525 = vld [vmem:[#allocation3 + $0x988] sm:$0xff]
    %v526 = vld [vmem:[#allocation3 + $0x990] sm:$0xff]
    %v527 = vld [vmem:[#allocation3 + $0x998] sm:$0xff]
    %v528 = vld [vmem:[#allocation3 + $0x9a0] sm:$0xff]
    %v529 = vld [vmem:[#allocation3 + $0x9a8] sm:$0xff]
    %v530 = vld [vmem:[#allocation3 + $0x9b0] sm:$0xff]
    %v531 = vld [vmem:[#allocation3 + $0x9b8] sm:$0xff]
    %v532 = vld [vmem:[#allocation3 + $0x9c0] sm:$0xff]
    %v533 = vld [vmem:[#allocation3 + $0x9c8] sm:$0xff]
    %v534 = vld [vmem:[#allocation3 + $0x9d0] sm:$0xff]
    %v535 = vld [vmem:[#allocation3 + $0x9d8] sm:$0xff]
    %v536 = vld [vmem:[#allocation3 + $0x9e0] sm:$0xff]
    %v537 = vld [vmem:[#allocation3 + $0x9e8] sm:$0xff]
    %v538 = vld [vmem:[#allocation3 + $0x9f0] sm:$0xff]
    %v539 = vld [vmem:[#allocation3 + $0x9f8] sm:$0xff]
    %v540 = vld [vmem:[#allocation3 + $0xa00] sm:$0xff]
    %v541 = vld [vmem:[#allocation3 + $0xa08] sm:$0xff]
    %v542 = vld [vmem:[#allocation3 + $0xa10] sm:$0xff]
    %v543 = vld [vmem:[#allocation3 + $0xa18] sm:$0xff]
    %v544 = vld [vmem:[#allocation3 + $0xa20] sm:$0xff]
    %v545 = vld [vmem:[#allocation3 + $0xa28] sm:$0xff]
    %v546 = vld [vmem:[#allocation3 + $0xa30] sm:$0xff]
    %v547 = vld [vmem:[#allocation3 + $0xa38] sm:$0xff]
    %v548 = vld [vmem:[#allocation3 + $0xa40] sm:$0xff]
    %v549 = vld [vmem:[#allocation3 + $0xa48] sm:$0xff]
    %v550 = vld [vmem:[#allocation3 + $0xa50] sm:$0xff]
    %v551 = vld [vmem:[#allocation3 + $0xa58] sm:$0xff]
    %v552 = vld [vmem:[#allocation3 + $0xa60] sm:$0xff]
    %v553 = vld [vmem:[#allocation3 + $0xa68] sm:$0xff]
    %v554 = vld [vmem:[#allocation3 + $0xa70] sm:$0xff]
    %v555 = vld [vmem:[#allocation3 + $0xa78] sm:$0xff]
    %v556 = vld [vmem:[#allocation3 + $0xa80] sm:$0xff]
    %v557 = vld [vmem:[#allocation3 + $0xa88] sm:$0xff]
    %v558 = vld [vmem:[#allocation3 + $0xa90] sm:$0xff]
    %v559 = vld [vmem:[#allocation3 + $0xa98] sm:$0xff]
    %v560 = vld [vmem:[#allocation3 + $0xaa0] sm:$0xff]
    %v561 = vld [vmem:[#allocation3 + $0xaa8] sm:$0xff]
    %v562 = vld [vmem:[#allocation3 + $0xab0] sm:$0xff]
    %v563 = vld [vmem:[#allocation3 + $0xab8] sm:$0xff]
    %v564 = vld [vmem:[#allocation3 + $0xac0] sm:$0xff]
    %v565 = vld [vmem:[#allocation3 + $0xac8] sm:$0xff]
    %v566 = vld [vmem:[#allocation3 + $0xad0] sm:$0xff]
    %v567 = vld [vmem:[#allocation3 + $0xad8] sm:$0xff]
    %v568 = vld [vmem:[#allocation3 + $0xae0] sm:$0xff]
    %v569 = vld [vmem:[#allocation3 + $0xae8] sm:$0xff]
    %v570 = vld [vmem:[#allocation3 + $0xaf0] sm:$0xff]
    %v571 = vld [vmem:[#allocation3 + $0xaf8] sm:$0xff]
    %v572 = vld [vmem:[#allocation3 + $0xb00] sm:$0xff]
    %v573 = vld [vmem:[#allocation3 + $0xb08] sm:$0xff]
    %v574 = vld [vmem:[#allocation3 + $0xb10] sm:$0xff]
    %v575 = vld [vmem:[#allocation3 + $0xb18] sm:$0xff]
    %v576 = vld [vmem:[#allocation3 + $0xb20] sm:$0xff]
    %v577 = vld [vmem:[#allocation3 + $0xb28] sm:$0xff]
    %v578 = vld [vmem:[#allocation3 + $0xb30] sm:$0xff]
    %v579 = vld [vmem:[#allocation3 + $0xb38] sm:$0xff]
    %v580 = vld [vmem:[#allocation3 + $0xb40] sm:$0xff]
    %v581 = vld [vmem:[#allocation3 + $0xb48] sm:$0xff]
    %v582 = vld [vmem:[#allocation3 + $0xb50] sm:$0xff]
    %v583 = vld [vmem:[#allocation3 + $0xb58] sm:$0xff]
    %v584 = vld [vmem:[#allocation3 + $0xb60] sm:$0xff]
    %v585 = vld [vmem:[#allocation3 + $0xb68] sm:$0xff]
    %v586 = vld [vmem:[#allocation3 + $0xb70] sm:$0xff]
    %v587 = vld [vmem:[#allocation3 + $0xb78] sm:$0xff]
    %v588 = vld [vmem:[#allocation3 + $0xb80] sm:$0xff]
    %v589 = vld [vmem:[#allocation3 + $0xb88] sm:$0xff]
    %v590 = vld [vmem:[#allocation3 + $0xb90] sm:$0xff]
    %v591 = vld [vmem:[#allocation3 + $0xb98] sm:$0xff]
    %v592 = vld [vmem:[#allocation3 + $0xba0] sm:$0xff]
    %v593 = vld [vmem:[#allocation3 + $0xba8] sm:$0xff]
    %v594 = vld [vmem:[#allocation3 + $0xbb0] sm:$0xff]
    %v595 = vld [vmem:[#allocation3 + $0xbb8] sm:$0xff]
    %v596 = vld [vmem:[#allocation3 + $0xbc0] sm:$0xff]
    %v597 = vld [vmem:[#allocation3 + $0xbc8] sm:$0xff]
    %v598 = vld [vmem:[#allocation3 + $0xbd0] sm:$0xff]
    %v599 = vld [vmem:[#allocation3 + $0xbd8] sm:$0xff]
    %v600 = vld [vmem:[#allocation3 + $0xbe0] sm:$0xff]
    %v601 = vld [vmem:[#allocation3 + $0xbe8] sm:$0xff]
    %v602 = vld [vmem:[#allocation3 + $0xbf0] sm:$0xff]
    %v603 = vld [vmem:[#allocation3 + $0xbf8] sm:$0xff]
    %v604 = vld [vmem:[#allocation5] sm:$0xff]
    %v606 = vlaneseq
    %v607 = vshrl.u32 %v606, 7
    %v608 = vsub.s32 0, %v607
    %v609 = vrot.slane %v604, %v608
    %v610 = vlaneseq
    %v611 = vshrl.u32 %v610, 7
    %v612 = vsub.s32 1, %v611
    %v613 = vrot.slane %v604, %v612
    %v614 = vlaneseq
    %v615 = vshrl.u32 %v614, 7
    %v616 = vsub.s32 2, %v615
    %v617 = vrot.slane %v604, %v616
    %v618 = vlaneseq
    %v619 = vshrl.u32 %v618, 7
    %v620 = vsub.s32 3, %v619
    %v621 = vrot.slane %v604, %v620
    %v622 = vlaneseq
    %v623 = vshrl.u32 %v622, 7
    %v624 = vsub.s32 4, %v623
    %v625 = vrot.slane %v604, %v624
    %v626 = vlaneseq
    %v627 = vshrl.u32 %v626, 7
    %v628 = vsub.s32 5, %v627
    %v629 = vrot.slane %v604, %v628
    %v630 = vlaneseq
    %v631 = vshrl.u32 %v630, 7
    %v632 = vsub.s32 6, %v631
    %v633 = vrot.slane %v604, %v632
    %v634 = vlaneseq
    %v635 = vshrl.u32 %v634, 7
    %v636 = vsub.s32 7, %v635
    %v637 = vrot.slane %v604, %v636
    %v1030 = vunpack.c.l.b16 %v220
    %v1031 = vunpack.c.h.b16 %v220
    %v1032 = vunpack.c.l.b16 %v221
    %v1033 = vunpack.c.h.b16 %v221
    %v1034 = vunpack.c.l.b16 %v222
    %v1035 = vunpack.c.h.b16 %v222
    %v1036 = vunpack.c.l.b16 %v223
    %v1037 = vunpack.c.h.b16 %v223
    %v1038 = vunpack.c.l.b16 %v224
    %v1039 = vunpack.c.h.b16 %v224
    %v1040 = vunpack.c.l.b16 %v225
    %v1041 = vunpack.c.h.b16 %v225
    %v1042 = vunpack.c.l.b16 %v226
    %v1043 = vunpack.c.h.b16 %v226
    %v1044 = vunpack.c.l.b16 %v227
    %v1045 = vunpack.c.h.b16 %v227
    %v1046 = vunpack.c.l.b16 %v228
    %v1047 = vunpack.c.h.b16 %v228
    %v1048 = vunpack.c.l.b16 %v229
    %v1049 = vunpack.c.h.b16 %v229
    %v1050 = vunpack.c.l.b16 %v230
    %v1051 = vunpack.c.h.b16 %v230
    %v1052 = vunpack.c.l.b16 %v231
    %v1053 = vunpack.c.h.b16 %v231
    %v1054 = vunpack.c.l.b16 %v232
    %v1055 = vunpack.c.h.b16 %v232
    %v1056 = vunpack.c.l.b16 %v233
    %v1057 = vunpack.c.h.b16 %v233
    %v1058 = vunpack.c.l.b16 %v234
    %v1059 = vunpack.c.h.b16 %v234
    %v1060 = vunpack.c.l.b16 %v235
    %v1061 = vunpack.c.h.b16 %v235
    %v1062 = vunpack.c.l.b16 %v236
    %v1063 = vunpack.c.h.b16 %v236
    %v1064 = vunpack.c.l.b16 %v237
    %v1065 = vunpack.c.h.b16 %v237
    %v1066 = vunpack.c.l.b16 %v238
    %v1067 = vunpack.c.h.b16 %v238
    %v1068 = vunpack.c.l.b16 %v239
    %v1069 = vunpack.c.h.b16 %v239
    %v1070 = vunpack.c.l.b16 %v240
    %v1071 = vunpack.c.h.b16 %v240
    %v1072 = vunpack.c.l.b16 %v241
    %v1073 = vunpack.c.h.b16 %v241
    %v1074 = vunpack.c.l.b16 %v242
    %v1075 = vunpack.c.h.b16 %v242
    %v1076 = vunpack.c.l.b16 %v243
    %v1077 = vunpack.c.h.b16 %v243
    %v1078 = vunpack.c.l.b16 %v244
    %v1079 = vunpack.c.h.b16 %v244
    %v1080 = vunpack.c.l.b16 %v245
    %v1081 = vunpack.c.h.b16 %v245
    %v1082 = vunpack.c.l.b16 %v246
    %v1083 = vunpack.c.h.b16 %v246
    %v1084 = vunpack.c.l.b16 %v247
    %v1085 = vunpack.c.h.b16 %v247
    %v1086 = vunpack.c.l.b16 %v248
    %v1087 = vunpack.c.h.b16 %v248
    %v1088 = vunpack.c.l.b16 %v249
    %v1089 = vunpack.c.h.b16 %v249
    %v1090 = vunpack.c.l.b16 %v250
    %v1091 = vunpack.c.h.b16 %v250
    %v1092 = vunpack.c.l.b16 %v251
    %v1093 = vunpack.c.h.b16 %v251
    %v1094 = vunpack.c.l.b16 %v252
    %v1095 = vunpack.c.h.b16 %v252
    %v1096 = vunpack.c.l.b16 %v253
    %v1097 = vunpack.c.h.b16 %v253
    %v1098 = vunpack.c.l.b16 %v254
    %v1099 = vunpack.c.h.b16 %v254
    %v1100 = vunpack.c.l.b16 %v255
    %v1101 = vunpack.c.h.b16 %v255
    %v1102 = vunpack.c.l.b16 %v256
    %v1103 = vunpack.c.h.b16 %v256
    %v1104 = vunpack.c.l.b16 %v257
    %v1105 = vunpack.c.h.b16 %v257
    %v1106 = vunpack.c.l.b16 %v258
    %v1107 = vunpack.c.h.b16 %v258
    %v1108 = vunpack.c.l.b16 %v259
    %v1109 = vunpack.c.h.b16 %v259
    %v1110 = vunpack.c.l.b16 %v260
    %v1111 = vunpack.c.h.b16 %v260
    %v1112 = vunpack.c.l.b16 %v261
    %v1113 = vunpack.c.h.b16 %v261
    %v1114 = vunpack.c.l.b16 %v262
    %v1115 = vunpack.c.h.b16 %v262
    %v1116 = vunpack.c.l.b16 %v263
    %v1117 = vunpack.c.h.b16 %v263
    %v1118 = vunpack.c.l.b16 %v264
    %v1119 = vunpack.c.h.b16 %v264
    %v1120 = vunpack.c.l.b16 %v265
    %v1121 = vunpack.c.h.b16 %v265
    %v1122 = vunpack.c.l.b16 %v266
    %v1123 = vunpack.c.h.b16 %v266
    %v1124 = vunpack.c.l.b16 %v267
    %v1125 = vunpack.c.h.b16 %v267
    %v1126 = vunpack.c.l.b16 %v268
    %v1127 = vunpack.c.h.b16 %v268
    %v1128 = vunpack.c.l.b16 %v269
    %v1129 = vunpack.c.h.b16 %v269
    %v1130 = vunpack.c.l.b16 %v270
    %v1131 = vunpack.c.h.b16 %v270
    %v1132 = vunpack.c.l.b16 %v271
    %v1133 = vunpack.c.h.b16 %v271
    %v1134 = vunpack.c.l.b16 %v272
    %v1135 = vunpack.c.h.b16 %v272
    %v1136 = vunpack.c.l.b16 %v273
    %v1137 = vunpack.c.h.b16 %v273
    %v1138 = vunpack.c.l.b16 %v274
    %v1139 = vunpack.c.h.b16 %v274
    %v1140 = vunpack.c.l.b16 %v275
    %v1141 = vunpack.c.h.b16 %v275
    %v1142 = vunpack.c.l.b16 %v276
    %v1143 = vunpack.c.h.b16 %v276
    %v1144 = vunpack.c.l.b16 %v277
    %v1145 = vunpack.c.h.b16 %v277
    %v1146 = vunpack.c.l.b16 %v278
    %v1147 = vunpack.c.h.b16 %v278
    %v1148 = vunpack.c.l.b16 %v279
    %v1149 = vunpack.c.h.b16 %v279
    %v1150 = vunpack.c.l.b16 %v280
    %v1151 = vunpack.c.h.b16 %v280
    %v1152 = vunpack.c.l.b16 %v281
    %v1153 = vunpack.c.h.b16 %v281
    %v1154 = vunpack.c.l.b16 %v282
    %v1155 = vunpack.c.h.b16 %v282
    %v1156 = vunpack.c.l.b16 %v283
    %v1157 = vunpack.c.h.b16 %v283
    %v1158 = vunpack.c.l.b16 %v284
    %v1159 = vunpack.c.h.b16 %v284
    %v1160 = vunpack.c.l.b16 %v285
    %v1161 = vunpack.c.h.b16 %v285
    %v1162 = vunpack.c.l.b16 %v286
    %v1163 = vunpack.c.h.b16 %v286
    %v1164 = vunpack.c.l.b16 %v287
    %v1165 = vunpack.c.h.b16 %v287
    %v1166 = vunpack.c.l.b16 %v288
    %v1167 = vunpack.c.h.b16 %v288
    %v1168 = vunpack.c.l.b16 %v289
    %v1169 = vunpack.c.h.b16 %v289
    %v1170 = vunpack.c.l.b16 %v290
    %v1171 = vunpack.c.h.b16 %v290
    %v1172 = vunpack.c.l.b16 %v291
    %v1173 = vunpack.c.h.b16 %v291
    %v1174 = vunpack.c.l.b16 %v292
    %v1175 = vunpack.c.h.b16 %v292
    %v1176 = vunpack.c.l.b16 %v293
    %v1177 = vunpack.c.h.b16 %v293
    %v1178 = vunpack.c.l.b16 %v294
    %v1179 = vunpack.c.h.b16 %v294
    %v1180 = vunpack.c.l.b16 %v295
    %v1181 = vunpack.c.h.b16 %v295
    %v1182 = vunpack.c.l.b16 %v296
    %v1183 = vunpack.c.h.b16 %v296
    %v1184 = vunpack.c.l.b16 %v297
    %v1185 = vunpack.c.h.b16 %v297
    %v1186 = vunpack.c.l.b16 %v298
    %v1187 = vunpack.c.h.b16 %v298
    %v1188 = vunpack.c.l.b16 %v299
    %v1189 = vunpack.c.h.b16 %v299
    %v1190 = vunpack.c.l.b16 %v300
    %v1191 = vunpack.c.h.b16 %v300
    %v1192 = vunpack.c.l.b16 %v301
    %v1193 = vunpack.c.h.b16 %v301
    %v1194 = vunpack.c.l.b16 %v302
    %v1195 = vunpack.c.h.b16 %v302
    %v1196 = vunpack.c.l.b16 %v303
    %v1197 = vunpack.c.h.b16 %v303
    %v1198 = vunpack.c.l.b16 %v304
    %v1199 = vunpack.c.h.b16 %v304
    %v1200 = vunpack.c.l.b16 %v305
    %v1201 = vunpack.c.h.b16 %v305
    %v1202 = vunpack.c.l.b16 %v306
    %v1203 = vunpack.c.h.b16 %v306
    %v1204 = vunpack.c.l.b16 %v307
    %v1205 = vunpack.c.h.b16 %v307
    %v1206 = vunpack.c.l.b16 %v308
    %v1207 = vunpack.c.h.b16 %v308
    %v1208 = vunpack.c.l.b16 %v309
    %v1209 = vunpack.c.h.b16 %v309
    %v1210 = vunpack.c.l.b16 %v310
    %v1211 = vunpack.c.h.b16 %v310
    %v1212 = vunpack.c.l.b16 %v311
    %v1213 = vunpack.c.h.b16 %v311
    %v1214 = vunpack.c.l.b16 %v312
    %v1215 = vunpack.c.h.b16 %v312
    %v1216 = vunpack.c.l.b16 %v313
    %v1217 = vunpack.c.h.b16 %v313
    %v1218 = vunpack.c.l.b16 %v314
    %v1219 = vunpack.c.h.b16 %v314
    %v1220 = vunpack.c.l.b16 %v315
    %v1221 = vunpack.c.h.b16 %v315
    %v1222 = vunpack.c.l.b16 %v316
    %v1223 = vunpack.c.h.b16 %v316
    %v1224 = vunpack.c.l.b16 %v317
    %v1225 = vunpack.c.h.b16 %v317
    %v1226 = vunpack.c.l.b16 %v318
    %v1227 = vunpack.c.h.b16 %v318
    %v1228 = vunpack.c.l.b16 %v319
    %v1229 = vunpack.c.h.b16 %v319
    %v1230 = vunpack.c.l.b16 %v320
    %v1231 = vunpack.c.h.b16 %v320
    %v1232 = vunpack.c.l.b16 %v321
    %v1233 = vunpack.c.h.b16 %v321
    %v1234 = vunpack.c.l.b16 %v322
    %v1235 = vunpack.c.h.b16 %v322
    %v1236 = vunpack.c.l.b16 %v323
    %v1237 = vunpack.c.h.b16 %v323
    %v1238 = vunpack.c.l.b16 %v324
    %v1239 = vunpack.c.h.b16 %v324
    %v1240 = vunpack.c.l.b16 %v325
    %v1241 = vunpack.c.h.b16 %v325
    %v1242 = vunpack.c.l.b16 %v326
    %v1243 = vunpack.c.h.b16 %v326
    %v1244 = vunpack.c.l.b16 %v327
    %v1245 = vunpack.c.h.b16 %v327
    %v1246 = vunpack.c.l.b16 %v328
    %v1247 = vunpack.c.h.b16 %v328
    %v1248 = vunpack.c.l.b16 %v329
    %v1249 = vunpack.c.h.b16 %v329
    %v1250 = vunpack.c.l.b16 %v330
    %v1251 = vunpack.c.h.b16 %v330
    %v1252 = vunpack.c.l.b16 %v331
    %v1253 = vunpack.c.h.b16 %v331
    %v1254 = vunpack.c.l.b16 %v332
    %v1255 = vunpack.c.h.b16 %v332
    %v1256 = vunpack.c.l.b16 %v333
    %v1257 = vunpack.c.h.b16 %v333
    %v1258 = vunpack.c.l.b16 %v334
    %v1259 = vunpack.c.h.b16 %v334
    %v1260 = vunpack.c.l.b16 %v335
    %v1261 = vunpack.c.h.b16 %v335
    %v1262 = vunpack.c.l.b16 %v336
    %v1263 = vunpack.c.h.b16 %v336
    %v1264 = vunpack.c.l.b16 %v337
    %v1265 = vunpack.c.h.b16 %v337
    %v1266 = vunpack.c.l.b16 %v338
    %v1267 = vunpack.c.h.b16 %v338
    %v1268 = vunpack.c.l.b16 %v339
    %v1269 = vunpack.c.h.b16 %v339
    %v1270 = vunpack.c.l.b16 %v340
    %v1271 = vunpack.c.h.b16 %v340
    %v1272 = vunpack.c.l.b16 %v341
    %v1273 = vunpack.c.h.b16 %v341
    %v1274 = vunpack.c.l.b16 %v342
    %v1275 = vunpack.c.h.b16 %v342
    %v1276 = vunpack.c.l.b16 %v343
    %v1277 = vunpack.c.h.b16 %v343
    %v1278 = vunpack.c.l.b16 %v344
    %v1279 = vunpack.c.h.b16 %v344
    %v1280 = vunpack.c.l.b16 %v345
    %v1281 = vunpack.c.h.b16 %v345
    %v1282 = vunpack.c.l.b16 %v346
    %v1283 = vunpack.c.h.b16 %v346
    %v1284 = vunpack.c.l.b16 %v347
    %v1285 = vunpack.c.h.b16 %v347
    %v1286 = vunpack.c.l.b16 %v348
    %v1287 = vunpack.c.h.b16 %v348
    %v1288 = vunpack.c.l.b16 %v349
    %v1289 = vunpack.c.h.b16 %v349
    %v1290 = vunpack.c.l.b16 %v350
    %v1291 = vunpack.c.h.b16 %v350
    %v1292 = vunpack.c.l.b16 %v351
    %v1293 = vunpack.c.h.b16 %v351
    %v1294 = vunpack.c.l.b16 %v352
    %v1295 = vunpack.c.h.b16 %v352
    %v1296 = vunpack.c.l.b16 %v353
    %v1297 = vunpack.c.h.b16 %v353
    %v1298 = vunpack.c.l.b16 %v354
    %v1299 = vunpack.c.h.b16 %v354
    %v1300 = vunpack.c.l.b16 %v355
    %v1301 = vunpack.c.h.b16 %v355
    %v1302 = vunpack.c.l.b16 %v356
    %v1303 = vunpack.c.h.b16 %v356
    %v1304 = vunpack.c.l.b16 %v357
    %v1305 = vunpack.c.h.b16 %v357
    %v1306 = vunpack.c.l.b16 %v358
    %v1307 = vunpack.c.h.b16 %v358
    %v1308 = vunpack.c.l.b16 %v359
    %v1309 = vunpack.c.h.b16 %v359
    %v1310 = vunpack.c.l.b16 %v360
    %v1311 = vunpack.c.h.b16 %v360
    %v1312 = vunpack.c.l.b16 %v361
    %v1313 = vunpack.c.h.b16 %v361
    %v1314 = vunpack.c.l.b16 %v362
    %v1315 = vunpack.c.h.b16 %v362
    %v1316 = vunpack.c.l.b16 %v363
    %v1317 = vunpack.c.h.b16 %v363
    %v1318 = vunpack.c.l.b16 %v364
    %v1319 = vunpack.c.h.b16 %v364
    %v1320 = vunpack.c.l.b16 %v365
    %v1321 = vunpack.c.h.b16 %v365
    %v1322 = vunpack.c.l.b16 %v366
    %v1323 = vunpack.c.h.b16 %v366
    %v1324 = vunpack.c.l.b16 %v367
    %v1325 = vunpack.c.h.b16 %v367
    %v1326 = vunpack.c.l.b16 %v368
    %v1327 = vunpack.c.h.b16 %v368
    %v1328 = vunpack.c.l.b16 %v369
    %v1329 = vunpack.c.h.b16 %v369
    %v1330 = vunpack.c.l.b16 %v370
    %v1331 = vunpack.c.h.b16 %v370
    %v1332 = vunpack.c.l.b16 %v371
    %v1333 = vunpack.c.h.b16 %v371
    %v1334 = vunpack.c.l.b16 %v372
    %v1335 = vunpack.c.h.b16 %v372
    %v1336 = vunpack.c.l.b16 %v373
    %v1337 = vunpack.c.h.b16 %v373
    %v1338 = vunpack.c.l.b16 %v374
    %v1339 = vunpack.c.h.b16 %v374
    %v1340 = vunpack.c.l.b16 %v375
    %v1341 = vunpack.c.h.b16 %v375
    %v1342 = vunpack.c.l.b16 %v376
    %v1343 = vunpack.c.h.b16 %v376
    %v1344 = vunpack.c.l.b16 %v377
    %v1345 = vunpack.c.h.b16 %v377
    %v1346 = vunpack.c.l.b16 %v378
    %v1347 = vunpack.c.h.b16 %v378
    %v1348 = vunpack.c.l.b16 %v379
    %v1349 = vunpack.c.h.b16 %v379
    %v1350 = vunpack.c.l.b16 %v380
    %v1351 = vunpack.c.h.b16 %v380
    %v1352 = vunpack.c.l.b16 %v381
    %v1353 = vunpack.c.h.b16 %v381
    %v1354 = vunpack.c.l.b16 %v382
    %v1355 = vunpack.c.h.b16 %v382
    %v1356 = vunpack.c.l.b16 %v383
    %v1357 = vunpack.c.h.b16 %v383
    %v1358 = vunpack.c.l.b16 %v384
    %v1359 = vunpack.c.h.b16 %v384
    %v1360 = vunpack.c.l.b16 %v385
    %v1361 = vunpack.c.h.b16 %v385
    %v1362 = vunpack.c.l.b16 %v386
    %v1363 = vunpack.c.h.b16 %v386
    %v1364 = vunpack.c.l.b16 %v387
    %v1365 = vunpack.c.h.b16 %v387
    %v1366 = vunpack.c.l.b16 %v388
    %v1367 = vunpack.c.h.b16 %v388
    %v1368 = vunpack.c.l.b16 %v389
    %v1369 = vunpack.c.h.b16 %v389
    %v1370 = vunpack.c.l.b16 %v390
    %v1371 = vunpack.c.h.b16 %v390
    %v1372 = vunpack.c.l.b16 %v391
    %v1373 = vunpack.c.h.b16 %v391
    %v1374 = vunpack.c.l.b16 %v392
    %v1375 = vunpack.c.h.b16 %v392
    %v1376 = vunpack.c.l.b16 %v393
    %v1377 = vunpack.c.h.b16 %v393
    %v1378 = vunpack.c.l.b16 %v394
    %v1379 = vunpack.c.h.b16 %v394
    %v1380 = vunpack.c.l.b16 %v395
    %v1381 = vunpack.c.h.b16 %v395
    %v1382 = vunpack.c.l.b16 %v396
    %v1383 = vunpack.c.h.b16 %v396
    %v1384 = vunpack.c.l.b16 %v397
    %v1385 = vunpack.c.h.b16 %v397
    %v1386 = vunpack.c.l.b16 %v398
    %v1387 = vunpack.c.h.b16 %v398
    %v1388 = vunpack.c.l.b16 %v399
    %v1389 = vunpack.c.h.b16 %v399
    %v1390 = vunpack.c.l.b16 %v400
    %v1391 = vunpack.c.h.b16 %v400
    %v1392 = vunpack.c.l.b16 %v401
    %v1393 = vunpack.c.h.b16 %v401
    %v1394 = vunpack.c.l.b16 %v402
    %v1395 = vunpack.c.h.b16 %v402
    %v1396 = vunpack.c.l.b16 %v403
    %v1397 = vunpack.c.h.b16 %v403
    %v1398 = vunpack.c.l.b16 %v404
    %v1399 = vunpack.c.h.b16 %v404
    %v1400 = vunpack.c.l.b16 %v405
    %v1401 = vunpack.c.h.b16 %v405
    %v1402 = vunpack.c.l.b16 %v406
    %v1403 = vunpack.c.h.b16 %v406
    %v1404 = vunpack.c.l.b16 %v407
    %v1405 = vunpack.c.h.b16 %v407
    %v1406 = vunpack.c.l.b16 %v408
    %v1407 = vunpack.c.h.b16 %v408
    %v1408 = vunpack.c.l.b16 %v409
    %v1409 = vunpack.c.h.b16 %v409
    %v1410 = vunpack.c.l.b16 %v410
    %v1411 = vunpack.c.h.b16 %v410
    %v1412 = vunpack.c.l.b16 %v411
    %v1413 = vunpack.c.h.b16 %v411
    %v1414 = vunpack.c.l.b16 %v412
    %v1415 = vunpack.c.h.b16 %v412
    %v1416 = vunpack.c.l.b16 %v413
    %v1417 = vunpack.c.h.b16 %v413
    %v1418 = vunpack.c.l.b16 %v414
    %v1419 = vunpack.c.h.b16 %v414
    %v1420 = vunpack.c.l.b16 %v415
    %v1421 = vunpack.c.h.b16 %v415
    %v1422 = vunpack.c.l.b16 %v416
    %v1423 = vunpack.c.h.b16 %v416
    %v1424 = vunpack.c.l.b16 %v417
    %v1425 = vunpack.c.h.b16 %v417
    %v1426 = vunpack.c.l.b16 %v418
    %v1427 = vunpack.c.h.b16 %v418
    %v1428 = vunpack.c.l.b16 %v419
    %v1429 = vunpack.c.h.b16 %v419
    %v1430 = vunpack.c.l.b16 %v420
    %v1431 = vunpack.c.h.b16 %v420
    %v1432 = vunpack.c.l.b16 %v421
    %v1433 = vunpack.c.h.b16 %v421
    %v1434 = vunpack.c.l.b16 %v422
    %v1435 = vunpack.c.h.b16 %v422
    %v1436 = vunpack.c.l.b16 %v423
    %v1437 = vunpack.c.h.b16 %v423
    %v1438 = vunpack.c.l.b16 %v424
    %v1439 = vunpack.c.h.b16 %v424
    %v1440 = vunpack.c.l.b16 %v425
    %v1441 = vunpack.c.h.b16 %v425
    %v1442 = vunpack.c.l.b16 %v426
    %v1443 = vunpack.c.h.b16 %v426
    %v1444 = vunpack.c.l.b16 %v427
    %v1445 = vunpack.c.h.b16 %v427
    %v1446 = vunpack.c.l.b16 %v428
    %v1447 = vunpack.c.h.b16 %v428
    %v1448 = vunpack.c.l.b16 %v429
    %v1449 = vunpack.c.h.b16 %v429
    %v1450 = vunpack.c.l.b16 %v430
    %v1451 = vunpack.c.h.b16 %v430
    %v1452 = vunpack.c.l.b16 %v431
    %v1453 = vunpack.c.h.b16 %v431
    %v1454 = vunpack.c.l.b16 %v432
    %v1455 = vunpack.c.h.b16 %v432
    %v1456 = vunpack.c.l.b16 %v433
    %v1457 = vunpack.c.h.b16 %v433
    %v1458 = vunpack.c.l.b16 %v434
    %v1459 = vunpack.c.h.b16 %v434
    %v1460 = vunpack.c.l.b16 %v435
    %v1461 = vunpack.c.h.b16 %v435
    %v1462 = vunpack.c.l.b16 %v436
    %v1463 = vunpack.c.h.b16 %v436
    %v1464 = vunpack.c.l.b16 %v437
    %v1465 = vunpack.c.h.b16 %v437
    %v1466 = vunpack.c.l.b16 %v438
    %v1467 = vunpack.c.h.b16 %v438
    %v1468 = vunpack.c.l.b16 %v439
    %v1469 = vunpack.c.h.b16 %v439
    %v1470 = vunpack.c.l.b16 %v440
    %v1471 = vunpack.c.h.b16 %v440
    %v1472 = vunpack.c.l.b16 %v441
    %v1473 = vunpack.c.h.b16 %v441
    %v1474 = vunpack.c.l.b16 %v442
    %v1475 = vunpack.c.h.b16 %v442
    %v1476 = vunpack.c.l.b16 %v443
    %v1477 = vunpack.c.h.b16 %v443
    %v1478 = vunpack.c.l.b16 %v444
    %v1479 = vunpack.c.h.b16 %v444
    %v1480 = vunpack.c.l.b16 %v445
    %v1481 = vunpack.c.h.b16 %v445
    %v1482 = vunpack.c.l.b16 %v446
    %v1483 = vunpack.c.h.b16 %v446
    %v1484 = vunpack.c.l.b16 %v447
    %v1485 = vunpack.c.h.b16 %v447
    %v1486 = vunpack.c.l.b16 %v448
    %v1487 = vunpack.c.h.b16 %v448
    %v1488 = vunpack.c.l.b16 %v449
    %v1489 = vunpack.c.h.b16 %v449
    %v1490 = vunpack.c.l.b16 %v450
    %v1491 = vunpack.c.h.b16 %v450
    %v1492 = vunpack.c.l.b16 %v451
    %v1493 = vunpack.c.h.b16 %v451
    %v1494 = vunpack.c.l.b16 %v452
    %v1495 = vunpack.c.h.b16 %v452
    %v1496 = vunpack.c.l.b16 %v453
    %v1497 = vunpack.c.h.b16 %v453
    %v1498 = vunpack.c.l.b16 %v454
    %v1499 = vunpack.c.h.b16 %v454
    %v1500 = vunpack.c.l.b16 %v455
    %v1501 = vunpack.c.h.b16 %v455
    %v1502 = vunpack.c.l.b16 %v456
    %v1503 = vunpack.c.h.b16 %v456
    %v1504 = vunpack.c.l.b16 %v457
    %v1505 = vunpack.c.h.b16 %v457
    %v1506 = vunpack.c.l.b16 %v458
    %v1507 = vunpack.c.h.b16 %v458
    %v1508 = vunpack.c.l.b16 %v459
    %v1509 = vunpack.c.h.b16 %v459
    %v1510 = vunpack.c.l.b16 %v460
    %v1511 = vunpack.c.h.b16 %v460
    %v1512 = vunpack.c.l.b16 %v461
    %v1513 = vunpack.c.h.b16 %v461
    %v1514 = vunpack.c.l.b16 %v462
    %v1515 = vunpack.c.h.b16 %v462
    %v1516 = vunpack.c.l.b16 %v463
    %v1517 = vunpack.c.h.b16 %v463
    %v1518 = vunpack.c.l.b16 %v464
    %v1519 = vunpack.c.h.b16 %v464
    %v1520 = vunpack.c.l.b16 %v465
    %v1521 = vunpack.c.h.b16 %v465
    %v1522 = vunpack.c.l.b16 %v466
    %v1523 = vunpack.c.h.b16 %v466
    %v1524 = vunpack.c.l.b16 %v467
    %v1525 = vunpack.c.h.b16 %v467
    %v1526 = vunpack.c.l.b16 %v468
    %v1527 = vunpack.c.h.b16 %v468
    %v1528 = vunpack.c.l.b16 %v469
    %v1529 = vunpack.c.h.b16 %v469
    %v1530 = vunpack.c.l.b16 %v470
    %v1531 = vunpack.c.h.b16 %v470
    %v1532 = vunpack.c.l.b16 %v471
    %v1533 = vunpack.c.h.b16 %v471
    %v1534 = vunpack.c.l.b16 %v472
    %v1535 = vunpack.c.h.b16 %v472
    %v1536 = vunpack.c.l.b16 %v473
    %v1537 = vunpack.c.h.b16 %v473
    %v1538 = vunpack.c.l.b16 %v474
    %v1539 = vunpack.c.h.b16 %v474
    %v1540 = vunpack.c.l.b16 %v475
    %v1541 = vunpack.c.h.b16 %v475
    %v1542 = vunpack.c.l.b16 %v476
    %v1543 = vunpack.c.h.b16 %v476
    %v1544 = vunpack.c.l.b16 %v477
    %v1545 = vunpack.c.h.b16 %v477
    %v1546 = vunpack.c.l.b16 %v478
    %v1547 = vunpack.c.h.b16 %v478
    %v1548 = vunpack.c.l.b16 %v479
    %v1549 = vunpack.c.h.b16 %v479
    %v1550 = vunpack.c.l.b16 %v480
    %v1551 = vunpack.c.h.b16 %v480
    %v1552 = vunpack.c.l.b16 %v481
    %v1553 = vunpack.c.h.b16 %v481
    %v1554 = vunpack.c.l.b16 %v482
    %v1555 = vunpack.c.h.b16 %v482
    %v1556 = vunpack.c.l.b16 %v483
    %v1557 = vunpack.c.h.b16 %v483
    %v1558 = vunpack.c.l.b16 %v484
    %v1559 = vunpack.c.h.b16 %v484
    %v1560 = vunpack.c.l.b16 %v485
    %v1561 = vunpack.c.h.b16 %v485
    %v1562 = vunpack.c.l.b16 %v486
    %v1563 = vunpack.c.h.b16 %v486
    %v1564 = vunpack.c.l.b16 %v487
    %v1565 = vunpack.c.h.b16 %v487
    %v1566 = vunpack.c.l.b16 %v488
    %v1567 = vunpack.c.h.b16 %v488
    %v1568 = vunpack.c.l.b16 %v489
    %v1569 = vunpack.c.h.b16 %v489
    %v1570 = vunpack.c.l.b16 %v490
    %v1571 = vunpack.c.h.b16 %v490
    %v1572 = vunpack.c.l.b16 %v491
    %v1573 = vunpack.c.h.b16 %v491
    %v1574 = vunpack.c.l.b16 %v492
    %v1575 = vunpack.c.h.b16 %v492
    %v1576 = vunpack.c.l.b16 %v493
    %v1577 = vunpack.c.h.b16 %v493
    %v1578 = vunpack.c.l.b16 %v494
    %v1579 = vunpack.c.h.b16 %v494
    %v1580 = vunpack.c.l.b16 %v495
    %v1581 = vunpack.c.h.b16 %v495
    %v1582 = vunpack.c.l.b16 %v496
    %v1583 = vunpack.c.h.b16 %v496
    %v1584 = vunpack.c.l.b16 %v497
    %v1585 = vunpack.c.h.b16 %v497
    %v1586 = vunpack.c.l.b16 %v498
    %v1587 = vunpack.c.h.b16 %v498
    %v1588 = vunpack.c.l.b16 %v499
    %v1589 = vunpack.c.h.b16 %v499
    %v1590 = vunpack.c.l.b16 %v500
    %v1591 = vunpack.c.h.b16 %v500
    %v1592 = vunpack.c.l.b16 %v501
    %v1593 = vunpack.c.h.b16 %v501
    %v1594 = vunpack.c.l.b16 %v502
    %v1595 = vunpack.c.h.b16 %v502
    %v1596 = vunpack.c.l.b16 %v503
    %v1597 = vunpack.c.h.b16 %v503
    %v1598 = vunpack.c.l.b16 %v504
    %v1599 = vunpack.c.h.b16 %v504
    %v1600 = vunpack.c.l.b16 %v505
    %v1601 = vunpack.c.h.b16 %v505
    %v1602 = vunpack.c.l.b16 %v506
    %v1603 = vunpack.c.h.b16 %v506
    %v1604 = vunpack.c.l.b16 %v507
    %v1605 = vunpack.c.h.b16 %v507
    %v1606 = vunpack.c.l.b16 %v508
    %v1607 = vunpack.c.h.b16 %v508
    %v1608 = vunpack.c.l.b16 %v509
    %v1609 = vunpack.c.h.b16 %v509
    %v1610 = vunpack.c.l.b16 %v510
    %v1611 = vunpack.c.h.b16 %v510
    %v1612 = vunpack.c.l.b16 %v511
    %v1613 = vunpack.c.h.b16 %v511
    %v1614 = vunpack.c.l.b16 %v512
    %v1615 = vunpack.c.h.b16 %v512
    %v1616 = vunpack.c.l.b16 %v513
    %v1617 = vunpack.c.h.b16 %v513
    %v1618 = vunpack.c.l.b16 %v514
    %v1619 = vunpack.c.h.b16 %v514
    %v1620 = vunpack.c.l.b16 %v515
    %v1621 = vunpack.c.h.b16 %v515
    %v1622 = vunpack.c.l.b16 %v516
    %v1623 = vunpack.c.h.b16 %v516
    %v1624 = vunpack.c.l.b16 %v517
    %v1625 = vunpack.c.h.b16 %v517
    %v1626 = vunpack.c.l.b16 %v518
    %v1627 = vunpack.c.h.b16 %v518
    %v1628 = vunpack.c.l.b16 %v519
    %v1629 = vunpack.c.h.b16 %v519
    %v1630 = vunpack.c.l.b16 %v520
    %v1631 = vunpack.c.h.b16 %v520
    %v1632 = vunpack.c.l.b16 %v521
    %v1633 = vunpack.c.h.b16 %v521
    %v1634 = vunpack.c.l.b16 %v522
    %v1635 = vunpack.c.h.b16 %v522
    %v1636 = vunpack.c.l.b16 %v523
    %v1637 = vunpack.c.h.b16 %v523
    %v1638 = vunpack.c.l.b16 %v524
    %v1639 = vunpack.c.h.b16 %v524
    %v1640 = vunpack.c.l.b16 %v525
    %v1641 = vunpack.c.h.b16 %v525
    %v1642 = vunpack.c.l.b16 %v526
    %v1643 = vunpack.c.h.b16 %v526
    %v1644 = vunpack.c.l.b16 %v527
    %v1645 = vunpack.c.h.b16 %v527
    %v1646 = vunpack.c.l.b16 %v528
    %v1647 = vunpack.c.h.b16 %v528
    %v1648 = vunpack.c.l.b16 %v529
    %v1649 = vunpack.c.h.b16 %v529
    %v1650 = vunpack.c.l.b16 %v530
    %v1651 = vunpack.c.h.b16 %v530
    %v1652 = vunpack.c.l.b16 %v531
    %v1653 = vunpack.c.h.b16 %v531
    %v1654 = vunpack.c.l.b16 %v532
    %v1655 = vunpack.c.h.b16 %v532
    %v1656 = vunpack.c.l.b16 %v533
    %v1657 = vunpack.c.h.b16 %v533
    %v1658 = vunpack.c.l.b16 %v534
    %v1659 = vunpack.c.h.b16 %v534
    %v1660 = vunpack.c.l.b16 %v535
    %v1661 = vunpack.c.h.b16 %v535
    %v1662 = vunpack.c.l.b16 %v536
    %v1663 = vunpack.c.h.b16 %v536
    %v1664 = vunpack.c.l.b16 %v537
    %v1665 = vunpack.c.h.b16 %v537
    %v1666 = vunpack.c.l.b16 %v538
    %v1667 = vunpack.c.h.b16 %v538
    %v1668 = vunpack.c.l.b16 %v539
    %v1669 = vunpack.c.h.b16 %v539
    %v1670 = vunpack.c.l.b16 %v540
    %v1671 = vunpack.c.h.b16 %v540
    %v1672 = vunpack.c.l.b16 %v541
    %v1673 = vunpack.c.h.b16 %v541
    %v1674 = vunpack.c.l.b16 %v542
    %v1675 = vunpack.c.h.b16 %v542
    %v1676 = vunpack.c.l.b16 %v543
    %v1677 = vunpack.c.h.b16 %v543
    %v1678 = vunpack.c.l.b16 %v544
    %v1679 = vunpack.c.h.b16 %v544
    %v1680 = vunpack.c.l.b16 %v545
    %v1681 = vunpack.c.h.b16 %v545
    %v1682 = vunpack.c.l.b16 %v546
    %v1683 = vunpack.c.h.b16 %v546
    %v1684 = vunpack.c.l.b16 %v547
    %v1685 = vunpack.c.h.b16 %v547
    %v1686 = vunpack.c.l.b16 %v548
    %v1687 = vunpack.c.h.b16 %v548
    %v1688 = vunpack.c.l.b16 %v549
    %v1689 = vunpack.c.h.b16 %v549
    %v1690 = vunpack.c.l.b16 %v550
    %v1691 = vunpack.c.h.b16 %v550
    %v1692 = vunpack.c.l.b16 %v551
    %v1693 = vunpack.c.h.b16 %v551
    %v1694 = vunpack.c.l.b16 %v552
    %v1695 = vunpack.c.h.b16 %v552
    %v1696 = vunpack.c.l.b16 %v553
    %v1697 = vunpack.c.h.b16 %v553
    %v1698 = vunpack.c.l.b16 %v554
    %v1699 = vunpack.c.h.b16 %v554
    %v1700 = vunpack.c.l.b16 %v555
    %v1701 = vunpack.c.h.b16 %v555
    %v1702 = vunpack.c.l.b16 %v556
    %v1703 = vunpack.c.h.b16 %v556
    %v1704 = vunpack.c.l.b16 %v557
    %v1705 = vunpack.c.h.b16 %v557
    %v1706 = vunpack.c.l.b16 %v558
    %v1707 = vunpack.c.h.b16 %v558
    %v1708 = vunpack.c.l.b16 %v559
    %v1709 = vunpack.c.h.b16 %v559
    %v1710 = vunpack.c.l.b16 %v560
    %v1711 = vunpack.c.h.b16 %v560
    %v1712 = vunpack.c.l.b16 %v561
    %v1713 = vunpack.c.h.b16 %v561
    %v1714 = vunpack.c.l.b16 %v562
    %v1715 = vunpack.c.h.b16 %v562
    %v1716 = vunpack.c.l.b16 %v563
    %v1717 = vunpack.c.h.b16 %v563
    %v1718 = vunpack.c.l.b16 %v564
    %v1719 = vunpack.c.h.b16 %v564
    %v1720 = vunpack.c.l.b16 %v565
    %v1721 = vunpack.c.h.b16 %v565
    %v1722 = vunpack.c.l.b16 %v566
    %v1723 = vunpack.c.h.b16 %v566
    %v1724 = vunpack.c.l.b16 %v567
    %v1725 = vunpack.c.h.b16 %v567
    %v1726 = vunpack.c.l.b16 %v568
    %v1727 = vunpack.c.h.b16 %v568
    %v1728 = vunpack.c.l.b16 %v569
    %v1729 = vunpack.c.h.b16 %v569
    %v1730 = vunpack.c.l.b16 %v570
    %v1731 = vunpack.c.h.b16 %v570
    %v1732 = vunpack.c.l.b16 %v571
    %v1733 = vunpack.c.h.b16 %v571
    %v1734 = vunpack.c.l.b16 %v572
    %v1735 = vunpack.c.h.b16 %v572
    %v1736 = vunpack.c.l.b16 %v573
    %v1737 = vunpack.c.h.b16 %v573
    %v1738 = vunpack.c.l.b16 %v574
    %v1739 = vunpack.c.h.b16 %v574
    %v1740 = vunpack.c.l.b16 %v575
    %v1741 = vunpack.c.h.b16 %v575
    %v1742 = vunpack.c.l.b16 %v576
    %v1743 = vunpack.c.h.b16 %v576
    %v1744 = vunpack.c.l.b16 %v577
    %v1745 = vunpack.c.h.b16 %v577
    %v1746 = vunpack.c.l.b16 %v578
    %v1747 = vunpack.c.h.b16 %v578
    %v1748 = vunpack.c.l.b16 %v579
    %v1749 = vunpack.c.h.b16 %v579
    %v1750 = vunpack.c.l.b16 %v580
    %v1751 = vunpack.c.h.b16 %v580
    %v1752 = vunpack.c.l.b16 %v581
    %v1753 = vunpack.c.h.b16 %v581
    %v1754 = vunpack.c.l.b16 %v582
    %v1755 = vunpack.c.h.b16 %v582
    %v1756 = vunpack.c.l.b16 %v583
    %v1757 = vunpack.c.h.b16 %v583
    %v1758 = vunpack.c.l.b16 %v584
    %v1759 = vunpack.c.h.b16 %v584
    %v1760 = vunpack.c.l.b16 %v585
    %v1761 = vunpack.c.h.b16 %v585
    %v1762 = vunpack.c.l.b16 %v586
    %v1763 = vunpack.c.h.b16 %v586
    %v1764 = vunpack.c.l.b16 %v587
    %v1765 = vunpack.c.h.b16 %v587
    %v1766 = vunpack.c.l.b16 %v588
    %v1767 = vunpack.c.h.b16 %v588
    %v1768 = vunpack.c.l.b16 %v589
    %v1769 = vunpack.c.h.b16 %v589
    %v1770 = vunpack.c.l.b16 %v590
    %v1771 = vunpack.c.h.b16 %v590
    %v1772 = vunpack.c.l.b16 %v591
    %v1773 = vunpack.c.h.b16 %v591
    %v1774 = vunpack.c.l.b16 %v592
    %v1775 = vunpack.c.h.b16 %v592
    %v1776 = vunpack.c.l.b16 %v593
    %v1777 = vunpack.c.h.b16 %v593
    %v1778 = vunpack.c.l.b16 %v594
    %v1779 = vunpack.c.h.b16 %v594
    %v1780 = vunpack.c.l.b16 %v595
    %v1781 = vunpack.c.h.b16 %v595
    %v1782 = vunpack.c.l.b16 %v596
    %v1783 = vunpack.c.h.b16 %v596
    %v1784 = vunpack.c.l.b16 %v597
    %v1785 = vunpack.c.h.b16 %v597
    %v1786 = vunpack.c.l.b16 %v598
    %v1787 = vunpack.c.h.b16 %v598
    %v1788 = vunpack.c.l.b16 %v599
    %v1789 = vunpack.c.h.b16 %v599
    %v1790 = vunpack.c.l.b16 %v600
    %v1791 = vunpack.c.h.b16 %v600
    %v1792 = vunpack.c.l.b16 %v601
    %v1793 = vunpack.c.h.b16 %v601
    %v1794 = vunpack.c.l.b16 %v602
    %v1795 = vunpack.c.h.b16 %v602
    %v1796 = vunpack.c.l.b16 %v603
    %v1797 = vunpack.c.h.b16 %v603
    %v1798 = vpack.c.b16 %v1038, %v1030
    %v1799 = vpack.c.b16 %v1039, %v1031
    %v1800 = vpack.c.b16 %v1040, %v1032
    %v1801 = vpack.c.b16 %v1041, %v1033
    %v1802 = vpack.c.b16 %v1042, %v1034
    %v1803 = vpack.c.b16 %v1043, %v1035
    %v1804 = vpack.c.b16 %v1044, %v1036
    %v1805 = vpack.c.b16 %v1045, %v1037
    %v1806 = vpack.c.b16 %v1054, %v1046
    %v1807 = vpack.c.b16 %v1055, %v1047
    %v1808 = vpack.c.b16 %v1056, %v1048
    %v1809 = vpack.c.b16 %v1057, %v1049
    %v1810 = vpack.c.b16 %v1058, %v1050
    %v1811 = vpack.c.b16 %v1059, %v1051
    %v1812 = vpack.c.b16 %v1060, %v1052
    %v1813 = vpack.c.b16 %v1061, %v1053
    %v1814 = vpack.c.b16 %v1070, %v1062
    %v1815 = vpack.c.b16 %v1071, %v1063
    %v1816 = vpack.c.b16 %v1072, %v1064
    %v1817 = vpack.c.b16 %v1073, %v1065
    %v1818 = vpack.c.b16 %v1074, %v1066
    %v1819 = vpack.c.b16 %v1075, %v1067
    %v1820 = vpack.c.b16 %v1076, %v1068
    %v1821 = vpack.c.b16 %v1077, %v1069
    %v1822 = vpack.c.b16 %v1086, %v1078
    %v1823 = vpack.c.b16 %v1087, %v1079
    %v1824 = vpack.c.b16 %v1088, %v1080
    %v1825 = vpack.c.b16 %v1089, %v1081
    %v1826 = vpack.c.b16 %v1090, %v1082
    %v1827 = vpack.c.b16 %v1091, %v1083
    %v1828 = vpack.c.b16 %v1092, %v1084
    %v1829 = vpack.c.b16 %v1093, %v1085
    %v1830 = vpack.c.b16 %v1102, %v1094
    %v1831 = vpack.c.b16 %v1103, %v1095
    %v1832 = vpack.c.b16 %v1104, %v1096
    %v1833 = vpack.c.b16 %v1105, %v1097
    %v1834 = vpack.c.b16 %v1106, %v1098
    %v1835 = vpack.c.b16 %v1107, %v1099
    %v1836 = vpack.c.b16 %v1108, %v1100
    %v1837 = vpack.c.b16 %v1109, %v1101
    %v1838 = vpack.c.b16 %v1118, %v1110
    %v1839 = vpack.c.b16 %v1119, %v1111
    %v1840 = vpack.c.b16 %v1120, %v1112
    %v1841 = vpack.c.b16 %v1121, %v1113
    %v1842 = vpack.c.b16 %v1122, %v1114
    %v1843 = vpack.c.b16 %v1123, %v1115
    %v1844 = vpack.c.b16 %v1124, %v1116
    %v1845 = vpack.c.b16 %v1125, %v1117
    %v1846 = vpack.c.b16 %v1134, %v1126
    %v1847 = vpack.c.b16 %v1135, %v1127
    %v1848 = vpack.c.b16 %v1136, %v1128
    %v1849 = vpack.c.b16 %v1137, %v1129
    %v1850 = vpack.c.b16 %v1138, %v1130
    %v1851 = vpack.c.b16 %v1139, %v1131
    %v1852 = vpack.c.b16 %v1140, %v1132
    %v1853 = vpack.c.b16 %v1141, %v1133
    %v1854 = vpack.c.b16 %v1150, %v1142
    %v1855 = vpack.c.b16 %v1151, %v1143
    %v1856 = vpack.c.b16 %v1152, %v1144
    %v1857 = vpack.c.b16 %v1153, %v1145
    %v1858 = vpack.c.b16 %v1154, %v1146
    %v1859 = vpack.c.b16 %v1155, %v1147
    %v1860 = vpack.c.b16 %v1156, %v1148
    %v1861 = vpack.c.b16 %v1157, %v1149
    %v1862 = vpack.c.b16 %v1166, %v1158
    %v1863 = vpack.c.b16 %v1167, %v1159
    %v1864 = vpack.c.b16 %v1168, %v1160
    %v1865 = vpack.c.b16 %v1169, %v1161
    %v1866 = vpack.c.b16 %v1170, %v1162
    %v1867 = vpack.c.b16 %v1171, %v1163
    %v1868 = vpack.c.b16 %v1172, %v1164
    %v1869 = vpack.c.b16 %v1173, %v1165
    %v1870 = vpack.c.b16 %v1182, %v1174
    %v1871 = vpack.c.b16 %v1183, %v1175
    %v1872 = vpack.c.b16 %v1184, %v1176
    %v1873 = vpack.c.b16 %v1185, %v1177
    %v1874 = vpack.c.b16 %v1186, %v1178
    %v1875 = vpack.c.b16 %v1187, %v1179
    %v1876 = vpack.c.b16 %v1188, %v1180
    %v1877 = vpack.c.b16 %v1189, %v1181
    %v1878 = vpack.c.b16 %v1198, %v1190
    %v1879 = vpack.c.b16 %v1199, %v1191
    %v1880 = vpack.c.b16 %v1200, %v1192
    %v1881 = vpack.c.b16 %v1201, %v1193
    %v1882 = vpack.c.b16 %v1202, %v1194
    %v1883 = vpack.c.b16 %v1203, %v1195
    %v1884 = vpack.c.b16 %v1204, %v1196
    %v1885 = vpack.c.b16 %v1205, %v1197
    %v1886 = vpack.c.b16 %v1214, %v1206
    %v1887 = vpack.c.b16 %v1215, %v1207
    %v1888 = vpack.c.b16 %v1216, %v1208
    %v1889 = vpack.c.b16 %v1217, %v1209
    %v1890 = vpack.c.b16 %v1218, %v1210
    %v1891 = vpack.c.b16 %v1219, %v1211
    %v1892 = vpack.c.b16 %v1220, %v1212
    %v1893 = vpack.c.b16 %v1221, %v1213
    %v1894 = vpack.c.b16 %v1230, %v1222
    %v1895 = vpack.c.b16 %v1231, %v1223
    %v1896 = vpack.c.b16 %v1232, %v1224
    %v1897 = vpack.c.b16 %v1233, %v1225
    %v1898 = vpack.c.b16 %v1234, %v1226
    %v1899 = vpack.c.b16 %v1235, %v1227
    %v1900 = vpack.c.b16 %v1236, %v1228
    %v1901 = vpack.c.b16 %v1237, %v1229
    %v1902 = vpack.c.b16 %v1246, %v1238
    %v1903 = vpack.c.b16 %v1247, %v1239
    %v1904 = vpack.c.b16 %v1248, %v1240
    %v1905 = vpack.c.b16 %v1249, %v1241
    %v1906 = vpack.c.b16 %v1250, %v1242
    %v1907 = vpack.c.b16 %v1251, %v1243
    %v1908 = vpack.c.b16 %v1252, %v1244
    %v1909 = vpack.c.b16 %v1253, %v1245
    %v1910 = vpack.c.b16 %v1262, %v1254
    %v1911 = vpack.c.b16 %v1263, %v1255
    %v1912 = vpack.c.b16 %v1264, %v1256
    %v1913 = vpack.c.b16 %v1265, %v1257
    %v1914 = vpack.c.b16 %v1266, %v1258
    %v1915 = vpack.c.b16 %v1267, %v1259
    %v1916 = vpack.c.b16 %v1268, %v1260
    %v1917 = vpack.c.b16 %v1269, %v1261
    %v1918 = vpack.c.b16 %v1278, %v1270
    %v1919 = vpack.c.b16 %v1279, %v1271
    %v1920 = vpack.c.b16 %v1280, %v1272
    %v1921 = vpack.c.b16 %v1281, %v1273
    %v1922 = vpack.c.b16 %v1282, %v1274
    %v1923 = vpack.c.b16 %v1283, %v1275
    %v1924 = vpack.c.b16 %v1284, %v1276
    %v1925 = vpack.c.b16 %v1285, %v1277
    %v1926 = vpack.c.b16 %v1294, %v1286
    %v1927 = vpack.c.b16 %v1295, %v1287
    %v1928 = vpack.c.b16 %v1296, %v1288
    %v1929 = vpack.c.b16 %v1297, %v1289
    %v1930 = vpack.c.b16 %v1298, %v1290
    %v1931 = vpack.c.b16 %v1299, %v1291
    %v1932 = vpack.c.b16 %v1300, %v1292
    %v1933 = vpack.c.b16 %v1301, %v1293
    %v1934 = vpack.c.b16 %v1310, %v1302
    %v1935 = vpack.c.b16 %v1311, %v1303
    %v1936 = vpack.c.b16 %v1312, %v1304
    %v1937 = vpack.c.b16 %v1313, %v1305
    %v1938 = vpack.c.b16 %v1314, %v1306
    %v1939 = vpack.c.b16 %v1315, %v1307
    %v1940 = vpack.c.b16 %v1316, %v1308
    %v1941 = vpack.c.b16 %v1317, %v1309
    %v1942 = vpack.c.b16 %v1326, %v1318
    %v1943 = vpack.c.b16 %v1327, %v1319
    %v1944 = vpack.c.b16 %v1328, %v1320
    %v1945 = vpack.c.b16 %v1329, %v1321
    %v1946 = vpack.c.b16 %v1330, %v1322
    %v1947 = vpack.c.b16 %v1331, %v1323
    %v1948 = vpack.c.b16 %v1332, %v1324
    %v1949 = vpack.c.b16 %v1333, %v1325
    %v1950 = vpack.c.b16 %v1342, %v1334
    %v1951 = vpack.c.b16 %v1343, %v1335
    %v1952 = vpack.c.b16 %v1344, %v1336
    %v1953 = vpack.c.b16 %v1345, %v1337
    %v1954 = vpack.c.b16 %v1346, %v1338
    %v1955 = vpack.c.b16 %v1347, %v1339
    %v1956 = vpack.c.b16 %v1348, %v1340
    %v1957 = vpack.c.b16 %v1349, %v1341
    %v1958 = vpack.c.b16 %v1358, %v1350
    %v1959 = vpack.c.b16 %v1359, %v1351
    %v1960 = vpack.c.b16 %v1360, %v1352
    %v1961 = vpack.c.b16 %v1361, %v1353
    %v1962 = vpack.c.b16 %v1362, %v1354
    %v1963 = vpack.c.b16 %v1363, %v1355
    %v1964 = vpack.c.b16 %v1364, %v1356
    %v1965 = vpack.c.b16 %v1365, %v1357
    %v1966 = vpack.c.b16 %v1374, %v1366
    %v1967 = vpack.c.b16 %v1375, %v1367
    %v1968 = vpack.c.b16 %v1376, %v1368
    %v1969 = vpack.c.b16 %v1377, %v1369
    %v1970 = vpack.c.b16 %v1378, %v1370
    %v1971 = vpack.c.b16 %v1379, %v1371
    %v1972 = vpack.c.b16 %v1380, %v1372
    %v1973 = vpack.c.b16 %v1381, %v1373
    %v1974 = vpack.c.b16 %v1390, %v1382
    %v1975 = vpack.c.b16 %v1391, %v1383
    %v1976 = vpack.c.b16 %v1392, %v1384
    %v1977 = vpack.c.b16 %v1393, %v1385
    %v1978 = vpack.c.b16 %v1394, %v1386
    %v1979 = vpack.c.b16 %v1395, %v1387
    %v1980 = vpack.c.b16 %v1396, %v1388
    %v1981 = vpack.c.b16 %v1397, %v1389
    %v1982 = vpack.c.b16 %v1406, %v1398
    %v1983 = vpack.c.b16 %v1407, %v1399
    %v1984 = vpack.c.b16 %v1408, %v1400
    %v1985 = vpack.c.b16 %v1409, %v1401
    %v1986 = vpack.c.b16 %v1410, %v1402
    %v1987 = vpack.c.b16 %v1411, %v1403
    %v1988 = vpack.c.b16 %v1412, %v1404
    %v1989 = vpack.c.b16 %v1413, %v1405
    %v1990 = vpack.c.b16 %v1422, %v1414
    %v1991 = vpack.c.b16 %v1423, %v1415
    %v1992 = vpack.c.b16 %v1424, %v1416
    %v1993 = vpack.c.b16 %v1425, %v1417
    %v1994 = vpack.c.b16 %v1426, %v1418
    %v1995 = vpack.c.b16 %v1427, %v1419
    %v1996 = vpack.c.b16 %v1428, %v1420
    %v1997 = vpack.c.b16 %v1429, %v1421
    %v1998 = vpack.c.b16 %v1438, %v1430
    %v1999 = vpack.c.b16 %v1439, %v1431
    %v2000 = vpack.c.b16 %v1440, %v1432
    %v2001 = vpack.c.b16 %v1441, %v1433
    %v2002 = vpack.c.b16 %v1442, %v1434
    %v2003 = vpack.c.b16 %v1443, %v1435
    %v2004 = vpack.c.b16 %v1444, %v1436
    %v2005 = vpack.c.b16 %v1445, %v1437
    %v2006 = vpack.c.b16 %v1454, %v1446
    %v2007 = vpack.c.b16 %v1455, %v1447
    %v2008 = vpack.c.b16 %v1456, %v1448
    %v2009 = vpack.c.b16 %v1457, %v1449
    %v2010 = vpack.c.b16 %v1458, %v1450
    %v2011 = vpack.c.b16 %v1459, %v1451
    %v2012 = vpack.c.b16 %v1460, %v1452
    %v2013 = vpack.c.b16 %v1461, %v1453
    %v2014 = vpack.c.b16 %v1470, %v1462
    %v2015 = vpack.c.b16 %v1471, %v1463
    %v2016 = vpack.c.b16 %v1472, %v1464
    %v2017 = vpack.c.b16 %v1473, %v1465
    %v2018 = vpack.c.b16 %v1474, %v1466
    %v2019 = vpack.c.b16 %v1475, %v1467
    %v2020 = vpack.c.b16 %v1476, %v1468
    %v2021 = vpack.c.b16 %v1477, %v1469
    %v2022 = vpack.c.b16 %v1486, %v1478
    %v2023 = vpack.c.b16 %v1487, %v1479
    %v2024 = vpack.c.b16 %v1488, %v1480
    %v2025 = vpack.c.b16 %v1489, %v1481
    %v2026 = vpack.c.b16 %v1490, %v1482
    %v2027 = vpack.c.b16 %v1491, %v1483
    %v2028 = vpack.c.b16 %v1492, %v1484
    %v2029 = vpack.c.b16 %v1493, %v1485
    %v2030 = vpack.c.b16 %v1502, %v1494
    %v2031 = vpack.c.b16 %v1503, %v1495
    %v2032 = vpack.c.b16 %v1504, %v1496
    %v2033 = vpack.c.b16 %v1505, %v1497
    %v2034 = vpack.c.b16 %v1506, %v1498
    %v2035 = vpack.c.b16 %v1507, %v1499
    %v2036 = vpack.c.b16 %v1508, %v1500
    %v2037 = vpack.c.b16 %v1509, %v1501
    %v2038 = vpack.c.b16 %v1518, %v1510
    %v2039 = vpack.c.b16 %v1519, %v1511
    %v2040 = vpack.c.b16 %v1520, %v1512
    %v2041 = vpack.c.b16 %v1521, %v1513
    %v2042 = vpack.c.b16 %v1522, %v1514
    %v2043 = vpack.c.b16 %v1523, %v1515
    %v2044 = vpack.c.b16 %v1524, %v1516
    %v2045 = vpack.c.b16 %v1525, %v1517
    %v2046 = vpack.c.b16 %v1534, %v1526
    %v2047 = vpack.c.b16 %v1535, %v1527
    %v2048 = vpack.c.b16 %v1536, %v1528
    %v2049 = vpack.c.b16 %v1537, %v1529
    %v2050 = vpack.c.b16 %v1538, %v1530
    %v2051 = vpack.c.b16 %v1539, %v1531
    %v2052 = vpack.c.b16 %v1540, %v1532
    %v2053 = vpack.c.b16 %v1541, %v1533
    %v2054 = vpack.c.b16 %v1550, %v1542
    %v2055 = vpack.c.b16 %v1551, %v1543
    %v2056 = vpack.c.b16 %v1552, %v1544
    %v2057 = vpack.c.b16 %v1553, %v1545
    %v2058 = vpack.c.b16 %v1554, %v1546
    %v2059 = vpack.c.b16 %v1555, %v1547
    %v2060 = vpack.c.b16 %v1556, %v1548
    %v2061 = vpack.c.b16 %v1557, %v1549
    %v2062 = vpack.c.b16 %v1566, %v1558
    %v2063 = vpack.c.b16 %v1567, %v1559
    %v2064 = vpack.c.b16 %v1568, %v1560
    %v2065 = vpack.c.b16 %v1569, %v1561
    %v2066 = vpack.c.b16 %v1570, %v1562
    %v2067 = vpack.c.b16 %v1571, %v1563
    %v2068 = vpack.c.b16 %v1572, %v1564
    %v2069 = vpack.c.b16 %v1573, %v1565
    %v2070 = vpack.c.b16 %v1582, %v1574
    %v2071 = vpack.c.b16 %v1583, %v1575
    %v2072 = vpack.c.b16 %v1584, %v1576
    %v2073 = vpack.c.b16 %v1585, %v1577
    %v2074 = vpack.c.b16 %v1586, %v1578
    %v2075 = vpack.c.b16 %v1587, %v1579
    %v2076 = vpack.c.b16 %v1588, %v1580
    %v2077 = vpack.c.b16 %v1589, %v1581
    %v2078 = vpack.c.b16 %v1598, %v1590
    %v2079 = vpack.c.b16 %v1599, %v1591
    %v2080 = vpack.c.b16 %v1600, %v1592
    %v2081 = vpack.c.b16 %v1601, %v1593
    %v2082 = vpack.c.b16 %v1602, %v1594
    %v2083 = vpack.c.b16 %v1603, %v1595
    %v2084 = vpack.c.b16 %v1604, %v1596
    %v2085 = vpack.c.b16 %v1605, %v1597
    %v2086 = vpack.c.b16 %v1614, %v1606
    %v2087 = vpack.c.b16 %v1615, %v1607
    %v2088 = vpack.c.b16 %v1616, %v1608
    %v2089 = vpack.c.b16 %v1617, %v1609
    %v2090 = vpack.c.b16 %v1618, %v1610
    %v2091 = vpack.c.b16 %v1619, %v1611
    %v2092 = vpack.c.b16 %v1620, %v1612
    %v2093 = vpack.c.b16 %v1621, %v1613
    %v2094 = vpack.c.b16 %v1630, %v1622
    %v2095 = vpack.c.b16 %v1631, %v1623
    %v2096 = vpack.c.b16 %v1632, %v1624
    %v2097 = vpack.c.b16 %v1633, %v1625
    %v2098 = vpack.c.b16 %v1634, %v1626
    %v2099 = vpack.c.b16 %v1635, %v1627
    %v2100 = vpack.c.b16 %v1636, %v1628
    %v2101 = vpack.c.b16 %v1637, %v1629
    %v2102 = vpack.c.b16 %v1646, %v1638
    %v2103 = vpack.c.b16 %v1647, %v1639
    %v2104 = vpack.c.b16 %v1648, %v1640
    %v2105 = vpack.c.b16 %v1649, %v1641
    %v2106 = vpack.c.b16 %v1650, %v1642
    %v2107 = vpack.c.b16 %v1651, %v1643
    %v2108 = vpack.c.b16 %v1652, %v1644
    %v2109 = vpack.c.b16 %v1653, %v1645
    %v2110 = vpack.c.b16 %v1662, %v1654
    %v2111 = vpack.c.b16 %v1663, %v1655
    %v2112 = vpack.c.b16 %v1664, %v1656
    %v2113 = vpack.c.b16 %v1665, %v1657
    %v2114 = vpack.c.b16 %v1666, %v1658
    %v2115 = vpack.c.b16 %v1667, %v1659
    %v2116 = vpack.c.b16 %v1668, %v1660
    %v2117 = vpack.c.b16 %v1669, %v1661
    %v2118 = vpack.c.b16 %v1678, %v1670
    %v2119 = vpack.c.b16 %v1679, %v1671
    %v2120 = vpack.c.b16 %v1680, %v1672
    %v2121 = vpack.c.b16 %v1681, %v1673
    %v2122 = vpack.c.b16 %v1682, %v1674
    %v2123 = vpack.c.b16 %v1683, %v1675
    %v2124 = vpack.c.b16 %v1684, %v1676
    %v2125 = vpack.c.b16 %v1685, %v1677
    %v2126 = vpack.c.b16 %v1694, %v1686
    %v2127 = vpack.c.b16 %v1695, %v1687
    %v2128 = vpack.c.b16 %v1696, %v1688
    %v2129 = vpack.c.b16 %v1697, %v1689
    %v2130 = vpack.c.b16 %v1698, %v1690
    %v2131 = vpack.c.b16 %v1699, %v1691
    %v2132 = vpack.c.b16 %v1700, %v1692
    %v2133 = vpack.c.b16 %v1701, %v1693
    %v2134 = vpack.c.b16 %v1710, %v1702
    %v2135 = vpack.c.b16 %v1711, %v1703
    %v2136 = vpack.c.b16 %v1712, %v1704
    %v2137 = vpack.c.b16 %v1713, %v1705
    %v2138 = vpack.c.b16 %v1714, %v1706
    %v2139 = vpack.c.b16 %v1715, %v1707
    %v2140 = vpack.c.b16 %v1716, %v1708
    %v2141 = vpack.c.b16 %v1717, %v1709
    %v2142 = vpack.c.b16 %v1726, %v1718
    %v2143 = vpack.c.b16 %v1727, %v1719
    %v2144 = vpack.c.b16 %v1728, %v1720
    %v2145 = vpack.c.b16 %v1729, %v1721
    %v2146 = vpack.c.b16 %v1730, %v1722
    %v2147 = vpack.c.b16 %v1731, %v1723
    %v2148 = vpack.c.b16 %v1732, %v1724
    %v2149 = vpack.c.b16 %v1733, %v1725
    %v2150 = vpack.c.b16 %v1742, %v1734
    %v2151 = vpack.c.b16 %v1743, %v1735
    %v2152 = vpack.c.b16 %v1744, %v1736
    %v2153 = vpack.c.b16 %v1745, %v1737
    %v2154 = vpack.c.b16 %v1746, %v1738
    %v2155 = vpack.c.b16 %v1747, %v1739
    %v2156 = vpack.c.b16 %v1748, %v1740
    %v2157 = vpack.c.b16 %v1749, %v1741
    %v2158 = vpack.c.b16 %v1758, %v1750
    %v2159 = vpack.c.b16 %v1759, %v1751
    %v2160 = vpack.c.b16 %v1760, %v1752
    %v2161 = vpack.c.b16 %v1761, %v1753
    %v2162 = vpack.c.b16 %v1762, %v1754
    %v2163 = vpack.c.b16 %v1763, %v1755
    %v2164 = vpack.c.b16 %v1764, %v1756
    %v2165 = vpack.c.b16 %v1765, %v1757
    %v2166 = vpack.c.b16 %v1774, %v1766
    %v2167 = vpack.c.b16 %v1775, %v1767
    %v2168 = vpack.c.b16 %v1776, %v1768
    %v2169 = vpack.c.b16 %v1777, %v1769
    %v2170 = vpack.c.b16 %v1778, %v1770
    %v2171 = vpack.c.b16 %v1779, %v1771
    %v2172 = vpack.c.b16 %v1780, %v1772
    %v2173 = vpack.c.b16 %v1781, %v1773
    %v2174 = vpack.c.b16 %v1790, %v1782
    %v2175 = vpack.c.b16 %v1791, %v1783
    %v2176 = vpack.c.b16 %v1792, %v1784
    %v2177 = vpack.c.b16 %v1793, %v1785
    %v2178 = vpack.c.b16 %v1794, %v1786
    %v2179 = vpack.c.b16 %v1795, %v1787
    %v2180 = vpack.c.b16 %v1796, %v1788
    %v2181 = vpack.c.b16 %v1797, %v1789
    %2566 = vmatprep.subr.bf16.mxu0 %v1799
    %2567 = vmatpush1.bf16.msra.mxu0 %v1798
    %2568 = vmatprep.subr.bf16.mxu0 %v1807
    %2569 = vmatpush1.bf16.msra.mxu0 %v1806
    %2570 = vmatprep.subr.bf16.mxu0 %v1815
    %2571 = vmatpush1.bf16.msra.mxu0 %v1814
    %2572 = vmatprep.subr.bf16.mxu0 %v1823
    %2573 = vmatpush1.bf16.msra.mxu0 %v1822
    %2574 = vmatprep.subr.bf16.mxu0 %v1831
    %2575 = vmatpush1.bf16.msra.mxu0 %v1830
    %2576 = vmatprep.subr.bf16.mxu0 %v1839
    %2577 = vmatpush1.bf16.msra.mxu0 %v1838
    %2578 = vmatprep.subr.bf16.mxu0 %v1847
    %2579 = vmatpush1.bf16.msra.mxu0 %v1846
    %2580 = vmatprep.subr.bf16.mxu0 %v1855
    %2581 = vmatpush1.bf16.msra.mxu0 %v1854
    %2582 = vmatprep.subr.bf16.mxu0 %v1863
    %2583 = vmatpush1.bf16.msra.mxu0 %v1862
    %2584 = vmatprep.subr.bf16.mxu0 %v1871
    %2585 = vmatpush1.bf16.msra.mxu0 %v1870
    %2586 = vmatprep.subr.bf16.mxu0 %v1879
    %2587 = vmatpush1.bf16.msra.mxu0 %v1878
    %2588 = vmatprep.subr.bf16.mxu0 %v1887
    %2589 = vmatpush1.bf16.msra.mxu0 %v1886
    %2590 = vmatprep.subr.bf16.mxu0 %v1895
    %2591 = vmatpush1.bf16.msra.mxu0 %v1894
    %2592 = vmatprep.subr.bf16.mxu0 %v1903
    %2593 = vmatpush1.bf16.msra.mxu0 %v1902
    %2594 = vmatprep.subr.bf16.mxu0 %v1911
    %2595 = vmatpush1.bf16.msra.mxu0 %v1910
    %2596 = vmatprep.subr.bf16.mxu0 %v1919
    %2597 = vmatpush1.bf16.msra.mxu0 %v1918
    %2598 = vmatprep.mubr.bf16.mxu0 %v215
    %2599 = vmatmul.mubr.bf16.gmra.mrb[0].mxu0 %v214
    %v2600 = vpop.f32.mrb[0].mxu0
    %v2601 = vadd.f32 %v609, %v2600
    %v2602 = vpop.f32.mrb[0].mxu0
    %v2603 = vadd.f32 %v613, %v2602
    %v2604 = vpop.f32.mrb[0].mxu0
    %v2605 = vpop.f32.mrb[0].mxu0
    %2606 = vdwg.mxu0
    %2607 = vmatprep.subr.bf16.mxu0 %v1927
    %2608 = vmatpush1.bf16.msra.mxu0 %v1926
    %2609 = vmatprep.subr.bf16.mxu0 %v1935
    %2610 = vmatpush1.bf16.msra.mxu0 %v1934
    %2611 = vmatprep.subr.bf16.mxu0 %v1943
    %2612 = vmatpush1.bf16.msra.mxu0 %v1942
    %2613 = vmatprep.subr.bf16.mxu0 %v1951
    %2614 = vmatpush1.bf16.msra.mxu0 %v1950
    %2615 = vmatprep.subr.bf16.mxu0 %v1959
    %2616 = vmatpush1.bf16.msra.mxu0 %v1958
    %2617 = vmatprep.subr.bf16.mxu0 %v1967
    %2618 = vmatpush1.bf16.msra.mxu0 %v1966
    %2619 = vmatprep.subr.bf16.mxu0 %v1975
    %2620 = vmatpush1.bf16.msra.mxu0 %v1974
    %2621 = vmatprep.subr.bf16.mxu0 %v1983
    %2622 = vmatpush1.bf16.msra.mxu0 %v1982
    %2623 = vmatprep.subr.bf16.mxu0 %v1991
    %2624 = vmatpush1.bf16.msra.mxu0 %v1990
    %2625 = vmatprep.subr.bf16.mxu0 %v1999
    %2626 = vmatpush1.bf16.msra.mxu0 %v1998
    %2627 = vmatprep.subr.bf16.mxu0 %v2007
    %2628 = vmatpush1.bf16.msra.mxu0 %v2006
    %2629 = vmatprep.subr.bf16.mxu0 %v2015
    %2630 = vmatpush1.bf16.msra.mxu0 %v2014
    %2631 = vmatprep.subr.bf16.mxu0 %v2023
    %2632 = vmatpush1.bf16.msra.mxu0 %v2022
    %2633 = vmatprep.subr.bf16.mxu0 %v2031
    %2634 = vmatpush1.bf16.msra.mxu0 %v2030
    %2635 = vmatprep.subr.bf16.mxu0 %v2039
    %2636 = vmatpush1.bf16.msra.mxu0 %v2038
    %2637 = vmatprep.subr.bf16.mxu0 %v2047
    %2638 = vmatpush1.bf16.msra.mxu0 %v2046
    %2639 = vmatprep.mubr.bf16.mxu0 %v217
    %2640 = vmatmul.mubr.bf16.gmra.mrb[0].mxu0 %v216
    %v2641 = vpop.f32.mrb[0].mxu0
    %v2642 = vadd.f32 %v2601, %v2641
    %v2643 = vpop.f32.mrb[0].mxu0
    %v2644 = vadd.f32 %v2603, %v2643
    %v2645 = vpop.f32.mrb[0].mxu0
    %v2646 = vpop.f32.mrb[0].mxu0
    %2647 = vdwg.mxu0
    %2648 = vmatprep.subr.bf16.mxu0 %v2055
    %2649 = vmatpush1.bf16.msra.mxu0 %v2054
    %2650 = vmatprep.subr.bf16.mxu0 %v2063
    %2651 = vmatpush1.bf16.msra.mxu0 %v2062
    %2652 = vmatprep.subr.bf16.mxu0 %v2071
    %2653 = vmatpush1.bf16.msra.mxu0 %v2070
    %2654 = vmatprep.subr.bf16.mxu0 %v2079
    %2655 = vmatpush1.bf16.msra.mxu0 %v2078
    %2656 = vmatprep.subr.bf16.mxu0 %v2087
    %2657 = vmatpush1.bf16.msra.mxu0 %v2086
    %2658 = vmatprep.subr.bf16.mxu0 %v2095
    %2659 = vmatpush1.bf16.msra.mxu0 %v2094
    %2660 = vmatprep.subr.bf16.mxu0 %v2103
    %2661 = vmatpush1.bf16.msra.mxu0 %v2102
    %2662 = vmatprep.subr.bf16.mxu0 %v2111
    %2663 = vmatpush1.bf16.msra.mxu0 %v2110
    %2664 = vmatprep.subr.bf16.mxu0 %v2119
    %2665 = vmatpush1.bf16.msra.mxu0 %v2118
    %2666 = vmatprep.subr.bf16.mxu0 %v2127
    %2667 = vmatpush1.bf16.msra.mxu0 %v2126
    %2668 = vmatprep.subr.bf16.mxu0 %v2135
    %2669 = vmatpush1.bf16.msra.mxu0 %v2134
    %2670 = vmatprep.subr.bf16.mxu0 %v2143
    %2671 = vmatpush1.bf16.msra.mxu0 %v2142
    %2672 = vmatprep.subr.bf16.mxu0 %v2151
    %2673 = vmatpush1.bf16.msra.mxu0 %v2150
    %2674 = vmatprep.subr.bf16.mxu0 %v2159
    %2675 = vmatpush1.bf16.msra.mxu0 %v2158
    %2676 = vmatprep.subr.bf16.mxu0 %v2167
    %2677 = vmatpush1.bf16.msra.mxu0 %v2166
    %2678 = vmatprep.subr.bf16.mxu0 %v2175
    %2679 = vmatpush1.bf16.msra.mxu0 %v2174
    %2680 = vmatprep.mubr.bf16.mxu0 %v219
    %2681 = vmatmul.mubr.bf16.gmra.mrb[0].mxu0 %v218
    %v2682 = vpop.f32.mrb[0].mxu0
    %v2683 = vadd.f32 %v2642, %v2682
    %v2684 = vpop.f32.mrb[0].mxu0
    %v2685 = vadd.f32 %v2644, %v2684
    %v2686 = vpop.f32.mrb[0].mxu0
    %v2687 = vpop.f32.mrb[0].mxu0
    %2688 = vdwg.mxu0
    %2689 = vmatprep.subr.bf16.mxu0 %v1801
    %2690 = vmatpush1.bf16.msra.mxu0 %v1800
    %2691 = vmatprep.subr.bf16.mxu0 %v1809
    %2692 = vmatpush1.bf16.msra.mxu0 %v1808
    %2693 = vmatprep.subr.bf16.mxu0 %v1817
    %2694 = vmatpush1.bf16.msra.mxu0 %v1816
    %2695 = vmatprep.subr.bf16.mxu0 %v1825
    %2696 = vmatpush1.bf16.msra.mxu0 %v1824
    %2697 = vmatprep.subr.bf16.mxu0 %v1833
    %2698 = vmatpush1.bf16.msra.mxu0 %v1832
    %2699 = vmatprep.subr.bf16.mxu0 %v1841
    %2700 = vmatpush1.bf16.msra.mxu0 %v1840
    %2701 = vmatprep.subr.bf16.mxu0 %v1849
    %2702 = vmatpush1.bf16.msra.mxu0 %v1848
    %2703 = vmatprep.subr.bf16.mxu0 %v1857
    %2704 = vmatpush1.bf16.msra.mxu0 %v1856
    %2705 = vmatprep.subr.bf16.mxu0 %v1865
    %2706 = vmatpush1.bf16.msra.mxu0 %v1864
    %2707 = vmatprep.subr.bf16.mxu0 %v1873
    %2708 = vmatpush1.bf16.msra.mxu0 %v1872
    %2709 = vmatprep.subr.bf16.mxu0 %v1881
    %2710 = vmatpush1.bf16.msra.mxu0 %v1880
    %2711 = vmatprep.subr.bf16.mxu0 %v1889
    %2712 = vmatpush1.bf16.msra.mxu0 %v1888
    %2713 = vmatprep.subr.bf16.mxu0 %v1897
    %2714 = vmatpush1.bf16.msra.mxu0 %v1896
    %2715 = vmatprep.subr.bf16.mxu0 %v1905
    %2716 = vmatpush1.bf16.msra.mxu0 %v1904
    %2717 = vmatprep.subr.bf16.mxu0 %v1913
    %2718 = vmatpush1.bf16.msra.mxu0 %v1912
    %2719 = vmatprep.subr.bf16.mxu0 %v1921
    %2720 = vmatpush1.bf16.msra.mxu0 %v1920
    %2721 = vmatprep.mubr.bf16.mxu0 %v215
    %2722 = vmatmul.mubr.bf16.gmra.mrb[0].mxu0 %v214
    %v2723 = vpop.f32.mrb[0].mxu0
    %v2724 = vadd.f32 %v617, %v2723
    %v2725 = vpop.f32.mrb[0].mxu0
    %v2726 = vadd.f32 %v621, %v2725
    %v2727 = vpop.f32.mrb[0].mxu0
    %v2728 = vpop.f32.mrb[0].mxu0
    %2729 = vdwg.mxu0
    %2730 = vmatprep.subr.bf16.mxu0 %v1929
    %2731 = vmatpush1.bf16.msra.mxu0 %v1928
    %2732 = vmatprep.subr.bf16.mxu0 %v1937
    %2733 = vmatpush1.bf16.msra.mxu0 %v1936
    %2734 = vmatprep.subr.bf16.mxu0 %v1945
    %2735 = vmatpush1.bf16.msra.mxu0 %v1944
    %2736 = vmatprep.subr.bf16.mxu0 %v1953
    %2737 = vmatpush1.bf16.msra.mxu0 %v1952
    %2738 = vmatprep.subr.bf16.mxu0 %v1961
    %2739 = vmatpush1.bf16.msra.mxu0 %v1960
    %2740 = vmatprep.subr.bf16.mxu0 %v1969
    %2741 = vmatpush1.bf16.msra.mxu0 %v1968
    %2742 = vmatprep.subr.bf16.mxu0 %v1977
    %2743 = vmatpush1.bf16.msra.mxu0 %v1976
    %2744 = vmatprep.subr.bf16.mxu0 %v1985
    %2745 = vmatpush1.bf16.msra.mxu0 %v1984
    %2746 = vmatprep.subr.bf16.mxu0 %v1993
    %2747 = vmatpush1.bf16.msra.mxu0 %v1992
    %2748 = vmatprep.subr.bf16.mxu0 %v2001
    %2749 = vmatpush1.bf16.msra.mxu0 %v2000
    %2750 = vmatprep.subr.bf16.mxu0 %v2009
    %2751 = vmatpush1.bf16.msra.mxu0 %v2008
    %2752 = vmatprep.subr.bf16.mxu0 %v2017
    %2753 = vmatpush1.bf16.msra.mxu0 %v2016
    %2754 = vmatprep.subr.bf16.mxu0 %v2025
    %2755 = vmatpush1.bf16.msra.mxu0 %v2024
    %2756 = vmatprep.subr.bf16.mxu0 %v2033
    %2757 = vmatpush1.bf16.msra.mxu0 %v2032
    %2758 = vmatprep.subr.bf16.mxu0 %v2041
    %2759 = vmatpush1.bf16.msra.mxu0 %v2040
    %2760 = vmatprep.subr.bf16.mxu0 %v2049
    %2761 = vmatpush1.bf16.msra.mxu0 %v2048
    %2762 = vmatprep.mubr.bf16.mxu0 %v217
    %2763 = vmatmul.mubr.bf16.gmra.mrb[0].mxu0 %v216
    %v2764 = vpop.f32.mrb[0].mxu0
    %v2765 = vadd.f32 %v2724, %v2764
    %v2766 = vpop.f32.mrb[0].mxu0
    %v2767 = vadd.f32 %v2726, %v2766
    %v2768 = vpop.f32.mrb[0].mxu0
    %v2769 = vpop.f32.mrb[0].mxu0
    %2770 = vdwg.mxu0
    %2771 = vmatprep.subr.bf16.mxu0 %v2057
    %2772 = vmatpush1.bf16.msra.mxu0 %v2056
    %2773 = vmatprep.subr.bf16.mxu0 %v2065
    %2774 = vmatpush1.bf16.msra.mxu0 %v2064
    %2775 = vmatprep.subr.bf16.mxu0 %v2073
    %2776 = vmatpush1.bf16.msra.mxu0 %v2072
    %2777 = vmatprep.subr.bf16.mxu0 %v2081
    %2778 = vmatpush1.bf16.msra.mxu0 %v2080
    %2779 = vmatprep.subr.bf16.mxu0 %v2089
    %2780 = vmatpush1.bf16.msra.mxu0 %v2088
    %2781 = vmatprep.subr.bf16.mxu0 %v2097
    %2782 = vmatpush1.bf16.msra.mxu0 %v2096
    %2783 = vmatprep.subr.bf16.mxu0 %v2105
    %2784 = vmatpush1.bf16.msra.mxu0 %v2104
    %2785 = vmatprep.subr.bf16.mxu0 %v2113
    %2786 = vmatpush1.bf16.msra.mxu0 %v2112
    %2787 = vmatprep.subr.bf16.mxu0 %v2121
    %2788 = vmatpush1.bf16.msra.mxu0 %v2120
    %2789 = vmatprep.subr.bf16.mxu0 %v2129
    %2790 = vmatpush1.bf16.msra.mxu0 %v2128
    %2791 = vmatprep.subr.bf16.mxu0 %v2137
    %2792 = vmatpush1.bf16.msra.mxu0 %v2136
    %2793 = vmatprep.subr.bf16.mxu0 %v2145
    %2794 = vmatpush1.bf16.msra.mxu0 %v2144
    %2795 = vmatprep.subr.bf16.mxu0 %v2153
    %2796 = vmatpush1.bf16.msra.mxu0 %v2152
    %2797 = vmatprep.subr.bf16.mxu0 %v2161
    %2798 = vmatpush1.bf16.msra.mxu0 %v2160
    %2799 = vmatprep.subr.bf16.mxu0 %v2169
    %2800 = vmatpush1.bf16.msra.mxu0 %v2168
    %2801 = vmatprep.subr.bf16.mxu0 %v2177
    %2802 = vmatpush1.bf16.msra.mxu0 %v2176
    %2803 = vmatprep.mubr.bf16.mxu0 %v219
    %2804 = vmatmul.mubr.bf16.gmra.mrb[0].mxu0 %v218
    %v2805 = vpop.f32.mrb[0].mxu0
    %v2806 = vadd.f32 %v2765, %v2805
    %v2807 = vpop.f32.mrb[0].mxu0
    %v2808 = vadd.f32 %v2767, %v2807
    %v2809 = vpop.f32.mrb[0].mxu0
    %v2810 = vpop.f32.mrb[0].mxu0
    %2811 = vdwg.mxu0
    %2812 = vmatprep.subr.bf16.mxu0 %v1803
    %2813 = vmatpush1.bf16.msra.mxu0 %v1802
    %2814 = vmatprep.subr.bf16.mxu0 %v1811
    %2815 = vmatpush1.bf16.msra.mxu0 %v1810
    %2816 = vmatprep.subr.bf16.mxu0 %v1819
    %2817 = vmatpush1.bf16.msra.mxu0 %v1818
    %2818 = vmatprep.subr.bf16.mxu0 %v1827
    %2819 = vmatpush1.bf16.msra.mxu0 %v1826
    %2820 = vmatprep.subr.bf16.mxu0 %v1835
    %2821 = vmatpush1.bf16.msra.mxu0 %v1834
    %2822 = vmatprep.subr.bf16.mxu0 %v1843
    %2823 = vmatpush1.bf16.msra.mxu0 %v1842
    %2824 = vmatprep.subr.bf16.mxu0 %v1851
    %2825 = vmatpush1.bf16.msra.mxu0 %v1850
    %2826 = vmatprep.subr.bf16.mxu0 %v1859
    %2827 = vmatpush1.bf16.msra.mxu0 %v1858
    %2828 = vmatprep.subr.bf16.mxu0 %v1867
    %2829 = vmatpush1.bf16.msra.mxu0 %v1866
    %2830 = vmatprep.subr.bf16.mxu0 %v1875
    %2831 = vmatpush1.bf16.msra.mxu0 %v1874
    %2832 = vmatprep.subr.bf16.mxu0 %v1883
    %2833 = vmatpush1.bf16.msra.mxu0 %v1882
    %2834 = vmatprep.subr.bf16.mxu0 %v1891
    %2835 = vmatpush1.bf16.msra.mxu0 %v1890
    %2836 = vmatprep.subr.bf16.mxu0 %v1899
    %2837 = vmatpush1.bf16.msra.mxu0 %v1898
    %2838 = vmatprep.subr.bf16.mxu0 %v1907
    %2839 = vmatpush1.bf16.msra.mxu0 %v1906
    %2840 = vmatprep.subr.bf16.mxu0 %v1915
    %2841 = vmatpush1.bf16.msra.mxu0 %v1914
    %2842 = vmatprep.subr.bf16.mxu0 %v1923
    %2843 = vmatpush1.bf16.msra.mxu0 %v1922
    %2844 = vmatprep.mubr.bf16.mxu0 %v215
    %2845 = vmatmul.mubr.bf16.gmra.mrb[0].mxu0 %v214
    %v2846 = vpop.f32.mrb[0].mxu0
    %v2847 = vadd.f32 %v625, %v2846
    %v2848 = vpop.f32.mrb[0].mxu0
    %v2849 = vadd.f32 %v629, %v2848
    %v2850 = vpop.f32.mrb[0].mxu0
    %v2851 = vpop.f32.mrb[0].mxu0
    %2852 = vdwg.mxu0
    %2853 = vmatprep.subr.bf16.mxu0 %v1931
    %2854 = vmatpush1.bf16.msra.mxu0 %v1930
    %2855 = vmatprep.subr.bf16.mxu0 %v1939
    %2856 = vmatpush1.bf16.msra.mxu0 %v1938
    %2857 = vmatprep.subr.bf16.mxu0 %v1947
    %2858 = vmatpush1.bf16.msra.mxu0 %v1946
    %2859 = vmatprep.subr.bf16.mxu0 %v1955
    %2860 = vmatpush1.bf16.msra.mxu0 %v1954
    %2861 = vmatprep.subr.bf16.mxu0 %v1963
    %2862 = vmatpush1.bf16.msra.mxu0 %v1962
    %2863 = vmatprep.subr.bf16.mxu0 %v1971
    %2864 = vmatpush1.bf16.msra.mxu0 %v1970
    %2865 = vmatprep.subr.bf16.mxu0 %v1979
    %2866 = vmatpush1.bf16.msra.mxu0 %v1978
    %2867 = vmatprep.subr.bf16.mxu0 %v1987
    %2868 = vmatpush1.bf16.msra.mxu0 %v1986
    %2869 = vmatprep.subr.bf16.mxu0 %v1995
    %2870 = vmatpush1.bf16.msra.mxu0 %v1994
    %2871 = vmatprep.subr.bf16.mxu0 %v2003
    %2872 = vmatpush1.bf16.msra.mxu0 %v2002
    %2873 = vmatprep.subr.bf16.mxu0 %v2011
    %2874 = vmatpush1.bf16.msra.mxu0 %v2010
    %2875 = vmatprep.subr.bf16.mxu0 %v2019
    %2876 = vmatpush1.bf16.msra.mxu0 %v2018
    %2877 = vmatprep.subr.bf16.mxu0 %v2027
    %2878 = vmatpush1.bf16.msra.mxu0 %v2026
    %2879 = vmatprep.subr.bf16.mxu0 %v2035
    %2880 = vmatpush1.bf16.msra.mxu0 %v2034
    %2881 = vmatprep.subr.bf16.mxu0 %v2043
    %2882 = vmatpush1.bf16.msra.mxu0 %v2042
    %2883 = vmatprep.subr.bf16.mxu0 %v2051
    %2884 = vmatpush1.bf16.msra.mxu0 %v2050
    %2885 = vmatprep.mubr.bf16.mxu0 %v217
    %2886 = vmatmul.mubr.bf16.gmra.mrb[0].mxu0 %v216
    %v2887 = vpop.f32.mrb[0].mxu0
    %v2888 = vadd.f32 %v2847, %v2887
    %v2889 = vpop.f32.mrb[0].mxu0
    %v2890 = vadd.f32 %v2849, %v2889
    %v2891 = vpop.f32.mrb[0].mxu0
    %v2892 = vpop.f32.mrb[0].mxu0
    %2893 = vdwg.mxu0
    %2894 = vmatprep.subr.bf16.mxu0 %v2059
    %2895 = vmatpush1.bf16.msra.mxu0 %v2058
    %2896 = vmatprep.subr.bf16.mxu0 %v2067
    %2897 = vmatpush1.bf16.msra.mxu0 %v2066
    %2898 = vmatprep.subr.bf16.mxu0 %v2075
    %2899 = vmatpush1.bf16.msra.mxu0 %v2074
    %2900 = vmatprep.subr.bf16.mxu0 %v2083
    %2901 = vmatpush1.bf16.msra.mxu0 %v2082
    %2902 = vmatprep.subr.bf16.mxu0 %v2091
    %2903 = vmatpush1.bf16.msra.mxu0 %v2090
    %2904 = vmatprep.subr.bf16.mxu0 %v2099
    %2905 = vmatpush1.bf16.msra.mxu0 %v2098
    %2906 = vmatprep.subr.bf16.mxu0 %v2107
    %2907 = vmatpush1.bf16.msra.mxu0 %v2106
    %2908 = vmatprep.subr.bf16.mxu0 %v2115
    %2909 = vmatpush1.bf16.msra.mxu0 %v2114
    %2910 = vmatprep.subr.bf16.mxu0 %v2123
    %2911 = vmatpush1.bf16.msra.mxu0 %v2122
    %2912 = vmatprep.subr.bf16.mxu0 %v2131
    %2913 = vmatpush1.bf16.msra.mxu0 %v2130
    %2914 = vmatprep.subr.bf16.mxu0 %v2139
    %2915 = vmatpush1.bf16.msra.mxu0 %v2138
    %2916 = vmatprep.subr.bf16.mxu0 %v2147
    %2917 = vmatpush1.bf16.msra.mxu0 %v2146
    %2918 = vmatprep.subr.bf16.mxu0 %v2155
    %2919 = vmatpush1.bf16.msra.mxu0 %v2154
    %2920 = vmatprep.subr.bf16.mxu0 %v2163
    %2921 = vmatpush1.bf16.msra.mxu0 %v2162
    %2922 = vmatprep.subr.bf16.mxu0 %v2171
    %2923 = vmatpush1.bf16.msra.mxu0 %v2170
    %2924 = vmatprep.subr.bf16.mxu0 %v2179
    %2925 = vmatpush1.bf16.msra.mxu0 %v2178
    %2926 = vmatprep.mubr.bf16.mxu0 %v219
    %2927 = vmatmul.mubr.bf16.gmra.mrb[0].mxu0 %v218
    %v2928 = vpop.f32.mrb[0].mxu0
    %v2929 = vadd.f32 %v2888, %v2928
    %v2930 = vpop.f32.mrb[0].mxu0
    %v2931 = vadd.f32 %v2890, %v2930
    %v2932 = vpop.f32.mrb[0].mxu0
    %v2933 = vpop.f32.mrb[0].mxu0
    %2934 = vdwg.mxu0
    %2935 = vmatprep.subr.bf16.mxu0 %v1805
    %2936 = vmatpush1.bf16.msra.mxu0 %v1804
    %2937 = vmatprep.subr.bf16.mxu0 %v1813
    %2938 = vmatpush1.bf16.msra.mxu0 %v1812
    %2939 = vmatprep.subr.bf16.mxu0 %v1821
    %2940 = vmatpush1.bf16.msra.mxu0 %v1820
    %2941 = vmatprep.subr.bf16.mxu0 %v1829
    %2942 = vmatpush1.bf16.msra.mxu0 %v1828
    %2943 = vmatprep.subr.bf16.mxu0 %v1837
    %2944 = vmatpush1.bf16.msra.mxu0 %v1836
    %2945 = vmatprep.subr.bf16.mxu0 %v1845
    %2946 = vmatpush1.bf16.msra.mxu0 %v1844
    %2947 = vmatprep.subr.bf16.mxu0 %v1853
    %2948 = vmatpush1.bf16.msra.mxu0 %v1852
    %2949 = vmatprep.subr.bf16.mxu0 %v1861
    %2950 = vmatpush1.bf16.msra.mxu0 %v1860
    %2951 = vmatprep.subr.bf16.mxu0 %v1869
    %2952 = vmatpush1.bf16.msra.mxu0 %v1868
    %2953 = vmatprep.subr.bf16.mxu0 %v1877
    %2954 = vmatpush1.bf16.msra.mxu0 %v1876
    %2955 = vmatprep.subr.bf16.mxu0 %v1885
    %2956 = vmatpush1.bf16.msra.mxu0 %v1884
    %2957 = vmatprep.subr.bf16.mxu0 %v1893
    %2958 = vmatpush1.bf16.msra.mxu0 %v1892
    %2959 = vmatprep.subr.bf16.mxu0 %v1901
    %2960 = vmatpush1.bf16.msra.mxu0 %v1900
    %2961 = vmatprep.subr.bf16.mxu0 %v1909
    %2962 = vmatpush1.bf16.msra.mxu0 %v1908
    %2963 = vmatprep.subr.bf16.mxu0 %v1917
    %2964 = vmatpush1.bf16.msra.mxu0 %v1916
    %2965 = vmatprep.subr.bf16.mxu0 %v1925
    %2966 = vmatpush1.bf16.msra.mxu0 %v1924
    %2967 = vmatprep.mubr.bf16.mxu0 %v215
    %2968 = vmatmul.mubr.bf16.gmra.mrb[0].mxu0 %v214
    %v2969 = vpop.f32.mrb[0].mxu0
    %v2970 = vadd.f32 %v633, %v2969
    %v2971 = vpop.f32.mrb[0].mxu0
    %v2972 = vadd.f32 %v637, %v2971
    %v2973 = vpop.f32.mrb[0].mxu0
    %v2974 = vpop.f32.mrb[0].mxu0
    %2975 = vdwg.mxu0
    %2976 = vmatprep.subr.bf16.mxu0 %v1933
    %2977 = vmatpush1.bf16.msra.mxu0 %v1932
    %2978 = vmatprep.subr.bf16.mxu0 %v1941
    %2979 = vmatpush1.bf16.msra.mxu0 %v1940
    %2980 = vmatprep.subr.bf16.mxu0 %v1949
    %2981 = vmatpush1.bf16.msra.mxu0 %v1948
    %2982 = vmatprep.subr.bf16.mxu0 %v1957
    %2983 = vmatpush1.bf16.msra.mxu0 %v1956
    %2984 = vmatprep.subr.bf16.mxu0 %v1965
    %2985 = vmatpush1.bf16.msra.mxu0 %v1964
    %2986 = vmatprep.subr.bf16.mxu0 %v1973
    %2987 = vmatpush1.bf16.msra.mxu0 %v1972
    %2988 = vmatprep.subr.bf16.mxu0 %v1981
    %2989 = vmatpush1.bf16.msra.mxu0 %v1980
    %2990 = vmatprep.subr.bf16.mxu0 %v1989
    %2991 = vmatpush1.bf16.msra.mxu0 %v1988
    %2992 = vmatprep.subr.bf16.mxu0 %v1997
    %2993 = vmatpush1.bf16.msra.mxu0 %v1996
    %2994 = vmatprep.subr.bf16.mxu0 %v2005
    %2995 = vmatpush1.bf16.msra.mxu0 %v2004
    %2996 = vmatprep.subr.bf16.mxu0 %v2013
    %2997 = vmatpush1.bf16.msra.mxu0 %v2012
    %2998 = vmatprep.subr.bf16.mxu0 %v2021
    %2999 = vmatpush1.bf16.msra.mxu0 %v2020
    %3000 = vmatprep.subr.bf16.mxu0 %v2029
    %3001 = vmatpush1.bf16.msra.mxu0 %v2028
    %3002 = vmatprep.subr.bf16.mxu0 %v2037
    %3003 = vmatpush1.bf16.msra.mxu0 %v2036
    %3004 = vmatprep.subr.bf16.mxu0 %v2045
    %3005 = vmatpush1.bf16.msra.mxu0 %v2044
    %3006 = vmatprep.subr.bf16.mxu0 %v2053
    %3007 = vmatpush1.bf16.msra.mxu0 %v2052
    %3008 = vmatprep.mubr.bf16.mxu0 %v217
    %3009 = vmatmul.mubr.bf16.gmra.mrb[0].mxu0 %v216
    %v3010 = vpop.f32.mrb[0].mxu0
    %v3011 = vadd.f32 %v2970, %v3010
    %v3012 = vpop.f32.mrb[0].mxu0
    %v3013 = vadd.f32 %v2972, %v3012
    %v3014 = vpop.f32.mrb[0].mxu0
    %v3015 = vpop.f32.mrb[0].mxu0
    %3016 = vdwg.mxu0
    %3017 = vmatprep.subr.bf16.mxu0 %v2061
    %3018 = vmatpush1.bf16.msra.mxu0 %v2060
    %3019 = vmatprep.subr.bf16.mxu0 %v2069
    %3020 = vmatpush1.bf16.msra.mxu0 %v2068
    %3021 = vmatprep.subr.bf16.mxu0 %v2077
    %3022 = vmatpush1.bf16.msra.mxu0 %v2076
    %3023 = vmatprep.subr.bf16.mxu0 %v2085
    %3024 = vmatpush1.bf16.msra.mxu0 %v2084
    %3025 = vmatprep.subr.bf16.mxu0 %v2093
    %3026 = vmatpush1.bf16.msra.mxu0 %v2092
    %3027 = vmatprep.subr.bf16.mxu0 %v2101
    %3028 = vmatpush1.bf16.msra.mxu0 %v2100
    %3029 = vmatprep.subr.bf16.mxu0 %v2109
    %3030 = vmatpush1.bf16.msra.mxu0 %v2108
    %3031 = vmatprep.subr.bf16.mxu0 %v2117
    %3032 = vmatpush1.bf16.msra.mxu0 %v2116
    %3033 = vmatprep.subr.bf16.mxu0 %v2125
    %3034 = vmatpush1.bf16.msra.mxu0 %v2124
    %3035 = vmatprep.subr.bf16.mxu0 %v2133
    %3036 = vmatpush1.bf16.msra.mxu0 %v2132
    %3037 = vmatprep.subr.bf16.mxu0 %v2141
    %3038 = vmatpush1.bf16.msra.mxu0 %v2140
    %3039 = vmatprep.subr.bf16.mxu0 %v2149
    %3040 = vmatpush1.bf16.msra.mxu0 %v2148
    %3041 = vmatprep.subr.bf16.mxu0 %v2157
    %3042 = vmatpush1.bf16.msra.mxu0 %v2156
    %3043 = vmatprep.subr.bf16.mxu0 %v2165
    %3044 = vmatpush1.bf16.msra.mxu0 %v2164
    %3045 = vmatprep.subr.bf16.mxu0 %v2173
    %3046 = vmatpush1.bf16.msra.mxu0 %v2172
    %3047 = vmatprep.subr.bf16.mxu0 %v2181
    %3048 = vmatpush1.bf16.msra.mxu0 %v2180
    %3049 = vmatprep.mubr.bf16.mxu0 %v219
    %3050 = vmatmul.mubr.bf16.gmra.mrb[0].mxu0 %v218
    %v3051 = vpop.f32.mrb[0].mxu0
    %v3052 = vadd.f32 %v3011, %v3051
    %v3053 = vpop.f32.mrb[0].mxu0
    %v3054 = vadd.f32 %v3013, %v3053
    %v3055 = vpop.f32.mrb[0].mxu0
    %v3056 = vpop.f32.mrb[0].mxu0
    %3057 = vdwg.mxu0
    %vm3058 = vcmp.ge.f32.partialorder %v2683, 0.0
    %vm3059 = vcmp.ge.f32.partialorder %v2685, 0.0
    %vm3060 = vcmp.ge.f32.partialorder %v2806, 0.0
    %vm3061 = vcmp.ge.f32.partialorder %v2808, 0.0
    %vm3062 = vcmp.ge.f32.partialorder %v2929, 0.0
    %vm3063 = vcmp.ge.f32.partialorder %v2931, 0.0
    %vm3064 = vcmp.ge.f32.partialorder %v3052, 0.0
    %vm3065 = vcmp.ge.f32.partialorder %v3054, 0.0
    %v3066 = vmul.f32 %v2683, 0.2
    %v3067 = vmul.f32 %v2685, 0.2
    %v3068 = vmul.f32 %v2806, 0.2
    %v3069 = vmul.f32 %v2808, 0.2
    %v3070 = vmul.f32 %v2929, 0.2
    %v3071 = vmul.f32 %v2931, 0.2
    %v3072 = vmul.f32 %v3052, 0.2
    %v3073 = vmul.f32 %v3054, 0.2
    %v3074 = vsel %vm3058, %v2683, %v3066
    %v3075 = vsel %vm3059, %v2685, %v3067
    %v3076 = vsel %vm3060, %v2806, %v3068
    %v3077 = vsel %vm3061, %v2808, %v3069
    %v3078 = vsel %vm3062, %v2929, %v3070
    %v3079 = vsel %vm3063, %v2931, %v3071
    %v3080 = vsel %vm3064, %v3052, %v3072
    %v3081 = vsel %vm3065, %v3054, %v3073
    %v3082 = vpack.c.bf16 %v3074, %v3074
    %v3083 = vpack.c.bf16 %v3075, %v3075
    %v3084 = vpack.c.bf16 %v3076, %v3076
    %v3085 = vpack.c.bf16 %v3077, %v3077
    %v3086 = vpack.c.bf16 %v3078, %v3078
    %v3087 = vpack.c.bf16 %v3079, %v3079
    %v3088 = vpack.c.bf16 %v3080, %v3080
    %v3089 = vpack.c.bf16 %v3081, %v3081
    %v3090 = vld [vmem:[#allocation7] sm:$0xff]
    %v3091 = vld [vmem:[#allocation7 + $0x8] sm:$0xff]
    %v3092 = vld [vmem:[#allocation7 + $0x10] sm:$0xff]
    %v3093 = vld [vmem:[#allocation7 + $0x18] sm:$0xff]
    %v3094 = vld [vmem:[#allocation7 + $0x20] sm:$0xff]
    %v3095 = vld [vmem:[#allocation7 + $0x28] sm:$0xff]
    %v3096 = vld [vmem:[#allocation7 + $0x30] sm:$0xff]
    %v3097 = vld [vmem:[#allocation7 + $0x38] sm:$0xff]
    %v3098 = vld [vmem:[#allocation7 + $0x40] sm:$0xff]
    %v3099 = vld [vmem:[#allocation7 + $0x48] sm:$0xff]
    %v3100 = vld [vmem:[#allocation7 + $0x50] sm:$0xff]
    %v3101 = vld [vmem:[#allocation7 + $0x58] sm:$0xff]
    %v3102 = vld [vmem:[#allocation7 + $0x60] sm:$0xff]
    %v3103 = vld [vmem:[#allocation7 + $0x68] sm:$0xff]
    %v3104 = vld [vmem:[#allocation7 + $0x70] sm:$0xff]
    %v3105 = vld [vmem:[#allocation7 + $0x78] sm:$0xff]
    %v3106 = vld [vmem:[#allocation7 + $0x80] sm:$0xff]
    %v3107 = vld [vmem:[#allocation7 + $0x88] sm:$0xff]
    %v3108 = vld [vmem:[#allocation7 + $0x90] sm:$0xff]
    %v3109 = vld [vmem:[#allocation7 + $0x98] sm:$0xff]
    %v3110 = vld [vmem:[#allocation7 + $0xa0] sm:$0xff]
    %v3111 = vld [vmem:[#allocation7 + $0xa8] sm:$0xff]
    %v3112 = vld [vmem:[#allocation7 + $0xb0] sm:$0xff]
    %v3113 = vld [vmem:[#allocation7 + $0xb8] sm:$0xff]
    %v3114 = vld [vmem:[#allocation7 + $0xc0] sm:$0xff]
    %v3115 = vld [vmem:[#allocation7 + $0xc8] sm:$0xff]
    %v3116 = vld [vmem:[#allocation7 + $0xd0] sm:$0xff]
    %v3117 = vld [vmem:[#allocation7 + $0xd8] sm:$0xff]
    %v3118 = vld [vmem:[#allocation7 + $0xe0] sm:$0xff]
    %v3119 = vld [vmem:[#allocation7 + $0xe8] sm:$0xff]
    %v3120 = vld [vmem:[#allocation7 + $0xf0] sm:$0xff]
    %v3121 = vld [vmem:[#allocation7 + $0xf8] sm:$0xff]
    %v3122 = vld [vmem:[#allocation7 + $0x100] sm:$0xff]
    %v3123 = vld [vmem:[#allocation7 + $0x108] sm:$0xff]
    %v3124 = vld [vmem:[#allocation7 + $0x110] sm:$0xff]
    %v3125 = vld [vmem:[#allocation7 + $0x118] sm:$0xff]
    %v3126 = vld [vmem:[#allocation7 + $0x120] sm:$0xff]
    %v3127 = vld [vmem:[#allocation7 + $0x128] sm:$0xff]
    %v3128 = vld [vmem:[#allocation7 + $0x130] sm:$0xff]
    %v3129 = vld [vmem:[#allocation7 + $0x138] sm:$0xff]
    %v3130 = vld [vmem:[#allocation7 + $0x140] sm:$0xff]
    %v3131 = vld [vmem:[#allocation7 + $0x148] sm:$0xff]
    %v3132 = vld [vmem:[#allocation7 + $0x150] sm:$0xff]
    %v3133 = vld [vmem:[#allocation7 + $0x158] sm:$0xff]
    %v3134 = vld [vmem:[#allocation7 + $0x160] sm:$0xff]
    %v3135 = vld [vmem:[#allocation7 + $0x168] sm:$0xff]
    %v3136 = vld [vmem:[#allocation7 + $0x170] sm:$0xff]
    %v3137 = vld [vmem:[#allocation7 + $0x178] sm:$0xff]
    %v3138 = vld [vmem:[#allocation7 + $0x180] sm:$0xff]
    %v3139 = vld [vmem:[#allocation7 + $0x188] sm:$0xff]
    %v3140 = vld [vmem:[#allocation7 + $0x190] sm:$0xff]
    %v3141 = vld [vmem:[#allocation7 + $0x198] sm:$0xff]
    %v3142 = vld [vmem:[#allocation7 + $0x1a0] sm:$0xff]
    %v3143 = vld [vmem:[#allocation7 + $0x1a8] sm:$0xff]
    %v3144 = vld [vmem:[#allocation7 + $0x1b0] sm:$0xff]
    %v3145 = vld [vmem:[#allocation7 + $0x1b8] sm:$0xff]
    %v3146 = vld [vmem:[#allocation7 + $0x1c0] sm:$0xff]
    %v3147 = vld [vmem:[#allocation7 + $0x1c8] sm:$0xff]
    %v3148 = vld [vmem:[#allocation7 + $0x1d0] sm:$0xff]
    %v3149 = vld [vmem:[#allocation7 + $0x1d8] sm:$0xff]
    %v3150 = vld [vmem:[#allocation7 + $0x1e0] sm:$0xff]
    %v3151 = vld [vmem:[#allocation7 + $0x1e8] sm:$0xff]
    %v3152 = vld [vmem:[#allocation7 + $0x1f0] sm:$0xff]
    %v3153 = vld [vmem:[#allocation7 + $0x1f8] sm:$0xff]
    %v3154 = vld [vmem:[#allocation7 + $0x200] sm:$0xff]
    %v3155 = vld [vmem:[#allocation7 + $0x208] sm:$0xff]
    %v3156 = vld [vmem:[#allocation7 + $0x210] sm:$0xff]
    %v3157 = vld [vmem:[#allocation7 + $0x218] sm:$0xff]
    %v3158 = vld [vmem:[#allocation7 + $0x220] sm:$0xff]
    %v3159 = vld [vmem:[#allocation7 + $0x228] sm:$0xff]
    %v3160 = vld [vmem:[#allocation7 + $0x230] sm:$0xff]
    %v3161 = vld [vmem:[#allocation7 + $0x238] sm:$0xff]
    %v3162 = vld [vmem:[#allocation7 + $0x240] sm:$0xff]
    %v3163 = vld [vmem:[#allocation7 + $0x248] sm:$0xff]
    %v3164 = vld [vmem:[#allocation7 + $0x250] sm:$0xff]
    %v3165 = vld [vmem:[#allocation7 + $0x258] sm:$0xff]
    %v3166 = vld [vmem:[#allocation7 + $0x260] sm:$0xff]
    %v3167 = vld [vmem:[#allocation7 + $0x268] sm:$0xff]
    %v3168 = vld [vmem:[#allocation7 + $0x270] sm:$0xff]
    %v3169 = vld [vmem:[#allocation7 + $0x278] sm:$0xff]
    %v3170 = vld [vmem:[#allocation7 + $0x280] sm:$0xff]
    %v3171 = vld [vmem:[#allocation7 + $0x288] sm:$0xff]
    %v3172 = vld [vmem:[#allocation7 + $0x290] sm:$0xff]
    %v3173 = vld [vmem:[#allocation7 + $0x298] sm:$0xff]
    %v3174 = vld [vmem:[#allocation7 + $0x2a0] sm:$0xff]
    %v3175 = vld [vmem:[#allocation7 + $0x2a8] sm:$0xff]
    %v3176 = vld [vmem:[#allocation7 + $0x2b0] sm:$0xff]
    %v3177 = vld [vmem:[#allocation7 + $0x2b8] sm:$0xff]
    %v3178 = vld [vmem:[#allocation7 + $0x2c0] sm:$0xff]
    %v3179 = vld [vmem:[#allocation7 + $0x2c8] sm:$0xff]
    %v3180 = vld [vmem:[#allocation7 + $0x2d0] sm:$0xff]
    %v3181 = vld [vmem:[#allocation7 + $0x2d8] sm:$0xff]
    %v3182 = vld [vmem:[#allocation7 + $0x2e0] sm:$0xff]
    %v3183 = vld [vmem:[#allocation7 + $0x2e8] sm:$0xff]
    %v3184 = vld [vmem:[#allocation7 + $0x2f0] sm:$0xff]
    %v3185 = vld [vmem:[#allocation7 + $0x2f8] sm:$0xff]
    %v3186 = vld [vmem:[#allocation7 + $0x300] sm:$0xff]
    %v3187 = vld [vmem:[#allocation7 + $0x308] sm:$0xff]
    %v3188 = vld [vmem:[#allocation7 + $0x310] sm:$0xff]
    %v3189 = vld [vmem:[#allocation7 + $0x318] sm:$0xff]
    %v3190 = vld [vmem:[#allocation7 + $0x320] sm:$0xff]
    %v3191 = vld [vmem:[#allocation7 + $0x328] sm:$0xff]
    %v3192 = vld [vmem:[#allocation7 + $0x330] sm:$0xff]
    %v3193 = vld [vmem:[#allocation7 + $0x338] sm:$0xff]
    %v3194 = vld [vmem:[#allocation7 + $0x340] sm:$0xff]
    %v3195 = vld [vmem:[#allocation7 + $0x348] sm:$0xff]
    %v3196 = vld [vmem:[#allocation7 + $0x350] sm:$0xff]
    %v3197 = vld [vmem:[#allocation7 + $0x358] sm:$0xff]
    %v3198 = vld [vmem:[#allocation7 + $0x360] sm:$0xff]
    %v3199 = vld [vmem:[#allocation7 + $0x368] sm:$0xff]
    %v3200 = vld [vmem:[#allocation7 + $0x370] sm:$0xff]
    %v3201 = vld [vmem:[#allocation7 + $0x378] sm:$0xff]
    %v3202 = vld [vmem:[#allocation7 + $0x380] sm:$0xff]
    %v3203 = vld [vmem:[#allocation7 + $0x388] sm:$0xff]
    %v3204 = vld [vmem:[#allocation7 + $0x390] sm:$0xff]
    %v3205 = vld [vmem:[#allocation7 + $0x398] sm:$0xff]
    %v3206 = vld [vmem:[#allocation7 + $0x3a0] sm:$0xff]
    %v3207 = vld [vmem:[#allocation7 + $0x3a8] sm:$0xff]
    %v3208 = vld [vmem:[#allocation7 + $0x3b0] sm:$0xff]
    %v3209 = vld [vmem:[#allocation7 + $0x3b8] sm:$0xff]
    %v3210 = vld [vmem:[#allocation7 + $0x3c0] sm:$0xff]
    %v3211 = vld [vmem:[#allocation7 + $0x3c8] sm:$0xff]
    %v3212 = vld [vmem:[#allocation7 + $0x3d0] sm:$0xff]
    %v3213 = vld [vmem:[#allocation7 + $0x3d8] sm:$0xff]
    %v3214 = vld [vmem:[#allocation7 + $0x3e0] sm:$0xff]
    %v3215 = vld [vmem:[#allocation7 + $0x3e8] sm:$0xff]
    %v3216 = vld [vmem:[#allocation7 + $0x3f0] sm:$0xff]
    %v3217 = vld [vmem:[#allocation7 + $0x3f8] sm:$0xff]
    %v3218 = vld [vmem:[#allocation7 + $0x400] sm:$0xff]
    %v3219 = vld [vmem:[#allocation7 + $0x408] sm:$0xff]
    %v3220 = vld [vmem:[#allocation7 + $0x410] sm:$0xff]
    %v3221 = vld [vmem:[#allocation7 + $0x418] sm:$0xff]
    %v3222 = vld [vmem:[#allocation7 + $0x420] sm:$0xff]
    %v3223 = vld [vmem:[#allocation7 + $0x428] sm:$0xff]
    %v3224 = vld [vmem:[#allocation7 + $0x430] sm:$0xff]
    %v3225 = vld [vmem:[#allocation7 + $0x438] sm:$0xff]
    %v3226 = vld [vmem:[#allocation7 + $0x440] sm:$0xff]
    %v3227 = vld [vmem:[#allocation7 + $0x448] sm:$0xff]
    %v3228 = vld [vmem:[#allocation7 + $0x450] sm:$0xff]
    %v3229 = vld [vmem:[#allocation7 + $0x458] sm:$0xff]
    %v3230 = vld [vmem:[#allocation7 + $0x460] sm:$0xff]
    %v3231 = vld [vmem:[#allocation7 + $0x468] sm:$0xff]
    %v3232 = vld [vmem:[#allocation7 + $0x470] sm:$0xff]
    %v3233 = vld [vmem:[#allocation7 + $0x478] sm:$0xff]
    %v3234 = vld [vmem:[#allocation7 + $0x480] sm:$0xff]
    %v3235 = vld [vmem:[#allocation7 + $0x488] sm:$0xff]
    %v3236 = vld [vmem:[#allocation7 + $0x490] sm:$0xff]
    %v3237 = vld [vmem:[#allocation7 + $0x498] sm:$0xff]
    %v3238 = vld [vmem:[#allocation7 + $0x4a0] sm:$0xff]
    %v3239 = vld [vmem:[#allocation7 + $0x4a8] sm:$0xff]
    %v3240 = vld [vmem:[#allocation7 + $0x4b0] sm:$0xff]
    %v3241 = vld [vmem:[#allocation7 + $0x4b8] sm:$0xff]
    %v3242 = vld [vmem:[#allocation7 + $0x4c0] sm:$0xff]
    %v3243 = vld [vmem:[#allocation7 + $0x4c8] sm:$0xff]
    %v3244 = vld [vmem:[#allocation7 + $0x4d0] sm:$0xff]
    %v3245 = vld [vmem:[#allocation7 + $0x4d8] sm:$0xff]
    %v3246 = vld [vmem:[#allocation7 + $0x4e0] sm:$0xff]
    %v3247 = vld [vmem:[#allocation7 + $0x4e8] sm:$0xff]
    %v3248 = vld [vmem:[#allocation7 + $0x4f0] sm:$0xff]
    %v3249 = vld [vmem:[#allocation7 + $0x4f8] sm:$0xff]
    %v3250 = vld [vmem:[#allocation7 + $0x500] sm:$0xff]
    %v3251 = vld [vmem:[#allocation7 + $0x508] sm:$0xff]
    %v3252 = vld [vmem:[#allocation7 + $0x510] sm:$0xff]
    %v3253 = vld [vmem:[#allocation7 + $0x518] sm:$0xff]
    %v3254 = vld [vmem:[#allocation7 + $0x520] sm:$0xff]
    %v3255 = vld [vmem:[#allocation7 + $0x528] sm:$0xff]
    %v3256 = vld [vmem:[#allocation7 + $0x530] sm:$0xff]
    %v3257 = vld [vmem:[#allocation7 + $0x538] sm:$0xff]
    %v3258 = vld [vmem:[#allocation7 + $0x540] sm:$0xff]
    %v3259 = vld [vmem:[#allocation7 + $0x548] sm:$0xff]
    %v3260 = vld [vmem:[#allocation7 + $0x550] sm:$0xff]
    %v3261 = vld [vmem:[#allocation7 + $0x558] sm:$0xff]
    %v3262 = vld [vmem:[#allocation7 + $0x560] sm:$0xff]
    %v3263 = vld [vmem:[#allocation7 + $0x568] sm:$0xff]
    %v3264 = vld [vmem:[#allocation7 + $0x570] sm:$0xff]
    %v3265 = vld [vmem:[#allocation7 + $0x578] sm:$0xff]
    %v3266 = vld [vmem:[#allocation7 + $0x580] sm:$0xff]
    %v3267 = vld [vmem:[#allocation7 + $0x588] sm:$0xff]
    %v3268 = vld [vmem:[#allocation7 + $0x590] sm:$0xff]
    %v3269 = vld [vmem:[#allocation7 + $0x598] sm:$0xff]
    %v3270 = vld [vmem:[#allocation7 + $0x5a0] sm:$0xff]
    %v3271 = vld [vmem:[#allocation7 + $0x5a8] sm:$0xff]
    %v3272 = vld [vmem:[#allocation7 + $0x5b0] sm:$0xff]
    %v3273 = vld [vmem:[#allocation7 + $0x5b8] sm:$0xff]
    %v3274 = vld [vmem:[#allocation7 + $0x5c0] sm:$0xff]
    %v3275 = vld [vmem:[#allocation7 + $0x5c8] sm:$0xff]
    %v3276 = vld [vmem:[#allocation7 + $0x5d0] sm:$0xff]
    %v3277 = vld [vmem:[#allocation7 + $0x5d8] sm:$0xff]
    %v3278 = vld [vmem:[#allocation7 + $0x5e0] sm:$0xff]
    %v3279 = vld [vmem:[#allocation7 + $0x5e8] sm:$0xff]
    %v3280 = vld [vmem:[#allocation7 + $0x5f0] sm:$0xff]
    %v3281 = vld [vmem:[#allocation7 + $0x5f8] sm:$0xff]
    %v3282 = vld [vmem:[#allocation7 + $0x600] sm:$0xff]
    %v3283 = vld [vmem:[#allocation7 + $0x608] sm:$0xff]
    %v3284 = vld [vmem:[#allocation7 + $0x610] sm:$0xff]
    %v3285 = vld [vmem:[#allocation7 + $0x618] sm:$0xff]
    %v3286 = vld [vmem:[#allocation7 + $0x620] sm:$0xff]
    %v3287 = vld [vmem:[#allocation7 + $0x628] sm:$0xff]
    %v3288 = vld [vmem:[#allocation7 + $0x630] sm:$0xff]
    %v3289 = vld [vmem:[#allocation7 + $0x638] sm:$0xff]
    %v3290 = vld [vmem:[#allocation7 + $0x640] sm:$0xff]
    %v3291 = vld [vmem:[#allocation7 + $0x648] sm:$0xff]
    %v3292 = vld [vmem:[#allocation7 + $0x650] sm:$0xff]
    %v3293 = vld [vmem:[#allocation7 + $0x658] sm:$0xff]
    %v3294 = vld [vmem:[#allocation7 + $0x660] sm:$0xff]
    %v3295 = vld [vmem:[#allocation7 + $0x668] sm:$0xff]
    %v3296 = vld [vmem:[#allocation7 + $0x670] sm:$0xff]
    %v3297 = vld [vmem:[#allocation7 + $0x678] sm:$0xff]
    %v3298 = vld [vmem:[#allocation7 + $0x680] sm:$0xff]
    %v3299 = vld [vmem:[#allocation7 + $0x688] sm:$0xff]
    %v3300 = vld [vmem:[#allocation7 + $0x690] sm:$0xff]
    %v3301 = vld [vmem:[#allocation7 + $0x698] sm:$0xff]
    %v3302 = vld [vmem:[#allocation7 + $0x6a0] sm:$0xff]
    %v3303 = vld [vmem:[#allocation7 + $0x6a8] sm:$0xff]
    %v3304 = vld [vmem:[#allocation7 + $0x6b0] sm:$0xff]
    %v3305 = vld [vmem:[#allocation7 + $0x6b8] sm:$0xff]
    %v3306 = vld [vmem:[#allocation7 + $0x6c0] sm:$0xff]
    %v3307 = vld [vmem:[#allocation7 + $0x6c8] sm:$0xff]
    %v3308 = vld [vmem:[#allocation7 + $0x6d0] sm:$0xff]
    %v3309 = vld [vmem:[#allocation7 + $0x6d8] sm:$0xff]
    %v3310 = vld [vmem:[#allocation7 + $0x6e0] sm:$0xff]
    %v3311 = vld [vmem:[#allocation7 + $0x6e8] sm:$0xff]
    %v3312 = vld [vmem:[#allocation7 + $0x6f0] sm:$0xff]
    %v3313 = vld [vmem:[#allocation7 + $0x6f8] sm:$0xff]
    %v3314 = vld [vmem:[#allocation7 + $0x700] sm:$0xff]
    %v3315 = vld [vmem:[#allocation7 + $0x708] sm:$0xff]
    %v3316 = vld [vmem:[#allocation7 + $0x710] sm:$0xff]
    %v3317 = vld [vmem:[#allocation7 + $0x718] sm:$0xff]
    %v3318 = vld [vmem:[#allocation7 + $0x720] sm:$0xff]
    %v3319 = vld [vmem:[#allocation7 + $0x728] sm:$0xff]
    %v3320 = vld [vmem:[#allocation7 + $0x730] sm:$0xff]
    %v3321 = vld [vmem:[#allocation7 + $0x738] sm:$0xff]
    %v3322 = vld [vmem:[#allocation7 + $0x740] sm:$0xff]
    %v3323 = vld [vmem:[#allocation7 + $0x748] sm:$0xff]
    %v3324 = vld [vmem:[#allocation7 + $0x750] sm:$0xff]
    %v3325 = vld [vmem:[#allocation7 + $0x758] sm:$0xff]
    %v3326 = vld [vmem:[#allocation7 + $0x760] sm:$0xff]
    %v3327 = vld [vmem:[#allocation7 + $0x768] sm:$0xff]
    %v3328 = vld [vmem:[#allocation7 + $0x770] sm:$0xff]
    %v3329 = vld [vmem:[#allocation7 + $0x778] sm:$0xff]
    %v3330 = vld [vmem:[#allocation7 + $0x780] sm:$0xff]
    %v3331 = vld [vmem:[#allocation7 + $0x788] sm:$0xff]
    %v3332 = vld [vmem:[#allocation7 + $0x790] sm:$0xff]
    %v3333 = vld [vmem:[#allocation7 + $0x798] sm:$0xff]
    %v3334 = vld [vmem:[#allocation7 + $0x7a0] sm:$0xff]
    %v3335 = vld [vmem:[#allocation7 + $0x7a8] sm:$0xff]
    %v3336 = vld [vmem:[#allocation7 + $0x7b0] sm:$0xff]
    %v3337 = vld [vmem:[#allocation7 + $0x7b8] sm:$0xff]
    %v3338 = vld [vmem:[#allocation7 + $0x7c0] sm:$0xff]
    %v3339 = vld [vmem:[#allocation7 + $0x7c8] sm:$0xff]
    %v3340 = vld [vmem:[#allocation7 + $0x7d0] sm:$0xff]
    %v3341 = vld [vmem:[#allocation7 + $0x7d8] sm:$0xff]
    %v3342 = vld [vmem:[#allocation7 + $0x7e0] sm:$0xff]
    %v3343 = vld [vmem:[#allocation7 + $0x7e8] sm:$0xff]
    %v3344 = vld [vmem:[#allocation7 + $0x7f0] sm:$0xff]
    %v3345 = vld [vmem:[#allocation7 + $0x7f8] sm:$0xff]
    %v3346 = vld [vmem:[#allocation7 + $0x800] sm:$0xff]
    %v3347 = vld [vmem:[#allocation7 + $0x808] sm:$0xff]
    %v3348 = vld [vmem:[#allocation7 + $0x810] sm:$0xff]
    %v3349 = vld [vmem:[#allocation7 + $0x818] sm:$0xff]
    %v3350 = vld [vmem:[#allocation7 + $0x820] sm:$0xff]
    %v3351 = vld [vmem:[#allocation7 + $0x828] sm:$0xff]
    %v3352 = vld [vmem:[#allocation7 + $0x830] sm:$0xff]
    %v3353 = vld [vmem:[#allocation7 + $0x838] sm:$0xff]
    %v3354 = vld [vmem:[#allocation7 + $0x840] sm:$0xff]
    %v3355 = vld [vmem:[#allocation7 + $0x848] sm:$0xff]
    %v3356 = vld [vmem:[#allocation7 + $0x850] sm:$0xff]
    %v3357 = vld [vmem:[#allocation7 + $0x858] sm:$0xff]
    %v3358 = vld [vmem:[#allocation7 + $0x860] sm:$0xff]
    %v3359 = vld [vmem:[#allocation7 + $0x868] sm:$0xff]
    %v3360 = vld [vmem:[#allocation7 + $0x870] sm:$0xff]
    %v3361 = vld [vmem:[#allocation7 + $0x878] sm:$0xff]
    %v3362 = vld [vmem:[#allocation7 + $0x880] sm:$0xff]
    %v3363 = vld [vmem:[#allocation7 + $0x888] sm:$0xff]
    %v3364 = vld [vmem:[#allocation7 + $0x890] sm:$0xff]
    %v3365 = vld [vmem:[#allocation7 + $0x898] sm:$0xff]
    %v3366 = vld [vmem:[#allocation7 + $0x8a0] sm:$0xff]
    %v3367 = vld [vmem:[#allocation7 + $0x8a8] sm:$0xff]
    %v3368 = vld [vmem:[#allocation7 + $0x8b0] sm:$0xff]
    %v3369 = vld [vmem:[#allocation7 + $0x8b8] sm:$0xff]
    %v3370 = vld [vmem:[#allocation7 + $0x8c0] sm:$0xff]
    %v3371 = vld [vmem:[#allocation7 + $0x8c8] sm:$0xff]
    %v3372 = vld [vmem:[#allocation7 + $0x8d0] sm:$0xff]
    %v3373 = vld [vmem:[#allocation7 + $0x8d8] sm:$0xff]
    %v3374 = vld [vmem:[#allocation7 + $0x8e0] sm:$0xff]
    %v3375 = vld [vmem:[#allocation7 + $0x8e8] sm:$0xff]
    %v3376 = vld [vmem:[#allocation7 + $0x8f0] sm:$0xff]
    %v3377 = vld [vmem:[#allocation7 + $0x8f8] sm:$0xff]
    %v3378 = vld [vmem:[#allocation7 + $0x900] sm:$0xff]
    %v3379 = vld [vmem:[#allocation7 + $0x908] sm:$0xff]
    %v3380 = vld [vmem:[#allocation7 + $0x910] sm:$0xff]
    %v3381 = vld [vmem:[#allocation7 + $0x918] sm:$0xff]
    %v3382 = vld [vmem:[#allocation7 + $0x920] sm:$0xff]
    %v3383 = vld [vmem:[#allocation7 + $0x928] sm:$0xff]
    %v3384 = vld [vmem:[#allocation7 + $0x930] sm:$0xff]
    %v3385 = vld [vmem:[#allocation7 + $0x938] sm:$0xff]
    %v3386 = vld [vmem:[#allocation7 + $0x940] sm:$0xff]
    %v3387 = vld [vmem:[#allocation7 + $0x948] sm:$0xff]
    %v3388 = vld [vmem:[#allocation7 + $0x950] sm:$0xff]
    %v3389 = vld [vmem:[#allocation7 + $0x958] sm:$0xff]
    %v3390 = vld [vmem:[#allocation7 + $0x960] sm:$0xff]
    %v3391 = vld [vmem:[#allocation7 + $0x968] sm:$0xff]
    %v3392 = vld [vmem:[#allocation7 + $0x970] sm:$0xff]
    %v3393 = vld [vmem:[#allocation7 + $0x978] sm:$0xff]
    %v3394 = vld [vmem:[#allocation7 + $0x980] sm:$0xff]
    %v3395 = vld [vmem:[#allocation7 + $0x988] sm:$0xff]
    %v3396 = vld [vmem:[#allocation7 + $0x990] sm:$0xff]
    %v3397 = vld [vmem:[#allocation7 + $0x998] sm:$0xff]
    %v3398 = vld [vmem:[#allocation7 + $0x9a0] sm:$0xff]
    %v3399 = vld [vmem:[#allocation7 + $0x9a8] sm:$0xff]
    %v3400 = vld [vmem:[#allocation7 + $0x9b0] sm:$0xff]
    %v3401 = vld [vmem:[#allocation7 + $0x9b8] sm:$0xff]
    %v3402 = vld [vmem:[#allocation7 + $0x9c0] sm:$0xff]
    %v3403 = vld [vmem:[#allocation7 + $0x9c8] sm:$0xff]
    %v3404 = vld [vmem:[#allocation7 + $0x9d0] sm:$0xff]
    %v3405 = vld [vmem:[#allocation7 + $0x9d8] sm:$0xff]
    %v3406 = vld [vmem:[#allocation7 + $0x9e0] sm:$0xff]
    %v3407 = vld [vmem:[#allocation7 + $0x9e8] sm:$0xff]
    %v3408 = vld [vmem:[#allocation7 + $0x9f0] sm:$0xff]
    %v3409 = vld [vmem:[#allocation7 + $0x9f8] sm:$0xff]
    %v3410 = vld [vmem:[#allocation7 + $0xa00] sm:$0xff]
    %v3411 = vld [vmem:[#allocation7 + $0xa08] sm:$0xff]
    %v3412 = vld [vmem:[#allocation7 + $0xa10] sm:$0xff]
    %v3413 = vld [vmem:[#allocation7 + $0xa18] sm:$0xff]
    %v3414 = vld [vmem:[#allocation7 + $0xa20] sm:$0xff]
    %v3415 = vld [vmem:[#allocation7 + $0xa28] sm:$0xff]
    %v3416 = vld [vmem:[#allocation7 + $0xa30] sm:$0xff]
    %v3417 = vld [vmem:[#allocation7 + $0xa38] sm:$0xff]
    %v3418 = vld [vmem:[#allocation7 + $0xa40] sm:$0xff]
    %v3419 = vld [vmem:[#allocation7 + $0xa48] sm:$0xff]
    %v3420 = vld [vmem:[#allocation7 + $0xa50] sm:$0xff]
    %v3421 = vld [vmem:[#allocation7 + $0xa58] sm:$0xff]
    %v3422 = vld [vmem:[#allocation7 + $0xa60] sm:$0xff]
    %v3423 = vld [vmem:[#allocation7 + $0xa68] sm:$0xff]
    %v3424 = vld [vmem:[#allocation7 + $0xa70] sm:$0xff]
    %v3425 = vld [vmem:[#allocation7 + $0xa78] sm:$0xff]
    %v3426 = vld [vmem:[#allocation7 + $0xa80] sm:$0xff]
    %v3427 = vld [vmem:[#allocation7 + $0xa88] sm:$0xff]
    %v3428 = vld [vmem:[#allocation7 + $0xa90] sm:$0xff]
    %v3429 = vld [vmem:[#allocation7 + $0xa98] sm:$0xff]
    %v3430 = vld [vmem:[#allocation7 + $0xaa0] sm:$0xff]
    %v3431 = vld [vmem:[#allocation7 + $0xaa8] sm:$0xff]
    %v3432 = vld [vmem:[#allocation7 + $0xab0] sm:$0xff]
    %v3433 = vld [vmem:[#allocation7 + $0xab8] sm:$0xff]
    %v3434 = vld [vmem:[#allocation7 + $0xac0] sm:$0xff]
    %v3435 = vld [vmem:[#allocation7 + $0xac8] sm:$0xff]
    %v3436 = vld [vmem:[#allocation7 + $0xad0] sm:$0xff]
    %v3437 = vld [vmem:[#allocation7 + $0xad8] sm:$0xff]
    %v3438 = vld [vmem:[#allocation7 + $0xae0] sm:$0xff]
    %v3439 = vld [vmem:[#allocation7 + $0xae8] sm:$0xff]
    %v3440 = vld [vmem:[#allocation7 + $0xaf0] sm:$0xff]
    %v3441 = vld [vmem:[#allocation7 + $0xaf8] sm:$0xff]
    %v3442 = vld [vmem:[#allocation7 + $0xb00] sm:$0xff]
    %v3443 = vld [vmem:[#allocation7 + $0xb08] sm:$0xff]
    %v3444 = vld [vmem:[#allocation7 + $0xb10] sm:$0xff]
    %v3445 = vld [vmem:[#allocation7 + $0xb18] sm:$0xff]
    %v3446 = vld [vmem:[#allocation7 + $0xb20] sm:$0xff]
    %v3447 = vld [vmem:[#allocation7 + $0xb28] sm:$0xff]
    %v3448 = vld [vmem:[#allocation7 + $0xb30] sm:$0xff]
    %v3449 = vld [vmem:[#allocation7 + $0xb38] sm:$0xff]
    %v3450 = vld [vmem:[#allocation7 + $0xb40] sm:$0xff]
    %v3451 = vld [vmem:[#allocation7 + $0xb48] sm:$0xff]
    %v3452 = vld [vmem:[#allocation7 + $0xb50] sm:$0xff]
    %v3453 = vld [vmem:[#allocation7 + $0xb58] sm:$0xff]
    %v3454 = vld [vmem:[#allocation7 + $0xb60] sm:$0xff]
    %v3455 = vld [vmem:[#allocation7 + $0xb68] sm:$0xff]
    %v3456 = vld [vmem:[#allocation7 + $0xb70] sm:$0xff]
    %v3457 = vld [vmem:[#allocation7 + $0xb78] sm:$0xff]
    %v3458 = vld [vmem:[#allocation7 + $0xb80] sm:$0xff]
    %v3459 = vld [vmem:[#allocation7 + $0xb88] sm:$0xff]
    %v3460 = vld [vmem:[#allocation7 + $0xb90] sm:$0xff]
    %v3461 = vld [vmem:[#allocation7 + $0xb98] sm:$0xff]
    %v3462 = vld [vmem:[#allocation7 + $0xba0] sm:$0xff]
    %v3463 = vld [vmem:[#allocation7 + $0xba8] sm:$0xff]
    %v3464 = vld [vmem:[#allocation7 + $0xbb0] sm:$0xff]
    %v3465 = vld [vmem:[#allocation7 + $0xbb8] sm:$0xff]
    %v3466 = vld [vmem:[#allocation7 + $0xbc0] sm:$0xff]
    %v3467 = vld [vmem:[#allocation7 + $0xbc8] sm:$0xff]
    %v3468 = vld [vmem:[#allocation7 + $0xbd0] sm:$0xff]
    %v3469 = vld [vmem:[#allocation7 + $0xbd8] sm:$0xff]
    %v3470 = vld [vmem:[#allocation7 + $0xbe0] sm:$0xff]
    %v3471 = vld [vmem:[#allocation7 + $0xbe8] sm:$0xff]
    %v3472 = vld [vmem:[#allocation7 + $0xbf0] sm:$0xff]
    %v3473 = vld [vmem:[#allocation7 + $0xbf8] sm:$0xff]
    %v3474 = vld [vmem:[#allocation7 + $0xc00] sm:$0xff]
    %v3475 = vld [vmem:[#allocation7 + $0xc08] sm:$0xff]
    %v3476 = vld [vmem:[#allocation7 + $0xc10] sm:$0xff]
    %v3477 = vld [vmem:[#allocation7 + $0xc18] sm:$0xff]
    %v3478 = vld [vmem:[#allocation7 + $0xc20] sm:$0xff]
    %v3479 = vld [vmem:[#allocation7 + $0xc28] sm:$0xff]
    %v3480 = vld [vmem:[#allocation7 + $0xc30] sm:$0xff]
    %v3481 = vld [vmem:[#allocation7 + $0xc38] sm:$0xff]
    %v3482 = vld [vmem:[#allocation7 + $0xc40] sm:$0xff]
    %v3483 = vld [vmem:[#allocation7 + $0xc48] sm:$0xff]
    %v3484 = vld [vmem:[#allocation7 + $0xc50] sm:$0xff]
    %v3485 = vld [vmem:[#allocation7 + $0xc58] sm:$0xff]
    %v3486 = vld [vmem:[#allocation7 + $0xc60] sm:$0xff]
    %v3487 = vld [vmem:[#allocation7 + $0xc68] sm:$0xff]
    %v3488 = vld [vmem:[#allocation7 + $0xc70] sm:$0xff]
    %v3489 = vld [vmem:[#allocation7 + $0xc78] sm:$0xff]
    %v3490 = vld [vmem:[#allocation7 + $0xc80] sm:$0xff]
    %v3491 = vld [vmem:[#allocation7 + $0xc88] sm:$0xff]
    %v3492 = vld [vmem:[#allocation7 + $0xc90] sm:$0xff]
    %v3493 = vld [vmem:[#allocation7 + $0xc98] sm:$0xff]
    %v3494 = vld [vmem:[#allocation7 + $0xca0] sm:$0xff]
    %v3495 = vld [vmem:[#allocation7 + $0xca8] sm:$0xff]
    %v3496 = vld [vmem:[#allocation7 + $0xcb0] sm:$0xff]
    %v3497 = vld [vmem:[#allocation7 + $0xcb8] sm:$0xff]
    %v3498 = vld [vmem:[#allocation7 + $0xcc0] sm:$0xff]
    %v3499 = vld [vmem:[#allocation7 + $0xcc8] sm:$0xff]
    %v3500 = vld [vmem:[#allocation7 + $0xcd0] sm:$0xff]
    %v3501 = vld [vmem:[#allocation7 + $0xcd8] sm:$0xff]
    %v3502 = vld [vmem:[#allocation7 + $0xce0] sm:$0xff]
    %v3503 = vld [vmem:[#allocation7 + $0xce8] sm:$0xff]
    %v3504 = vld [vmem:[#allocation7 + $0xcf0] sm:$0xff]
    %v3505 = vld [vmem:[#allocation7 + $0xcf8] sm:$0xff]
    %v3506 = vld [vmem:[#allocation7 + $0xd00] sm:$0xff]
    %v3507 = vld [vmem:[#allocation7 + $0xd08] sm:$0xff]
    %v3508 = vld [vmem:[#allocation7 + $0xd10] sm:$0xff]
    %v3509 = vld [vmem:[#allocation7 + $0xd18] sm:$0xff]
    %v3510 = vld [vmem:[#allocation7 + $0xd20] sm:$0xff]
    %v3511 = vld [vmem:[#allocation7 + $0xd28] sm:$0xff]
    %v3512 = vld [vmem:[#allocation7 + $0xd30] sm:$0xff]
    %v3513 = vld [vmem:[#allocation7 + $0xd38] sm:$0xff]
    %v3514 = vld [vmem:[#allocation7 + $0xd40] sm:$0xff]
    %v3515 = vld [vmem:[#allocation7 + $0xd48] sm:$0xff]
    %v3516 = vld [vmem:[#allocation7 + $0xd50] sm:$0xff]
    %v3517 = vld [vmem:[#allocation7 + $0xd58] sm:$0xff]
    %v3518 = vld [vmem:[#allocation7 + $0xd60] sm:$0xff]
    %v3519 = vld [vmem:[#allocation7 + $0xd68] sm:$0xff]
    %v3520 = vld [vmem:[#allocation7 + $0xd70] sm:$0xff]
    %v3521 = vld [vmem:[#allocation7 + $0xd78] sm:$0xff]
    %v3522 = vld [vmem:[#allocation7 + $0xd80] sm:$0xff]
    %v3523 = vld [vmem:[#allocation7 + $0xd88] sm:$0xff]
    %v3524 = vld [vmem:[#allocation7 + $0xd90] sm:$0xff]
    %v3525 = vld [vmem:[#allocation7 + $0xd98] sm:$0xff]
    %v3526 = vld [vmem:[#allocation7 + $0xda0] sm:$0xff]
    %v3527 = vld [vmem:[#allocation7 + $0xda8] sm:$0xff]
    %v3528 = vld [vmem:[#allocation7 + $0xdb0] sm:$0xff]
    %v3529 = vld [vmem:[#allocation7 + $0xdb8] sm:$0xff]
    %v3530 = vld [vmem:[#allocation7 + $0xdc0] sm:$0xff]
    %v3531 = vld [vmem:[#allocation7 + $0xdc8] sm:$0xff]
    %v3532 = vld [vmem:[#allocation7 + $0xdd0] sm:$0xff]
    %v3533 = vld [vmem:[#allocation7 + $0xdd8] sm:$0xff]
    %v3534 = vld [vmem:[#allocation7 + $0xde0] sm:$0xff]
    %v3535 = vld [vmem:[#allocation7 + $0xde8] sm:$0xff]
    %v3536 = vld [vmem:[#allocation7 + $0xdf0] sm:$0xff]
    %v3537 = vld [vmem:[#allocation7 + $0xdf8] sm:$0xff]
    %v3538 = vld [vmem:[#allocation7 + $0xe00] sm:$0xff]
    %v3539 = vld [vmem:[#allocation7 + $0xe08] sm:$0xff]
    %v3540 = vld [vmem:[#allocation7 + $0xe10] sm:$0xff]
    %v3541 = vld [vmem:[#allocation7 + $0xe18] sm:$0xff]
    %v3542 = vld [vmem:[#allocation7 + $0xe20] sm:$0xff]
    %v3543 = vld [vmem:[#allocation7 + $0xe28] sm:$0xff]
    %v3544 = vld [vmem:[#allocation7 + $0xe30] sm:$0xff]
    %v3545 = vld [vmem:[#allocation7 + $0xe38] sm:$0xff]
    %v3546 = vld [vmem:[#allocation7 + $0xe40] sm:$0xff]
    %v3547 = vld [vmem:[#allocation7 + $0xe48] sm:$0xff]
    %v3548 = vld [vmem:[#allocation7 + $0xe50] sm:$0xff]
    %v3549 = vld [vmem:[#allocation7 + $0xe58] sm:$0xff]
    %v3550 = vld [vmem:[#allocation7 + $0xe60] sm:$0xff]
    %v3551 = vld [vmem:[#allocation7 + $0xe68] sm:$0xff]
    %v3552 = vld [vmem:[#allocation7 + $0xe70] sm:$0xff]
    %v3553 = vld [vmem:[#allocation7 + $0xe78] sm:$0xff]
    %v3554 = vld [vmem:[#allocation7 + $0xe80] sm:$0xff]
    %v3555 = vld [vmem:[#allocation7 + $0xe88] sm:$0xff]
    %v3556 = vld [vmem:[#allocation7 + $0xe90] sm:$0xff]
    %v3557 = vld [vmem:[#allocation7 + $0xe98] sm:$0xff]
    %v3558 = vld [vmem:[#allocation7 + $0xea0] sm:$0xff]
    %v3559 = vld [vmem:[#allocation7 + $0xea8] sm:$0xff]
    %v3560 = vld [vmem:[#allocation7 + $0xeb0] sm:$0xff]
    %v3561 = vld [vmem:[#allocation7 + $0xeb8] sm:$0xff]
    %v3562 = vld [vmem:[#allocation7 + $0xec0] sm:$0xff]
    %v3563 = vld [vmem:[#allocation7 + $0xec8] sm:$0xff]
    %v3564 = vld [vmem:[#allocation7 + $0xed0] sm:$0xff]
    %v3565 = vld [vmem:[#allocation7 + $0xed8] sm:$0xff]
    %v3566 = vld [vmem:[#allocation7 + $0xee0] sm:$0xff]
    %v3567 = vld [vmem:[#allocation7 + $0xee8] sm:$0xff]
    %v3568 = vld [vmem:[#allocation7 + $0xef0] sm:$0xff]
    %v3569 = vld [vmem:[#allocation7 + $0xef8] sm:$0xff]
    %v3570 = vld [vmem:[#allocation7 + $0xf00] sm:$0xff]
    %v3571 = vld [vmem:[#allocation7 + $0xf08] sm:$0xff]
    %v3572 = vld [vmem:[#allocation7 + $0xf10] sm:$0xff]
    %v3573 = vld [vmem:[#allocation7 + $0xf18] sm:$0xff]
    %v3574 = vld [vmem:[#allocation7 + $0xf20] sm:$0xff]
    %v3575 = vld [vmem:[#allocation7 + $0xf28] sm:$0xff]
    %v3576 = vld [vmem:[#allocation7 + $0xf30] sm:$0xff]
    %v3577 = vld [vmem:[#allocation7 + $0xf38] sm:$0xff]
    %v3578 = vld [vmem:[#allocation7 + $0xf40] sm:$0xff]
    %v3579 = vld [vmem:[#allocation7 + $0xf48] sm:$0xff]
    %v3580 = vld [vmem:[#allocation7 + $0xf50] sm:$0xff]
    %v3581 = vld [vmem:[#allocation7 + $0xf58] sm:$0xff]
    %v3582 = vld [vmem:[#allocation7 + $0xf60] sm:$0xff]
    %v3583 = vld [vmem:[#allocation7 + $0xf68] sm:$0xff]
    %v3584 = vld [vmem:[#allocation7 + $0xf70] sm:$0xff]
    %v3585 = vld [vmem:[#allocation7 + $0xf78] sm:$0xff]
    %v3586 = vld [vmem:[#allocation7 + $0xf80] sm:$0xff]
    %v3587 = vld [vmem:[#allocation7 + $0xf88] sm:$0xff]
    %v3588 = vld [vmem:[#allocation7 + $0xf90] sm:$0xff]
    %v3589 = vld [vmem:[#allocation7 + $0xf98] sm:$0xff]
    %v3590 = vld [vmem:[#allocation7 + $0xfa0] sm:$0xff]
    %v3591 = vld [vmem:[#allocation7 + $0xfa8] sm:$0xff]
    %v3592 = vld [vmem:[#allocation7 + $0xfb0] sm:$0xff]
    %v3593 = vld [vmem:[#allocation7 + $0xfb8] sm:$0xff]
    %v3594 = vld [vmem:[#allocation7 + $0xfc0] sm:$0xff]
    %v3595 = vld [vmem:[#allocation7 + $0xfc8] sm:$0xff]
    %v3596 = vld [vmem:[#allocation7 + $0xfd0] sm:$0xff]
    %v3597 = vld [vmem:[#allocation7 + $0xfd8] sm:$0xff]
    %v3598 = vld [vmem:[#allocation7 + $0xfe0] sm:$0xff]
    %v3599 = vld [vmem:[#allocation7 + $0xfe8] sm:$0xff]
    %v3600 = vld [vmem:[#allocation7 + $0xff0] sm:$0xff]
    %v3601 = vld [vmem:[#allocation7 + $0xff8] sm:$0xff]
    %v3602 = vld [vmem:[#allocation8] sm:$0xff]
    %v3604 = vlaneseq
    %v3605 = vshrl.u32 %v3604, 7
    %v3606 = vsub.s32 0, %v3605
    %v3607 = vrot.slane %v3602, %v3606
    %v3608 = vlaneseq
    %v3609 = vshrl.u32 %v3608, 7
    %v3610 = vsub.s32 1, %v3609
    %v3611 = vrot.slane %v3602, %v3610
    %v3612 = vlaneseq
    %v3613 = vshrl.u32 %v3612, 7
    %v3614 = vsub.s32 2, %v3613
    %v3615 = vrot.slane %v3602, %v3614
    %v3616 = vlaneseq
    %v3617 = vshrl.u32 %v3616, 7
    %v3618 = vsub.s32 3, %v3617
    %v3619 = vrot.slane %v3602, %v3618
    %v3620 = vlaneseq
    %v3621 = vshrl.u32 %v3620, 7
    %v3622 = vsub.s32 4, %v3621
    %v3623 = vrot.slane %v3602, %v3622
    %v3624 = vlaneseq
    %v3625 = vshrl.u32 %v3624, 7
    %v3626 = vsub.s32 5, %v3625
    %v3627 = vrot.slane %v3602, %v3626
    %v3628 = vlaneseq
    %v3629 = vshrl.u32 %v3628, 7
    %v3630 = vsub.s32 6, %v3629
    %v3631 = vrot.slane %v3602, %v3630
    %v3632 = vlaneseq
    %v3633 = vshrl.u32 %v3632, 7
    %v3634 = vsub.s32 7, %v3633
    %v3635 = vrot.slane %v3602, %v3634
    %v4156 = vunpack.c.l.b16 %v3090
    %v4157 = vunpack.c.h.b16 %v3090
    %v4158 = vunpack.c.l.b16 %v3091
    %v4159 = vunpack.c.h.b16 %v3091
    %v4160 = vunpack.c.l.b16 %v3092
    %v4161 = vunpack.c.h.b16 %v3092
    %v4162 = vunpack.c.l.b16 %v3093
    %v4163 = vunpack.c.h.b16 %v3093
    %v4164 = vunpack.c.l.b16 %v3094
    %v4165 = vunpack.c.h.b16 %v3094
    %v4166 = vunpack.c.l.b16 %v3095
    %v4167 = vunpack.c.h.b16 %v3095
    %v4168 = vunpack.c.l.b16 %v3096
    %v4169 = vunpack.c.h.b16 %v3096
    %v4170 = vunpack.c.l.b16 %v3097
    %v4171 = vunpack.c.h.b16 %v3097
    %v4172 = vunpack.c.l.b16 %v3098
    %v4173 = vunpack.c.h.b16 %v3098
    %v4174 = vunpack.c.l.b16 %v3099
    %v4175 = vunpack.c.h.b16 %v3099
    %v4176 = vunpack.c.l.b16 %v3100
    %v4177 = vunpack.c.h.b16 %v3100
    %v4178 = vunpack.c.l.b16 %v3101
    %v4179 = vunpack.c.h.b16 %v3101
    %v4180 = vunpack.c.l.b16 %v3102
    %v4181 = vunpack.c.h.b16 %v3102
    %v4182 = vunpack.c.l.b16 %v3103
    %v4183 = vunpack.c.h.b16 %v3103
    %v4184 = vunpack.c.l.b16 %v3104
    %v4185 = vunpack.c.h.b16 %v3104
    %v4186 = vunpack.c.l.b16 %v3105
    %v4187 = vunpack.c.h.b16 %v3105
    %v4188 = vunpack.c.l.b16 %v3106
    %v4189 = vunpack.c.h.b16 %v3106
    %v4190 = vunpack.c.l.b16 %v3107
    %v4191 = vunpack.c.h.b16 %v3107
    %v4192 = vunpack.c.l.b16 %v3108
    %v4193 = vunpack.c.h.b16 %v3108
    %v4194 = vunpack.c.l.b16 %v3109
    %v4195 = vunpack.c.h.b16 %v3109
    %v4196 = vunpack.c.l.b16 %v3110
    %v4197 = vunpack.c.h.b16 %v3110
    %v4198 = vunpack.c.l.b16 %v3111
    %v4199 = vunpack.c.h.b16 %v3111
    %v4200 = vunpack.c.l.b16 %v3112
    %v4201 = vunpack.c.h.b16 %v3112
    %v4202 = vunpack.c.l.b16 %v3113
    %v4203 = vunpack.c.h.b16 %v3113
    %v4204 = vunpack.c.l.b16 %v3114
    %v4205 = vunpack.c.h.b16 %v3114
    %v4206 = vunpack.c.l.b16 %v3115
    %v4207 = vunpack.c.h.b16 %v3115
    %v4208 = vunpack.c.l.b16 %v3116
    %v4209 = vunpack.c.h.b16 %v3116
    %v4210 = vunpack.c.l.b16 %v3117
    %v4211 = vunpack.c.h.b16 %v3117
    %v4212 = vunpack.c.l.b16 %v3118
    %v4213 = vunpack.c.h.b16 %v3118
    %v4214 = vunpack.c.l.b16 %v3119
    %v4215 = vunpack.c.h.b16 %v3119
    %v4216 = vunpack.c.l.b16 %v3120
    %v4217 = vunpack.c.h.b16 %v3120
    %v4218 = vunpack.c.l.b16 %v3121
    %v4219 = vunpack.c.h.b16 %v3121
    %v4220 = vunpack.c.l.b16 %v3122
    %v4221 = vunpack.c.h.b16 %v3122
    %v4222 = vunpack.c.l.b16 %v3123
    %v4223 = vunpack.c.h.b16 %v3123
    %v4224 = vunpack.c.l.b16 %v3124
    %v4225 = vunpack.c.h.b16 %v3124
    %v4226 = vunpack.c.l.b16 %v3125
    %v4227 = vunpack.c.h.b16 %v3125
    %v4228 = vunpack.c.l.b16 %v3126
    %v4229 = vunpack.c.h.b16 %v3126
    %v4230 = vunpack.c.l.b16 %v3127
    %v4231 = vunpack.c.h.b16 %v3127
    %v4232 = vunpack.c.l.b16 %v3128
    %v4233 = vunpack.c.h.b16 %v3128
    %v4234 = vunpack.c.l.b16 %v3129
    %v4235 = vunpack.c.h.b16 %v3129
    %v4236 = vunpack.c.l.b16 %v3130
    %v4237 = vunpack.c.h.b16 %v3130
    %v4238 = vunpack.c.l.b16 %v3131
    %v4239 = vunpack.c.h.b16 %v3131
    %v4240 = vunpack.c.l.b16 %v3132
    %v4241 = vunpack.c.h.b16 %v3132
    %v4242 = vunpack.c.l.b16 %v3133
    %v4243 = vunpack.c.h.b16 %v3133
    %v4244 = vunpack.c.l.b16 %v3134
    %v4245 = vunpack.c.h.b16 %v3134
    %v4246 = vunpack.c.l.b16 %v3135
    %v4247 = vunpack.c.h.b16 %v3135
    %v4248 = vunpack.c.l.b16 %v3136
    %v4249 = vunpack.c.h.b16 %v3136
    %v4250 = vunpack.c.l.b16 %v3137
    %v4251 = vunpack.c.h.b16 %v3137
    %v4252 = vunpack.c.l.b16 %v3138
    %v4253 = vunpack.c.h.b16 %v3138
    %v4254 = vunpack.c.l.b16 %v3139
    %v4255 = vunpack.c.h.b16 %v3139
    %v4256 = vunpack.c.l.b16 %v3140
    %v4257 = vunpack.c.h.b16 %v3140
    %v4258 = vunpack.c.l.b16 %v3141
    %v4259 = vunpack.c.h.b16 %v3141
    %v4260 = vunpack.c.l.b16 %v3142
    %v4261 = vunpack.c.h.b16 %v3142
    %v4262 = vunpack.c.l.b16 %v3143
    %v4263 = vunpack.c.h.b16 %v3143
    %v4264 = vunpack.c.l.b16 %v3144
    %v4265 = vunpack.c.h.b16 %v3144
    %v4266 = vunpack.c.l.b16 %v3145
    %v4267 = vunpack.c.h.b16 %v3145
    %v4268 = vunpack.c.l.b16 %v3146
    %v4269 = vunpack.c.h.b16 %v3146
    %v4270 = vunpack.c.l.b16 %v3147
    %v4271 = vunpack.c.h.b16 %v3147
    %v4272 = vunpack.c.l.b16 %v3148
    %v4273 = vunpack.c.h.b16 %v3148
    %v4274 = vunpack.c.l.b16 %v3149
    %v4275 = vunpack.c.h.b16 %v3149
    %v4276 = vunpack.c.l.b16 %v3150
    %v4277 = vunpack.c.h.b16 %v3150
    %v4278 = vunpack.c.l.b16 %v3151
    %v4279 = vunpack.c.h.b16 %v3151
    %v4280 = vunpack.c.l.b16 %v3152
    %v4281 = vunpack.c.h.b16 %v3152
    %v4282 = vunpack.c.l.b16 %v3153
    %v4283 = vunpack.c.h.b16 %v3153
    %v4284 = vunpack.c.l.b16 %v3154
    %v4285 = vunpack.c.h.b16 %v3154
    %v4286 = vunpack.c.l.b16 %v3155
    %v4287 = vunpack.c.h.b16 %v3155
    %v4288 = vunpack.c.l.b16 %v3156
    %v4289 = vunpack.c.h.b16 %v3156
    %v4290 = vunpack.c.l.b16 %v3157
    %v4291 = vunpack.c.h.b16 %v3157
    %v4292 = vunpack.c.l.b16 %v3158
    %v4293 = vunpack.c.h.b16 %v3158
    %v4294 = vunpack.c.l.b16 %v3159
    %v4295 = vunpack.c.h.b16 %v3159
    %v4296 = vunpack.c.l.b16 %v3160
    %v4297 = vunpack.c.h.b16 %v3160
    %v4298 = vunpack.c.l.b16 %v3161
    %v4299 = vunpack.c.h.b16 %v3161
    %v4300 = vunpack.c.l.b16 %v3162
    %v4301 = vunpack.c.h.b16 %v3162
    %v4302 = vunpack.c.l.b16 %v3163
    %v4303 = vunpack.c.h.b16 %v3163
    %v4304 = vunpack.c.l.b16 %v3164
    %v4305 = vunpack.c.h.b16 %v3164
    %v4306 = vunpack.c.l.b16 %v3165
    %v4307 = vunpack.c.h.b16 %v3165
    %v4308 = vunpack.c.l.b16 %v3166
    %v4309 = vunpack.c.h.b16 %v3166
    %v4310 = vunpack.c.l.b16 %v3167
    %v4311 = vunpack.c.h.b16 %v3167
    %v4312 = vunpack.c.l.b16 %v3168
    %v4313 = vunpack.c.h.b16 %v3168
    %v4314 = vunpack.c.l.b16 %v3169
    %v4315 = vunpack.c.h.b16 %v3169
    %v4316 = vunpack.c.l.b16 %v3170
    %v4317 = vunpack.c.h.b16 %v3170
    %v4318 = vunpack.c.l.b16 %v3171
    %v4319 = vunpack.c.h.b16 %v3171
    %v4320 = vunpack.c.l.b16 %v3172
    %v4321 = vunpack.c.h.b16 %v3172
    %v4322 = vunpack.c.l.b16 %v3173
    %v4323 = vunpack.c.h.b16 %v3173
    %v4324 = vunpack.c.l.b16 %v3174
    %v4325 = vunpack.c.h.b16 %v3174
    %v4326 = vunpack.c.l.b16 %v3175
    %v4327 = vunpack.c.h.b16 %v3175
    %v4328 = vunpack.c.l.b16 %v3176
    %v4329 = vunpack.c.h.b16 %v3176
    %v4330 = vunpack.c.l.b16 %v3177
    %v4331 = vunpack.c.h.b16 %v3177
    %v4332 = vunpack.c.l.b16 %v3178
    %v4333 = vunpack.c.h.b16 %v3178
    %v4334 = vunpack.c.l.b16 %v3179
    %v4335 = vunpack.c.h.b16 %v3179
    %v4336 = vunpack.c.l.b16 %v3180
    %v4337 = vunpack.c.h.b16 %v3180
    %v4338 = vunpack.c.l.b16 %v3181
    %v4339 = vunpack.c.h.b16 %v3181
    %v4340 = vunpack.c.l.b16 %v3182
    %v4341 = vunpack.c.h.b16 %v3182
    %v4342 = vunpack.c.l.b16 %v3183
    %v4343 = vunpack.c.h.b16 %v3183
    %v4344 = vunpack.c.l.b16 %v3184
    %v4345 = vunpack.c.h.b16 %v3184
    %v4346 = vunpack.c.l.b16 %v3185
    %v4347 = vunpack.c.h.b16 %v3185
    %v4348 = vunpack.c.l.b16 %v3186
    %v4349 = vunpack.c.h.b16 %v3186
    %v4350 = vunpack.c.l.b16 %v3187
    %v4351 = vunpack.c.h.b16 %v3187
    %v4352 = vunpack.c.l.b16 %v3188
    %v4353 = vunpack.c.h.b16 %v3188
    %v4354 = vunpack.c.l.b16 %v3189
    %v4355 = vunpack.c.h.b16 %v3189
    %v4356 = vunpack.c.l.b16 %v3190
    %v4357 = vunpack.c.h.b16 %v3190
    %v4358 = vunpack.c.l.b16 %v3191
    %v4359 = vunpack.c.h.b16 %v3191
    %v4360 = vunpack.c.l.b16 %v3192
    %v4361 = vunpack.c.h.b16 %v3192
    %v4362 = vunpack.c.l.b16 %v3193
    %v4363 = vunpack.c.h.b16 %v3193
    %v4364 = vunpack.c.l.b16 %v3194
    %v4365 = vunpack.c.h.b16 %v3194
    %v4366 = vunpack.c.l.b16 %v3195
    %v4367 = vunpack.c.h.b16 %v3195
    %v4368 = vunpack.c.l.b16 %v3196
    %v4369 = vunpack.c.h.b16 %v3196
    %v4370 = vunpack.c.l.b16 %v3197
    %v4371 = vunpack.c.h.b16 %v3197
    %v4372 = vunpack.c.l.b16 %v3198
    %v4373 = vunpack.c.h.b16 %v3198
    %v4374 = vunpack.c.l.b16 %v3199
    %v4375 = vunpack.c.h.b16 %v3199
    %v4376 = vunpack.c.l.b16 %v3200
    %v4377 = vunpack.c.h.b16 %v3200
    %v4378 = vunpack.c.l.b16 %v3201
    %v4379 = vunpack.c.h.b16 %v3201
    %v4380 = vunpack.c.l.b16 %v3202
    %v4381 = vunpack.c.h.b16 %v3202
    %v4382 = vunpack.c.l.b16 %v3203
    %v4383 = vunpack.c.h.b16 %v3203
    %v4384 = vunpack.c.l.b16 %v3204
    %v4385 = vunpack.c.h.b16 %v3204
    %v4386 = vunpack.c.l.b16 %v3205
    %v4387 = vunpack.c.h.b16 %v3205
    %v4388 = vunpack.c.l.b16 %v3206
    %v4389 = vunpack.c.h.b16 %v3206
    %v4390 = vunpack.c.l.b16 %v3207
    %v4391 = vunpack.c.h.b16 %v3207
    %v4392 = vunpack.c.l.b16 %v3208
    %v4393 = vunpack.c.h.b16 %v3208
    %v4394 = vunpack.c.l.b16 %v3209
    %v4395 = vunpack.c.h.b16 %v3209
    %v4396 = vunpack.c.l.b16 %v3210
    %v4397 = vunpack.c.h.b16 %v3210
    %v4398 = vunpack.c.l.b16 %v3211
    %v4399 = vunpack.c.h.b16 %v3211
    %v4400 = vunpack.c.l.b16 %v3212
    %v4401 = vunpack.c.h.b16 %v3212
    %v4402 = vunpack.c.l.b16 %v3213
    %v4403 = vunpack.c.h.b16 %v3213
    %v4404 = vunpack.c.l.b16 %v3214
    %v4405 = vunpack.c.h.b16 %v3214
    %v4406 = vunpack.c.l.b16 %v3215
    %v4407 = vunpack.c.h.b16 %v3215
    %v4408 = vunpack.c.l.b16 %v3216
    %v4409 = vunpack.c.h.b16 %v3216
    %v4410 = vunpack.c.l.b16 %v3217
    %v4411 = vunpack.c.h.b16 %v3217
    %v4412 = vunpack.c.l.b16 %v3218
    %v4413 = vunpack.c.h.b16 %v3218
    %v4414 = vunpack.c.l.b16 %v3219
    %v4415 = vunpack.c.h.b16 %v3219
    %v4416 = vunpack.c.l.b16 %v3220
    %v4417 = vunpack.c.h.b16 %v3220
    %v4418 = vunpack.c.l.b16 %v3221
    %v4419 = vunpack.c.h.b16 %v3221
    %v4420 = vunpack.c.l.b16 %v3222
    %v4421 = vunpack.c.h.b16 %v3222
    %v4422 = vunpack.c.l.b16 %v3223
    %v4423 = vunpack.c.h.b16 %v3223
    %v4424 = vunpack.c.l.b16 %v3224
    %v4425 = vunpack.c.h.b16 %v3224
    %v4426 = vunpack.c.l.b16 %v3225
    %v4427 = vunpack.c.h.b16 %v3225
    %v4428 = vunpack.c.l.b16 %v3226
    %v4429 = vunpack.c.h.b16 %v3226
    %v4430 = vunpack.c.l.b16 %v3227
    %v4431 = vunpack.c.h.b16 %v3227
    %v4432 = vunpack.c.l.b16 %v3228
    %v4433 = vunpack.c.h.b16 %v3228
    %v4434 = vunpack.c.l.b16 %v3229
    %v4435 = vunpack.c.h.b16 %v3229
    %v4436 = vunpack.c.l.b16 %v3230
    %v4437 = vunpack.c.h.b16 %v3230
    %v4438 = vunpack.c.l.b16 %v3231
    %v4439 = vunpack.c.h.b16 %v3231
    %v4440 = vunpack.c.l.b16 %v3232
    %v4441 = vunpack.c.h.b16 %v3232
    %v4442 = vunpack.c.l.b16 %v3233
    %v4443 = vunpack.c.h.b16 %v3233
    %v4444 = vunpack.c.l.b16 %v3234
    %v4445 = vunpack.c.h.b16 %v3234
    %v4446 = vunpack.c.l.b16 %v3235
    %v4447 = vunpack.c.h.b16 %v3235
    %v4448 = vunpack.c.l.b16 %v3236
    %v4449 = vunpack.c.h.b16 %v3236
    %v4450 = vunpack.c.l.b16 %v3237
    %v4451 = vunpack.c.h.b16 %v3237
    %v4452 = vunpack.c.l.b16 %v3238
    %v4453 = vunpack.c.h.b16 %v3238
    %v4454 = vunpack.c.l.b16 %v3239
    %v4455 = vunpack.c.h.b16 %v3239
    %v4456 = vunpack.c.l.b16 %v3240
    %v4457 = vunpack.c.h.b16 %v3240
    %v4458 = vunpack.c.l.b16 %v3241
    %v4459 = vunpack.c.h.b16 %v3241
    %v4460 = vunpack.c.l.b16 %v3242
    %v4461 = vunpack.c.h.b16 %v3242
    %v4462 = vunpack.c.l.b16 %v3243
    %v4463 = vunpack.c.h.b16 %v3243
    %v4464 = vunpack.c.l.b16 %v3244
    %v4465 = vunpack.c.h.b16 %v3244
    %v4466 = vunpack.c.l.b16 %v3245
    %v4467 = vunpack.c.h.b16 %v3245
    %v4468 = vunpack.c.l.b16 %v3246
    %v4469 = vunpack.c.h.b16 %v3246
    %v4470 = vunpack.c.l.b16 %v3247
    %v4471 = vunpack.c.h.b16 %v3247
    %v4472 = vunpack.c.l.b16 %v3248
    %v4473 = vunpack.c.h.b16 %v3248
    %v4474 = vunpack.c.l.b16 %v3249
    %v4475 = vunpack.c.h.b16 %v3249
    %v4476 = vunpack.c.l.b16 %v3250
    %v4477 = vunpack.c.h.b16 %v3250
    %v4478 = vunpack.c.l.b16 %v3251
    %v4479 = vunpack.c.h.b16 %v3251
    %v4480 = vunpack.c.l.b16 %v3252
    %v4481 = vunpack.c.h.b16 %v3252
    %v4482 = vunpack.c.l.b16 %v3253
    %v4483 = vunpack.c.h.b16 %v3253
    %v4484 = vunpack.c.l.b16 %v3254
    %v4485 = vunpack.c.h.b16 %v3254
    %v4486 = vunpack.c.l.b16 %v3255
    %v4487 = vunpack.c.h.b16 %v3255
    %v4488 = vunpack.c.l.b16 %v3256
    %v4489 = vunpack.c.h.b16 %v3256
    %v4490 = vunpack.c.l.b16 %v3257
    %v4491 = vunpack.c.h.b16 %v3257
    %v4492 = vunpack.c.l.b16 %v3258
    %v4493 = vunpack.c.h.b16 %v3258
    %v4494 = vunpack.c.l.b16 %v3259
    %v4495 = vunpack.c.h.b16 %v3259
    %v4496 = vunpack.c.l.b16 %v3260
    %v4497 = vunpack.c.h.b16 %v3260
    %v4498 = vunpack.c.l.b16 %v3261
    %v4499 = vunpack.c.h.b16 %v3261
    %v4500 = vunpack.c.l.b16 %v3262
    %v4501 = vunpack.c.h.b16 %v3262
    %v4502 = vunpack.c.l.b16 %v3263
    %v4503 = vunpack.c.h.b16 %v3263
    %v4504 = vunpack.c.l.b16 %v3264
    %v4505 = vunpack.c.h.b16 %v3264
    %v4506 = vunpack.c.l.b16 %v3265
    %v4507 = vunpack.c.h.b16 %v3265
    %v4508 = vunpack.c.l.b16 %v3266
    %v4509 = vunpack.c.h.b16 %v3266
    %v4510 = vunpack.c.l.b16 %v3267
    %v4511 = vunpack.c.h.b16 %v3267
    %v4512 = vunpack.c.l.b16 %v3268
    %v4513 = vunpack.c.h.b16 %v3268
    %v4514 = vunpack.c.l.b16 %v3269
    %v4515 = vunpack.c.h.b16 %v3269
    %v4516 = vunpack.c.l.b16 %v3270
    %v4517 = vunpack.c.h.b16 %v3270
    %v4518 = vunpack.c.l.b16 %v3271
    %v4519 = vunpack.c.h.b16 %v3271
    %v4520 = vunpack.c.l.b16 %v3272
    %v4521 = vunpack.c.h.b16 %v3272
    %v4522 = vunpack.c.l.b16 %v3273
    %v4523 = vunpack.c.h.b16 %v3273
    %v4524 = vunpack.c.l.b16 %v3274
    %v4525 = vunpack.c.h.b16 %v3274
    %v4526 = vunpack.c.l.b16 %v3275
    %v4527 = vunpack.c.h.b16 %v3275
    %v4528 = vunpack.c.l.b16 %v3276
    %v4529 = vunpack.c.h.b16 %v3276
    %v4530 = vunpack.c.l.b16 %v3277
    %v4531 = vunpack.c.h.b16 %v3277
    %v4532 = vunpack.c.l.b16 %v3278
    %v4533 = vunpack.c.h.b16 %v3278
    %v4534 = vunpack.c.l.b16 %v3279
    %v4535 = vunpack.c.h.b16 %v3279
    %v4536 = vunpack.c.l.b16 %v3280
    %v4537 = vunpack.c.h.b16 %v3280
    %v4538 = vunpack.c.l.b16 %v3281
    %v4539 = vunpack.c.h.b16 %v3281
    %v4540 = vunpack.c.l.b16 %v3282
    %v4541 = vunpack.c.h.b16 %v3282
    %v4542 = vunpack.c.l.b16 %v3283
    %v4543 = vunpack.c.h.b16 %v3283
    %v4544 = vunpack.c.l.b16 %v3284
    %v4545 = vunpack.c.h.b16 %v3284
    %v4546 = vunpack.c.l.b16 %v3285
    %v4547 = vunpack.c.h.b16 %v3285
    %v4548 = vunpack.c.l.b16 %v3286
    %v4549 = vunpack.c.h.b16 %v3286
    %v4550 = vunpack.c.l.b16 %v3287
    %v4551 = vunpack.c.h.b16 %v3287
    %v4552 = vunpack.c.l.b16 %v3288
    %v4553 = vunpack.c.h.b16 %v3288
    %v4554 = vunpack.c.l.b16 %v3289
    %v4555 = vunpack.c.h.b16 %v3289
    %v4556 = vunpack.c.l.b16 %v3290
    %v4557 = vunpack.c.h.b16 %v3290
    %v4558 = vunpack.c.l.b16 %v3291
    %v4559 = vunpack.c.h.b16 %v3291
    %v4560 = vunpack.c.l.b16 %v3292
    %v4561 = vunpack.c.h.b16 %v3292
    %v4562 = vunpack.c.l.b16 %v3293
    %v4563 = vunpack.c.h.b16 %v3293
    %v4564 = vunpack.c.l.b16 %v3294
    %v4565 = vunpack.c.h.b16 %v3294
    %v4566 = vunpack.c.l.b16 %v3295
    %v4567 = vunpack.c.h.b16 %v3295
    %v4568 = vunpack.c.l.b16 %v3296
    %v4569 = vunpack.c.h.b16 %v3296
    %v4570 = vunpack.c.l.b16 %v3297
    %v4571 = vunpack.c.h.b16 %v3297
    %v4572 = vunpack.c.l.b16 %v3298
    %v4573 = vunpack.c.h.b16 %v3298
    %v4574 = vunpack.c.l.b16 %v3299
    %v4575 = vunpack.c.h.b16 %v3299
    %v4576 = vunpack.c.l.b16 %v3300
    %v4577 = vunpack.c.h.b16 %v3300
    %v4578 = vunpack.c.l.b16 %v3301
    %v4579 = vunpack.c.h.b16 %v3301
    %v4580 = vunpack.c.l.b16 %v3302
    %v4581 = vunpack.c.h.b16 %v3302
    %v4582 = vunpack.c.l.b16 %v3303
    %v4583 = vunpack.c.h.b16 %v3303
    %v4584 = vunpack.c.l.b16 %v3304
    %v4585 = vunpack.c.h.b16 %v3304
    %v4586 = vunpack.c.l.b16 %v3305
    %v4587 = vunpack.c.h.b16 %v3305
    %v4588 = vunpack.c.l.b16 %v3306
    %v4589 = vunpack.c.h.b16 %v3306
    %v4590 = vunpack.c.l.b16 %v3307
    %v4591 = vunpack.c.h.b16 %v3307
    %v4592 = vunpack.c.l.b16 %v3308
    %v4593 = vunpack.c.h.b16 %v3308
    %v4594 = vunpack.c.l.b16 %v3309
    %v4595 = vunpack.c.h.b16 %v3309
    %v4596 = vunpack.c.l.b16 %v3310
    %v4597 = vunpack.c.h.b16 %v3310
    %v4598 = vunpack.c.l.b16 %v3311
    %v4599 = vunpack.c.h.b16 %v3311
    %v4600 = vunpack.c.l.b16 %v3312
    %v4601 = vunpack.c.h.b16 %v3312
    %v4602 = vunpack.c.l.b16 %v3313
    %v4603 = vunpack.c.h.b16 %v3313
    %v4604 = vunpack.c.l.b16 %v3314
    %v4605 = vunpack.c.h.b16 %v3314
    %v4606 = vunpack.c.l.b16 %v3315
    %v4607 = vunpack.c.h.b16 %v3315
    %v4608 = vunpack.c.l.b16 %v3316
    %v4609 = vunpack.c.h.b16 %v3316
    %v4610 = vunpack.c.l.b16 %v3317
    %v4611 = vunpack.c.h.b16 %v3317
    %v4612 = vunpack.c.l.b16 %v3318
    %v4613 = vunpack.c.h.b16 %v3318
    %v4614 = vunpack.c.l.b16 %v3319
    %v4615 = vunpack.c.h.b16 %v3319
    %v4616 = vunpack.c.l.b16 %v3320
    %v4617 = vunpack.c.h.b16 %v3320
    %v4618 = vunpack.c.l.b16 %v3321
    %v4619 = vunpack.c.h.b16 %v3321
    %v4620 = vunpack.c.l.b16 %v3322
    %v4621 = vunpack.c.h.b16 %v3322
    %v4622 = vunpack.c.l.b16 %v3323
    %v4623 = vunpack.c.h.b16 %v3323
    %v4624 = vunpack.c.l.b16 %v3324
    %v4625 = vunpack.c.h.b16 %v3324
    %v4626 = vunpack.c.l.b16 %v3325
    %v4627 = vunpack.c.h.b16 %v3325
    %v4628 = vunpack.c.l.b16 %v3326
    %v4629 = vunpack.c.h.b16 %v3326
    %v4630 = vunpack.c.l.b16 %v3327
    %v4631 = vunpack.c.h.b16 %v3327
    %v4632 = vunpack.c.l.b16 %v3328
    %v4633 = vunpack.c.h.b16 %v3328
    %v4634 = vunpack.c.l.b16 %v3329
    %v4635 = vunpack.c.h.b16 %v3329
    %v4636 = vunpack.c.l.b16 %v3330
    %v4637 = vunpack.c.h.b16 %v3330
    %v4638 = vunpack.c.l.b16 %v3331
    %v4639 = vunpack.c.h.b16 %v3331
    %v4640 = vunpack.c.l.b16 %v3332
    %v4641 = vunpack.c.h.b16 %v3332
    %v4642 = vunpack.c.l.b16 %v3333
    %v4643 = vunpack.c.h.b16 %v3333
    %v4644 = vunpack.c.l.b16 %v3334
    %v4645 = vunpack.c.h.b16 %v3334
    %v4646 = vunpack.c.l.b16 %v3335
    %v4647 = vunpack.c.h.b16 %v3335
    %v4648 = vunpack.c.l.b16 %v3336
    %v4649 = vunpack.c.h.b16 %v3336
    %v4650 = vunpack.c.l.b16 %v3337
    %v4651 = vunpack.c.h.b16 %v3337
    %v4652 = vunpack.c.l.b16 %v3338
    %v4653 = vunpack.c.h.b16 %v3338
    %v4654 = vunpack.c.l.b16 %v3339
    %v4655 = vunpack.c.h.b16 %v3339
    %v4656 = vunpack.c.l.b16 %v3340
    %v4657 = vunpack.c.h.b16 %v3340
    %v4658 = vunpack.c.l.b16 %v3341
    %v4659 = vunpack.c.h.b16 %v3341
    %v4660 = vunpack.c.l.b16 %v3342
    %v4661 = vunpack.c.h.b16 %v3342
    %v4662 = vunpack.c.l.b16 %v3343
    %v4663 = vunpack.c.h.b16 %v3343
    %v4664 = vunpack.c.l.b16 %v3344
    %v4665 = vunpack.c.h.b16 %v3344
    %v4666 = vunpack.c.l.b16 %v3345
    %v4667 = vunpack.c.h.b16 %v3345
    %v4668 = vunpack.c.l.b16 %v3346
    %v4669 = vunpack.c.h.b16 %v3346
    %v4670 = vunpack.c.l.b16 %v3347
    %v4671 = vunpack.c.h.b16 %v3347
    %v4672 = vunpack.c.l.b16 %v3348
    %v4673 = vunpack.c.h.b16 %v3348
    %v4674 = vunpack.c.l.b16 %v3349
    %v4675 = vunpack.c.h.b16 %v3349
    %v4676 = vunpack.c.l.b16 %v3350
    %v4677 = vunpack.c.h.b16 %v3350
    %v4678 = vunpack.c.l.b16 %v3351
    %v4679 = vunpack.c.h.b16 %v3351
    %v4680 = vunpack.c.l.b16 %v3352
    %v4681 = vunpack.c.h.b16 %v3352
    %v4682 = vunpack.c.l.b16 %v3353
    %v4683 = vunpack.c.h.b16 %v3353
    %v4684 = vunpack.c.l.b16 %v3354
    %v4685 = vunpack.c.h.b16 %v3354
    %v4686 = vunpack.c.l.b16 %v3355
    %v4687 = vunpack.c.h.b16 %v3355
    %v4688 = vunpack.c.l.b16 %v3356
    %v4689 = vunpack.c.h.b16 %v3356
    %v4690 = vunpack.c.l.b16 %v3357
    %v4691 = vunpack.c.h.b16 %v3357
    %v4692 = vunpack.c.l.b16 %v3358
    %v4693 = vunpack.c.h.b16 %v3358
    %v4694 = vunpack.c.l.b16 %v3359
    %v4695 = vunpack.c.h.b16 %v3359
    %v4696 = vunpack.c.l.b16 %v3360
    %v4697 = vunpack.c.h.b16 %v3360
    %v4698 = vunpack.c.l.b16 %v3361
    %v4699 = vunpack.c.h.b16 %v3361
    %v4700 = vunpack.c.l.b16 %v3362
    %v4701 = vunpack.c.h.b16 %v3362
    %v4702 = vunpack.c.l.b16 %v3363
    %v4703 = vunpack.c.h.b16 %v3363
    %v4704 = vunpack.c.l.b16 %v3364
    %v4705 = vunpack.c.h.b16 %v3364
    %v4706 = vunpack.c.l.b16 %v3365
    %v4707 = vunpack.c.h.b16 %v3365
    %v4708 = vunpack.c.l.b16 %v3366
    %v4709 = vunpack.c.h.b16 %v3366
    %v4710 = vunpack.c.l.b16 %v3367
    %v4711 = vunpack.c.h.b16 %v3367
    %v4712 = vunpack.c.l.b16 %v3368
    %v4713 = vunpack.c.h.b16 %v3368
    %v4714 = vunpack.c.l.b16 %v3369
    %v4715 = vunpack.c.h.b16 %v3369
    %v4716 = vunpack.c.l.b16 %v3370
    %v4717 = vunpack.c.h.b16 %v3370
    %v4718 = vunpack.c.l.b16 %v3371
    %v4719 = vunpack.c.h.b16 %v3371
    %v4720 = vunpack.c.l.b16 %v3372
    %v4721 = vunpack.c.h.b16 %v3372
    %v4722 = vunpack.c.l.b16 %v3373
    %v4723 = vunpack.c.h.b16 %v3373
    %v4724 = vunpack.c.l.b16 %v3374
    %v4725 = vunpack.c.h.b16 %v3374
    %v4726 = vunpack.c.l.b16 %v3375
    %v4727 = vunpack.c.h.b16 %v3375
    %v4728 = vunpack.c.l.b16 %v3376
    %v4729 = vunpack.c.h.b16 %v3376
    %v4730 = vunpack.c.l.b16 %v3377
    %v4731 = vunpack.c.h.b16 %v3377
    %v4732 = vunpack.c.l.b16 %v3378
    %v4733 = vunpack.c.h.b16 %v3378
    %v4734 = vunpack.c.l.b16 %v3379
    %v4735 = vunpack.c.h.b16 %v3379
    %v4736 = vunpack.c.l.b16 %v3380
    %v4737 = vunpack.c.h.b16 %v3380
    %v4738 = vunpack.c.l.b16 %v3381
    %v4739 = vunpack.c.h.b16 %v3381
    %v4740 = vunpack.c.l.b16 %v3382
    %v4741 = vunpack.c.h.b16 %v3382
    %v4742 = vunpack.c.l.b16 %v3383
    %v4743 = vunpack.c.h.b16 %v3383
    %v4744 = vunpack.c.l.b16 %v3384
    %v4745 = vunpack.c.h.b16 %v3384
    %v4746 = vunpack.c.l.b16 %v3385
    %v4747 = vunpack.c.h.b16 %v3385
    %v4748 = vunpack.c.l.b16 %v3386
    %v4749 = vunpack.c.h.b16 %v3386
    %v4750 = vunpack.c.l.b16 %v3387
    %v4751 = vunpack.c.h.b16 %v3387
    %v4752 = vunpack.c.l.b16 %v3388
    %v4753 = vunpack.c.h.b16 %v3388
    %v4754 = vunpack.c.l.b16 %v3389
    %v4755 = vunpack.c.h.b16 %v3389
    %v4756 = vunpack.c.l.b16 %v3390
    %v4757 = vunpack.c.h.b16 %v3390
    %v4758 = vunpack.c.l.b16 %v3391
    %v4759 = vunpack.c.h.b16 %v3391
    %v4760 = vunpack.c.l.b16 %v3392
    %v4761 = vunpack.c.h.b16 %v3392
    %v4762 = vunpack.c.l.b16 %v3393
    %v4763 = vunpack.c.h.b16 %v3393
    %v4764 = vunpack.c.l.b16 %v3394
    %v4765 = vunpack.c.h.b16 %v3394
    %v4766 = vunpack.c.l.b16 %v3395
    %v4767 = vunpack.c.h.b16 %v3395
    %v4768 = vunpack.c.l.b16 %v3396
    %v4769 = vunpack.c.h.b16 %v3396
    %v4770 = vunpack.c.l.b16 %v3397
    %v4771 = vunpack.c.h.b16 %v3397
    %v4772 = vunpack.c.l.b16 %v3398
    %v4773 = vunpack.c.h.b16 %v3398
    %v4774 = vunpack.c.l.b16 %v3399
    %v4775 = vunpack.c.h.b16 %v3399
    %v4776 = vunpack.c.l.b16 %v3400
    %v4777 = vunpack.c.h.b16 %v3400
    %v4778 = vunpack.c.l.b16 %v3401
    %v4779 = vunpack.c.h.b16 %v3401
    %v4780 = vunpack.c.l.b16 %v3402
    %v4781 = vunpack.c.h.b16 %v3402
    %v4782 = vunpack.c.l.b16 %v3403
    %v4783 = vunpack.c.h.b16 %v3403
    %v4784 = vunpack.c.l.b16 %v3404
    %v4785 = vunpack.c.h.b16 %v3404
    %v4786 = vunpack.c.l.b16 %v3405
    %v4787 = vunpack.c.h.b16 %v3405
    %v4788 = vunpack.c.l.b16 %v3406
    %v4789 = vunpack.c.h.b16 %v3406
    %v4790 = vunpack.c.l.b16 %v3407
    %v4791 = vunpack.c.h.b16 %v3407
    %v4792 = vunpack.c.l.b16 %v3408
    %v4793 = vunpack.c.h.b16 %v3408
    %v4794 = vunpack.c.l.b16 %v3409
    %v4795 = vunpack.c.h.b16 %v3409
    %v4796 = vunpack.c.l.b16 %v3410
    %v4797 = vunpack.c.h.b16 %v3410
    %v4798 = vunpack.c.l.b16 %v3411
    %v4799 = vunpack.c.h.b16 %v3411
    %v4800 = vunpack.c.l.b16 %v3412
    %v4801 = vunpack.c.h.b16 %v3412
    %v4802 = vunpack.c.l.b16 %v3413
    %v4803 = vunpack.c.h.b16 %v3413
    %v4804 = vunpack.c.l.b16 %v3414
    %v4805 = vunpack.c.h.b16 %v3414
    %v4806 = vunpack.c.l.b16 %v3415
    %v4807 = vunpack.c.h.b16 %v3415
    %v4808 = vunpack.c.l.b16 %v3416
    %v4809 = vunpack.c.h.b16 %v3416
    %v4810 = vunpack.c.l.b16 %v3417
    %v4811 = vunpack.c.h.b16 %v3417
    %v4812 = vunpack.c.l.b16 %v3418
    %v4813 = vunpack.c.h.b16 %v3418
    %v4814 = vunpack.c.l.b16 %v3419
    %v4815 = vunpack.c.h.b16 %v3419
    %v4816 = vunpack.c.l.b16 %v3420
    %v4817 = vunpack.c.h.b16 %v3420
    %v4818 = vunpack.c.l.b16 %v3421
    %v4819 = vunpack.c.h.b16 %v3421
    %v4820 = vunpack.c.l.b16 %v3422
    %v4821 = vunpack.c.h.b16 %v3422
    %v4822 = vunpack.c.l.b16 %v3423
    %v4823 = vunpack.c.h.b16 %v3423
    %v4824 = vunpack.c.l.b16 %v3424
    %v4825 = vunpack.c.h.b16 %v3424
    %v4826 = vunpack.c.l.b16 %v3425
    %v4827 = vunpack.c.h.b16 %v3425
    %v4828 = vunpack.c.l.b16 %v3426
    %v4829 = vunpack.c.h.b16 %v3426
    %v4830 = vunpack.c.l.b16 %v3427
    %v4831 = vunpack.c.h.b16 %v3427
    %v4832 = vunpack.c.l.b16 %v3428
    %v4833 = vunpack.c.h.b16 %v3428
    %v4834 = vunpack.c.l.b16 %v3429
    %v4835 = vunpack.c.h.b16 %v3429
    %v4836 = vunpack.c.l.b16 %v3430
    %v4837 = vunpack.c.h.b16 %v3430
    %v4838 = vunpack.c.l.b16 %v3431
    %v4839 = vunpack.c.h.b16 %v3431
    %v4840 = vunpack.c.l.b16 %v3432
    %v4841 = vunpack.c.h.b16 %v3432
    %v4842 = vunpack.c.l.b16 %v3433
    %v4843 = vunpack.c.h.b16 %v3433
    %v4844 = vunpack.c.l.b16 %v3434
    %v4845 = vunpack.c.h.b16 %v3434
    %v4846 = vunpack.c.l.b16 %v3435
    %v4847 = vunpack.c.h.b16 %v3435
    %v4848 = vunpack.c.l.b16 %v3436
    %v4849 = vunpack.c.h.b16 %v3436
    %v4850 = vunpack.c.l.b16 %v3437
    %v4851 = vunpack.c.h.b16 %v3437
    %v4852 = vunpack.c.l.b16 %v3438
    %v4853 = vunpack.c.h.b16 %v3438
    %v4854 = vunpack.c.l.b16 %v3439
    %v4855 = vunpack.c.h.b16 %v3439
    %v4856 = vunpack.c.l.b16 %v3440
    %v4857 = vunpack.c.h.b16 %v3440
    %v4858 = vunpack.c.l.b16 %v3441
    %v4859 = vunpack.c.h.b16 %v3441
    %v4860 = vunpack.c.l.b16 %v3442
    %v4861 = vunpack.c.h.b16 %v3442
    %v4862 = vunpack.c.l.b16 %v3443
    %v4863 = vunpack.c.h.b16 %v3443
    %v4864 = vunpack.c.l.b16 %v3444
    %v4865 = vunpack.c.h.b16 %v3444
    %v4866 = vunpack.c.l.b16 %v3445
    %v4867 = vunpack.c.h.b16 %v3445
    %v4868 = vunpack.c.l.b16 %v3446
    %v4869 = vunpack.c.h.b16 %v3446
    %v4870 = vunpack.c.l.b16 %v3447
    %v4871 = vunpack.c.h.b16 %v3447
    %v4872 = vunpack.c.l.b16 %v3448
    %v4873 = vunpack.c.h.b16 %v3448
    %v4874 = vunpack.c.l.b16 %v3449
    %v4875 = vunpack.c.h.b16 %v3449
    %v4876 = vunpack.c.l.b16 %v3450
    %v4877 = vunpack.c.h.b16 %v3450
    %v4878 = vunpack.c.l.b16 %v3451
    %v4879 = vunpack.c.h.b16 %v3451
    %v4880 = vunpack.c.l.b16 %v3452
    %v4881 = vunpack.c.h.b16 %v3452
    %v4882 = vunpack.c.l.b16 %v3453
    %v4883 = vunpack.c.h.b16 %v3453
    %v4884 = vunpack.c.l.b16 %v3454
    %v4885 = vunpack.c.h.b16 %v3454
    %v4886 = vunpack.c.l.b16 %v3455
    %v4887 = vunpack.c.h.b16 %v3455
    %v4888 = vunpack.c.l.b16 %v3456
    %v4889 = vunpack.c.h.b16 %v3456
    %v4890 = vunpack.c.l.b16 %v3457
    %v4891 = vunpack.c.h.b16 %v3457
    %v4892 = vunpack.c.l.b16 %v3458
    %v4893 = vunpack.c.h.b16 %v3458
    %v4894 = vunpack.c.l.b16 %v3459
    %v4895 = vunpack.c.h.b16 %v3459
    %v4896 = vunpack.c.l.b16 %v3460
    %v4897 = vunpack.c.h.b16 %v3460
    %v4898 = vunpack.c.l.b16 %v3461
    %v4899 = vunpack.c.h.b16 %v3461
    %v4900 = vunpack.c.l.b16 %v3462
    %v4901 = vunpack.c.h.b16 %v3462
    %v4902 = vunpack.c.l.b16 %v3463
    %v4903 = vunpack.c.h.b16 %v3463
    %v4904 = vunpack.c.l.b16 %v3464
    %v4905 = vunpack.c.h.b16 %v3464
    %v4906 = vunpack.c.l.b16 %v3465
    %v4907 = vunpack.c.h.b16 %v3465
    %v4908 = vunpack.c.l.b16 %v3466
    %v4909 = vunpack.c.h.b16 %v3466
    %v4910 = vunpack.c.l.b16 %v3467
    %v4911 = vunpack.c.h.b16 %v3467
    %v4912 = vunpack.c.l.b16 %v3468
    %v4913 = vunpack.c.h.b16 %v3468
    %v4914 = vunpack.c.l.b16 %v3469
    %v4915 = vunpack.c.h.b16 %v3469
    %v4916 = vunpack.c.l.b16 %v3470
    %v4917 = vunpack.c.h.b16 %v3470
    %v4918 = vunpack.c.l.b16 %v3471
    %v4919 = vunpack.c.h.b16 %v3471
    %v4920 = vunpack.c.l.b16 %v3472
    %v4921 = vunpack.c.h.b16 %v3472
    %v4922 = vunpack.c.l.b16 %v3473
    %v4923 = vunpack.c.h.b16 %v3473
    %v4924 = vunpack.c.l.b16 %v3474
    %v4925 = vunpack.c.h.b16 %v3474
    %v4926 = vunpack.c.l.b16 %v3475
    %v4927 = vunpack.c.h.b16 %v3475
    %v4928 = vunpack.c.l.b16 %v3476
    %v4929 = vunpack.c.h.b16 %v3476
    %v4930 = vunpack.c.l.b16 %v3477
    %v4931 = vunpack.c.h.b16 %v3477
    %v4932 = vunpack.c.l.b16 %v3478
    %v4933 = vunpack.c.h.b16 %v3478
    %v4934 = vunpack.c.l.b16 %v3479
    %v4935 = vunpack.c.h.b16 %v3479
    %v4936 = vunpack.c.l.b16 %v3480
    %v4937 = vunpack.c.h.b16 %v3480
    %v4938 = vunpack.c.l.b16 %v3481
    %v4939 = vunpack.c.h.b16 %v3481
    %v4940 = vunpack.c.l.b16 %v3482
    %v4941 = vunpack.c.h.b16 %v3482
    %v4942 = vunpack.c.l.b16 %v3483
    %v4943 = vunpack.c.h.b16 %v3483
    %v4944 = vunpack.c.l.b16 %v3484
    %v4945 = vunpack.c.h.b16 %v3484
    %v4946 = vunpack.c.l.b16 %v3485
    %v4947 = vunpack.c.h.b16 %v3485
    %v4948 = vunpack.c.l.b16 %v3486
    %v4949 = vunpack.c.h.b16 %v3486
    %v4950 = vunpack.c.l.b16 %v3487
    %v4951 = vunpack.c.h.b16 %v3487
    %v4952 = vunpack.c.l.b16 %v3488
    %v4953 = vunpack.c.h.b16 %v3488
    %v4954 = vunpack.c.l.b16 %v3489
    %v4955 = vunpack.c.h.b16 %v3489
    %v4956 = vunpack.c.l.b16 %v3490
    %v4957 = vunpack.c.h.b16 %v3490
    %v4958 = vunpack.c.l.b16 %v3491
    %v4959 = vunpack.c.h.b16 %v3491
    %v4960 = vunpack.c.l.b16 %v3492
    %v4961 = vunpack.c.h.b16 %v3492
    %v4962 = vunpack.c.l.b16 %v3493
    %v4963 = vunpack.c.h.b16 %v3493
    %v4964 = vunpack.c.l.b16 %v3494
    %v4965 = vunpack.c.h.b16 %v3494
    %v4966 = vunpack.c.l.b16 %v3495
    %v4967 = vunpack.c.h.b16 %v3495
    %v4968 = vunpack.c.l.b16 %v3496
    %v4969 = vunpack.c.h.b16 %v3496
    %v4970 = vunpack.c.l.b16 %v3497
    %v4971 = vunpack.c.h.b16 %v3497
    %v4972 = vunpack.c.l.b16 %v3498
    %v4973 = vunpack.c.h.b16 %v3498
    %v4974 = vunpack.c.l.b16 %v3499
    %v4975 = vunpack.c.h.b16 %v3499
    %v4976 = vunpack.c.l.b16 %v3500
    %v4977 = vunpack.c.h.b16 %v3500
    %v4978 = vunpack.c.l.b16 %v3501
    %v4979 = vunpack.c.h.b16 %v3501
    %v4980 = vunpack.c.l.b16 %v3502
    %v4981 = vunpack.c.h.b16 %v3502
    %v4982 = vunpack.c.l.b16 %v3503
    %v4983 = vunpack.c.h.b16 %v3503
    %v4984 = vunpack.c.l.b16 %v3504
    %v4985 = vunpack.c.h.b16 %v3504
    %v4986 = vunpack.c.l.b16 %v3505
    %v4987 = vunpack.c.h.b16 %v3505
    %v4988 = vunpack.c.l.b16 %v3506
    %v4989 = vunpack.c.h.b16 %v3506
    %v4990 = vunpack.c.l.b16 %v3507
    %v4991 = vunpack.c.h.b16 %v3507
    %v4992 = vunpack.c.l.b16 %v3508
    %v4993 = vunpack.c.h.b16 %v3508
    %v4994 = vunpack.c.l.b16 %v3509
    %v4995 = vunpack.c.h.b16 %v3509
    %v4996 = vunpack.c.l.b16 %v3510
    %v4997 = vunpack.c.h.b16 %v3510
    %v4998 = vunpack.c.l.b16 %v3511
    %v4999 = vunpack.c.h.b16 %v3511
    %v5000 = vunpack.c.l.b16 %v3512
    %v5001 = vunpack.c.h.b16 %v3512
    %v5002 = vunpack.c.l.b16 %v3513
    %v5003 = vunpack.c.h.b16 %v3513
    %v5004 = vunpack.c.l.b16 %v3514
    %v5005 = vunpack.c.h.b16 %v3514
    %v5006 = vunpack.c.l.b16 %v3515
    %v5007 = vunpack.c.h.b16 %v3515
    %v5008 = vunpack.c.l.b16 %v3516
    %v5009 = vunpack.c.h.b16 %v3516
    %v5010 = vunpack.c.l.b16 %v3517
    %v5011 = vunpack.c.h.b16 %v3517
    %v5012 = vunpack.c.l.b16 %v3518
    %v5013 = vunpack.c.h.b16 %v3518
    %v5014 = vunpack.c.l.b16 %v3519
    %v5015 = vunpack.c.h.b16 %v3519
    %v5016 = vunpack.c.l.b16 %v3520
    %v5017 = vunpack.c.h.b16 %v3520
    %v5018 = vunpack.c.l.b16 %v3521
    %v5019 = vunpack.c.h.b16 %v3521
    %v5020 = vunpack.c.l.b16 %v3522
    %v5021 = vunpack.c.h.b16 %v3522
    %v5022 = vunpack.c.l.b16 %v3523
    %v5023 = vunpack.c.h.b16 %v3523
    %v5024 = vunpack.c.l.b16 %v3524
    %v5025 = vunpack.c.h.b16 %v3524
    %v5026 = vunpack.c.l.b16 %v3525
    %v5027 = vunpack.c.h.b16 %v3525
    %v5028 = vunpack.c.l.b16 %v3526
    %v5029 = vunpack.c.h.b16 %v3526
    %v5030 = vunpack.c.l.b16 %v3527
    %v5031 = vunpack.c.h.b16 %v3527
    %v5032 = vunpack.c.l.b16 %v3528
    %v5033 = vunpack.c.h.b16 %v3528
    %v5034 = vunpack.c.l.b16 %v3529
    %v5035 = vunpack.c.h.b16 %v3529
    %v5036 = vunpack.c.l.b16 %v3530
    %v5037 = vunpack.c.h.b16 %v3530
    %v5038 = vunpack.c.l.b16 %v3531
    %v5039 = vunpack.c.h.b16 %v3531
    %v5040 = vunpack.c.l.b16 %v3532
    %v5041 = vunpack.c.h.b16 %v3532
    %v5042 = vunpack.c.l.b16 %v3533
    %v5043 = vunpack.c.h.b16 %v3533
    %v5044 = vunpack.c.l.b16 %v3534
    %v5045 = vunpack.c.h.b16 %v3534
    %v5046 = vunpack.c.l.b16 %v3535
    %v5047 = vunpack.c.h.b16 %v3535
    %v5048 = vunpack.c.l.b16 %v3536
    %v5049 = vunpack.c.h.b16 %v3536
    %v5050 = vunpack.c.l.b16 %v3537
    %v5051 = vunpack.c.h.b16 %v3537
    %v5052 = vunpack.c.l.b16 %v3538
    %v5053 = vunpack.c.h.b16 %v3538
    %v5054 = vunpack.c.l.b16 %v3539
    %v5055 = vunpack.c.h.b16 %v3539
    %v5056 = vunpack.c.l.b16 %v3540
    %v5057 = vunpack.c.h.b16 %v3540
    %v5058 = vunpack.c.l.b16 %v3541
    %v5059 = vunpack.c.h.b16 %v3541
    %v5060 = vunpack.c.l.b16 %v3542
    %v5061 = vunpack.c.h.b16 %v3542
    %v5062 = vunpack.c.l.b16 %v3543
    %v5063 = vunpack.c.h.b16 %v3543
    %v5064 = vunpack.c.l.b16 %v3544
    %v5065 = vunpack.c.h.b16 %v3544
    %v5066 = vunpack.c.l.b16 %v3545
    %v5067 = vunpack.c.h.b16 %v3545
    %v5068 = vunpack.c.l.b16 %v3546
    %v5069 = vunpack.c.h.b16 %v3546
    %v5070 = vunpack.c.l.b16 %v3547
    %v5071 = vunpack.c.h.b16 %v3547
    %v5072 = vunpack.c.l.b16 %v3548
    %v5073 = vunpack.c.h.b16 %v3548
    %v5074 = vunpack.c.l.b16 %v3549
    %v5075 = vunpack.c.h.b16 %v3549
    %v5076 = vunpack.c.l.b16 %v3550
    %v5077 = vunpack.c.h.b16 %v3550
    %v5078 = vunpack.c.l.b16 %v3551
    %v5079 = vunpack.c.h.b16 %v3551
    %v5080 = vunpack.c.l.b16 %v3552
    %v5081 = vunpack.c.h.b16 %v3552
    %v5082 = vunpack.c.l.b16 %v3553
    %v5083 = vunpack.c.h.b16 %v3553
    %v5084 = vunpack.c.l.b16 %v3554
    %v5085 = vunpack.c.h.b16 %v3554
    %v5086 = vunpack.c.l.b16 %v3555
    %v5087 = vunpack.c.h.b16 %v3555
    %v5088 = vunpack.c.l.b16 %v3556
    %v5089 = vunpack.c.h.b16 %v3556
    %v5090 = vunpack.c.l.b16 %v3557
    %v5091 = vunpack.c.h.b16 %v3557
    %v5092 = vunpack.c.l.b16 %v3558
    %v5093 = vunpack.c.h.b16 %v3558
    %v5094 = vunpack.c.l.b16 %v3559
    %v5095 = vunpack.c.h.b16 %v3559
    %v5096 = vunpack.c.l.b16 %v3560
    %v5097 = vunpack.c.h.b16 %v3560
    %v5098 = vunpack.c.l.b16 %v3561
    %v5099 = vunpack.c.h.b16 %v3561
    %v5100 = vunpack.c.l.b16 %v3562
    %v5101 = vunpack.c.h.b16 %v3562
    %v5102 = vunpack.c.l.b16 %v3563
    %v5103 = vunpack.c.h.b16 %v3563
    %v5104 = vunpack.c.l.b16 %v3564
    %v5105 = vunpack.c.h.b16 %v3564
    %v5106 = vunpack.c.l.b16 %v3565
    %v5107 = vunpack.c.h.b16 %v3565
    %v5108 = vunpack.c.l.b16 %v3566
    %v5109 = vunpack.c.h.b16 %v3566
    %v5110 = vunpack.c.l.b16 %v3567
    %v5111 = vunpack.c.h.b16 %v3567
    %v5112 = vunpack.c.l.b16 %v3568
    %v5113 = vunpack.c.h.b16 %v3568
    %v5114 = vunpack.c.l.b16 %v3569
    %v5115 = vunpack.c.h.b16 %v3569
    %v5116 = vunpack.c.l.b16 %v3570
    %v5117 = vunpack.c.h.b16 %v3570
    %v5118 = vunpack.c.l.b16 %v3571
    %v5119 = vunpack.c.h.b16 %v3571
    %v5120 = vunpack.c.l.b16 %v3572
    %v5121 = vunpack.c.h.b16 %v3572
    %v5122 = vunpack.c.l.b16 %v3573
    %v5123 = vunpack.c.h.b16 %v3573
    %v5124 = vunpack.c.l.b16 %v3574
    %v5125 = vunpack.c.h.b16 %v3574
    %v5126 = vunpack.c.l.b16 %v3575
    %v5127 = vunpack.c.h.b16 %v3575
    %v5128 = vunpack.c.l.b16 %v3576
    %v5129 = vunpack.c.h.b16 %v3576
    %v5130 = vunpack.c.l.b16 %v3577
    %v5131 = vunpack.c.h.b16 %v3577
    %v5132 = vunpack.c.l.b16 %v3578
    %v5133 = vunpack.c.h.b16 %v3578
    %v5134 = vunpack.c.l.b16 %v3579
    %v5135 = vunpack.c.h.b16 %v3579
    %v5136 = vunpack.c.l.b16 %v3580
    %v5137 = vunpack.c.h.b16 %v3580
    %v5138 = vunpack.c.l.b16 %v3581
    %v5139 = vunpack.c.h.b16 %v3581
    %v5140 = vunpack.c.l.b16 %v3582
    %v5141 = vunpack.c.h.b16 %v3582
    %v5142 = vunpack.c.l.b16 %v3583
    %v5143 = vunpack.c.h.b16 %v3583
    %v5144 = vunpack.c.l.b16 %v3584
    %v5145 = vunpack.c.h.b16 %v3584
    %v5146 = vunpack.c.l.b16 %v3585
    %v5147 = vunpack.c.h.b16 %v3585
    %v5148 = vunpack.c.l.b16 %v3586
    %v5149 = vunpack.c.h.b16 %v3586
    %v5150 = vunpack.c.l.b16 %v3587
    %v5151 = vunpack.c.h.b16 %v3587
    %v5152 = vunpack.c.l.b16 %v3588
    %v5153 = vunpack.c.h.b16 %v3588
    %v5154 = vunpack.c.l.b16 %v3589
    %v5155 = vunpack.c.h.b16 %v3589
    %v5156 = vunpack.c.l.b16 %v3590
    %v5157 = vunpack.c.h.b16 %v3590
    %v5158 = vunpack.c.l.b16 %v3591
    %v5159 = vunpack.c.h.b16 %v3591
    %v5160 = vunpack.c.l.b16 %v3592
    %v5161 = vunpack.c.h.b16 %v3592
    %v5162 = vunpack.c.l.b16 %v3593
    %v5163 = vunpack.c.h.b16 %v3593
    %v5164 = vunpack.c.l.b16 %v3594
    %v5165 = vunpack.c.h.b16 %v3594
    %v5166 = vunpack.c.l.b16 %v3595
    %v5167 = vunpack.c.h.b16 %v3595
    %v5168 = vunpack.c.l.b16 %v3596
    %v5169 = vunpack.c.h.b16 %v3596
    %v5170 = vunpack.c.l.b16 %v3597
    %v5171 = vunpack.c.h.b16 %v3597
    %v5172 = vunpack.c.l.b16 %v3598
    %v5173 = vunpack.c.h.b16 %v3598
    %v5174 = vunpack.c.l.b16 %v3599
    %v5175 = vunpack.c.h.b16 %v3599
    %v5176 = vunpack.c.l.b16 %v3600
    %v5177 = vunpack.c.h.b16 %v3600
    %v5178 = vunpack.c.l.b16 %v3601
    %v5179 = vunpack.c.h.b16 %v3601
    %v5180 = vpack.c.b16 %v4164, %v4156
    %v5181 = vpack.c.b16 %v4165, %v4157
    %v5182 = vpack.c.b16 %v4166, %v4158
    %v5183 = vpack.c.b16 %v4167, %v4159
    %v5184 = vpack.c.b16 %v4168, %v4160
    %v5185 = vpack.c.b16 %v4169, %v4161
    %v5186 = vpack.c.b16 %v4170, %v4162
    %v5187 = vpack.c.b16 %v4171, %v4163
    %v5188 = vpack.c.b16 %v4180, %v4172
    %v5189 = vpack.c.b16 %v4181, %v4173
    %v5190 = vpack.c.b16 %v4182, %v4174
    %v5191 = vpack.c.b16 %v4183, %v4175
    %v5192 = vpack.c.b16 %v4184, %v4176
    %v5193 = vpack.c.b16 %v4185, %v4177
    %v5194 = vpack.c.b16 %v4186, %v4178
    %v5195 = vpack.c.b16 %v4187, %v4179
    %v5196 = vpack.c.b16 %v4196, %v4188
    %v5197 = vpack.c.b16 %v4197, %v4189
    %v5198 = vpack.c.b16 %v4198, %v4190
    %v5199 = vpack.c.b16 %v4199, %v4191
    %v5200 = vpack.c.b16 %v4200, %v4192
    %v5201 = vpack.c.b16 %v4201, %v4193
    %v5202 = vpack.c.b16 %v4202, %v4194
    %v5203 = vpack.c.b16 %v4203, %v4195
    %v5204 = vpack.c.b16 %v4212, %v4204
    %v5205 = vpack.c.b16 %v4213, %v4205
    %v5206 = vpack.c.b16 %v4214, %v4206
    %v5207 = vpack.c.b16 %v4215, %v4207
    %v5208 = vpack.c.b16 %v4216, %v4208
    %v5209 = vpack.c.b16 %v4217, %v4209
    %v5210 = vpack.c.b16 %v4218, %v4210
    %v5211 = vpack.c.b16 %v4219, %v4211
    %v5212 = vpack.c.b16 %v4228, %v4220
    %v5213 = vpack.c.b16 %v4229, %v4221
    %v5214 = vpack.c.b16 %v4230, %v4222
    %v5215 = vpack.c.b16 %v4231, %v4223
    %v5216 = vpack.c.b16 %v4232, %v4224
    %v5217 = vpack.c.b16 %v4233, %v4225
    %v5218 = vpack.c.b16 %v4234, %v4226
    %v5219 = vpack.c.b16 %v4235, %v4227
    %v5220 = vpack.c.b16 %v4244, %v4236
    %v5221 = vpack.c.b16 %v4245, %v4237
    %v5222 = vpack.c.b16 %v4246, %v4238
    %v5223 = vpack.c.b16 %v4247, %v4239
    %v5224 = vpack.c.b16 %v4248, %v4240
    %v5225 = vpack.c.b16 %v4249, %v4241
    %v5226 = vpack.c.b16 %v4250, %v4242
    %v5227 = vpack.c.b16 %v4251, %v4243
    %v5228 = vpack.c.b16 %v4260, %v4252
    %v5229 = vpack.c.b16 %v4261, %v4253
    %v5230 = vpack.c.b16 %v4262, %v4254
    %v5231 = vpack.c.b16 %v4263, %v4255
    %v5232 = vpack.c.b16 %v4264, %v4256
    %v5233 = vpack.c.b16 %v4265, %v4257
    %v5234 = vpack.c.b16 %v4266, %v4258
    %v5235 = vpack.c.b16 %v4267, %v4259
    %v5236 = vpack.c.b16 %v4276, %v4268
    %v5237 = vpack.c.b16 %v4277, %v4269
    %v5238 = vpack.c.b16 %v4278, %v4270
    %v5239 = vpack.c.b16 %v4279, %v4271
    %v5240 = vpack.c.b16 %v4280, %v4272
    %v5241 = vpack.c.b16 %v4281, %v4273
    %v5242 = vpack.c.b16 %v4282, %v4274
    %v5243 = vpack.c.b16 %v4283, %v4275
    %v5244 = vpack.c.b16 %v4292, %v4284
    %v5245 = vpack.c.b16 %v4293, %v4285
    %v5246 = vpack.c.b16 %v4294, %v4286
    %v5247 = vpack.c.b16 %v4295, %v4287
    %v5248 = vpack.c.b16 %v4296, %v4288
    %v5249 = vpack.c.b16 %v4297, %v4289
    %v5250 = vpack.c.b16 %v4298, %v4290
    %v5251 = vpack.c.b16 %v4299, %v4291
    %v5252 = vpack.c.b16 %v4308, %v4300
    %v5253 = vpack.c.b16 %v4309, %v4301
    %v5254 = vpack.c.b16 %v4310, %v4302
    %v5255 = vpack.c.b16 %v4311, %v4303
    %v5256 = vpack.c.b16 %v4312, %v4304
    %v5257 = vpack.c.b16 %v4313, %v4305
    %v5258 = vpack.c.b16 %v4314, %v4306
    %v5259 = vpack.c.b16 %v4315, %v4307
    %v5260 = vpack.c.b16 %v4324, %v4316
    %v5261 = vpack.c.b16 %v4325, %v4317
    %v5262 = vpack.c.b16 %v4326, %v4318
    %v5263 = vpack.c.b16 %v4327, %v4319
    %v5264 = vpack.c.b16 %v4328, %v4320
    %v5265 = vpack.c.b16 %v4329, %v4321
    %v5266 = vpack.c.b16 %v4330, %v4322
    %v5267 = vpack.c.b16 %v4331, %v4323
    %v5268 = vpack.c.b16 %v4340, %v4332
    %v5269 = vpack.c.b16 %v4341, %v4333
    %v5270 = vpack.c.b16 %v4342, %v4334
    %v5271 = vpack.c.b16 %v4343, %v4335
    %v5272 = vpack.c.b16 %v4344, %v4336
    %v5273 = vpack.c.b16 %v4345, %v4337
    %v5274 = vpack.c.b16 %v4346, %v4338
    %v5275 = vpack.c.b16 %v4347, %v4339
    %v5276 = vpack.c.b16 %v4356, %v4348
    %v5277 = vpack.c.b16 %v4357, %v4349
    %v5278 = vpack.c.b16 %v4358, %v4350
    %v5279 = vpack.c.b16 %v4359, %v4351
    %v5280 = vpack.c.b16 %v4360, %v4352
    %v5281 = vpack.c.b16 %v4361, %v4353
    %v5282 = vpack.c.b16 %v4362, %v4354
    %v5283 = vpack.c.b16 %v4363, %v4355
    %v5284 = vpack.c.b16 %v4372, %v4364
    %v5285 = vpack.c.b16 %v4373, %v4365
    %v5286 = vpack.c.b16 %v4374, %v4366
    %v5287 = vpack.c.b16 %v4375, %v4367
    %v5288 = vpack.c.b16 %v4376, %v4368
    %v5289 = vpack.c.b16 %v4377, %v4369
    %v5290 = vpack.c.b16 %v4378, %v4370
    %v5291 = vpack.c.b16 %v4379, %v4371
    %v5292 = vpack.c.b16 %v4388, %v4380
    %v5293 = vpack.c.b16 %v4389, %v4381
    %v5294 = vpack.c.b16 %v4390, %v4382
    %v5295 = vpack.c.b16 %v4391, %v4383
    %v5296 = vpack.c.b16 %v4392, %v4384
    %v5297 = vpack.c.b16 %v4393, %v4385
    %v5298 = vpack.c.b16 %v4394, %v4386
    %v5299 = vpack.c.b16 %v4395, %v4387
    %v5300 = vpack.c.b16 %v4404, %v4396
    %v5301 = vpack.c.b16 %v4405, %v4397
    %v5302 = vpack.c.b16 %v4406, %v4398
    %v5303 = vpack.c.b16 %v4407, %v4399
    %v5304 = vpack.c.b16 %v4408, %v4400
    %v5305 = vpack.c.b16 %v4409, %v4401
    %v5306 = vpack.c.b16 %v4410, %v4402
    %v5307 = vpack.c.b16 %v4411, %v4403
    %v5308 = vpack.c.b16 %v4420, %v4412
    %v5309 = vpack.c.b16 %v4421, %v4413
    %v5310 = vpack.c.b16 %v4422, %v4414
    %v5311 = vpack.c.b16 %v4423, %v4415
    %v5312 = vpack.c.b16 %v4424, %v4416
    %v5313 = vpack.c.b16 %v4425, %v4417
    %v5314 = vpack.c.b16 %v4426, %v4418
    %v5315 = vpack.c.b16 %v4427, %v4419
    %v5316 = vpack.c.b16 %v4436, %v4428
    %v5317 = vpack.c.b16 %v4437, %v4429
    %v5318 = vpack.c.b16 %v4438, %v4430
    %v5319 = vpack.c.b16 %v4439, %v4431
    %v5320 = vpack.c.b16 %v4440, %v4432
    %v5321 = vpack.c.b16 %v4441, %v4433
    %v5322 = vpack.c.b16 %v4442, %v4434
    %v5323 = vpack.c.b16 %v4443, %v4435
    %v5324 = vpack.c.b16 %v4452, %v4444
    %v5325 = vpack.c.b16 %v4453, %v4445
    %v5326 = vpack.c.b16 %v4454, %v4446
    %v5327 = vpack.c.b16 %v4455, %v4447
    %v5328 = vpack.c.b16 %v4456, %v4448
    %v5329 = vpack.c.b16 %v4457, %v4449
    %v5330 = vpack.c.b16 %v4458, %v4450
    %v5331 = vpack.c.b16 %v4459, %v4451
    %v5332 = vpack.c.b16 %v4468, %v4460
    %v5333 = vpack.c.b16 %v4469, %v4461
    %v5334 = vpack.c.b16 %v4470, %v4462
    %v5335 = vpack.c.b16 %v4471, %v4463
    %v5336 = vpack.c.b16 %v4472, %v4464
    %v5337 = vpack.c.b16 %v4473, %v4465
    %v5338 = vpack.c.b16 %v4474, %v4466
    %v5339 = vpack.c.b16 %v4475, %v4467
    %v5340 = vpack.c.b16 %v4484, %v4476
    %v5341 = vpack.c.b16 %v4485, %v4477
    %v5342 = vpack.c.b16 %v4486, %v4478
    %v5343 = vpack.c.b16 %v4487, %v4479
    %v5344 = vpack.c.b16 %v4488, %v4480
    %v5345 = vpack.c.b16 %v4489, %v4481
    %v5346 = vpack.c.b16 %v4490, %v4482
    %v5347 = vpack.c.b16 %v4491, %v4483
    %v5348 = vpack.c.b16 %v4500, %v4492
    %v5349 = vpack.c.b16 %v4501, %v4493
    %v5350 = vpack.c.b16 %v4502, %v4494
    %v5351 = vpack.c.b16 %v4503, %v4495
    %v5352 = vpack.c.b16 %v4504, %v4496
    %v5353 = vpack.c.b16 %v4505, %v4497
    %v5354 = vpack.c.b16 %v4506, %v4498
    %v5355 = vpack.c.b16 %v4507, %v4499
    %v5356 = vpack.c.b16 %v4516, %v4508
    %v5357 = vpack.c.b16 %v4517, %v4509
    %v5358 = vpack.c.b16 %v4518, %v4510
    %v5359 = vpack.c.b16 %v4519, %v4511
    %v5360 = vpack.c.b16 %v4520, %v4512
    %v5361 = vpack.c.b16 %v4521, %v4513
    %v5362 = vpack.c.b16 %v4522, %v4514
    %v5363 = vpack.c.b16 %v4523, %v4515
    %v5364 = vpack.c.b16 %v4532, %v4524
    %v5365 = vpack.c.b16 %v4533, %v4525
    %v5366 = vpack.c.b16 %v4534, %v4526
    %v5367 = vpack.c.b16 %v4535, %v4527
    %v5368 = vpack.c.b16 %v4536, %v4528
    %v5369 = vpack.c.b16 %v4537, %v4529
    %v5370 = vpack.c.b16 %v4538, %v4530
    %v5371 = vpack.c.b16 %v4539, %v4531
    %v5372 = vpack.c.b16 %v4548, %v4540
    %v5373 = vpack.c.b16 %v4549, %v4541
    %v5374 = vpack.c.b16 %v4550, %v4542
    %v5375 = vpack.c.b16 %v4551, %v4543
    %v5376 = vpack.c.b16 %v4552, %v4544
    %v5377 = vpack.c.b16 %v4553, %v4545
    %v5378 = vpack.c.b16 %v4554, %v4546
    %v5379 = vpack.c.b16 %v4555, %v4547
    %v5380 = vpack.c.b16 %v4564, %v4556
    %v5381 = vpack.c.b16 %v4565, %v4557
    %v5382 = vpack.c.b16 %v4566, %v4558
    %v5383 = vpack.c.b16 %v4567, %v4559
    %v5384 = vpack.c.b16 %v4568, %v4560
    %v5385 = vpack.c.b16 %v4569, %v4561
    %v5386 = vpack.c.b16 %v4570, %v4562
    %v5387 = vpack.c.b16 %v4571, %v4563
    %v5388 = vpack.c.b16 %v4580, %v4572
    %v5389 = vpack.c.b16 %v4581, %v4573
    %v5390 = vpack.c.b16 %v4582, %v4574
    %v5391 = vpack.c.b16 %v4583, %v4575
    %v5392 = vpack.c.b16 %v4584, %v4576
    %v5393 = vpack.c.b16 %v4585, %v4577
    %v5394 = vpack.c.b16 %v4586, %v4578
    %v5395 = vpack.c.b16 %v4587, %v4579
    %v5396 = vpack.c.b16 %v4596, %v4588
    %v5397 = vpack.c.b16 %v4597, %v4589
    %v5398 = vpack.c.b16 %v4598, %v4590
    %v5399 = vpack.c.b16 %v4599, %v4591
    %v5400 = vpack.c.b16 %v4600, %v4592
    %v5401 = vpack.c.b16 %v4601, %v4593
    %v5402 = vpack.c.b16 %v4602, %v4594
    %v5403 = vpack.c.b16 %v4603, %v4595
    %v5404 = vpack.c.b16 %v4612, %v4604
    %v5405 = vpack.c.b16 %v4613, %v4605
    %v5406 = vpack.c.b16 %v4614, %v4606
    %v5407 = vpack.c.b16 %v4615, %v4607
    %v5408 = vpack.c.b16 %v4616, %v4608
    %v5409 = vpack.c.b16 %v4617, %v4609
    %v5410 = vpack.c.b16 %v4618, %v4610
    %v5411 = vpack.c.b16 %v4619, %v4611
    %v5412 = vpack.c.b16 %v4628, %v4620
    %v5413 = vpack.c.b16 %v4629, %v4621
    %v5414 = vpack.c.b16 %v4630, %v4622
    %v5415 = vpack.c.b16 %v4631, %v4623
    %v5416 = vpack.c.b16 %v4632, %v4624
    %v5417 = vpack.c.b16 %v4633, %v4625
    %v5418 = vpack.c.b16 %v4634, %v4626
    %v5419 = vpack.c.b16 %v4635, %v4627
    %v5420 = vpack.c.b16 %v4644, %v4636
    %v5421 = vpack.c.b16 %v4645, %v4637
    %v5422 = vpack.c.b16 %v4646, %v4638
    %v5423 = vpack.c.b16 %v4647, %v4639
    %v5424 = vpack.c.b16 %v4648, %v4640
    %v5425 = vpack.c.b16 %v4649, %v4641
    %v5426 = vpack.c.b16 %v4650, %v4642
    %v5427 = vpack.c.b16 %v4651, %v4643
    %v5428 = vpack.c.b16 %v4660, %v4652
    %v5429 = vpack.c.b16 %v4661, %v4653
    %v5430 = vpack.c.b16 %v4662, %v4654
    %v5431 = vpack.c.b16 %v4663, %v4655
    %v5432 = vpack.c.b16 %v4664, %v4656
    %v5433 = vpack.c.b16 %v4665, %v4657
    %v5434 = vpack.c.b16 %v4666, %v4658
    %v5435 = vpack.c.b16 %v4667, %v4659
    %v5436 = vpack.c.b16 %v4676, %v4668
    %v5437 = vpack.c.b16 %v4677, %v4669
    %v5438 = vpack.c.b16 %v4678, %v4670
    %v5439 = vpack.c.b16 %v4679, %v4671
    %v5440 = vpack.c.b16 %v4680, %v4672
    %v5441 = vpack.c.b16 %v4681, %v4673
    %v5442 = vpack.c.b16 %v4682, %v4674
    %v5443 = vpack.c.b16 %v4683, %v4675
    %v5444 = vpack.c.b16 %v4692, %v4684
    %v5445 = vpack.c.b16 %v4693, %v4685
    %v5446 = vpack.c.b16 %v4694, %v4686
    %v5447 = vpack.c.b16 %v4695, %v4687
    %v5448 = vpack.c.b16 %v4696, %v4688
    %v5449 = vpack.c.b16 %v4697, %v4689
    %v5450 = vpack.c.b16 %v4698, %v4690
    %v5451 = vpack.c.b16 %v4699, %v4691
    %v5452 = vpack.c.b16 %v4708, %v4700
    %v5453 = vpack.c.b16 %v4709, %v4701
    %v5454 = vpack.c.b16 %v4710, %v4702
    %v5455 = vpack.c.b16 %v4711, %v4703
    %v5456 = vpack.c.b16 %v4712, %v4704
    %v5457 = vpack.c.b16 %v4713, %v4705
    %v5458 = vpack.c.b16 %v4714, %v4706
    %v5459 = vpack.c.b16 %v4715, %v4707
    %v5460 = vpack.c.b16 %v4724, %v4716
    %v5461 = vpack.c.b16 %v4725, %v4717
    %v5462 = vpack.c.b16 %v4726, %v4718
    %v5463 = vpack.c.b16 %v4727, %v4719
    %v5464 = vpack.c.b16 %v4728, %v4720
    %v5465 = vpack.c.b16 %v4729, %v4721
    %v5466 = vpack.c.b16 %v4730, %v4722
    %v5467 = vpack.c.b16 %v4731, %v4723
    %v5468 = vpack.c.b16 %v4740, %v4732
    %v5469 = vpack.c.b16 %v4741, %v4733
    %v5470 = vpack.c.b16 %v4742, %v4734
    %v5471 = vpack.c.b16 %v4743, %v4735
    %v5472 = vpack.c.b16 %v4744, %v4736
    %v5473 = vpack.c.b16 %v4745, %v4737
    %v5474 = vpack.c.b16 %v4746, %v4738
    %v5475 = vpack.c.b16 %v4747, %v4739
    %v5476 = vpack.c.b16 %v4756, %v4748
    %v5477 = vpack.c.b16 %v4757, %v4749
    %v5478 = vpack.c.b16 %v4758, %v4750
    %v5479 = vpack.c.b16 %v4759, %v4751
    %v5480 = vpack.c.b16 %v4760, %v4752
    %v5481 = vpack.c.b16 %v4761, %v4753
    %v5482 = vpack.c.b16 %v4762, %v4754
    %v5483 = vpack.c.b16 %v4763, %v4755
    %v5484 = vpack.c.b16 %v4772, %v4764
    %v5485 = vpack.c.b16 %v4773, %v4765
    %v5486 = vpack.c.b16 %v4774, %v4766
    %v5487 = vpack.c.b16 %v4775, %v4767
    %v5488 = vpack.c.b16 %v4776, %v4768
    %v5489 = vpack.c.b16 %v4777, %v4769
    %v5490 = vpack.c.b16 %v4778, %v4770
    %v5491 = vpack.c.b16 %v4779, %v4771
    %v5492 = vpack.c.b16 %v4788, %v4780
    %v5493 = vpack.c.b16 %v4789, %v4781
    %v5494 = vpack.c.b16 %v4790, %v4782
    %v5495 = vpack.c.b16 %v4791, %v4783
    %v5496 = vpack.c.b16 %v4792, %v4784
    %v5497 = vpack.c.b16 %v4793, %v4785
    %v5498 = vpack.c.b16 %v4794, %v4786
    %v5499 = vpack.c.b16 %v4795, %v4787
    %v5500 = vpack.c.b16 %v4804, %v4796
    %v5501 = vpack.c.b16 %v4805, %v4797
    %v5502 = vpack.c.b16 %v4806, %v4798
    %v5503 = vpack.c.b16 %v4807, %v4799
    %v5504 = vpack.c.b16 %v4808, %v4800
    %v5505 = vpack.c.b16 %v4809, %v4801
    %v5506 = vpack.c.b16 %v4810, %v4802
    %v5507 = vpack.c.b16 %v4811, %v4803
    %v5508 = vpack.c.b16 %v4820, %v4812
    %v5509 = vpack.c.b16 %v4821, %v4813
    %v5510 = vpack.c.b16 %v4822, %v4814
    %v5511 = vpack.c.b16 %v4823, %v4815
    %v5512 = vpack.c.b16 %v4824, %v4816
    %v5513 = vpack.c.b16 %v4825, %v4817
    %v5514 = vpack.c.b16 %v4826, %v4818
    %v5515 = vpack.c.b16 %v4827, %v4819
    %v5516 = vpack.c.b16 %v4836, %v4828
    %v5517 = vpack.c.b16 %v4837, %v4829
    %v5518 = vpack.c.b16 %v4838, %v4830
    %v5519 = vpack.c.b16 %v4839, %v4831
    %v5520 = vpack.c.b16 %v4840, %v4832
    %v5521 = vpack.c.b16 %v4841, %v4833
    %v5522 = vpack.c.b16 %v4842, %v4834
    %v5523 = vpack.c.b16 %v4843, %v4835
    %v5524 = vpack.c.b16 %v4852, %v4844
    %v5525 = vpack.c.b16 %v4853, %v4845
    %v5526 = vpack.c.b16 %v4854, %v4846
    %v5527 = vpack.c.b16 %v4855, %v4847
    %v5528 = vpack.c.b16 %v4856, %v4848
    %v5529 = vpack.c.b16 %v4857, %v4849
    %v5530 = vpack.c.b16 %v4858, %v4850
    %v5531 = vpack.c.b16 %v4859, %v4851
    %v5532 = vpack.c.b16 %v4868, %v4860
    %v5533 = vpack.c.b16 %v4869, %v4861
    %v5534 = vpack.c.b16 %v4870, %v4862
    %v5535 = vpack.c.b16 %v4871, %v4863
    %v5536 = vpack.c.b16 %v4872, %v4864
    %v5537 = vpack.c.b16 %v4873, %v4865
    %v5538 = vpack.c.b16 %v4874, %v4866
    %v5539 = vpack.c.b16 %v4875, %v4867
    %v5540 = vpack.c.b16 %v4884, %v4876
    %v5541 = vpack.c.b16 %v4885, %v4877
    %v5542 = vpack.c.b16 %v4886, %v4878
    %v5543 = vpack.c.b16 %v4887, %v4879
    %v5544 = vpack.c.b16 %v4888, %v4880
    %v5545 = vpack.c.b16 %v4889, %v4881
    %v5546 = vpack.c.b16 %v4890, %v4882
    %v5547 = vpack.c.b16 %v4891, %v4883
    %v5548 = vpack.c.b16 %v4900, %v4892
    %v5549 = vpack.c.b16 %v4901, %v4893
    %v5550 = vpack.c.b16 %v4902, %v4894
    %v5551 = vpack.c.b16 %v4903, %v4895
    %v5552 = vpack.c.b16 %v4904, %v4896
    %v5553 = vpack.c.b16 %v4905, %v4897
    %v5554 = vpack.c.b16 %v4906, %v4898
    %v5555 = vpack.c.b16 %v4907, %v4899
    %v5556 = vpack.c.b16 %v4916, %v4908
    %v5557 = vpack.c.b16 %v4917, %v4909
    %v5558 = vpack.c.b16 %v4918, %v4910
    %v5559 = vpack.c.b16 %v4919, %v4911
    %v5560 = vpack.c.b16 %v4920, %v4912
    %v5561 = vpack.c.b16 %v4921, %v4913
    %v5562 = vpack.c.b16 %v4922, %v4914
    %v5563 = vpack.c.b16 %v4923, %v4915
    %v5564 = vpack.c.b16 %v4932, %v4924
    %v5565 = vpack.c.b16 %v4933, %v4925
    %v5566 = vpack.c.b16 %v4934, %v4926
    %v5567 = vpack.c.b16 %v4935, %v4927
    %v5568 = vpack.c.b16 %v4936, %v4928
    %v5569 = vpack.c.b16 %v4937, %v4929
    %v5570 = vpack.c.b16 %v4938, %v4930
    %v5571 = vpack.c.b16 %v4939, %v4931
    %v5572 = vpack.c.b16 %v4948, %v4940
    %v5573 = vpack.c.b16 %v4949, %v4941
    %v5574 = vpack.c.b16 %v4950, %v4942
    %v5575 = vpack.c.b16 %v4951, %v4943
    %v5576 = vpack.c.b16 %v4952, %v4944
    %v5577 = vpack.c.b16 %v4953, %v4945
    %v5578 = vpack.c.b16 %v4954, %v4946
    %v5579 = vpack.c.b16 %v4955, %v4947
    %v5580 = vpack.c.b16 %v4964, %v4956
    %v5581 = vpack.c.b16 %v4965, %v4957
    %v5582 = vpack.c.b16 %v4966, %v4958
    %v5583 = vpack.c.b16 %v4967, %v4959
    %v5584 = vpack.c.b16 %v4968, %v4960
    %v5585 = vpack.c.b16 %v4969, %v4961
    %v5586 = vpack.c.b16 %v4970, %v4962
    %v5587 = vpack.c.b16 %v4971, %v4963
    %v5588 = vpack.c.b16 %v4980, %v4972
    %v5589 = vpack.c.b16 %v4981, %v4973
    %v5590 = vpack.c.b16 %v4982, %v4974
    %v5591 = vpack.c.b16 %v4983, %v4975
    %v5592 = vpack.c.b16 %v4984, %v4976
    %v5593 = vpack.c.b16 %v4985, %v4977
    %v5594 = vpack.c.b16 %v4986, %v4978
    %v5595 = vpack.c.b16 %v4987, %v4979
    %v5596 = vpack.c.b16 %v4996, %v4988
    %v5597 = vpack.c.b16 %v4997, %v4989
    %v5598 = vpack.c.b16 %v4998, %v4990
    %v5599 = vpack.c.b16 %v4999, %v4991
    %v5600 = vpack.c.b16 %v5000, %v4992
    %v5601 = vpack.c.b16 %v5001, %v4993
    %v5602 = vpack.c.b16 %v5002, %v4994
    %v5603 = vpack.c.b16 %v5003, %v4995
    %v5604 = vpack.c.b16 %v5012, %v5004
    %v5605 = vpack.c.b16 %v5013, %v5005
    %v5606 = vpack.c.b16 %v5014, %v5006
    %v5607 = vpack.c.b16 %v5015, %v5007
    %v5608 = vpack.c.b16 %v5016, %v5008
    %v5609 = vpack.c.b16 %v5017, %v5009
    %v5610 = vpack.c.b16 %v5018, %v5010
    %v5611 = vpack.c.b16 %v5019, %v5011
    %v5612 = vpack.c.b16 %v5028, %v5020
    %v5613 = vpack.c.b16 %v5029, %v5021
    %v5614 = vpack.c.b16 %v5030, %v5022
    %v5615 = vpack.c.b16 %v5031, %v5023
    %v5616 = vpack.c.b16 %v5032, %v5024
    %v5617 = vpack.c.b16 %v5033, %v5025
    %v5618 = vpack.c.b16 %v5034, %v5026
    %v5619 = vpack.c.b16 %v5035, %v5027
    %v5620 = vpack.c.b16 %v5044, %v5036
    %v5621 = vpack.c.b16 %v5045, %v5037
    %v5622 = vpack.c.b16 %v5046, %v5038
    %v5623 = vpack.c.b16 %v5047, %v5039
    %v5624 = vpack.c.b16 %v5048, %v5040
    %v5625 = vpack.c.b16 %v5049, %v5041
    %v5626 = vpack.c.b16 %v5050, %v5042
    %v5627 = vpack.c.b16 %v5051, %v5043
    %v5628 = vpack.c.b16 %v5060, %v5052
    %v5629 = vpack.c.b16 %v5061, %v5053
    %v5630 = vpack.c.b16 %v5062, %v5054
    %v5631 = vpack.c.b16 %v5063, %v5055
    %v5632 = vpack.c.b16 %v5064, %v5056
    %v5633 = vpack.c.b16 %v5065, %v5057
    %v5634 = vpack.c.b16 %v5066, %v5058
    %v5635 = vpack.c.b16 %v5067, %v5059
    %v5636 = vpack.c.b16 %v5076, %v5068
    %v5637 = vpack.c.b16 %v5077, %v5069
    %v5638 = vpack.c.b16 %v5078, %v5070
    %v5639 = vpack.c.b16 %v5079, %v5071
    %v5640 = vpack.c.b16 %v5080, %v5072
    %v5641 = vpack.c.b16 %v5081, %v5073
    %v5642 = vpack.c.b16 %v5082, %v5074
    %v5643 = vpack.c.b16 %v5083, %v5075
    %v5644 = vpack.c.b16 %v5092, %v5084
    %v5645 = vpack.c.b16 %v5093, %v5085
    %v5646 = vpack.c.b16 %v5094, %v5086
    %v5647 = vpack.c.b16 %v5095, %v5087
    %v5648 = vpack.c.b16 %v5096, %v5088
    %v5649 = vpack.c.b16 %v5097, %v5089
    %v5650 = vpack.c.b16 %v5098, %v5090
    %v5651 = vpack.c.b16 %v5099, %v5091
    %v5652 = vpack.c.b16 %v5108, %v5100
    %v5653 = vpack.c.b16 %v5109, %v5101
    %v5654 = vpack.c.b16 %v5110, %v5102
    %v5655 = vpack.c.b16 %v5111, %v5103
    %v5656 = vpack.c.b16 %v5112, %v5104
    %v5657 = vpack.c.b16 %v5113, %v5105
    %v5658 = vpack.c.b16 %v5114, %v5106
    %v5659 = vpack.c.b16 %v5115, %v5107
    %v5660 = vpack.c.b16 %v5124, %v5116
    %v5661 = vpack.c.b16 %v5125, %v5117
    %v5662 = vpack.c.b16 %v5126, %v5118
    %v5663 = vpack.c.b16 %v5127, %v5119
    %v5664 = vpack.c.b16 %v5128, %v5120
    %v5665 = vpack.c.b16 %v5129, %v5121
    %v5666 = vpack.c.b16 %v5130, %v5122
    %v5667 = vpack.c.b16 %v5131, %v5123
    %v5668 = vpack.c.b16 %v5140, %v5132
    %v5669 = vpack.c.b16 %v5141, %v5133
    %v5670 = vpack.c.b16 %v5142, %v5134
    %v5671 = vpack.c.b16 %v5143, %v5135
    %v5672 = vpack.c.b16 %v5144, %v5136
    %v5673 = vpack.c.b16 %v5145, %v5137
    %v5674 = vpack.c.b16 %v5146, %v5138
    %v5675 = vpack.c.b16 %v5147, %v5139
    %v5676 = vpack.c.b16 %v5156, %v5148
    %v5677 = vpack.c.b16 %v5157, %v5149
    %v5678 = vpack.c.b16 %v5158, %v5150
    %v5679 = vpack.c.b16 %v5159, %v5151
    %v5680 = vpack.c.b16 %v5160, %v5152
    %v5681 = vpack.c.b16 %v5161, %v5153
    %v5682 = vpack.c.b16 %v5162, %v5154
    %v5683 = vpack.c.b16 %v5163, %v5155
    %v5684 = vpack.c.b16 %v5172, %v5164
    %v5685 = vpack.c.b16 %v5173, %v5165
    %v5686 = vpack.c.b16 %v5174, %v5166
    %v5687 = vpack.c.b16 %v5175, %v5167
    %v5688 = vpack.c.b16 %v5176, %v5168
    %v5689 = vpack.c.b16 %v5177, %v5169
    %v5690 = vpack.c.b16 %v5178, %v5170
    %v5691 = vpack.c.b16 %v5179, %v5171
    %6204 = vmatprep.subr.bf16.mxu0 %v5181
    %6205 = vmatpush1.bf16.msra.mxu0 %v5180
    %6206 = vmatprep.subr.bf16.mxu0 %v5189
    %6207 = vmatpush1.bf16.msra.mxu0 %v5188
    %6208 = vmatprep.subr.bf16.mxu0 %v5197
    %6209 = vmatpush1.bf16.msra.mxu0 %v5196
    %6210 = vmatprep.subr.bf16.mxu0 %v5205
    %6211 = vmatpush1.bf16.msra.mxu0 %v5204
    %6212 = vmatprep.subr.bf16.mxu0 %v5213
    %6213 = vmatpush1.bf16.msra.mxu0 %v5212
    %6214 = vmatprep.subr.bf16.mxu0 %v5221
    %6215 = vmatpush1.bf16.msra.mxu0 %v5220
    %6216 = vmatprep.subr.bf16.mxu0 %v5229
    %6217 = vmatpush1.bf16.msra.mxu0 %v5228
    %6218 = vmatprep.subr.bf16.mxu0 %v5237
    %6219 = vmatpush1.bf16.msra.mxu0 %v5236
    %6220 = vmatprep.subr.bf16.mxu0 %v5245
    %6221 = vmatpush1.bf16.msra.mxu0 %v5244
    %6222 = vmatprep.subr.bf16.mxu0 %v5253
    %6223 = vmatpush1.bf16.msra.mxu0 %v5252
    %6224 = vmatprep.subr.bf16.mxu0 %v5261
    %6225 = vmatpush1.bf16.msra.mxu0 %v5260
    %6226 = vmatprep.subr.bf16.mxu0 %v5269
    %6227 = vmatpush1.bf16.msra.mxu0 %v5268
    %6228 = vmatprep.subr.bf16.mxu0 %v5277
    %6229 = vmatpush1.bf16.msra.mxu0 %v5276
    %6230 = vmatprep.subr.bf16.mxu0 %v5285
    %6231 = vmatpush1.bf16.msra.mxu0 %v5284
    %6232 = vmatprep.subr.bf16.mxu0 %v5293
    %6233 = vmatpush1.bf16.msra.mxu0 %v5292
    %6234 = vmatprep.subr.bf16.mxu0 %v5301
    %6235 = vmatpush1.bf16.msra.mxu0 %v5300
    %6236 = vmatprep.mubr.bf16.mxu0 %v3083
    %6237 = vmatmul.mubr.bf16.gmra.mrb[0].mxu0 %v3082
    %v6238 = vpop.f32.mrb[0].mxu0
    %v6239 = vadd.f32 %v3607, %v6238
    %v6240 = vpop.f32.mrb[0].mxu0
    %v6241 = vadd.f32 %v3611, %v6240
    %v6242 = vpop.f32.mrb[0].mxu0
    %v6243 = vpop.f32.mrb[0].mxu0
    %6244 = vdwg.mxu0
    %6245 = vmatprep.subr.bf16.mxu0 %v5309
    %6246 = vmatpush1.bf16.msra.mxu0 %v5308
    %6247 = vmatprep.subr.bf16.mxu0 %v5317
    %6248 = vmatpush1.bf16.msra.mxu0 %v5316
    %6249 = vmatprep.subr.bf16.mxu0 %v5325
    %6250 = vmatpush1.bf16.msra.mxu0 %v5324
    %6251 = vmatprep.subr.bf16.mxu0 %v5333
    %6252 = vmatpush1.bf16.msra.mxu0 %v5332
    %6253 = vmatprep.subr.bf16.mxu0 %v5341
    %6254 = vmatpush1.bf16.msra.mxu0 %v5340
    %6255 = vmatprep.subr.bf16.mxu0 %v5349
    %6256 = vmatpush1.bf16.msra.mxu0 %v5348
    %6257 = vmatprep.subr.bf16.mxu0 %v5357
    %6258 = vmatpush1.bf16.msra.mxu0 %v5356
    %6259 = vmatprep.subr.bf16.mxu0 %v5365
    %6260 = vmatpush1.bf16.msra.mxu0 %v5364
    %6261 = vmatprep.subr.bf16.mxu0 %v5373
    %6262 = vmatpush1.bf16.msra.mxu0 %v5372
    %6263 = vmatprep.subr.bf16.mxu0 %v5381
    %6264 = vmatpush1.bf16.msra.mxu0 %v5380
    %6265 = vmatprep.subr.bf16.mxu0 %v5389
    %6266 = vmatpush1.bf16.msra.mxu0 %v5388
    %6267 = vmatprep.subr.bf16.mxu0 %v5397
    %6268 = vmatpush1.bf16.msra.mxu0 %v5396
    %6269 = vmatprep.subr.bf16.mxu0 %v5405
    %6270 = vmatpush1.bf16.msra.mxu0 %v5404
    %6271 = vmatprep.subr.bf16.mxu0 %v5413
    %6272 = vmatpush1.bf16.msra.mxu0 %v5412
    %6273 = vmatprep.subr.bf16.mxu0 %v5421
    %6274 = vmatpush1.bf16.msra.mxu0 %v5420
    %6275 = vmatprep.subr.bf16.mxu0 %v5429
    %6276 = vmatpush1.bf16.msra.mxu0 %v5428
    %6277 = vmatprep.mubr.bf16.mxu0 %v3085
    %6278 = vmatmul.mubr.bf16.gmra.mrb[0].mxu0 %v3084
    %v6279 = vpop.f32.mrb[0].mxu0
    %v6280 = vadd.f32 %v6239, %v6279
    %v6281 = vpop.f32.mrb[0].mxu0
    %v6282 = vadd.f32 %v6241, %v6281
    %v6283 = vpop.f32.mrb[0].mxu0
    %v6284 = vpop.f32.mrb[0].mxu0
    %6285 = vdwg.mxu0
    %6286 = vmatprep.subr.bf16.mxu0 %v5437
    %6287 = vmatpush1.bf16.msra.mxu0 %v5436
    %6288 = vmatprep.subr.bf16.mxu0 %v5445
    %6289 = vmatpush1.bf16.msra.mxu0 %v5444
    %6290 = vmatprep.subr.bf16.mxu0 %v5453
    %6291 = vmatpush1.bf16.msra.mxu0 %v5452
    %6292 = vmatprep.subr.bf16.mxu0 %v5461
    %6293 = vmatpush1.bf16.msra.mxu0 %v5460
    %6294 = vmatprep.subr.bf16.mxu0 %v5469
    %6295 = vmatpush1.bf16.msra.mxu0 %v5468
    %6296 = vmatprep.subr.bf16.mxu0 %v5477
    %6297 = vmatpush1.bf16.msra.mxu0 %v5476
    %6298 = vmatprep.subr.bf16.mxu0 %v5485
    %6299 = vmatpush1.bf16.msra.mxu0 %v5484
    %6300 = vmatprep.subr.bf16.mxu0 %v5493
    %6301 = vmatpush1.bf16.msra.mxu0 %v5492
    %6302 = vmatprep.subr.bf16.mxu0 %v5501
    %6303 = vmatpush1.bf16.msra.mxu0 %v5500
    %6304 = vmatprep.subr.bf16.mxu0 %v5509
    %6305 = vmatpush1.bf16.msra.mxu0 %v5508
    %6306 = vmatprep.subr.bf16.mxu0 %v5517
    %6307 = vmatpush1.bf16.msra.mxu0 %v5516
    %6308 = vmatprep.subr.bf16.mxu0 %v5525
    %6309 = vmatpush1.bf16.msra.mxu0 %v5524
    %6310 = vmatprep.subr.bf16.mxu0 %v5533
    %6311 = vmatpush1.bf16.msra.mxu0 %v5532
    %6312 = vmatprep.subr.bf16.mxu0 %v5541
    %6313 = vmatpush1.bf16.msra.mxu0 %v5540
    %6314 = vmatprep.subr.bf16.mxu0 %v5549
    %6315 = vmatpush1.bf16.msra.mxu0 %v5548
    %6316 = vmatprep.subr.bf16.mxu0 %v5557
    %6317 = vmatpush1.bf16.msra.mxu0 %v5556
    %6318 = vmatprep.mubr.bf16.mxu0 %v3087
    %6319 = vmatmul.mubr.bf16.gmra.mrb[0].mxu0 %v3086
    %v6320 = vpop.f32.mrb[0].mxu0
    %v6321 = vadd.f32 %v6280, %v6320
    %v6322 = vpop.f32.mrb[0].mxu0
    %v6323 = vadd.f32 %v6282, %v6322
    %v6324 = vpop.f32.mrb[0].mxu0
    %v6325 = vpop.f32.mrb[0].mxu0
    %6326 = vdwg.mxu0
    %6327 = vmatprep.subr.bf16.mxu0 %v5565
    %6328 = vmatpush1.bf16.msra.mxu0 %v5564
    %6329 = vmatprep.subr.bf16.mxu0 %v5573
    %6330 = vmatpush1.bf16.msra.mxu0 %v5572
    %6331 = vmatprep.subr.bf16.mxu0 %v5581
    %6332 = vmatpush1.bf16.msra.mxu0 %v5580
    %6333 = vmatprep.subr.bf16.mxu0 %v5589
    %6334 = vmatpush1.bf16.msra.mxu0 %v5588
    %6335 = vmatprep.subr.bf16.mxu0 %v5597
    %6336 = vmatpush1.bf16.msra.mxu0 %v5596
    %6337 = vmatprep.subr.bf16.mxu0 %v5605
    %6338 = vmatpush1.bf16.msra.mxu0 %v5604
    %6339 = vmatprep.subr.bf16.mxu0 %v5613
    %6340 = vmatpush1.bf16.msra.mxu0 %v5612
    %6341 = vmatprep.subr.bf16.mxu0 %v5621
    %6342 = vmatpush1.bf16.msra.mxu0 %v5620
    %6343 = vmatprep.subr.bf16.mxu0 %v5629
    %6344 = vmatpush1.bf16.msra.mxu0 %v5628
    %6345 = vmatprep.subr.bf16.mxu0 %v5637
    %6346 = vmatpush1.bf16.msra.mxu0 %v5636
    %6347 = vmatprep.subr.bf16.mxu0 %v5645
    %6348 = vmatpush1.bf16.msra.mxu0 %v5644
    %6349 = vmatprep.subr.bf16.mxu0 %v5653
    %6350 = vmatpush1.bf16.msra.mxu0 %v5652
    %6351 = vmatprep.subr.bf16.mxu0 %v5661
    %6352 = vmatpush1.bf16.msra.mxu0 %v5660
    %6353 = vmatprep.subr.bf16.mxu0 %v5669
    %6354 = vmatpush1.bf16.msra.mxu0 %v5668
    %6355 = vmatprep.subr.bf16.mxu0 %v5677
    %6356 = vmatpush1.bf16.msra.mxu0 %v5676
    %6357 = vmatprep.subr.bf16.mxu0 %v5685
    %6358 = vmatpush1.bf16.msra.mxu0 %v5684
    %6359 = vmatprep.mubr.bf16.mxu0 %v3089
    %6360 = vmatmul.mubr.bf16.gmra.mrb[0].mxu0 %v3088
    %v6361 = vpop.f32.mrb[0].mxu0
    %v6362 = vadd.f32 %v6321, %v6361
    %v6363 = vpop.f32.mrb[0].mxu0
    %v6364 = vadd.f32 %v6323, %v6363
    %v6365 = vpop.f32.mrb[0].mxu0
    %v6366 = vpop.f32.mrb[0].mxu0
    %6367 = vdwg.mxu0
    %6368 = vmatprep.subr.bf16.mxu0 %v5183
    %6369 = vmatpush1.bf16.msra.mxu0 %v5182
    %6370 = vmatprep.subr.bf16.mxu0 %v5191
    %6371 = vmatpush1.bf16.msra.mxu0 %v5190
    %6372 = vmatprep.subr.bf16.mxu0 %v5199
    %6373 = vmatpush1.bf16.msra.mxu0 %v5198
    %6374 = vmatprep.subr.bf16.mxu0 %v5207
    %6375 = vmatpush1.bf16.msra.mxu0 %v5206
    %6376 = vmatprep.subr.bf16.mxu0 %v5215
    %6377 = vmatpush1.bf16.msra.mxu0 %v5214
    %6378 = vmatprep.subr.bf16.mxu0 %v5223
    %6379 = vmatpush1.bf16.msra.mxu0 %v5222
    %6380 = vmatprep.subr.bf16.mxu0 %v5231
    %6381 = vmatpush1.bf16.msra.mxu0 %v5230
    %6382 = vmatprep.subr.bf16.mxu0 %v5239
    %6383 = vmatpush1.bf16.msra.mxu0 %v5238
    %6384 = vmatprep.subr.bf16.mxu0 %v5247
    %6385 = vmatpush1.bf16.msra.mxu0 %v5246
    %6386 = vmatprep.subr.bf16.mxu0 %v5255
    %6387 = vmatpush1.bf16.msra.mxu0 %v5254
    %6388 = vmatprep.subr.bf16.mxu0 %v5263
    %6389 = vmatpush1.bf16.msra.mxu0 %v5262
    %6390 = vmatprep.subr.bf16.mxu0 %v5271
    %6391 = vmatpush1.bf16.msra.mxu0 %v5270
    %6392 = vmatprep.subr.bf16.mxu0 %v5279
    %6393 = vmatpush1.bf16.msra.mxu0 %v5278
    %6394 = vmatprep.subr.bf16.mxu0 %v5287
    %6395 = vmatpush1.bf16.msra.mxu0 %v5286
    %6396 = vmatprep.subr.bf16.mxu0 %v5295
    %6397 = vmatpush1.bf16.msra.mxu0 %v5294
    %6398 = vmatprep.subr.bf16.mxu0 %v5303
    %6399 = vmatpush1.bf16.msra.mxu0 %v5302
    %6400 = vmatprep.mubr.bf16.mxu0 %v3083
    %6401 = vmatmul.mubr.bf16.gmra.mrb[0].mxu0 %v3082
    %v6402 = vpop.f32.mrb[0].mxu0
    %v6403 = vadd.f32 %v3615, %v6402
    %v6404 = vpop.f32.mrb[0].mxu0
    %v6405 = vadd.f32 %v3619, %v6404
    %v6406 = vpop.f32.mrb[0].mxu0
    %v6407 = vpop.f32.mrb[0].mxu0
    %6408 = vdwg.mxu0
    %6409 = vmatprep.subr.bf16.mxu0 %v5311
    %6410 = vmatpush1.bf16.msra.mxu0 %v5310
    %6411 = vmatprep.subr.bf16.mxu0 %v5319
    %6412 = vmatpush1.bf16.msra.mxu0 %v5318
    %6413 = vmatprep.subr.bf16.mxu0 %v5327
    %6414 = vmatpush1.bf16.msra.mxu0 %v5326
    %6415 = vmatprep.subr.bf16.mxu0 %v5335
    %6416 = vmatpush1.bf16.msra.mxu0 %v5334
    %6417 = vmatprep.subr.bf16.mxu0 %v5343
    %6418 = vmatpush1.bf16.msra.mxu0 %v5342
    %6419 = vmatprep.subr.bf16.mxu0 %v5351
    %6420 = vmatpush1.bf16.msra.mxu0 %v5350
    %6421 = vmatprep.subr.bf16.mxu0 %v5359
    %6422 = vmatpush1.bf16.msra.mxu0 %v5358
    %6423 = vmatprep.subr.bf16.mxu0 %v5367
    %6424 = vmatpush1.bf16.msra.mxu0 %v5366
    %6425 = vmatprep.subr.bf16.mxu0 %v5375
    %6426 = vmatpush1.bf16.msra.mxu0 %v5374
    %6427 = vmatprep.subr.bf16.mxu0 %v5383
    %6428 = vmatpush1.bf16.msra.mxu0 %v5382
    %6429 = vmatprep.subr.bf16.mxu0 %v5391
    %6430 = vmatpush1.bf16.msra.mxu0 %v5390
    %6431 = vmatprep.subr.bf16.mxu0 %v5399
    %6432 = vmatpush1.bf16.msra.mxu0 %v5398
    %6433 = vmatprep.subr.bf16.mxu0 %v5407
    %6434 = vmatpush1.bf16.msra.mxu0 %v5406
    %6435 = vmatprep.subr.bf16.mxu0 %v5415
    %6436 = vmatpush1.bf16.msra.mxu0 %v5414
    %6437 = vmatprep.subr.bf16.mxu0 %v5423
    %6438 = vmatpush1.bf16.msra.mxu0 %v5422
    %6439 = vmatprep.subr.bf16.mxu0 %v5431
    %6440 = vmatpush1.bf16.msra.mxu0 %v5430
    %6441 = vmatprep.mubr.bf16.mxu0 %v3085
    %6442 = vmatmul.mubr.bf16.gmra.mrb[0].mxu0 %v3084
    %v6443 = vpop.f32.mrb[0].mxu0
    %v6444 = vadd.f32 %v6403, %v6443
    %v6445 = vpop.f32.mrb[0].mxu0
    %v6446 = vadd.f32 %v6405, %v6445
    %v6447 = vpop.f32.mrb[0].mxu0
    %v6448 = vpop.f32.mrb[0].mxu0
    %6449 = vdwg.mxu0
    %6450 = vmatprep.subr.bf16.mxu0 %v5439
    %6451 = vmatpush1.bf16.msra.mxu0 %v5438
    %6452 = vmatprep.subr.bf16.mxu0 %v5447
    %6453 = vmatpush1.bf16.msra.mxu0 %v5446
    %6454 = vmatprep.subr.bf16.mxu0 %v5455
    %6455 = vmatpush1.bf16.msra.mxu0 %v5454
    %6456 = vmatprep.subr.bf16.mxu0 %v5463
    %6457 = vmatpush1.bf16.msra.mxu0 %v5462
    %6458 = vmatprep.subr.bf16.mxu0 %v5471
    %6459 = vmatpush1.bf16.msra.mxu0 %v5470
    %6460 = vmatprep.subr.bf16.mxu0 %v5479
    %6461 = vmatpush1.bf16.msra.mxu0 %v5478
    %6462 = vmatprep.subr.bf16.mxu0 %v5487
    %6463 = vmatpush1.bf16.msra.mxu0 %v5486
    %6464 = vmatprep.subr.bf16.mxu0 %v5495
    %6465 = vmatpush1.bf16.msra.mxu0 %v5494
    %6466 = vmatprep.subr.bf16.mxu0 %v5503
    %6467 = vmatpush1.bf16.msra.mxu0 %v5502
    %6468 = vmatprep.subr.bf16.mxu0 %v5511
    %6469 = vmatpush1.bf16.msra.mxu0 %v5510
    %6470 = vmatprep.subr.bf16.mxu0 %v5519
    %6471 = vmatpush1.bf16.msra.mxu0 %v5518
    %6472 = vmatprep.subr.bf16.mxu0 %v5527
    %6473 = vmatpush1.bf16.msra.mxu0 %v5526
    %6474 = vmatprep.subr.bf16.mxu0 %v5535
    %6475 = vmatpush1.bf16.msra.mxu0 %v5534
    %6476 = vmatprep.subr.bf16.mxu0 %v5543
    %6477 = vmatpush1.bf16.msra.mxu0 %v5542
    %6478 = vmatprep.subr.bf16.mxu0 %v5551
    %6479 = vmatpush1.bf16.msra.mxu0 %v5550
    %6480 = vmatprep.subr.bf16.mxu0 %v5559
    %6481 = vmatpush1.bf16.msra.mxu0 %v5558
    %6482 = vmatprep.mubr.bf16.mxu0 %v3087
    %6483 = vmatmul.mubr.bf16.gmra.mrb[0].mxu0 %v3086
    %v6484 = vpop.f32.mrb[0].mxu0
    %v6485 = vadd.f32 %v6444, %v6484
    %v6486 = vpop.f32.mrb[0].mxu0
    %v6487 = vadd.f32 %v6446, %v6486
    %v6488 = vpop.f32.mrb[0].mxu0
    %v6489 = vpop.f32.mrb[0].mxu0
    %6490 = vdwg.mxu0
    %6491 = vmatprep.subr.bf16.mxu0 %v5567
    %6492 = vmatpush1.bf16.msra.mxu0 %v5566
    %6493 = vmatprep.subr.bf16.mxu0 %v5575
    %6494 = vmatpush1.bf16.msra.mxu0 %v5574
    %6495 = vmatprep.subr.bf16.mxu0 %v5583
    %6496 = vmatpush1.bf16.msra.mxu0 %v5582
    %6497 = vmatprep.subr.bf16.mxu0 %v5591
    %6498 = vmatpush1.bf16.msra.mxu0 %v5590
    %6499 = vmatprep.subr.bf16.mxu0 %v5599
    %6500 = vmatpush1.bf16.msra.mxu0 %v5598
    %6501 = vmatprep.subr.bf16.mxu0 %v5607
    %6502 = vmatpush1.bf16.msra.mxu0 %v5606
    %6503 = vmatprep.subr.bf16.mxu0 %v5615
    %6504 = vmatpush1.bf16.msra.mxu0 %v5614
    %6505 = vmatprep.subr.bf16.mxu0 %v5623
    %6506 = vmatpush1.bf16.msra.mxu0 %v5622
    %6507 = vmatprep.subr.bf16.mxu0 %v5631
    %6508 = vmatpush1.bf16.msra.mxu0 %v5630
    %6509 = vmatprep.subr.bf16.mxu0 %v5639
    %6510 = vmatpush1.bf16.msra.mxu0 %v5638
    %6511 = vmatprep.subr.bf16.mxu0 %v5647
    %6512 = vmatpush1.bf16.msra.mxu0 %v5646
    %6513 = vmatprep.subr.bf16.mxu0 %v5655
    %6514 = vmatpush1.bf16.msra.mxu0 %v5654
    %6515 = vmatprep.subr.bf16.mxu0 %v5663
    %6516 = vmatpush1.bf16.msra.mxu0 %v5662
    %6517 = vmatprep.subr.bf16.mxu0 %v5671
    %6518 = vmatpush1.bf16.msra.mxu0 %v5670
    %6519 = vmatprep.subr.bf16.mxu0 %v5679
    %6520 = vmatpush1.bf16.msra.mxu0 %v5678
    %6521 = vmatprep.subr.bf16.mxu0 %v5687
    %6522 = vmatpush1.bf16.msra.mxu0 %v5686
    %6523 = vmatprep.mubr.bf16.mxu0 %v3089
    %6524 = vmatmul.mubr.bf16.gmra.mrb[0].mxu0 %v3088
    %v6525 = vpop.f32.mrb[0].mxu0
    %v6526 = vadd.f32 %v6485, %v6525
    %v6527 = vpop.f32.mrb[0].mxu0
    %v6528 = vadd.f32 %v6487, %v6527
    %v6529 = vpop.f32.mrb[0].mxu0
    %v6530 = vpop.f32.mrb[0].mxu0
    %6531 = vdwg.mxu0
    %6532 = vmatprep.subr.bf16.mxu0 %v5185
    %6533 = vmatpush1.bf16.msra.mxu0 %v5184
    %6534 = vmatprep.subr.bf16.mxu0 %v5193
    %6535 = vmatpush1.bf16.msra.mxu0 %v5192
    %6536 = vmatprep.subr.bf16.mxu0 %v5201
    %6537 = vmatpush1.bf16.msra.mxu0 %v5200
    %6538 = vmatprep.subr.bf16.mxu0 %v5209
    %6539 = vmatpush1.bf16.msra.mxu0 %v5208
    %6540 = vmatprep.subr.bf16.mxu0 %v5217
    %6541 = vmatpush1.bf16.msra.mxu0 %v5216
    %6542 = vmatprep.subr.bf16.mxu0 %v5225
    %6543 = vmatpush1.bf16.msra.mxu0 %v5224
    %6544 = vmatprep.subr.bf16.mxu0 %v5233
    %6545 = vmatpush1.bf16.msra.mxu0 %v5232
    %6546 = vmatprep.subr.bf16.mxu0 %v5241
    %6547 = vmatpush1.bf16.msra.mxu0 %v5240
    %6548 = vmatprep.subr.bf16.mxu0 %v5249
    %6549 = vmatpush1.bf16.msra.mxu0 %v5248
    %6550 = vmatprep.subr.bf16.mxu0 %v5257
    %6551 = vmatpush1.bf16.msra.mxu0 %v5256
    %6552 = vmatprep.subr.bf16.mxu0 %v5265
    %6553 = vmatpush1.bf16.msra.mxu0 %v5264
    %6554 = vmatprep.subr.bf16.mxu0 %v5273
    %6555 = vmatpush1.bf16.msra.mxu0 %v5272
    %6556 = vmatprep.subr.bf16.mxu0 %v5281
    %6557 = vmatpush1.bf16.msra.mxu0 %v5280
    %6558 = vmatprep.subr.bf16.mxu0 %v5289
    %6559 = vmatpush1.bf16.msra.mxu0 %v5288
    %6560 = vmatprep.subr.bf16.mxu0 %v5297
    %6561 = vmatpush1.bf16.msra.mxu0 %v5296
    %6562 = vmatprep.subr.bf16.mxu0 %v5305
    %6563 = vmatpush1.bf16.msra.mxu0 %v5304
    %6564 = vmatprep.mubr.bf16.mxu0 %v3083
    %6565 = vmatmul.mubr.bf16.gmra.mrb[0].mxu0 %v3082
    %v6566 = vpop.f32.mrb[0].mxu0
    %v6567 = vadd.f32 %v3623, %v6566
    %v6568 = vpop.f32.mrb[0].mxu0
    %v6569 = vadd.f32 %v3627, %v6568
    %v6570 = vpop.f32.mrb[0].mxu0
    %v6571 = vpop.f32.mrb[0].mxu0
    %6572 = vdwg.mxu0
    %6573 = vmatprep.subr.bf16.mxu0 %v5313
    %6574 = vmatpush1.bf16.msra.mxu0 %v5312
    %6575 = vmatprep.subr.bf16.mxu0 %v5321
    %6576 = vmatpush1.bf16.msra.mxu0 %v5320
    %6577 = vmatprep.subr.bf16.mxu0 %v5329
    %6578 = vmatpush1.bf16.msra.mxu0 %v5328
    %6579 = vmatprep.subr.bf16.mxu0 %v5337
    %6580 = vmatpush1.bf16.msra.mxu0 %v5336
    %6581 = vmatprep.subr.bf16.mxu0 %v5345
    %6582 = vmatpush1.bf16.msra.mxu0 %v5344
    %6583 = vmatprep.subr.bf16.mxu0 %v5353
    %6584 = vmatpush1.bf16.msra.mxu0 %v5352
    %6585 = vmatprep.subr.bf16.mxu0 %v5361
    %6586 = vmatpush1.bf16.msra.mxu0 %v5360
    %6587 = vmatprep.subr.bf16.mxu0 %v5369
    %6588 = vmatpush1.bf16.msra.mxu0 %v5368
    %6589 = vmatprep.subr.bf16.mxu0 %v5377
    %6590 = vmatpush1.bf16.msra.mxu0 %v5376
    %6591 = vmatprep.subr.bf16.mxu0 %v5385
    %6592 = vmatpush1.bf16.msra.mxu0 %v5384
    %6593 = vmatprep.subr.bf16.mxu0 %v5393
    %6594 = vmatpush1.bf16.msra.mxu0 %v5392
    %6595 = vmatprep.subr.bf16.mxu0 %v5401
    %6596 = vmatpush1.bf16.msra.mxu0 %v5400
    %6597 = vmatprep.subr.bf16.mxu0 %v5409
    %6598 = vmatpush1.bf16.msra.mxu0 %v5408
    %6599 = vmatprep.subr.bf16.mxu0 %v5417
    %6600 = vmatpush1.bf16.msra.mxu0 %v5416
    %6601 = vmatprep.subr.bf16.mxu0 %v5425
    %6602 = vmatpush1.bf16.msra.mxu0 %v5424
    %6603 = vmatprep.subr.bf16.mxu0 %v5433
    %6604 = vmatpush1.bf16.msra.mxu0 %v5432
    %6605 = vmatprep.mubr.bf16.mxu0 %v3085
    %6606 = vmatmul.mubr.bf16.gmra.mrb[0].mxu0 %v3084
    %v6607 = vpop.f32.mrb[0].mxu0
    %v6608 = vadd.f32 %v6567, %v6607
    %v6609 = vpop.f32.mrb[0].mxu0
    %v6610 = vadd.f32 %v6569, %v6609
    %v6611 = vpop.f32.mrb[0].mxu0
    %v6612 = vpop.f32.mrb[0].mxu0
    %6613 = vdwg.mxu0
    %6614 = vmatprep.subr.bf16.mxu0 %v5441
    %6615 = vmatpush1.bf16.msra.mxu0 %v5440
    %6616 = vmatprep.subr.bf16.mxu0 %v5449
    %6617 = vmatpush1.bf16.msra.mxu0 %v5448
    %6618 = vmatprep.subr.bf16.mxu0 %v5457
    %6619 = vmatpush1.bf16.msra.mxu0 %v5456
    %6620 = vmatprep.subr.bf16.mxu0 %v5465
    %6621 = vmatpush1.bf16.msra.mxu0 %v5464
    %6622 = vmatprep.subr.bf16.mxu0 %v5473
    %6623 = vmatpush1.bf16.msra.mxu0 %v5472
    %6624 = vmatprep.subr.bf16.mxu0 %v5481
    %6625 = vmatpush1.bf16.msra.mxu0 %v5480
    %6626 = vmatprep.subr.bf16.mxu0 %v5489
    %6627 = vmatpush1.bf16.msra.mxu0 %v5488
    %6628 = vmatprep.subr.bf16.mxu0 %v5497
    %6629 = vmatpush1.bf16.msra.mxu0 %v5496
    %6630 = vmatprep.subr.bf16.mxu0 %v5505
    %6631 = vmatpush1.bf16.msra.mxu0 %v5504
    %6632 = vmatprep.subr.bf16.mxu0 %v5513
    %6633 = vmatpush1.bf16.msra.mxu0 %v5512
    %6634 = vmatprep.subr.bf16.mxu0 %v5521
    %6635 = vmatpush1.bf16.msra.mxu0 %v5520
    %6636 = vmatprep.subr.bf16.mxu0 %v5529
    %6637 = vmatpush1.bf16.msra.mxu0 %v5528
    %6638 = vmatprep.subr.bf16.mxu0 %v5537
    %6639 = vmatpush1.bf16.msra.mxu0 %v5536
    %6640 = vmatprep.subr.bf16.mxu0 %v5545
    %6641 = vmatpush1.bf16.msra.mxu0 %v5544
    %6642 = vmatprep.subr.bf16.mxu0 %v5553
    %6643 = vmatpush1.bf16.msra.mxu0 %v5552
    %6644 = vmatprep.subr.bf16.mxu0 %v5561
    %6645 = vmatpush1.bf16.msra.mxu0 %v5560
    %6646 = vmatprep.mubr.bf16.mxu0 %v3087
    %6647 = vmatmul.mubr.bf16.gmra.mrb[0].mxu0 %v3086
    %v6648 = vpop.f32.mrb[0].mxu0
    %v6649 = vadd.f32 %v6608, %v6648
    %v6650 = vpop.f32.mrb[0].mxu0
    %v6651 = vadd.f32 %v6610, %v6650
    %v6652 = vpop.f32.mrb[0].mxu0
    %v6653 = vpop.f32.mrb[0].mxu0
    %6654 = vdwg.mxu0
    %6655 = vmatprep.subr.bf16.mxu0 %v5569
    %6656 = vmatpush1.bf16.msra.mxu0 %v5568
    %6657 = vmatprep.subr.bf16.mxu0 %v5577
    %6658 = vmatpush1.bf16.msra.mxu0 %v5576
    %6659 = vmatprep.subr.bf16.mxu0 %v5585
    %6660 = vmatpush1.bf16.msra.mxu0 %v5584
    %6661 = vmatprep.subr.bf16.mxu0 %v5593
    %6662 = vmatpush1.bf16.msra.mxu0 %v5592
    %6663 = vmatprep.subr.bf16.mxu0 %v5601
    %6664 = vmatpush1.bf16.msra.mxu0 %v5600
    %6665 = vmatprep.subr.bf16.mxu0 %v5609
    %6666 = vmatpush1.bf16.msra.mxu0 %v5608
    %6667 = vmatprep.subr.bf16.mxu0 %v5617
    %6668 = vmatpush1.bf16.msra.mxu0 %v5616
    %6669 = vmatprep.subr.bf16.mxu0 %v5625
    %6670 = vmatpush1.bf16.msra.mxu0 %v5624
    %6671 = vmatprep.subr.bf16.mxu0 %v5633
    %6672 = vmatpush1.bf16.msra.mxu0 %v5632
    %6673 = vmatprep.subr.bf16.mxu0 %v5641
    %6674 = vmatpush1.bf16.msra.mxu0 %v5640
    %6675 = vmatprep.subr.bf16.mxu0 %v5649
    %6676 = vmatpush1.bf16.msra.mxu0 %v5648
    %6677 = vmatprep.subr.bf16.mxu0 %v5657
    %6678 = vmatpush1.bf16.msra.mxu0 %v5656
    %6679 = vmatprep.subr.bf16.mxu0 %v5665
    %6680 = vmatpush1.bf16.msra.mxu0 %v5664
    %6681 = vmatprep.subr.bf16.mxu0 %v5673
    %6682 = vmatpush1.bf16.msra.mxu0 %v5672
    %6683 = vmatprep.subr.bf16.mxu0 %v5681
    %6684 = vmatpush1.bf16.msra.mxu0 %v5680
    %6685 = vmatprep.subr.bf16.mxu0 %v5689
    %6686 = vmatpush1.bf16.msra.mxu0 %v5688
    %6687 = vmatprep.mubr.bf16.mxu0 %v3089
    %6688 = vmatmul.mubr.bf16.gmra.mrb[0].mxu0 %v3088
    %v6689 = vpop.f32.mrb[0].mxu0
    %v6690 = vadd.f32 %v6649, %v6689
    %v6691 = vpop.f32.mrb[0].mxu0
    %v6692 = vadd.f32 %v6651, %v6691
    %v6693 = vpop.f32.mrb[0].mxu0
    %v6694 = vpop.f32.mrb[0].mxu0
    %6695 = vdwg.mxu0
    %6696 = vmatprep.subr.bf16.mxu0 %v5187
    %6697 = vmatpush1.bf16.msra.mxu0 %v5186
    %6698 = vmatprep.subr.bf16.mxu0 %v5195
    %6699 = vmatpush1.bf16.msra.mxu0 %v5194
    %6700 = vmatprep.subr.bf16.mxu0 %v5203
    %6701 = vmatpush1.bf16.msra.mxu0 %v5202
    %6702 = vmatprep.subr.bf16.mxu0 %v5211
    %6703 = vmatpush1.bf16.msra.mxu0 %v5210
    %6704 = vmatprep.subr.bf16.mxu0 %v5219
    %6705 = vmatpush1.bf16.msra.mxu0 %v5218
    %6706 = vmatprep.subr.bf16.mxu0 %v5227
    %6707 = vmatpush1.bf16.msra.mxu0 %v5226
    %6708 = vmatprep.subr.bf16.mxu0 %v5235
    %6709 = vmatpush1.bf16.msra.mxu0 %v5234
    %6710 = vmatprep.subr.bf16.mxu0 %v5243
    %6711 = vmatpush1.bf16.msra.mxu0 %v5242
    %6712 = vmatprep.subr.bf16.mxu0 %v5251
    %6713 = vmatpush1.bf16.msra.mxu0 %v5250
    %6714 = vmatprep.subr.bf16.mxu0 %v5259
    %6715 = vmatpush1.bf16.msra.mxu0 %v5258
    %6716 = vmatprep.subr.bf16.mxu0 %v5267
    %6717 = vmatpush1.bf16.msra.mxu0 %v5266
    %6718 = vmatprep.subr.bf16.mxu0 %v5275
    %6719 = vmatpush1.bf16.msra.mxu0 %v5274
    %6720 = vmatprep.subr.bf16.mxu0 %v5283
    %6721 = vmatpush1.bf16.msra.mxu0 %v5282
    %6722 = vmatprep.subr.bf16.mxu0 %v5291
    %6723 = vmatpush1.bf16.msra.mxu0 %v5290
    %6724 = vmatprep.subr.bf16.mxu0 %v5299
    %6725 = vmatpush1.bf16.msra.mxu0 %v5298
    %6726 = vmatprep.subr.bf16.mxu0 %v5307
    %6727 = vmatpush1.bf16.msra.mxu0 %v5306
    %6728 = vmatprep.mubr.bf16.mxu0 %v3083
    %6729 = vmatmul.mubr.bf16.gmra.mrb[0].mxu0 %v3082
    %v6730 = vpop.f32.mrb[0].mxu0
    %v6731 = vadd.f32 %v3631, %v6730
    %v6732 = vpop.f32.mrb[0].mxu0
    %v6733 = vadd.f32 %v3635, %v6732
    %v6734 = vpop.f32.mrb[0].mxu0
    %v6735 = vpop.f32.mrb[0].mxu0
    %6736 = vdwg.mxu0
    %6737 = vmatprep.subr.bf16.mxu0 %v5315
    %6738 = vmatpush1.bf16.msra.mxu0 %v5314
    %6739 = vmatprep.subr.bf16.mxu0 %v5323
    %6740 = vmatpush1.bf16.msra.mxu0 %v5322
    %6741 = vmatprep.subr.bf16.mxu0 %v5331
    %6742 = vmatpush1.bf16.msra.mxu0 %v5330
    %6743 = vmatprep.subr.bf16.mxu0 %v5339
    %6744 = vmatpush1.bf16.msra.mxu0 %v5338
    %6745 = vmatprep.subr.bf16.mxu0 %v5347
    %6746 = vmatpush1.bf16.msra.mxu0 %v5346
    %6747 = vmatprep.subr.bf16.mxu0 %v5355
    %6748 = vmatpush1.bf16.msra.mxu0 %v5354
    %6749 = vmatprep.subr.bf16.mxu0 %v5363
    %6750 = vmatpush1.bf16.msra.mxu0 %v5362
    %6751 = vmatprep.subr.bf16.mxu0 %v5371
    %6752 = vmatpush1.bf16.msra.mxu0 %v5370
    %6753 = vmatprep.subr.bf16.mxu0 %v5379
    %6754 = vmatpush1.bf16.msra.mxu0 %v5378
    %6755 = vmatprep.subr.bf16.mxu0 %v5387
    %6756 = vmatpush1.bf16.msra.mxu0 %v5386
    %6757 = vmatprep.subr.bf16.mxu0 %v5395
    %6758 = vmatpush1.bf16.msra.mxu0 %v5394
    %6759 = vmatprep.subr.bf16.mxu0 %v5403
    %6760 = vmatpush1.bf16.msra.mxu0 %v5402
    %6761 = vmatprep.subr.bf16.mxu0 %v5411
    %6762 = vmatpush1.bf16.msra.mxu0 %v5410
    %6763 = vmatprep.subr.bf16.mxu0 %v5419
    %6764 = vmatpush1.bf16.msra.mxu0 %v5418
    %6765 = vmatprep.subr.bf16.mxu0 %v5427
    %6766 = vmatpush1.bf16.msra.mxu0 %v5426
    %6767 = vmatprep.subr.bf16.mxu0 %v5435
    %6768 = vmatpush1.bf16.msra.mxu0 %v5434
    %6769 = vmatprep.mubr.bf16.mxu0 %v3085
    %6770 = vmatmul.mubr.bf16.gmra.mrb[0].mxu0 %v3084
    %v6771 = vpop.f32.mrb[0].mxu0
    %v6772 = vadd.f32 %v6731, %v6771
    %v6773 = vpop.f32.mrb[0].mxu0
    %v6774 = vadd.f32 %v6733, %v6773
    %v6775 = vpop.f32.mrb[0].mxu0
    %v6776 = vpop.f32.mrb[0].mxu0
    %6777 = vdwg.mxu0
    %6778 = vmatprep.subr.bf16.mxu0 %v5443
    %6779 = vmatpush1.bf16.msra.mxu0 %v5442
    %6780 = vmatprep.subr.bf16.mxu0 %v5451
    %6781 = vmatpush1.bf16.msra.mxu0 %v5450
    %6782 = vmatprep.subr.bf16.mxu0 %v5459
    %6783 = vmatpush1.bf16.msra.mxu0 %v5458
    %6784 = vmatprep.subr.bf16.mxu0 %v5467
    %6785 = vmatpush1.bf16.msra.mxu0 %v5466
    %6786 = vmatprep.subr.bf16.mxu0 %v5475
    %6787 = vmatpush1.bf16.msra.mxu0 %v5474
    %6788 = vmatprep.subr.bf16.mxu0 %v5483
    %6789 = vmatpush1.bf16.msra.mxu0 %v5482
    %6790 = vmatprep.subr.bf16.mxu0 %v5491
    %6791 = vmatpush1.bf16.msra.mxu0 %v5490
    %6792 = vmatprep.subr.bf16.mxu0 %v5499
    %6793 = vmatpush1.bf16.msra.mxu0 %v5498
    %6794 = vmatprep.subr.bf16.mxu0 %v5507
    %6795 = vmatpush1.bf16.msra.mxu0 %v5506
    %6796 = vmatprep.subr.bf16.mxu0 %v5515
    %6797 = vmatpush1.bf16.msra.mxu0 %v5514
    %6798 = vmatprep.subr.bf16.mxu0 %v5523
    %6799 = vmatpush1.bf16.msra.mxu0 %v5522
    %6800 = vmatprep.subr.bf16.mxu0 %v5531
    %6801 = vmatpush1.bf16.msra.mxu0 %v5530
    %6802 = vmatprep.subr.bf16.mxu0 %v5539
    %6803 = vmatpush1.bf16.msra.mxu0 %v5538
    %6804 = vmatprep.subr.bf16.mxu0 %v5547
    %6805 = vmatpush1.bf16.msra.mxu0 %v5546
    %6806 = vmatprep.subr.bf16.mxu0 %v5555
    %6807 = vmatpush1.bf16.msra.mxu0 %v5554
    %6808 = vmatprep.subr.bf16.mxu0 %v5563
    %6809 = vmatpush1.bf16.msra.mxu0 %v5562
    %6810 = vmatprep.mubr.bf16.mxu0 %v3087
    %6811 = vmatmul.mubr.bf16.gmra.mrb[0].mxu0 %v3086
    %v6812 = vpop.f32.mrb[0].mxu0
    %v6813 = vadd.f32 %v6772, %v6812
    %v6814 = vpop.f32.mrb[0].mxu0
    %v6815 = vadd.f32 %v6774, %v6814
    %v6816 = vpop.f32.mrb[0].mxu0
    %v6817 = vpop.f32.mrb[0].mxu0
    %6818 = vdwg.mxu0
    %6819 = vmatprep.subr.bf16.mxu0 %v5571
    %6820 = vmatpush1.bf16.msra.mxu0 %v5570
    %6821 = vmatprep.subr.bf16.mxu0 %v5579
    %6822 = vmatpush1.bf16.msra.mxu0 %v5578
    %6823 = vmatprep.subr.bf16.mxu0 %v5587
    %6824 = vmatpush1.bf16.msra.mxu0 %v5586
    %6825 = vmatprep.subr.bf16.mxu0 %v5595
    %6826 = vmatpush1.bf16.msra.mxu0 %v5594
    %6827 = vmatprep.subr.bf16.mxu0 %v5603
    %6828 = vmatpush1.bf16.msra.mxu0 %v5602
    %6829 = vmatprep.subr.bf16.mxu0 %v5611
    %6830 = vmatpush1.bf16.msra.mxu0 %v5610
    %6831 = vmatprep.subr.bf16.mxu0 %v5619
    %6832 = vmatpush1.bf16.msra.mxu0 %v5618
    %6833 = vmatprep.subr.bf16.mxu0 %v5627
    %6834 = vmatpush1.bf16.msra.mxu0 %v5626
    %6835 = vmatprep.subr.bf16.mxu0 %v5635
    %6836 = vmatpush1.bf16.msra.mxu0 %v5634
    %6837 = vmatprep.subr.bf16.mxu0 %v5643
    %6838 = vmatpush1.bf16.msra.mxu0 %v5642
    %6839 = vmatprep.subr.bf16.mxu0 %v5651
    %6840 = vmatpush1.bf16.msra.mxu0 %v5650
    %6841 = vmatprep.subr.bf16.mxu0 %v5659
    %6842 = vmatpush1.bf16.msra.mxu0 %v5658
    %6843 = vmatprep.subr.bf16.mxu0 %v5667
    %6844 = vmatpush1.bf16.msra.mxu0 %v5666
    %6845 = vmatprep.subr.bf16.mxu0 %v5675
    %6846 = vmatpush1.bf16.msra.mxu0 %v5674
    %6847 = vmatprep.subr.bf16.mxu0 %v5683
    %6848 = vmatpush1.bf16.msra.mxu0 %v5682
    %6849 = vmatprep.subr.bf16.mxu0 %v5691
    %6850 = vmatpush1.bf16.msra.mxu0 %v5690
    %6851 = vmatprep.mubr.bf16.mxu0 %v3089
    %6852 = vmatmul.mubr.bf16.gmra.mrb[0].mxu0 %v3088
    %v6853 = vpop.f32.mrb[0].mxu0
    %v6854 = vadd.f32 %v6813, %v6853
    %v6855 = vpop.f32.mrb[0].mxu0
    %v6856 = vadd.f32 %v6815, %v6855
    %v6857 = vpop.f32.mrb[0].mxu0
    %v6858 = vpop.f32.mrb[0].mxu0
    %6859 = vdwg.mxu0
    %vm6860 = vcmask 1041408
    %v6861 = vsel %vm6860, %v6362, 0.0
    %v6862 = vsel %vm6860, %v6364, 0.0
    %v6863 = vadd.f32 %v6861, %v6862
    %v6864 = vsel %vm6860, %v6526, 0.0
    %v6865 = vadd.f32 %v6863, %v6864
    %v6866 = vsel %vm6860, %v6528, 0.0
    %v6867 = vadd.f32 %v6865, %v6866
    %v6868 = vsel %vm6860, %v6690, 0.0
    %v6869 = vadd.f32 %v6867, %v6868
    %v6870 = vsel %vm6860, %v6692, 0.0
    %v6871 = vadd.f32 %v6869, %v6870
    %v6872 = vsel %vm6860, %v6854, 0.0
    %v6873 = vadd.f32 %v6871, %v6872
    %v6874 = vsel %vm6860, %v6856, 0.0
    %v6875 = vadd.f32 %v6873, %v6874
    %6876 = vadd.xlane.f32.xlu0 %v6875
    %v6877 = vpop.xlane.xlu0 %6876
    %v6878 = vrcp.pop 1024.0
    %v6879 = vmul.f32 %v6877, %v6878
    %v6880 = vsub.f32 %v6362, %v6879
    %v6881 = vsub.f32 %v6364, %v6879
    %v6882 = vsub.f32 %v6526, %v6879
    %v6883 = vsub.f32 %v6528, %v6879
    %v6884 = vsub.f32 %v6690, %v6879
    %v6885 = vsub.f32 %v6692, %v6879
    %v6886 = vsub.f32 %v6854, %v6879
    %v6887 = vsub.f32 %v6856, %v6879
    %v6888 = vmul.f32 %v6880, %v6880
    %v6889 = vmul.f32 %v6881, %v6881
    %v6890 = vmul.f32 %v6882, %v6882
    %v6891 = vmul.f32 %v6883, %v6883
    %v6892 = vmul.f32 %v6884, %v6884
    %v6893 = vmul.f32 %v6885, %v6885
    %v6894 = vmul.f32 %v6886, %v6886
    %v6895 = vmul.f32 %v6887, %v6887
    %v6896 = vsel %vm6860, %v6888, 0.0
    %v6897 = vsel %vm6860, %v6889, 0.0
    %v6898 = vadd.f32 %v6896, %v6897
    %v6899 = vsel %vm6860, %v6890, 0.0
    %v6900 = vadd.f32 %v6898, %v6899
    %v6901 = vsel %vm6860, %v6891, 0.0
    %v6902 = vadd.f32 %v6900, %v6901
    %v6903 = vsel %vm6860, %v6892, 0.0
    %v6904 = vadd.f32 %v6902, %v6903
    %v6905 = vsel %vm6860, %v6893, 0.0
    %v6906 = vadd.f32 %v6904, %v6905
    %v6907 = vsel %vm6860, %v6894, 0.0
    %v6908 = vadd.f32 %v6906, %v6907
    %v6909 = vsel %vm6860, %v6895, 0.0
    %v6910 = vadd.f32 %v6908, %v6909
    %6911 = vadd.xlane.f32.xlu0 %v6910
    %v6912 = vpop.xlane.xlu0 %6911
    %v6913 = vmul.f32 %v6912, %v6878
    %v6914 = vadd.f32 %v6913, 1e-05
    %v6915 = vrsqrt.pop %v6914
    %v6916 = vmul.f32 %v6880, %v6915
    %v6917 = vmul.f32 %v6881, %v6915
    %v6918 = vmul.f32 %v6882, %v6915
    %v6919 = vmul.f32 %v6883, %v6915
    %v6920 = vmul.f32 %v6884, %v6915
    %v6921 = vmul.f32 %v6885, %v6915
    %v6922 = vmul.f32 %v6886, %v6915
    %v6923 = vmul.f32 %v6887, %v6915
    %v6924 = vld [vmem:[#allocation10] sm:$0xff]
    %v6926 = vlaneseq
    %v6927 = vshrl.u32 %v6926, 7
    %v6928 = vsub.s32 0, %v6927
    %v6929 = vrot.slane %v6924, %v6928
    %v6930 = vlaneseq
    %v6931 = vshrl.u32 %v6930, 7
    %v6932 = vsub.s32 1, %v6931
    %v6933 = vrot.slane %v6924, %v6932
    %v6934 = vlaneseq
    %v6935 = vshrl.u32 %v6934, 7
    %v6936 = vsub.s32 2, %v6935
    %v6937 = vrot.slane %v6924, %v6936
    %v6938 = vlaneseq
    %v6939 = vshrl.u32 %v6938, 7
    %v6940 = vsub.s32 3, %v6939
    %v6941 = vrot.slane %v6924, %v6940
    %v6942 = vlaneseq
    %v6943 = vshrl.u32 %v6942, 7
    %v6944 = vsub.s32 4, %v6943
    %v6945 = vrot.slane %v6924, %v6944
    %v6946 = vlaneseq
    %v6947 = vshrl.u32 %v6946, 7
    %v6948 = vsub.s32 5, %v6947
    %v6949 = vrot.slane %v6924, %v6948
    %v6950 = vlaneseq
    %v6951 = vshrl.u32 %v6950, 7
    %v6952 = vsub.s32 6, %v6951
    %v6953 = vrot.slane %v6924, %v6952
    %v6954 = vlaneseq
    %v6955 = vshrl.u32 %v6954, 7
    %v6956 = vsub.s32 7, %v6955
    %v6957 = vrot.slane %v6924, %v6956
    %v6966 = vmul.f32 %v6916, %v6929
    %v6967 = vmul.f32 %v6917, %v6933
    %v6968 = vmul.f32 %v6918, %v6937
    %v6969 = vmul.f32 %v6919, %v6941
    %v6970 = vmul.f32 %v6920, %v6945
    %v6971 = vmul.f32 %v6921, %v6949
    %v6972 = vmul.f32 %v6922, %v6953
    %v6973 = vmul.f32 %v6923, %v6957
    %v6974 = vld [vmem:[#allocation11] sm:$0xff]
    %v6976 = vlaneseq
    %v6977 = vshrl.u32 %v6976, 7
    %v6978 = vsub.s32 0, %v6977
    %v6979 = vrot.slane %v6974, %v6978
    %v6980 = vlaneseq
    %v6981 = vshrl.u32 %v6980, 7
    %v6982 = vsub.s32 1, %v6981
    %v6983 = vrot.slane %v6974, %v6982
    %v6984 = vlaneseq
    %v6985 = vshrl.u32 %v6984, 7
    %v6986 = vsub.s32 2, %v6985
    %v6987 = vrot.slane %v6974, %v6986
    %v6988 = vlaneseq
    %v6989 = vshrl.u32 %v6988, 7
    %v6990 = vsub.s32 3, %v6989
    %v6991 = vrot.slane %v6974, %v6990
    %v6992 = vlaneseq
    %v6993 = vshrl.u32 %v6992, 7
    %v6994 = vsub.s32 4, %v6993
    %v6995 = vrot.slane %v6974, %v6994
    %v6996 = vlaneseq
    %v6997 = vshrl.u32 %v6996, 7
    %v6998 = vsub.s32 5, %v6997
    %v6999 = vrot.slane %v6974, %v6998
    %v7000 = vlaneseq
    %v7001 = vshrl.u32 %v7000, 7
    %v7002 = vsub.s32 6, %v7001
    %v7003 = vrot.slane %v6974, %v7002
    %v7004 = vlaneseq
    %v7005 = vshrl.u32 %v7004, 7
    %v7006 = vsub.s32 7, %v7005
    %v7007 = vrot.slane %v6974, %v7006
    %v7016 = vadd.f32 %v6966, %v6979
    %v7017 = vadd.f32 %v6967, %v6983
    %v7018 = vadd.f32 %v6968, %v6987
    %v7019 = vadd.f32 %v6969, %v6991
    %v7020 = vadd.f32 %v6970, %v6995
    %v7021 = vadd.f32 %v6971, %v6999
    %v7022 = vadd.f32 %v6972, %v7003
    %v7023 = vadd.f32 %v6973, %v7007
    %vm7024 = vcmp.ge.f32.partialorder %v7016, 0.0
    %vm7025 = vcmp.ge.f32.partialorder %v7017, 0.0
    %vm7026 = vcmp.ge.f32.partialorder %v7018, 0.0
    %vm7027 = vcmp.ge.f32.partialorder %v7019, 0.0
    %vm7028 = vcmp.ge.f32.partialorder %v7020, 0.0
    %vm7029 = vcmp.ge.f32.partialorder %v7021, 0.0
    %vm7030 = vcmp.ge.f32.partialorder %v7022, 0.0
    %vm7031 = vcmp.ge.f32.partialorder %v7023, 0.0
    %v7032 = vmul.f32 %v7016, 0.2
    %v7033 = vmul.f32 %v7017, 0.2
    %v7034 = vmul.f32 %v7018, 0.2
    %v7035 = vmul.f32 %v7019, 0.2
    %v7036 = vmul.f32 %v7020, 0.2
    %v7037 = vmul.f32 %v7021, 0.2
    %v7038 = vmul.f32 %v7022, 0.2
    %v7039 = vmul.f32 %v7023, 0.2
    %v7040 = vsel %vm7024, %v7016, %v7032
    %v7041 = vsel %vm7025, %v7017, %v7033
    %v7042 = vsel %vm7026, %v7018, %v7034
    %v7043 = vsel %vm7027, %v7019, %v7035
    %v7044 = vsel %vm7028, %v7020, %v7036
    %v7045 = vsel %vm7029, %v7021, %v7037
    %v7046 = vsel %vm7030, %v7022, %v7038
    %v7047 = vsel %vm7031, %v7023, %v7039
    %v7048 = vpack.c.bf16 %v7040, %v7040
    %v7049 = vpack.c.bf16 %v7041, %v7041
    %v7050 = vpack.c.bf16 %v7042, %v7042
    %v7051 = vpack.c.bf16 %v7043, %v7043
    %v7052 = vpack.c.bf16 %v7044, %v7044
    %v7053 = vpack.c.bf16 %v7045, %v7045
    %v7054 = vpack.c.bf16 %v7046, %v7046
    %v7055 = vpack.c.bf16 %v7047, %v7047
    %v7056 = vld [vmem:[#allocation13] sm:$0xff]
    %v7057 = vld [vmem:[#allocation13 + $0x8] sm:$0xff]
    %v7058 = vld [vmem:[#allocation13 + $0x10] sm:$0xff]
    %v7059 = vld [vmem:[#allocation13 + $0x18] sm:$0xff]
    %v7060 = vld [vmem:[#allocation13 + $0x20] sm:$0xff]
    %v7061 = vld [vmem:[#allocation13 + $0x28] sm:$0xff]
    %v7062 = vld [vmem:[#allocation13 + $0x30] sm:$0xff]
    %v7063 = vld [vmem:[#allocation13 + $0x38] sm:$0xff]
    %v7064 = vld [vmem:[#allocation13 + $0x40] sm:$0xff]
    %v7065 = vld [vmem:[#allocation13 + $0x48] sm:$0xff]
    %v7066 = vld [vmem:[#allocation13 + $0x50] sm:$0xff]
    %v7067 = vld [vmem:[#allocation13 + $0x58] sm:$0xff]
    %v7068 = vld [vmem:[#allocation13 + $0x60] sm:$0xff]
    %v7069 = vld [vmem:[#allocation13 + $0x68] sm:$0xff]
    %v7070 = vld [vmem:[#allocation13 + $0x70] sm:$0xff]
    %v7071 = vld [vmem:[#allocation13 + $0x78] sm:$0xff]
    %v7072 = vld [vmem:[#allocation13 + $0x80] sm:$0xff]
    %v7073 = vld [vmem:[#allocation13 + $0x88] sm:$0xff]
    %v7074 = vld [vmem:[#allocation13 + $0x90] sm:$0xff]
    %v7075 = vld [vmem:[#allocation13 + $0x98] sm:$0xff]
    %v7076 = vld [vmem:[#allocation13 + $0xa0] sm:$0xff]
    %v7077 = vld [vmem:[#allocation13 + $0xa8] sm:$0xff]
    %v7078 = vld [vmem:[#allocation13 + $0xb0] sm:$0xff]
    %v7079 = vld [vmem:[#allocation13 + $0xb8] sm:$0xff]
    %v7080 = vld [vmem:[#allocation13 + $0xc0] sm:$0xff]
    %v7081 = vld [vmem:[#allocation13 + $0xc8] sm:$0xff]
    %v7082 = vld [vmem:[#allocation13 + $0xd0] sm:$0xff]
    %v7083 = vld [vmem:[#allocation13 + $0xd8] sm:$0xff]
    %v7084 = vld [vmem:[#allocation13 + $0xe0] sm:$0xff]
    %v7085 = vld [vmem:[#allocation13 + $0xe8] sm:$0xff]
    %v7086 = vld [vmem:[#allocation13 + $0xf0] sm:$0xff]
    %v7087 = vld [vmem:[#allocation13 + $0xf8] sm:$0xff]
    %v7088 = vld [vmem:[#allocation13 + $0x100] sm:$0xff]
    %v7089 = vld [vmem:[#allocation13 + $0x108] sm:$0xff]
    %v7090 = vld [vmem:[#allocation13 + $0x110] sm:$0xff]
    %v7091 = vld [vmem:[#allocation13 + $0x118] sm:$0xff]
    %v7092 = vld [vmem:[#allocation13 + $0x120] sm:$0xff]
    %v7093 = vld [vmem:[#allocation13 + $0x128] sm:$0xff]
    %v7094 = vld [vmem:[#allocation13 + $0x130] sm:$0xff]
    %v7095 = vld [vmem:[#allocation13 + $0x138] sm:$0xff]
    %v7096 = vld [vmem:[#allocation13 + $0x140] sm:$0xff]
    %v7097 = vld [vmem:[#allocation13 + $0x148] sm:$0xff]
    %v7098 = vld [vmem:[#allocation13 + $0x150] sm:$0xff]
    %v7099 = vld [vmem:[#allocation13 + $0x158] sm:$0xff]
    %v7100 = vld [vmem:[#allocation13 + $0x160] sm:$0xff]
    %v7101 = vld [vmem:[#allocation13 + $0x168] sm:$0xff]
    %v7102 = vld [vmem:[#allocation13 + $0x170] sm:$0xff]
    %v7103 = vld [vmem:[#allocation13 + $0x178] sm:$0xff]
    %v7104 = vld [vmem:[#allocation13 + $0x180] sm:$0xff]
    %v7105 = vld [vmem:[#allocation13 + $0x188] sm:$0xff]
    %v7106 = vld [vmem:[#allocation13 + $0x190] sm:$0xff]
    %v7107 = vld [vmem:[#allocation13 + $0x198] sm:$0xff]
    %v7108 = vld [vmem:[#allocation13 + $0x1a0] sm:$0xff]
    %v7109 = vld [vmem:[#allocation13 + $0x1a8] sm:$0xff]
    %v7110 = vld [vmem:[#allocation13 + $0x1b0] sm:$0xff]
    %v7111 = vld [vmem:[#allocation13 + $0x1b8] sm:$0xff]
    %v7112 = vld [vmem:[#allocation13 + $0x1c0] sm:$0xff]
    %v7113 = vld [vmem:[#allocation13 + $0x1c8] sm:$0xff]
    %v7114 = vld [vmem:[#allocation13 + $0x1d0] sm:$0xff]
    %v7115 = vld [vmem:[#allocation13 + $0x1d8] sm:$0xff]
    %v7116 = vld [vmem:[#allocation13 + $0x1e0] sm:$0xff]
    %v7117 = vld [vmem:[#allocation13 + $0x1e8] sm:$0xff]
    %v7118 = vld [vmem:[#allocation13 + $0x1f0] sm:$0xff]
    %v7119 = vld [vmem:[#allocation13 + $0x1f8] sm:$0xff]
    %v7120 = vld [vmem:[#allocation13 + $0x200] sm:$0xff]
    %v7121 = vld [vmem:[#allocation13 + $0x208] sm:$0xff]
    %v7122 = vld [vmem:[#allocation13 + $0x210] sm:$0xff]
    %v7123 = vld [vmem:[#allocation13 + $0x218] sm:$0xff]
    %v7124 = vld [vmem:[#allocation13 + $0x220] sm:$0xff]
    %v7125 = vld [vmem:[#allocation13 + $0x228] sm:$0xff]
    %v7126 = vld [vmem:[#allocation13 + $0x230] sm:$0xff]
    %v7127 = vld [vmem:[#allocation13 + $0x238] sm:$0xff]
    %v7128 = vld [vmem:[#allocation13 + $0x240] sm:$0xff]
    %v7129 = vld [vmem:[#allocation13 + $0x248] sm:$0xff]
    %v7130 = vld [vmem:[#allocation13 + $0x250] sm:$0xff]
    %v7131 = vld [vmem:[#allocation13 + $0x258] sm:$0xff]
    %v7132 = vld [vmem:[#allocation13 + $0x260] sm:$0xff]
    %v7133 = vld [vmem:[#allocation13 + $0x268] sm:$0xff]
    %v7134 = vld [vmem:[#allocation13 + $0x270] sm:$0xff]
    %v7135 = vld [vmem:[#allocation13 + $0x278] sm:$0xff]
    %v7136 = vld [vmem:[#allocation13 + $0x280] sm:$0xff]
    %v7137 = vld [vmem:[#allocation13 + $0x288] sm:$0xff]
    %v7138 = vld [vmem:[#allocation13 + $0x290] sm:$0xff]
    %v7139 = vld [vmem:[#allocation13 + $0x298] sm:$0xff]
    %v7140 = vld [vmem:[#allocation13 + $0x2a0] sm:$0xff]
    %v7141 = vld [vmem:[#allocation13 + $0x2a8] sm:$0xff]
    %v7142 = vld [vmem:[#allocation13 + $0x2b0] sm:$0xff]
    %v7143 = vld [vmem:[#allocation13 + $0x2b8] sm:$0xff]
    %v7144 = vld [vmem:[#allocation13 + $0x2c0] sm:$0xff]
    %v7145 = vld [vmem:[#allocation13 + $0x2c8] sm:$0xff]
    %v7146 = vld [vmem:[#allocation13 + $0x2d0] sm:$0xff]
    %v7147 = vld [vmem:[#allocation13 + $0x2d8] sm:$0xff]
    %v7148 = vld [vmem:[#allocation13 + $0x2e0] sm:$0xff]
    %v7149 = vld [vmem:[#allocation13 + $0x2e8] sm:$0xff]
    %v7150 = vld [vmem:[#allocation13 + $0x2f0] sm:$0xff]
    %v7151 = vld [vmem:[#allocation13 + $0x2f8] sm:$0xff]
    %v7152 = vld [vmem:[#allocation13 + $0x300] sm:$0xff]
    %v7153 = vld [vmem:[#allocation13 + $0x308] sm:$0xff]
    %v7154 = vld [vmem:[#allocation13 + $0x310] sm:$0xff]
    %v7155 = vld [vmem:[#allocation13 + $0x318] sm:$0xff]
    %v7156 = vld [vmem:[#allocation13 + $0x320] sm:$0xff]
    %v7157 = vld [vmem:[#allocation13 + $0x328] sm:$0xff]
    %v7158 = vld [vmem:[#allocation13 + $0x330] sm:$0xff]
    %v7159 = vld [vmem:[#allocation13 + $0x338] sm:$0xff]
    %v7160 = vld [vmem:[#allocation13 + $0x340] sm:$0xff]
    %v7161 = vld [vmem:[#allocation13 + $0x348] sm:$0xff]
    %v7162 = vld [vmem:[#allocation13 + $0x350] sm:$0xff]
    %v7163 = vld [vmem:[#allocation13 + $0x358] sm:$0xff]
    %v7164 = vld [vmem:[#allocation13 + $0x360] sm:$0xff]
    %v7165 = vld [vmem:[#allocation13 + $0x368] sm:$0xff]
    %v7166 = vld [vmem:[#allocation13 + $0x370] sm:$0xff]
    %v7167 = vld [vmem:[#allocation13 + $0x378] sm:$0xff]
    %v7168 = vld [vmem:[#allocation13 + $0x380] sm:$0xff]
    %v7169 = vld [vmem:[#allocation13 + $0x388] sm:$0xff]
    %v7170 = vld [vmem:[#allocation13 + $0x390] sm:$0xff]
    %v7171 = vld [vmem:[#allocation13 + $0x398] sm:$0xff]
    %v7172 = vld [vmem:[#allocation13 + $0x3a0] sm:$0xff]
    %v7173 = vld [vmem:[#allocation13 + $0x3a8] sm:$0xff]
    %v7174 = vld [vmem:[#allocation13 + $0x3b0] sm:$0xff]
    %v7175 = vld [vmem:[#allocation13 + $0x3b8] sm:$0xff]
    %v7176 = vld [vmem:[#allocation13 + $0x3c0] sm:$0xff]
    %v7177 = vld [vmem:[#allocation13 + $0x3c8] sm:$0xff]
    %v7178 = vld [vmem:[#allocation13 + $0x3d0] sm:$0xff]
    %v7179 = vld [vmem:[#allocation13 + $0x3d8] sm:$0xff]
    %v7180 = vld [vmem:[#allocation13 + $0x3e0] sm:$0xff]
    %v7181 = vld [vmem:[#allocation13 + $0x3e8] sm:$0xff]
    %v7182 = vld [vmem:[#allocation13 + $0x3f0] sm:$0xff]
    %v7183 = vld [vmem:[#allocation13 + $0x3f8] sm:$0xff]
    %v7184 = vld [vmem:[#allocation13 + $0x400] sm:$0xff]
    %v7185 = vld [vmem:[#allocation13 + $0x408] sm:$0xff]
    %v7186 = vld [vmem:[#allocation13 + $0x410] sm:$0xff]
    %v7187 = vld [vmem:[#allocation13 + $0x418] sm:$0xff]
    %v7188 = vld [vmem:[#allocation13 + $0x420] sm:$0xff]
    %v7189 = vld [vmem:[#allocation13 + $0x428] sm:$0xff]
    %v7190 = vld [vmem:[#allocation13 + $0x430] sm:$0xff]
    %v7191 = vld [vmem:[#allocation13 + $0x438] sm:$0xff]
    %v7192 = vld [vmem:[#allocation13 + $0x440] sm:$0xff]
    %v7193 = vld [vmem:[#allocation13 + $0x448] sm:$0xff]
    %v7194 = vld [vmem:[#allocation13 + $0x450] sm:$0xff]
    %v7195 = vld [vmem:[#allocation13 + $0x458] sm:$0xff]
    %v7196 = vld [vmem:[#allocation13 + $0x460] sm:$0xff]
    %v7197 = vld [vmem:[#allocation13 + $0x468] sm:$0xff]
    %v7198 = vld [vmem:[#allocation13 + $0x470] sm:$0xff]
    %v7199 = vld [vmem:[#allocation13 + $0x478] sm:$0xff]
    %v7200 = vld [vmem:[#allocation13 + $0x480] sm:$0xff]
    %v7201 = vld [vmem:[#allocation13 + $0x488] sm:$0xff]
    %v7202 = vld [vmem:[#allocation13 + $0x490] sm:$0xff]
    %v7203 = vld [vmem:[#allocation13 + $0x498] sm:$0xff]
    %v7204 = vld [vmem:[#allocation13 + $0x4a0] sm:$0xff]
    %v7205 = vld [vmem:[#allocation13 + $0x4a8] sm:$0xff]
    %v7206 = vld [vmem:[#allocation13 + $0x4b0] sm:$0xff]
    %v7207 = vld [vmem:[#allocation13 + $0x4b8] sm:$0xff]
    %v7208 = vld [vmem:[#allocation13 + $0x4c0] sm:$0xff]
    %v7209 = vld [vmem:[#allocation13 + $0x4c8] sm:$0xff]
    %v7210 = vld [vmem:[#allocation13 + $0x4d0] sm:$0xff]
    %v7211 = vld [vmem:[#allocation13 + $0x4d8] sm:$0xff]
    %v7212 = vld [vmem:[#allocation13 + $0x4e0] sm:$0xff]
    %v7213 = vld [vmem:[#allocation13 + $0x4e8] sm:$0xff]
    %v7214 = vld [vmem:[#allocation13 + $0x4f0] sm:$0xff]
    %v7215 = vld [vmem:[#allocation13 + $0x4f8] sm:$0xff]
    %v7216 = vld [vmem:[#allocation13 + $0x500] sm:$0xff]
    %v7217 = vld [vmem:[#allocation13 + $0x508] sm:$0xff]
    %v7218 = vld [vmem:[#allocation13 + $0x510] sm:$0xff]
    %v7219 = vld [vmem:[#allocation13 + $0x518] sm:$0xff]
    %v7220 = vld [vmem:[#allocation13 + $0x520] sm:$0xff]
    %v7221 = vld [vmem:[#allocation13 + $0x528] sm:$0xff]
    %v7222 = vld [vmem:[#allocation13 + $0x530] sm:$0xff]
    %v7223 = vld [vmem:[#allocation13 + $0x538] sm:$0xff]
    %v7224 = vld [vmem:[#allocation13 + $0x540] sm:$0xff]
    %v7225 = vld [vmem:[#allocation13 + $0x548] sm:$0xff]
    %v7226 = vld [vmem:[#allocation13 + $0x550] sm:$0xff]
    %v7227 = vld [vmem:[#allocation13 + $0x558] sm:$0xff]
    %v7228 = vld [vmem:[#allocation13 + $0x560] sm:$0xff]
    %v7229 = vld [vmem:[#allocation13 + $0x568] sm:$0xff]
    %v7230 = vld [vmem:[#allocation13 + $0x570] sm:$0xff]
    %v7231 = vld [vmem:[#allocation13 + $0x578] sm:$0xff]
    %v7232 = vld [vmem:[#allocation13 + $0x580] sm:$0xff]
    %v7233 = vld [vmem:[#allocation13 + $0x588] sm:$0xff]
    %v7234 = vld [vmem:[#allocation13 + $0x590] sm:$0xff]
    %v7235 = vld [vmem:[#allocation13 + $0x598] sm:$0xff]
    %v7236 = vld [vmem:[#allocation13 + $0x5a0] sm:$0xff]
    %v7237 = vld [vmem:[#allocation13 + $0x5a8] sm:$0xff]
    %v7238 = vld [vmem:[#allocation13 + $0x5b0] sm:$0xff]
    %v7239 = vld [vmem:[#allocation13 + $0x5b8] sm:$0xff]
    %v7240 = vld [vmem:[#allocation13 + $0x5c0] sm:$0xff]
    %v7241 = vld [vmem:[#allocation13 + $0x5c8] sm:$0xff]
    %v7242 = vld [vmem:[#allocation13 + $0x5d0] sm:$0xff]
    %v7243 = vld [vmem:[#allocation13 + $0x5d8] sm:$0xff]
    %v7244 = vld [vmem:[#allocation13 + $0x5e0] sm:$0xff]
    %v7245 = vld [vmem:[#allocation13 + $0x5e8] sm:$0xff]
    %v7246 = vld [vmem:[#allocation13 + $0x5f0] sm:$0xff]
    %v7247 = vld [vmem:[#allocation13 + $0x5f8] sm:$0xff]
    %v7248 = vld [vmem:[#allocation13 + $0x600] sm:$0xff]
    %v7249 = vld [vmem:[#allocation13 + $0x608] sm:$0xff]
    %v7250 = vld [vmem:[#allocation13 + $0x610] sm:$0xff]
    %v7251 = vld [vmem:[#allocation13 + $0x618] sm:$0xff]
    %v7252 = vld [vmem:[#allocation13 + $0x620] sm:$0xff]
    %v7253 = vld [vmem:[#allocation13 + $0x628] sm:$0xff]
    %v7254 = vld [vmem:[#allocation13 + $0x630] sm:$0xff]
    %v7255 = vld [vmem:[#allocation13 + $0x638] sm:$0xff]
    %v7256 = vld [vmem:[#allocation13 + $0x640] sm:$0xff]
    %v7257 = vld [vmem:[#allocation13 + $0x648] sm:$0xff]
    %v7258 = vld [vmem:[#allocation13 + $0x650] sm:$0xff]
    %v7259 = vld [vmem:[#allocation13 + $0x658] sm:$0xff]
    %v7260 = vld [vmem:[#allocation13 + $0x660] sm:$0xff]
    %v7261 = vld [vmem:[#allocation13 + $0x668] sm:$0xff]
    %v7262 = vld [vmem:[#allocation13 + $0x670] sm:$0xff]
    %v7263 = vld [vmem:[#allocation13 + $0x678] sm:$0xff]
    %v7264 = vld [vmem:[#allocation13 + $0x680] sm:$0xff]
    %v7265 = vld [vmem:[#allocation13 + $0x688] sm:$0xff]
    %v7266 = vld [vmem:[#allocation13 + $0x690] sm:$0xff]
    %v7267 = vld [vmem:[#allocation13 + $0x698] sm:$0xff]
    %v7268 = vld [vmem:[#allocation13 + $0x6a0] sm:$0xff]
    %v7269 = vld [vmem:[#allocation13 + $0x6a8] sm:$0xff]
    %v7270 = vld [vmem:[#allocation13 + $0x6b0] sm:$0xff]
    %v7271 = vld [vmem:[#allocation13 + $0x6b8] sm:$0xff]
    %v7272 = vld [vmem:[#allocation13 + $0x6c0] sm:$0xff]
    %v7273 = vld [vmem:[#allocation13 + $0x6c8] sm:$0xff]
    %v7274 = vld [vmem:[#allocation13 + $0x6d0] sm:$0xff]
    %v7275 = vld [vmem:[#allocation13 + $0x6d8] sm:$0xff]
    %v7276 = vld [vmem:[#allocation13 + $0x6e0] sm:$0xff]
    %v7277 = vld [vmem:[#allocation13 + $0x6e8] sm:$0xff]
    %v7278 = vld [vmem:[#allocation13 + $0x6f0] sm:$0xff]
    %v7279 = vld [vmem:[#allocation13 + $0x6f8] sm:$0xff]
    %v7280 = vld [vmem:[#allocation13 + $0x700] sm:$0xff]
    %v7281 = vld [vmem:[#allocation13 + $0x708] sm:$0xff]
    %v7282 = vld [vmem:[#allocation13 + $0x710] sm:$0xff]
    %v7283 = vld [vmem:[#allocation13 + $0x718] sm:$0xff]
    %v7284 = vld [vmem:[#allocation13 + $0x720] sm:$0xff]
    %v7285 = vld [vmem:[#allocation13 + $0x728] sm:$0xff]
    %v7286 = vld [vmem:[#allocation13 + $0x730] sm:$0xff]
    %v7287 = vld [vmem:[#allocation13 + $0x738] sm:$0xff]
    %v7288 = vld [vmem:[#allocation13 + $0x740] sm:$0xff]
    %v7289 = vld [vmem:[#allocation13 + $0x748] sm:$0xff]
    %v7290 = vld [vmem:[#allocation13 + $0x750] sm:$0xff]
    %v7291 = vld [vmem:[#allocation13 + $0x758] sm:$0xff]
    %v7292 = vld [vmem:[#allocation13 + $0x760] sm:$0xff]
    %v7293 = vld [vmem:[#allocation13 + $0x768] sm:$0xff]
    %v7294 = vld [vmem:[#allocation13 + $0x770] sm:$0xff]
    %v7295 = vld [vmem:[#allocation13 + $0x778] sm:$0xff]
    %v7296 = vld [vmem:[#allocation13 + $0x780] sm:$0xff]
    %v7297 = vld [vmem:[#allocation13 + $0x788] sm:$0xff]
    %v7298 = vld [vmem:[#allocation13 + $0x790] sm:$0xff]
    %v7299 = vld [vmem:[#allocation13 + $0x798] sm:$0xff]
    %v7300 = vld [vmem:[#allocation13 + $0x7a0] sm:$0xff]
    %v7301 = vld [vmem:[#allocation13 + $0x7a8] sm:$0xff]
    %v7302 = vld [vmem:[#allocation13 + $0x7b0] sm:$0xff]
    %v7303 = vld [vmem:[#allocation13 + $0x7b8] sm:$0xff]
    %v7304 = vld [vmem:[#allocation13 + $0x7c0] sm:$0xff]
    %v7305 = vld [vmem:[#allocation13 + $0x7c8] sm:$0xff]
    %v7306 = vld [vmem:[#allocation13 + $0x7d0] sm:$0xff]
    %v7307 = vld [vmem:[#allocation13 + $0x7d8] sm:$0xff]
    %v7308 = vld [vmem:[#allocation13 + $0x7e0] sm:$0xff]
    %v7309 = vld [vmem:[#allocation13 + $0x7e8] sm:$0xff]
    %v7310 = vld [vmem:[#allocation13 + $0x7f0] sm:$0xff]
    %v7311 = vld [vmem:[#allocation13 + $0x7f8] sm:$0xff]
    %v7312 = vld [vmem:[#allocation13 + $0x800] sm:$0xff]
    %v7313 = vld [vmem:[#allocation13 + $0x808] sm:$0xff]
    %v7314 = vld [vmem:[#allocation13 + $0x810] sm:$0xff]
    %v7315 = vld [vmem:[#allocation13 + $0x818] sm:$0xff]
    %v7316 = vld [vmem:[#allocation13 + $0x820] sm:$0xff]
    %v7317 = vld [vmem:[#allocation13 + $0x828] sm:$0xff]
    %v7318 = vld [vmem:[#allocation13 + $0x830] sm:$0xff]
    %v7319 = vld [vmem:[#allocation13 + $0x838] sm:$0xff]
    %v7320 = vld [vmem:[#allocation13 + $0x840] sm:$0xff]
    %v7321 = vld [vmem:[#allocation13 + $0x848] sm:$0xff]
    %v7322 = vld [vmem:[#allocation13 + $0x850] sm:$0xff]
    %v7323 = vld [vmem:[#allocation13 + $0x858] sm:$0xff]
    %v7324 = vld [vmem:[#allocation13 + $0x860] sm:$0xff]
    %v7325 = vld [vmem:[#allocation13 + $0x868] sm:$0xff]
    %v7326 = vld [vmem:[#allocation13 + $0x870] sm:$0xff]
    %v7327 = vld [vmem:[#allocation13 + $0x878] sm:$0xff]
    %v7328 = vld [vmem:[#allocation13 + $0x880] sm:$0xff]
    %v7329 = vld [vmem:[#allocation13 + $0x888] sm:$0xff]
    %v7330 = vld [vmem:[#allocation13 + $0x890] sm:$0xff]
    %v7331 = vld [vmem:[#allocation13 + $0x898] sm:$0xff]
    %v7332 = vld [vmem:[#allocation13 + $0x8a0] sm:$0xff]
    %v7333 = vld [vmem:[#allocation13 + $0x8a8] sm:$0xff]
    %v7334 = vld [vmem:[#allocation13 + $0x8b0] sm:$0xff]
    %v7335 = vld [vmem:[#allocation13 + $0x8b8] sm:$0xff]
    %v7336 = vld [vmem:[#allocation13 + $0x8c0] sm:$0xff]
    %v7337 = vld [vmem:[#allocation13 + $0x8c8] sm:$0xff]
    %v7338 = vld [vmem:[#allocation13 + $0x8d0] sm:$0xff]
    %v7339 = vld [vmem:[#allocation13 + $0x8d8] sm:$0xff]
    %v7340 = vld [vmem:[#allocation13 + $0x8e0] sm:$0xff]
    %v7341 = vld [vmem:[#allocation13 + $0x8e8] sm:$0xff]
    %v7342 = vld [vmem:[#allocation13 + $0x8f0] sm:$0xff]
    %v7343 = vld [vmem:[#allocation13 + $0x8f8] sm:$0xff]
    %v7344 = vld [vmem:[#allocation13 + $0x900] sm:$0xff]
    %v7345 = vld [vmem:[#allocation13 + $0x908] sm:$0xff]
    %v7346 = vld [vmem:[#allocation13 + $0x910] sm:$0xff]
    %v7347 = vld [vmem:[#allocation13 + $0x918] sm:$0xff]
    %v7348 = vld [vmem:[#allocation13 + $0x920] sm:$0xff]
    %v7349 = vld [vmem:[#allocation13 + $0x928] sm:$0xff]
    %v7350 = vld [vmem:[#allocation13 + $0x930] sm:$0xff]
    %v7351 = vld [vmem:[#allocation13 + $0x938] sm:$0xff]
    %v7352 = vld [vmem:[#allocation13 + $0x940] sm:$0xff]
    %v7353 = vld [vmem:[#allocation13 + $0x948] sm:$0xff]
    %v7354 = vld [vmem:[#allocation13 + $0x950] sm:$0xff]
    %v7355 = vld [vmem:[#allocation13 + $0x958] sm:$0xff]
    %v7356 = vld [vmem:[#allocation13 + $0x960] sm:$0xff]
    %v7357 = vld [vmem:[#allocation13 + $0x968] sm:$0xff]
    %v7358 = vld [vmem:[#allocation13 + $0x970] sm:$0xff]
    %v7359 = vld [vmem:[#allocation13 + $0x978] sm:$0xff]
    %v7360 = vld [vmem:[#allocation13 + $0x980] sm:$0xff]
    %v7361 = vld [vmem:[#allocation13 + $0x988] sm:$0xff]
    %v7362 = vld [vmem:[#allocation13 + $0x990] sm:$0xff]
    %v7363 = vld [vmem:[#allocation13 + $0x998] sm:$0xff]
    %v7364 = vld [vmem:[#allocation13 + $0x9a0] sm:$0xff]
    %v7365 = vld [vmem:[#allocation13 + $0x9a8] sm:$0xff]
    %v7366 = vld [vmem:[#allocation13 + $0x9b0] sm:$0xff]
    %v7367 = vld [vmem:[#allocation13 + $0x9b8] sm:$0xff]
    %v7368 = vld [vmem:[#allocation13 + $0x9c0] sm:$0xff]
    %v7369 = vld [vmem:[#allocation13 + $0x9c8] sm:$0xff]
    %v7370 = vld [vmem:[#allocation13 + $0x9d0] sm:$0xff]
    %v7371 = vld [vmem:[#allocation13 + $0x9d8] sm:$0xff]
    %v7372 = vld [vmem:[#allocation13 + $0x9e0] sm:$0xff]
    %v7373 = vld [vmem:[#allocation13 + $0x9e8] sm:$0xff]
    %v7374 = vld [vmem:[#allocation13 + $0x9f0] sm:$0xff]
    %v7375 = vld [vmem:[#allocation13 + $0x9f8] sm:$0xff]
    %v7376 = vld [vmem:[#allocation13 + $0xa00] sm:$0xff]
    %v7377 = vld [vmem:[#allocation13 + $0xa08] sm:$0xff]
    %v7378 = vld [vmem:[#allocation13 + $0xa10] sm:$0xff]
    %v7379 = vld [vmem:[#allocation13 + $0xa18] sm:$0xff]
    %v7380 = vld [vmem:[#allocation13 + $0xa20] sm:$0xff]
    %v7381 = vld [vmem:[#allocation13 + $0xa28] sm:$0xff]
    %v7382 = vld [vmem:[#allocation13 + $0xa30] sm:$0xff]
    %v7383 = vld [vmem:[#allocation13 + $0xa38] sm:$0xff]
    %v7384 = vld [vmem:[#allocation13 + $0xa40] sm:$0xff]
    %v7385 = vld [vmem:[#allocation13 + $0xa48] sm:$0xff]
    %v7386 = vld [vmem:[#allocation13 + $0xa50] sm:$0xff]
    %v7387 = vld [vmem:[#allocation13 + $0xa58] sm:$0xff]
    %v7388 = vld [vmem:[#allocation13 + $0xa60] sm:$0xff]
    %v7389 = vld [vmem:[#allocation13 + $0xa68] sm:$0xff]
    %v7390 = vld [vmem:[#allocation13 + $0xa70] sm:$0xff]
    %v7391 = vld [vmem:[#allocation13 + $0xa78] sm:$0xff]
    %v7392 = vld [vmem:[#allocation13 + $0xa80] sm:$0xff]
    %v7393 = vld [vmem:[#allocation13 + $0xa88] sm:$0xff]
    %v7394 = vld [vmem:[#allocation13 + $0xa90] sm:$0xff]
    %v7395 = vld [vmem:[#allocation13 + $0xa98] sm:$0xff]
    %v7396 = vld [vmem:[#allocation13 + $0xaa0] sm:$0xff]
    %v7397 = vld [vmem:[#allocation13 + $0xaa8] sm:$0xff]
    %v7398 = vld [vmem:[#allocation13 + $0xab0] sm:$0xff]
    %v7399 = vld [vmem:[#allocation13 + $0xab8] sm:$0xff]
    %v7400 = vld [vmem:[#allocation13 + $0xac0] sm:$0xff]
    %v7401 = vld [vmem:[#allocation13 + $0xac8] sm:$0xff]
    %v7402 = vld [vmem:[#allocation13 + $0xad0] sm:$0xff]
    %v7403 = vld [vmem:[#allocation13 + $0xad8] sm:$0xff]
    %v7404 = vld [vmem:[#allocation13 + $0xae0] sm:$0xff]
    %v7405 = vld [vmem:[#allocation13 + $0xae8] sm:$0xff]
    %v7406 = vld [vmem:[#allocation13 + $0xaf0] sm:$0xff]
    %v7407 = vld [vmem:[#allocation13 + $0xaf8] sm:$0xff]
    %v7408 = vld [vmem:[#allocation13 + $0xb00] sm:$0xff]
    %v7409 = vld [vmem:[#allocation13 + $0xb08] sm:$0xff]
    %v7410 = vld [vmem:[#allocation13 + $0xb10] sm:$0xff]
    %v7411 = vld [vmem:[#allocation13 + $0xb18] sm:$0xff]
    %v7412 = vld [vmem:[#allocation13 + $0xb20] sm:$0xff]
    %v7413 = vld [vmem:[#allocation13 + $0xb28] sm:$0xff]
    %v7414 = vld [vmem:[#allocation13 + $0xb30] sm:$0xff]
    %v7415 = vld [vmem:[#allocation13 + $0xb38] sm:$0xff]
    %v7416 = vld [vmem:[#allocation13 + $0xb40] sm:$0xff]
    %v7417 = vld [vmem:[#allocation13 + $0xb48] sm:$0xff]
    %v7418 = vld [vmem:[#allocation13 + $0xb50] sm:$0xff]
    %v7419 = vld [vmem:[#allocation13 + $0xb58] sm:$0xff]
    %v7420 = vld [vmem:[#allocation13 + $0xb60] sm:$0xff]
    %v7421 = vld [vmem:[#allocation13 + $0xb68] sm:$0xff]
    %v7422 = vld [vmem:[#allocation13 + $0xb70] sm:$0xff]
    %v7423 = vld [vmem:[#allocation13 + $0xb78] sm:$0xff]
    %v7424 = vld [vmem:[#allocation13 + $0xb80] sm:$0xff]
    %v7425 = vld [vmem:[#allocation13 + $0xb88] sm:$0xff]
    %v7426 = vld [vmem:[#allocation13 + $0xb90] sm:$0xff]
    %v7427 = vld [vmem:[#allocation13 + $0xb98] sm:$0xff]
    %v7428 = vld [vmem:[#allocation13 + $0xba0] sm:$0xff]
    %v7429 = vld [vmem:[#allocation13 + $0xba8] sm:$0xff]
    %v7430 = vld [vmem:[#allocation13 + $0xbb0] sm:$0xff]
    %v7431 = vld [vmem:[#allocation13 + $0xbb8] sm:$0xff]
    %v7432 = vld [vmem:[#allocation13 + $0xbc0] sm:$0xff]
    %v7433 = vld [vmem:[#allocation13 + $0xbc8] sm:$0xff]
    %v7434 = vld [vmem:[#allocation13 + $0xbd0] sm:$0xff]
    %v7435 = vld [vmem:[#allocation13 + $0xbd8] sm:$0xff]
    %v7436 = vld [vmem:[#allocation13 + $0xbe0] sm:$0xff]
    %v7437 = vld [vmem:[#allocation13 + $0xbe8] sm:$0xff]
    %v7438 = vld [vmem:[#allocation13 + $0xbf0] sm:$0xff]
    %v7439 = vld [vmem:[#allocation13 + $0xbf8] sm:$0xff]
    %v7440 = vld [vmem:[#allocation13 + $0xc00] sm:$0xff]
    %v7441 = vld [vmem:[#allocation13 + $0xc08] sm:$0xff]
    %v7442 = vld [vmem:[#allocation13 + $0xc10] sm:$0xff]
    %v7443 = vld [vmem:[#allocation13 + $0xc18] sm:$0xff]
    %v7444 = vld [vmem:[#allocation13 + $0xc20] sm:$0xff]
    %v7445 = vld [vmem:[#allocation13 + $0xc28] sm:$0xff]
    %v7446 = vld [vmem:[#allocation13 + $0xc30] sm:$0xff]
    %v7447 = vld [vmem:[#allocation13 + $0xc38] sm:$0xff]
    %v7448 = vld [vmem:[#allocation13 + $0xc40] sm:$0xff]
    %v7449 = vld [vmem:[#allocation13 + $0xc48] sm:$0xff]
    %v7450 = vld [vmem:[#allocation13 + $0xc50] sm:$0xff]
    %v7451 = vld [vmem:[#allocation13 + $0xc58] sm:$0xff]
    %v7452 = vld [vmem:[#allocation13 + $0xc60] sm:$0xff]
    %v7453 = vld [vmem:[#allocation13 + $0xc68] sm:$0xff]
    %v7454 = vld [vmem:[#allocation13 + $0xc70] sm:$0xff]
    %v7455 = vld [vmem:[#allocation13 + $0xc78] sm:$0xff]
    %v7456 = vld [vmem:[#allocation13 + $0xc80] sm:$0xff]
    %v7457 = vld [vmem:[#allocation13 + $0xc88] sm:$0xff]
    %v7458 = vld [vmem:[#allocation13 + $0xc90] sm:$0xff]
    %v7459 = vld [vmem:[#allocation13 + $0xc98] sm:$0xff]
    %v7460 = vld [vmem:[#allocation13 + $0xca0] sm:$0xff]
    %v7461 = vld [vmem:[#allocation13 + $0xca8] sm:$0xff]
    %v7462 = vld [vmem:[#allocation13 + $0xcb0] sm:$0xff]
    %v7463 = vld [vmem:[#allocation13 + $0xcb8] sm:$0xff]
    %v7464 = vld [vmem:[#allocation13 + $0xcc0] sm:$0xff]
    %v7465 = vld [vmem:[#allocation13 + $0xcc8] sm:$0xff]
    %v7466 = vld [vmem:[#allocation13 + $0xcd0] sm:$0xff]
    %v7467 = vld [vmem:[#allocation13 + $0xcd8] sm:$0xff]
    %v7468 = vld [vmem:[#allocation13 + $0xce0] sm:$0xff]
    %v7469 = vld [vmem:[#allocation13 + $0xce8] sm:$0xff]
    %v7470 = vld [vmem:[#allocation13 + $0xcf0] sm:$0xff]
    %v7471 = vld [vmem:[#allocation13 + $0xcf8] sm:$0xff]
    %v7472 = vld [vmem:[#allocation13 + $0xd00] sm:$0xff]
    %v7473 = vld [vmem:[#allocation13 + $0xd08] sm:$0xff]
    %v7474 = vld [vmem:[#allocation13 + $0xd10] sm:$0xff]
    %v7475 = vld [vmem:[#allocation13 + $0xd18] sm:$0xff]
    %v7476 = vld [vmem:[#allocation13 + $0xd20] sm:$0xff]
    %v7477 = vld [vmem:[#allocation13 + $0xd28] sm:$0xff]
    %v7478 = vld [vmem:[#allocation13 + $0xd30] sm:$0xff]
    %v7479 = vld [vmem:[#allocation13 + $0xd38] sm:$0xff]
    %v7480 = vld [vmem:[#allocation13 + $0xd40] sm:$0xff]
    %v7481 = vld [vmem:[#allocation13 + $0xd48] sm:$0xff]
    %v7482 = vld [vmem:[#allocation13 + $0xd50] sm:$0xff]
    %v7483 = vld [vmem:[#allocation13 + $0xd58] sm:$0xff]
    %v7484 = vld [vmem:[#allocation13 + $0xd60] sm:$0xff]
    %v7485 = vld [vmem:[#allocation13 + $0xd68] sm:$0xff]
    %v7486 = vld [vmem:[#allocation13 + $0xd70] sm:$0xff]
    %v7487 = vld [vmem:[#allocation13 + $0xd78] sm:$0xff]
    %v7488 = vld [vmem:[#allocation13 + $0xd80] sm:$0xff]
    %v7489 = vld [vmem:[#allocation13 + $0xd88] sm:$0xff]
    %v7490 = vld [vmem:[#allocation13 + $0xd90] sm:$0xff]
    %v7491 = vld [vmem:[#allocation13 + $0xd98] sm:$0xff]
    %v7492 = vld [vmem:[#allocation13 + $0xda0] sm:$0xff]
    %v7493 = vld [vmem:[#allocation13 + $0xda8] sm:$0xff]
    %v7494 = vld [vmem:[#allocation13 + $0xdb0] sm:$0xff]
    %v7495 = vld [vmem:[#allocation13 + $0xdb8] sm:$0xff]
    %v7496 = vld [vmem:[#allocation13 + $0xdc0] sm:$0xff]
    %v7497 = vld [vmem:[#allocation13 + $0xdc8] sm:$0xff]
    %v7498 = vld [vmem:[#allocation13 + $0xdd0] sm:$0xff]
    %v7499 = vld [vmem:[#allocation13 + $0xdd8] sm:$0xff]
    %v7500 = vld [vmem:[#allocation13 + $0xde0] sm:$0xff]
    %v7501 = vld [vmem:[#allocation13 + $0xde8] sm:$0xff]
    %v7502 = vld [vmem:[#allocation13 + $0xdf0] sm:$0xff]
    %v7503 = vld [vmem:[#allocation13 + $0xdf8] sm:$0xff]
    %v7504 = vld [vmem:[#allocation13 + $0xe00] sm:$0xff]
    %v7505 = vld [vmem:[#allocation13 + $0xe08] sm:$0xff]
    %v7506 = vld [vmem:[#allocation13 + $0xe10] sm:$0xff]
    %v7507 = vld [vmem:[#allocation13 + $0xe18] sm:$0xff]
    %v7508 = vld [vmem:[#allocation13 + $0xe20] sm:$0xff]
    %v7509 = vld [vmem:[#allocation13 + $0xe28] sm:$0xff]
    %v7510 = vld [vmem:[#allocation13 + $0xe30] sm:$0xff]
    %v7511 = vld [vmem:[#allocation13 + $0xe38] sm:$0xff]
    %v7512 = vld [vmem:[#allocation13 + $0xe40] sm:$0xff]
    %v7513 = vld [vmem:[#allocation13 + $0xe48] sm:$0xff]
    %v7514 = vld [vmem:[#allocation13 + $0xe50] sm:$0xff]
    %v7515 = vld [vmem:[#allocation13 + $0xe58] sm:$0xff]
    %v7516 = vld [vmem:[#allocation13 + $0xe60] sm:$0xff]
    %v7517 = vld [vmem:[#allocation13 + $0xe68] sm:$0xff]
    %v7518 = vld [vmem:[#allocation13 + $0xe70] sm:$0xff]
    %v7519 = vld [vmem:[#allocation13 + $0xe78] sm:$0xff]
    %v7520 = vld [vmem:[#allocation13 + $0xe80] sm:$0xff]
    %v7521 = vld [vmem:[#allocation13 + $0xe88] sm:$0xff]
    %v7522 = vld [vmem:[#allocation13 + $0xe90] sm:$0xff]
    %v7523 = vld [vmem:[#allocation13 + $0xe98] sm:$0xff]
    %v7524 = vld [vmem:[#allocation13 + $0xea0] sm:$0xff]
    %v7525 = vld [vmem:[#allocation13 + $0xea8] sm:$0xff]
    %v7526 = vld [vmem:[#allocation13 + $0xeb0] sm:$0xff]
    %v7527 = vld [vmem:[#allocation13 + $0xeb8] sm:$0xff]
    %v7528 = vld [vmem:[#allocation13 + $0xec0] sm:$0xff]
    %v7529 = vld [vmem:[#allocation13 + $0xec8] sm:$0xff]
    %v7530 = vld [vmem:[#allocation13 + $0xed0] sm:$0xff]
    %v7531 = vld [vmem:[#allocation13 + $0xed8] sm:$0xff]
    %v7532 = vld [vmem:[#allocation13 + $0xee0] sm:$0xff]
    %v7533 = vld [vmem:[#allocation13 + $0xee8] sm:$0xff]
    %v7534 = vld [vmem:[#allocation13 + $0xef0] sm:$0xff]
    %v7535 = vld [vmem:[#allocation13 + $0xef8] sm:$0xff]
    %v7536 = vld [vmem:[#allocation13 + $0xf00] sm:$0xff]
    %v7537 = vld [vmem:[#allocation13 + $0xf08] sm:$0xff]
    %v7538 = vld [vmem:[#allocation13 + $0xf10] sm:$0xff]
    %v7539 = vld [vmem:[#allocation13 + $0xf18] sm:$0xff]
    %v7540 = vld [vmem:[#allocation13 + $0xf20] sm:$0xff]
    %v7541 = vld [vmem:[#allocation13 + $0xf28] sm:$0xff]
    %v7542 = vld [vmem:[#allocation13 + $0xf30] sm:$0xff]
    %v7543 = vld [vmem:[#allocation13 + $0xf38] sm:$0xff]
    %v7544 = vld [vmem:[#allocation13 + $0xf40] sm:$0xff]
    %v7545 = vld [vmem:[#allocation13 + $0xf48] sm:$0xff]
    %v7546 = vld [vmem:[#allocation13 + $0xf50] sm:$0xff]
    %v7547 = vld [vmem:[#allocation13 + $0xf58] sm:$0xff]
    %v7548 = vld [vmem:[#allocation13 + $0xf60] sm:$0xff]
    %v7549 = vld [vmem:[#allocation13 + $0xf68] sm:$0xff]
    %v7550 = vld [vmem:[#allocation13 + $0xf70] sm:$0xff]
    %v7551 = vld [vmem:[#allocation13 + $0xf78] sm:$0xff]
    %v7552 = vld [vmem:[#allocation13 + $0xf80] sm:$0xff]
    %v7553 = vld [vmem:[#allocation13 + $0xf88] sm:$0xff]
    %v7554 = vld [vmem:[#allocation13 + $0xf90] sm:$0xff]
    %v7555 = vld [vmem:[#allocation13 + $0xf98] sm:$0xff]
    %v7556 = vld [vmem:[#allocation13 + $0xfa0] sm:$0xff]
    %v7557 = vld [vmem:[#allocation13 + $0xfa8] sm:$0xff]
    %v7558 = vld [vmem:[#allocation13 + $0xfb0] sm:$0xff]
    %v7559 = vld [vmem:[#allocation13 + $0xfb8] sm:$0xff]
    %v7560 = vld [vmem:[#allocation13 + $0xfc0] sm:$0xff]
    %v7561 = vld [vmem:[#allocation13 + $0xfc8] sm:$0xff]
    %v7562 = vld [vmem:[#allocation13 + $0xfd0] sm:$0xff]
    %v7563 = vld [vmem:[#allocation13 + $0xfd8] sm:$0xff]
    %v7564 = vld [vmem:[#allocation13 + $0xfe0] sm:$0xff]
    %v7565 = vld [vmem:[#allocation13 + $0xfe8] sm:$0xff]
    %v7566 = vld [vmem:[#allocation13 + $0xff0] sm:$0xff]
    %v7567 = vld [vmem:[#allocation13 + $0xff8] sm:$0xff]
    %v7568 = vld [vmem:[#allocation14] sm:$0xff]
    %v7570 = vlaneseq
    %v7571 = vshrl.u32 %v7570, 7
    %v7572 = vsub.s32 0, %v7571
    %v7573 = vrot.slane %v7568, %v7572
    %v7574 = vlaneseq
    %v7575 = vshrl.u32 %v7574, 7
    %v7576 = vsub.s32 1, %v7575
    %v7577 = vrot.slane %v7568, %v7576
    %v7578 = vlaneseq
    %v7579 = vshrl.u32 %v7578, 7
    %v7580 = vsub.s32 2, %v7579
    %v7581 = vrot.slane %v7568, %v7580
    %v7582 = vlaneseq
    %v7583 = vshrl.u32 %v7582, 7
    %v7584 = vsub.s32 3, %v7583
    %v7585 = vrot.slane %v7568, %v7584
    %v7586 = vlaneseq
    %v7587 = vshrl.u32 %v7586, 7
    %v7588 = vsub.s32 4, %v7587
    %v7589 = vrot.slane %v7568, %v7588
    %v7590 = vlaneseq
    %v7591 = vshrl.u32 %v7590, 7
    %v7592 = vsub.s32 5, %v7591
    %v7593 = vrot.slane %v7568, %v7592
    %v7594 = vlaneseq
    %v7595 = vshrl.u32 %v7594, 7
    %v7596 = vsub.s32 6, %v7595
    %v7597 = vrot.slane %v7568, %v7596
    %v7598 = vlaneseq
    %v7599 = vshrl.u32 %v7598, 7
    %v7600 = vsub.s32 7, %v7599
    %v7601 = vrot.slane %v7568, %v7600
    %v8122 = vunpack.c.l.b16 %v7056
    %v8123 = vunpack.c.h.b16 %v7056
    %v8124 = vunpack.c.l.b16 %v7057
    %v8125 = vunpack.c.h.b16 %v7057
    %v8126 = vunpack.c.l.b16 %v7058
    %v8127 = vunpack.c.h.b16 %v7058
    %v8128 = vunpack.c.l.b16 %v7059
    %v8129 = vunpack.c.h.b16 %v7059
    %v8130 = vunpack.c.l.b16 %v7060
    %v8131 = vunpack.c.h.b16 %v7060
    %v8132 = vunpack.c.l.b16 %v7061
    %v8133 = vunpack.c.h.b16 %v7061
    %v8134 = vunpack.c.l.b16 %v7062
    %v8135 = vunpack.c.h.b16 %v7062
    %v8136 = vunpack.c.l.b16 %v7063
    %v8137 = vunpack.c.h.b16 %v7063
    %v8138 = vunpack.c.l.b16 %v7064
    %v8139 = vunpack.c.h.b16 %v7064
    %v8140 = vunpack.c.l.b16 %v7065
    %v8141 = vunpack.c.h.b16 %v7065
    %v8142 = vunpack.c.l.b16 %v7066
    %v8143 = vunpack.c.h.b16 %v7066
    %v8144 = vunpack.c.l.b16 %v7067
    %v8145 = vunpack.c.h.b16 %v7067
    %v8146 = vunpack.c.l.b16 %v7068
    %v8147 = vunpack.c.h.b16 %v7068
    %v8148 = vunpack.c.l.b16 %v7069
    %v8149 = vunpack.c.h.b16 %v7069
    %v8150 = vunpack.c.l.b16 %v7070
    %v8151 = vunpack.c.h.b16 %v7070
    %v8152 = vunpack.c.l.b16 %v7071
    %v8153 = vunpack.c.h.b16 %v7071
    %v8154 = vunpack.c.l.b16 %v7072
    %v8155 = vunpack.c.h.b16 %v7072
    %v8156 = vunpack.c.l.b16 %v7073
    %v8157 = vunpack.c.h.b16 %v7073
    %v8158 = vunpack.c.l.b16 %v7074
    %v8159 = vunpack.c.h.b16 %v7074
    %v8160 = vunpack.c.l.b16 %v7075
    %v8161 = vunpack.c.h.b16 %v7075
    %v8162 = vunpack.c.l.b16 %v7076
    %v8163 = vunpack.c.h.b16 %v7076
    %v8164 = vunpack.c.l.b16 %v7077
    %v8165 = vunpack.c.h.b16 %v7077
    %v8166 = vunpack.c.l.b16 %v7078
    %v8167 = vunpack.c.h.b16 %v7078
    %v8168 = vunpack.c.l.b16 %v7079
    %v8169 = vunpack.c.h.b16 %v7079
    %v8170 = vunpack.c.l.b16 %v7080
    %v8171 = vunpack.c.h.b16 %v7080
    %v8172 = vunpack.c.l.b16 %v7081
    %v8173 = vunpack.c.h.b16 %v7081
    %v8174 = vunpack.c.l.b16 %v7082
    %v8175 = vunpack.c.h.b16 %v7082
    %v8176 = vunpack.c.l.b16 %v7083
    %v8177 = vunpack.c.h.b16 %v7083
    %v8178 = vunpack.c.l.b16 %v7084
    %v8179 = vunpack.c.h.b16 %v7084
    %v8180 = vunpack.c.l.b16 %v7085
    %v8181 = vunpack.c.h.b16 %v7085
    %v8182 = vunpack.c.l.b16 %v7086
    %v8183 = vunpack.c.h.b16 %v7086
    %v8184 = vunpack.c.l.b16 %v7087
    %v8185 = vunpack.c.h.b16 %v7087
    %v8186 = vunpack.c.l.b16 %v7088
    %v8187 = vunpack.c.h.b16 %v7088
    %v8188 = vunpack.c.l.b16 %v7089
    %v8189 = vunpack.c.h.b16 %v7089
    %v8190 = vunpack.c.l.b16 %v7090
    %v8191 = vunpack.c.h.b16 %v7090
    %v8192 = vunpack.c.l.b16 %v7091
    %v8193 = vunpack.c.h.b16 %v7091
    %v8194 = vunpack.c.l.b16 %v7092
    %v8195 = vunpack.c.h.b16 %v7092
    %v8196 = vunpack.c.l.b16 %v7093
    %v8197 = vunpack.c.h.b16 %v7093
    %v8198 = vunpack.c.l.b16 %v7094
    %v8199 = vunpack.c.h.b16 %v7094
    %v8200 = vunpack.c.l.b16 %v7095
    %v8201 = vunpack.c.h.b16 %v7095
    %v8202 = vunpack.c.l.b16 %v7096
    %v8203 = vunpack.c.h.b16 %v7096
    %v8204 = vunpack.c.l.b16 %v7097
    %v8205 = vunpack.c.h.b16 %v7097
    %v8206 = vunpack.c.l.b16 %v7098
    %v8207 = vunpack.c.h.b16 %v7098
    %v8208 = vunpack.c.l.b16 %v7099
    %v8209 = vunpack.c.h.b16 %v7099
    %v8210 = vunpack.c.l.b16 %v7100
    %v8211 = vunpack.c.h.b16 %v7100
    %v8212 = vunpack.c.l.b16 %v7101
    %v8213 = vunpack.c.h.b16 %v7101
    %v8214 = vunpack.c.l.b16 %v7102
    %v8215 = vunpack.c.h.b16 %v7102
    %v8216 = vunpack.c.l.b16 %v7103
    %v8217 = vunpack.c.h.b16 %v7103
    %v8218 = vunpack.c.l.b16 %v7104
    %v8219 = vunpack.c.h.b16 %v7104
    %v8220 = vunpack.c.l.b16 %v7105
    %v8221 = vunpack.c.h.b16 %v7105
    %v8222 = vunpack.c.l.b16 %v7106
    %v8223 = vunpack.c.h.b16 %v7106
    %v8224 = vunpack.c.l.b16 %v7107
    %v8225 = vunpack.c.h.b16 %v7107
    %v8226 = vunpack.c.l.b16 %v7108
    %v8227 = vunpack.c.h.b16 %v7108
    %v8228 = vunpack.c.l.b16 %v7109
    %v8229 = vunpack.c.h.b16 %v7109
    %v8230 = vunpack.c.l.b16 %v7110
    %v8231 = vunpack.c.h.b16 %v7110
    %v8232 = vunpack.c.l.b16 %v7111
    %v8233 = vunpack.c.h.b16 %v7111
    %v8234 = vunpack.c.l.b16 %v7112
    %v8235 = vunpack.c.h.b16 %v7112
    %v8236 = vunpack.c.l.b16 %v7113
    %v8237 = vunpack.c.h.b16 %v7113
    %v8238 = vunpack.c.l.b16 %v7114
    %v8239 = vunpack.c.h.b16 %v7114
    %v8240 = vunpack.c.l.b16 %v7115
    %v8241 = vunpack.c.h.b16 %v7115
    %v8242 = vunpack.c.l.b16 %v7116
    %v8243 = vunpack.c.h.b16 %v7116
    %v8244 = vunpack.c.l.b16 %v7117
    %v8245 = vunpack.c.h.b16 %v7117
    %v8246 = vunpack.c.l.b16 %v7118
    %v8247 = vunpack.c.h.b16 %v7118
    %v8248 = vunpack.c.l.b16 %v7119
    %v8249 = vunpack.c.h.b16 %v7119
    %v8250 = vunpack.c.l.b16 %v7120
    %v8251 = vunpack.c.h.b16 %v7120
    %v8252 = vunpack.c.l.b16 %v7121
    %v8253 = vunpack.c.h.b16 %v7121
    %v8254 = vunpack.c.l.b16 %v7122
    %v8255 = vunpack.c.h.b16 %v7122
    %v8256 = vunpack.c.l.b16 %v7123
    %v8257 = vunpack.c.h.b16 %v7123
    %v8258 = vunpack.c.l.b16 %v7124
    %v8259 = vunpack.c.h.b16 %v7124
    %v8260 = vunpack.c.l.b16 %v7125
    %v8261 = vunpack.c.h.b16 %v7125
    %v8262 = vunpack.c.l.b16 %v7126
    %v8263 = vunpack.c.h.b16 %v7126
    %v8264 = vunpack.c.l.b16 %v7127
    %v8265 = vunpack.c.h.b16 %v7127
    %v8266 = vunpack.c.l.b16 %v7128
    %v8267 = vunpack.c.h.b16 %v7128
    %v8268 = vunpack.c.l.b16 %v7129
    %v8269 = vunpack.c.h.b16 %v7129
    %v8270 = vunpack.c.l.b16 %v7130
    %v8271 = vunpack.c.h.b16 %v7130
    %v8272 = vunpack.c.l.b16 %v7131
    %v8273 = vunpack.c.h.b16 %v7131
    %v8274 = vunpack.c.l.b16 %v7132
    %v8275 = vunpack.c.h.b16 %v7132
    %v8276 = vunpack.c.l.b16 %v7133
    %v8277 = vunpack.c.h.b16 %v7133
    %v8278 = vunpack.c.l.b16 %v7134
    %v8279 = vunpack.c.h.b16 %v7134
    %v8280 = vunpack.c.l.b16 %v7135
    %v8281 = vunpack.c.h.b16 %v7135
    %v8282 = vunpack.c.l.b16 %v7136
    %v8283 = vunpack.c.h.b16 %v7136
    %v8284 = vunpack.c.l.b16 %v7137
    %v8285 = vunpack.c.h.b16 %v7137
    %v8286 = vunpack.c.l.b16 %v7138
    %v8287 = vunpack.c.h.b16 %v7138
    %v8288 = vunpack.c.l.b16 %v7139
    %v8289 = vunpack.c.h.b16 %v7139
    %v8290 = vunpack.c.l.b16 %v7140
    %v8291 = vunpack.c.h.b16 %v7140
    %v8292 = vunpack.c.l.b16 %v7141
    %v8293 = vunpack.c.h.b16 %v7141
    %v8294 = vunpack.c.l.b16 %v7142
    %v8295 = vunpack.c.h.b16 %v7142
    %v8296 = vunpack.c.l.b16 %v7143
    %v8297 = vunpack.c.h.b16 %v7143
    %v8298 = vunpack.c.l.b16 %v7144
    %v8299 = vunpack.c.h.b16 %v7144
    %v8300 = vunpack.c.l.b16 %v7145
    %v8301 = vunpack.c.h.b16 %v7145
    %v8302 = vunpack.c.l.b16 %v7146
    %v8303 = vunpack.c.h.b16 %v7146
    %v8304 = vunpack.c.l.b16 %v7147
    %v8305 = vunpack.c.h.b16 %v7147
    %v8306 = vunpack.c.l.b16 %v7148
    %v8307 = vunpack.c.h.b16 %v7148
    %v8308 = vunpack.c.l.b16 %v7149
    %v8309 = vunpack.c.h.b16 %v7149
    %v8310 = vunpack.c.l.b16 %v7150
    %v8311 = vunpack.c.h.b16 %v7150
    %v8312 = vunpack.c.l.b16 %v7151
    %v8313 = vunpack.c.h.b16 %v7151
    %v8314 = vunpack.c.l.b16 %v7152
    %v8315 = vunpack.c.h.b16 %v7152
    %v8316 = vunpack.c.l.b16 %v7153
    %v8317 = vunpack.c.h.b16 %v7153
    %v8318 = vunpack.c.l.b16 %v7154
    %v8319 = vunpack.c.h.b16 %v7154
    %v8320 = vunpack.c.l.b16 %v7155
    %v8321 = vunpack.c.h.b16 %v7155
    %v8322 = vunpack.c.l.b16 %v7156
    %v8323 = vunpack.c.h.b16 %v7156
    %v8324 = vunpack.c.l.b16 %v7157
    %v8325 = vunpack.c.h.b16 %v7157
    %v8326 = vunpack.c.l.b16 %v7158
    %v8327 = vunpack.c.h.b16 %v7158
    %v8328 = vunpack.c.l.b16 %v7159
    %v8329 = vunpack.c.h.b16 %v7159
    %v8330 = vunpack.c.l.b16 %v7160
    %v8331 = vunpack.c.h.b16 %v7160
    %v8332 = vunpack.c.l.b16 %v7161
    %v8333 = vunpack.c.h.b16 %v7161
    %v8334 = vunpack.c.l.b16 %v7162
    %v8335 = vunpack.c.h.b16 %v7162
    %v8336 = vunpack.c.l.b16 %v7163
    %v8337 = vunpack.c.h.b16 %v7163
    %v8338 = vunpack.c.l.b16 %v7164
    %v8339 = vunpack.c.h.b16 %v7164
    %v8340 = vunpack.c.l.b16 %v7165
    %v8341 = vunpack.c.h.b16 %v7165
    %v8342 = vunpack.c.l.b16 %v7166
    %v8343 = vunpack.c.h.b16 %v7166
    %v8344 = vunpack.c.l.b16 %v7167
    %v8345 = vunpack.c.h.b16 %v7167
    %v8346 = vunpack.c.l.b16 %v7168
    %v8347 = vunpack.c.h.b16 %v7168
    %v8348 = vunpack.c.l.b16 %v7169
    %v8349 = vunpack.c.h.b16 %v7169
    %v8350 = vunpack.c.l.b16 %v7170
    %v8351 = vunpack.c.h.b16 %v7170
    %v8352 = vunpack.c.l.b16 %v7171
    %v8353 = vunpack.c.h.b16 %v7171
    %v8354 = vunpack.c.l.b16 %v7172
    %v8355 = vunpack.c.h.b16 %v7172
    %v8356 = vunpack.c.l.b16 %v7173
    %v8357 = vunpack.c.h.b16 %v7173
    %v8358 = vunpack.c.l.b16 %v7174
    %v8359 = vunpack.c.h.b16 %v7174
    %v8360 = vunpack.c.l.b16 %v7175
    %v8361 = vunpack.c.h.b16 %v7175
    %v8362 = vunpack.c.l.b16 %v7176
    %v8363 = vunpack.c.h.b16 %v7176
    %v8364 = vunpack.c.l.b16 %v7177
    %v8365 = vunpack.c.h.b16 %v7177
    %v8366 = vunpack.c.l.b16 %v7178
    %v8367 = vunpack.c.h.b16 %v7178
    %v8368 = vunpack.c.l.b16 %v7179
    %v8369 = vunpack.c.h.b16 %v7179
    %v8370 = vunpack.c.l.b16 %v7180
    %v8371 = vunpack.c.h.b16 %v7180
    %v8372 = vunpack.c.l.b16 %v7181
    %v8373 = vunpack.c.h.b16 %v7181
    %v8374 = vunpack.c.l.b16 %v7182
    %v8375 = vunpack.c.h.b16 %v7182
    %v8376 = vunpack.c.l.b16 %v7183
    %v8377 = vunpack.c.h.b16 %v7183
    %v8378 = vunpack.c.l.b16 %v7184
    %v8379 = vunpack.c.h.b16 %v7184
    %v8380 = vunpack.c.l.b16 %v7185
    %v8381 = vunpack.c.h.b16 %v7185
    %v8382 = vunpack.c.l.b16 %v7186
    %v8383 = vunpack.c.h.b16 %v7186
    %v8384 = vunpack.c.l.b16 %v7187
    %v8385 = vunpack.c.h.b16 %v7187
    %v8386 = vunpack.c.l.b16 %v7188
    %v8387 = vunpack.c.h.b16 %v7188
    %v8388 = vunpack.c.l.b16 %v7189
    %v8389 = vunpack.c.h.b16 %v7189
    %v8390 = vunpack.c.l.b16 %v7190
    %v8391 = vunpack.c.h.b16 %v7190
    %v8392 = vunpack.c.l.b16 %v7191
    %v8393 = vunpack.c.h.b16 %v7191
    %v8394 = vunpack.c.l.b16 %v7192
    %v8395 = vunpack.c.h.b16 %v7192
    %v8396 = vunpack.c.l.b16 %v7193
    %v8397 = vunpack.c.h.b16 %v7193
    %v8398 = vunpack.c.l.b16 %v7194
    %v8399 = vunpack.c.h.b16 %v7194
    %v8400 = vunpack.c.l.b16 %v7195
    %v8401 = vunpack.c.h.b16 %v7195
    %v8402 = vunpack.c.l.b16 %v7196
    %v8403 = vunpack.c.h.b16 %v7196
    %v8404 = vunpack.c.l.b16 %v7197
    %v8405 = vunpack.c.h.b16 %v7197
    %v8406 = vunpack.c.l.b16 %v7198
    %v8407 = vunpack.c.h.b16 %v7198
    %v8408 = vunpack.c.l.b16 %v7199
    %v8409 = vunpack.c.h.b16 %v7199
    %v8410 = vunpack.c.l.b16 %v7200
    %v8411 = vunpack.c.h.b16 %v7200
    %v8412 = vunpack.c.l.b16 %v7201
    %v8413 = vunpack.c.h.b16 %v7201
    %v8414 = vunpack.c.l.b16 %v7202
    %v8415 = vunpack.c.h.b16 %v7202
    %v8416 = vunpack.c.l.b16 %v7203
    %v8417 = vunpack.c.h.b16 %v7203
    %v8418 = vunpack.c.l.b16 %v7204
    %v8419 = vunpack.c.h.b16 %v7204
    %v8420 = vunpack.c.l.b16 %v7205
    %v8421 = vunpack.c.h.b16 %v7205
    %v8422 = vunpack.c.l.b16 %v7206
    %v8423 = vunpack.c.h.b16 %v7206
    %v8424 = vunpack.c.l.b16 %v7207
    %v8425 = vunpack.c.h.b16 %v7207
    %v8426 = vunpack.c.l.b16 %v7208
    %v8427 = vunpack.c.h.b16 %v7208
    %v8428 = vunpack.c.l.b16 %v7209
    %v8429 = vunpack.c.h.b16 %v7209
    %v8430 = vunpack.c.l.b16 %v7210
    %v8431 = vunpack.c.h.b16 %v7210
    %v8432 = vunpack.c.l.b16 %v7211
    %v8433 = vunpack.c.h.b16 %v7211
    %v8434 = vunpack.c.l.b16 %v7212
    %v8435 = vunpack.c.h.b16 %v7212
    %v8436 = vunpack.c.l.b16 %v7213
    %v8437 = vunpack.c.h.b16 %v7213
    %v8438 = vunpack.c.l.b16 %v7214
    %v8439 = vunpack.c.h.b16 %v7214
    %v8440 = vunpack.c.l.b16 %v7215
    %v8441 = vunpack.c.h.b16 %v7215
    %v8442 = vunpack.c.l.b16 %v7216
    %v8443 = vunpack.c.h.b16 %v7216
    %v8444 = vunpack.c.l.b16 %v7217
    %v8445 = vunpack.c.h.b16 %v7217
    %v8446 = vunpack.c.l.b16 %v7218
    %v8447 = vunpack.c.h.b16 %v7218
    %v8448 = vunpack.c.l.b16 %v7219
    %v8449 = vunpack.c.h.b16 %v7219
    %v8450 = vunpack.c.l.b16 %v7220
    %v8451 = vunpack.c.h.b16 %v7220
    %v8452 = vunpack.c.l.b16 %v7221
    %v8453 = vunpack.c.h.b16 %v7221
    %v8454 = vunpack.c.l.b16 %v7222
    %v8455 = vunpack.c.h.b16 %v7222
    %v8456 = vunpack.c.l.b16 %v7223
    %v8457 = vunpack.c.h.b16 %v7223
    %v8458 = vunpack.c.l.b16 %v7224
    %v8459 = vunpack.c.h.b16 %v7224
    %v8460 = vunpack.c.l.b16 %v7225
    %v8461 = vunpack.c.h.b16 %v7225
    %v8462 = vunpack.c.l.b16 %v7226
    %v8463 = vunpack.c.h.b16 %v7226
    %v8464 = vunpack.c.l.b16 %v7227
    %v8465 = vunpack.c.h.b16 %v7227
    %v8466 = vunpack.c.l.b16 %v7228
    %v8467 = vunpack.c.h.b16 %v7228
    %v8468 = vunpack.c.l.b16 %v7229
    %v8469 = vunpack.c.h.b16 %v7229
    %v8470 = vunpack.c.l.b16 %v7230
    %v8471 = vunpack.c.h.b16 %v7230
    %v8472 = vunpack.c.l.b16 %v7231
    %v8473 = vunpack.c.h.b16 %v7231
    %v8474 = vunpack.c.l.b16 %v7232
    %v8475 = vunpack.c.h.b16 %v7232
    %v8476 = vunpack.c.l.b16 %v7233
    %v8477 = vunpack.c.h.b16 %v7233
    %v8478 = vunpack.c.l.b16 %v7234
    %v8479 = vunpack.c.h.b16 %v7234
    %v8480 = vunpack.c.l.b16 %v7235
    %v8481 = vunpack.c.h.b16 %v7235
    %v8482 = vunpack.c.l.b16 %v7236
    %v8483 = vunpack.c.h.b16 %v7236
    %v8484 = vunpack.c.l.b16 %v7237
    %v8485 = vunpack.c.h.b16 %v7237
    %v8486 = vunpack.c.l.b16 %v7238
    %v8487 = vunpack.c.h.b16 %v7238
    %v8488 = vunpack.c.l.b16 %v7239
    %v8489 = vunpack.c.h.b16 %v7239
    %v8490 = vunpack.c.l.b16 %v7240
    %v8491 = vunpack.c.h.b16 %v7240
    %v8492 = vunpack.c.l.b16 %v7241
    %v8493 = vunpack.c.h.b16 %v7241
    %v8494 = vunpack.c.l.b16 %v7242
    %v8495 = vunpack.c.h.b16 %v7242
    %v8496 = vunpack.c.l.b16 %v7243
    %v8497 = vunpack.c.h.b16 %v7243
    %v8498 = vunpack.c.l.b16 %v7244
    %v8499 = vunpack.c.h.b16 %v7244
    %v8500 = vunpack.c.l.b16 %v7245
    %v8501 = vunpack.c.h.b16 %v7245
    %v8502 = vunpack.c.l.b16 %v7246
    %v8503 = vunpack.c.h.b16 %v7246
    %v8504 = vunpack.c.l.b16 %v7247
    %v8505 = vunpack.c.h.b16 %v7247
    %v8506 = vunpack.c.l.b16 %v7248
    %v8507 = vunpack.c.h.b16 %v7248
    %v8508 = vunpack.c.l.b16 %v7249
    %v8509 = vunpack.c.h.b16 %v7249
    %v8510 = vunpack.c.l.b16 %v7250
    %v8511 = vunpack.c.h.b16 %v7250
    %v8512 = vunpack.c.l.b16 %v7251
    %v8513 = vunpack.c.h.b16 %v7251
    %v8514 = vunpack.c.l.b16 %v7252
    %v8515 = vunpack.c.h.b16 %v7252
    %v8516 = vunpack.c.l.b16 %v7253
    %v8517 = vunpack.c.h.b16 %v7253
    %v8518 = vunpack.c.l.b16 %v7254
    %v8519 = vunpack.c.h.b16 %v7254
    %v8520 = vunpack.c.l.b16 %v7255
    %v8521 = vunpack.c.h.b16 %v7255
    %v8522 = vunpack.c.l.b16 %v7256
    %v8523 = vunpack.c.h.b16 %v7256
    %v8524 = vunpack.c.l.b16 %v7257
    %v8525 = vunpack.c.h.b16 %v7257
    %v8526 = vunpack.c.l.b16 %v7258
    %v8527 = vunpack.c.h.b16 %v7258
    %v8528 = vunpack.c.l.b16 %v7259
    %v8529 = vunpack.c.h.b16 %v7259
    %v8530 = vunpack.c.l.b16 %v7260
    %v8531 = vunpack.c.h.b16 %v7260
    %v8532 = vunpack.c.l.b16 %v7261
    %v8533 = vunpack.c.h.b16 %v7261
    %v8534 = vunpack.c.l.b16 %v7262
    %v8535 = vunpack.c.h.b16 %v7262
    %v8536 = vunpack.c.l.b16 %v7263
    %v8537 = vunpack.c.h.b16 %v7263
    %v8538 = vunpack.c.l.b16 %v7264
    %v8539 = vunpack.c.h.b16 %v7264
    %v8540 = vunpack.c.l.b16 %v7265
    %v8541 = vunpack.c.h.b16 %v7265
    %v8542 = vunpack.c.l.b16 %v7266
    %v8543 = vunpack.c.h.b16 %v7266
    %v8544 = vunpack.c.l.b16 %v7267
    %v8545 = vunpack.c.h.b16 %v7267
    %v8546 = vunpack.c.l.b16 %v7268
    %v8547 = vunpack.c.h.b16 %v7268
    %v8548 = vunpack.c.l.b16 %v7269
    %v8549 = vunpack.c.h.b16 %v7269
    %v8550 = vunpack.c.l.b16 %v7270
    %v8551 = vunpack.c.h.b16 %v7270
    %v8552 = vunpack.c.l.b16 %v7271
    %v8553 = vunpack.c.h.b16 %v7271
    %v8554 = vunpack.c.l.b16 %v7272
    %v8555 = vunpack.c.h.b16 %v7272
    %v8556 = vunpack.c.l.b16 %v7273
    %v8557 = vunpack.c.h.b16 %v7273
    %v8558 = vunpack.c.l.b16 %v7274
    %v8559 = vunpack.c.h.b16 %v7274
    %v8560 = vunpack.c.l.b16 %v7275
    %v8561 = vunpack.c.h.b16 %v7275
    %v8562 = vunpack.c.l.b16 %v7276
    %v8563 = vunpack.c.h.b16 %v7276
    %v8564 = vunpack.c.l.b16 %v7277
    %v8565 = vunpack.c.h.b16 %v7277
    %v8566 = vunpack.c.l.b16 %v7278
    %v8567 = vunpack.c.h.b16 %v7278
    %v8568 = vunpack.c.l.b16 %v7279
    %v8569 = vunpack.c.h.b16 %v7279
    %v8570 = vunpack.c.l.b16 %v7280
    %v8571 = vunpack.c.h.b16 %v7280
    %v8572 = vunpack.c.l.b16 %v7281
    %v8573 = vunpack.c.h.b16 %v7281
    %v8574 = vunpack.c.l.b16 %v7282
    %v8575 = vunpack.c.h.b16 %v7282
    %v8576 = vunpack.c.l.b16 %v7283
    %v8577 = vunpack.c.h.b16 %v7283
    %v8578 = vunpack.c.l.b16 %v7284
    %v8579 = vunpack.c.h.b16 %v7284
    %v8580 = vunpack.c.l.b16 %v7285
    %v8581 = vunpack.c.h.b16 %v7285
    %v8582 = vunpack.c.l.b16 %v7286
    %v8583 = vunpack.c.h.b16 %v7286
    %v8584 = vunpack.c.l.b16 %v7287
    %v8585 = vunpack.c.h.b16 %v7287
    %v8586 = vunpack.c.l.b16 %v7288
    %v8587 = vunpack.c.h.b16 %v7288
    %v8588 = vunpack.c.l.b16 %v7289
    %v8589 = vunpack.c.h.b16 %v7289
    %v8590 = vunpack.c.l.b16 %v7290
    %v8591 = vunpack.c.h.b16 %v7290
    %v8592 = vunpack.c.l.b16 %v7291
    %v8593 = vunpack.c.h.b16 %v7291
    %v8594 = vunpack.c.l.b16 %v7292
    %v8595 = vunpack.c.h.b16 %v7292
    %v8596 = vunpack.c.l.b16 %v7293
    %v8597 = vunpack.c.h.b16 %v7293
    %v8598 = vunpack.c.l.b16 %v7294
    %v8599 = vunpack.c.h.b16 %v7294
    %v8600 = vunpack.c.l.b16 %v7295
    %v8601 = vunpack.c.h.b16 %v7295
    %v8602 = vunpack.c.l.b16 %v7296
    %v8603 = vunpack.c.h.b16 %v7296
    %v8604 = vunpack.c.l.b16 %v7297
    %v8605 = vunpack.c.h.b16 %v7297
    %v8606 = vunpack.c.l.b16 %v7298
    %v8607 = vunpack.c.h.b16 %v7298
    %v8608 = vunpack.c.l.b16 %v7299
    %v8609 = vunpack.c.h.b16 %v7299
    %v8610 = vunpack.c.l.b16 %v7300
    %v8611 = vunpack.c.h.b16 %v7300
    %v8612 = vunpack.c.l.b16 %v7301
    %v8613 = vunpack.c.h.b16 %v7301
    %v8614 = vunpack.c.l.b16 %v7302
    %v8615 = vunpack.c.h.b16 %v7302
    %v8616 = vunpack.c.l.b16 %v7303
    %v8617 = vunpack.c.h.b16 %v7303
    %v8618 = vunpack.c.l.b16 %v7304
    %v8619 = vunpack.c.h.b16 %v7304
    %v8620 = vunpack.c.l.b16 %v7305
    %v8621 = vunpack.c.h.b16 %v7305
    %v8622 = vunpack.c.l.b16 %v7306
    %v8623 = vunpack.c.h.b16 %v7306
    %v8624 = vunpack.c.l.b16 %v7307
    %v8625 = vunpack.c.h.b16 %v7307
    %v8626 = vunpack.c.l.b16 %v7308
    %v8627 = vunpack.c.h.b16 %v7308
    %v8628 = vunpack.c.l.b16 %v7309
    %v8629 = vunpack.c.h.b16 %v7309
    %v8630 = vunpack.c.l.b16 %v7310
    %v8631 = vunpack.c.h.b16 %v7310
    %v8632 = vunpack.c.l.b16 %v7311
    %v8633 = vunpack.c.h.b16 %v7311
    %v8634 = vunpack.c.l.b16 %v7312
    %v8635 = vunpack.c.h.b16 %v7312
    %v8636 = vunpack.c.l.b16 %v7313
    %v8637 = vunpack.c.h.b16 %v7313
    %v8638 = vunpack.c.l.b16 %v7314
    %v8639 = vunpack.c.h.b16 %v7314
    %v8640 = vunpack.c.l.b16 %v7315
    %v8641 = vunpack.c.h.b16 %v7315
    %v8642 = vunpack.c.l.b16 %v7316
    %v8643 = vunpack.c.h.b16 %v7316
    %v8644 = vunpack.c.l.b16 %v7317
    %v8645 = vunpack.c.h.b16 %v7317
    %v8646 = vunpack.c.l.b16 %v7318
    %v8647 = vunpack.c.h.b16 %v7318
    %v8648 = vunpack.c.l.b16 %v7319
    %v8649 = vunpack.c.h.b16 %v7319
    %v8650 = vunpack.c.l.b16 %v7320
    %v8651 = vunpack.c.h.b16 %v7320
    %v8652 = vunpack.c.l.b16 %v7321
    %v8653 = vunpack.c.h.b16 %v7321
    %v8654 = vunpack.c.l.b16 %v7322
    %v8655 = vunpack.c.h.b16 %v7322
    %v8656 = vunpack.c.l.b16 %v7323
    %v8657 = vunpack.c.h.b16 %v7323
    %v8658 = vunpack.c.l.b16 %v7324
    %v8659 = vunpack.c.h.b16 %v7324
    %v8660 = vunpack.c.l.b16 %v7325
    %v8661 = vunpack.c.h.b16 %v7325
    %v8662 = vunpack.c.l.b16 %v7326
    %v8663 = vunpack.c.h.b16 %v7326
    %v8664 = vunpack.c.l.b16 %v7327
    %v8665 = vunpack.c.h.b16 %v7327
    %v8666 = vunpack.c.l.b16 %v7328
    %v8667 = vunpack.c.h.b16 %v7328
    %v8668 = vunpack.c.l.b16 %v7329
    %v8669 = vunpack.c.h.b16 %v7329
    %v8670 = vunpack.c.l.b16 %v7330
    %v8671 = vunpack.c.h.b16 %v7330
    %v8672 = vunpack.c.l.b16 %v7331
    %v8673 = vunpack.c.h.b16 %v7331
    %v8674 = vunpack.c.l.b16 %v7332
    %v8675 = vunpack.c.h.b16 %v7332
    %v8676 = vunpack.c.l.b16 %v7333
    %v8677 = vunpack.c.h.b16 %v7333
    %v8678 = vunpack.c.l.b16 %v7334
    %v8679 = vunpack.c.h.b16 %v7334
    %v8680 = vunpack.c.l.b16 %v7335
    %v8681 = vunpack.c.h.b16 %v7335
    %v8682 = vunpack.c.l.b16 %v7336
    %v8683 = vunpack.c.h.b16 %v7336
    %v8684 = vunpack.c.l.b16 %v7337
    %v8685 = vunpack.c.h.b16 %v7337
    %v8686 = vunpack.c.l.b16 %v7338
    %v8687 = vunpack.c.h.b16 %v7338
    %v8688 = vunpack.c.l.b16 %v7339
    %v8689 = vunpack.c.h.b16 %v7339
    %v8690 = vunpack.c.l.b16 %v7340
    %v8691 = vunpack.c.h.b16 %v7340
    %v8692 = vunpack.c.l.b16 %v7341
    %v8693 = vunpack.c.h.b16 %v7341
    %v8694 = vunpack.c.l.b16 %v7342
    %v8695 = vunpack.c.h.b16 %v7342
    %v8696 = vunpack.c.l.b16 %v7343
    %v8697 = vunpack.c.h.b16 %v7343
    %v8698 = vunpack.c.l.b16 %v7344
    %v8699 = vunpack.c.h.b16 %v7344
    %v8700 = vunpack.c.l.b16 %v7345
    %v8701 = vunpack.c.h.b16 %v7345
    %v8702 = vunpack.c.l.b16 %v7346
    %v8703 = vunpack.c.h.b16 %v7346
    %v8704 = vunpack.c.l.b16 %v7347
    %v8705 = vunpack.c.h.b16 %v7347
    %v8706 = vunpack.c.l.b16 %v7348
    %v8707 = vunpack.c.h.b16 %v7348
    %v8708 = vunpack.c.l.b16 %v7349
    %v8709 = vunpack.c.h.b16 %v7349
    %v8710 = vunpack.c.l.b16 %v7350
    %v8711 = vunpack.c.h.b16 %v7350
    %v8712 = vunpack.c.l.b16 %v7351
    %v8713 = vunpack.c.h.b16 %v7351
    %v8714 = vunpack.c.l.b16 %v7352
    %v8715 = vunpack.c.h.b16 %v7352
    %v8716 = vunpack.c.l.b16 %v7353
    %v8717 = vunpack.c.h.b16 %v7353
    %v8718 = vunpack.c.l.b16 %v7354
    %v8719 = vunpack.c.h.b16 %v7354
    %v8720 = vunpack.c.l.b16 %v7355
    %v8721 = vunpack.c.h.b16 %v7355
    %v8722 = vunpack.c.l.b16 %v7356
    %v8723 = vunpack.c.h.b16 %v7356
    %v8724 = vunpack.c.l.b16 %v7357
    %v8725 = vunpack.c.h.b16 %v7357
    %v8726 = vunpack.c.l.b16 %v7358
    %v8727 = vunpack.c.h.b16 %v7358
    %v8728 = vunpack.c.l.b16 %v7359
    %v8729 = vunpack.c.h.b16 %v7359
    %v8730 = vunpack.c.l.b16 %v7360
    %v8731 = vunpack.c.h.b16 %v7360
    %v8732 = vunpack.c.l.b16 %v7361
    %v8733 = vunpack.c.h.b16 %v7361
    %v8734 = vunpack.c.l.b16 %v7362
    %v8735 = vunpack.c.h.b16 %v7362
    %v8736 = vunpack.c.l.b16 %v7363
    %v8737 = vunpack.c.h.b16 %v7363
    %v8738 = vunpack.c.l.b16 %v7364
    %v8739 = vunpack.c.h.b16 %v7364
    %v8740 = vunpack.c.l.b16 %v7365
    %v8741 = vunpack.c.h.b16 %v7365
    %v8742 = vunpack.c.l.b16 %v7366
    %v8743 = vunpack.c.h.b16 %v7366
    %v8744 = vunpack.c.l.b16 %v7367
    %v8745 = vunpack.c.h.b16 %v7367
    %v8746 = vunpack.c.l.b16 %v7368
    %v8747 = vunpack.c.h.b16 %v7368
    %v8748 = vunpack.c.l.b16 %v7369
    %v8749 = vunpack.c.h.b16 %v7369
    %v8750 = vunpack.c.l.b16 %v7370
    %v8751 = vunpack.c.h.b16 %v7370
    %v8752 = vunpack.c.l.b16 %v7371
    %v8753 = vunpack.c.h.b16 %v7371
    %v8754 = vunpack.c.l.b16 %v7372
    %v8755 = vunpack.c.h.b16 %v7372
    %v8756 = vunpack.c.l.b16 %v7373
    %v8757 = vunpack.c.h.b16 %v7373
    %v8758 = vunpack.c.l.b16 %v7374
    %v8759 = vunpack.c.h.b16 %v7374
    %v8760 = vunpack.c.l.b16 %v7375
    %v8761 = vunpack.c.h.b16 %v7375
    %v8762 = vunpack.c.l.b16 %v7376
    %v8763 = vunpack.c.h.b16 %v7376
    %v8764 = vunpack.c.l.b16 %v7377
    %v8765 = vunpack.c.h.b16 %v7377
    %v8766 = vunpack.c.l.b16 %v7378
    %v8767 = vunpack.c.h.b16 %v7378
    %v8768 = vunpack.c.l.b16 %v7379
    %v8769 = vunpack.c.h.b16 %v7379
    %v8770 = vunpack.c.l.b16 %v7380
    %v8771 = vunpack.c.h.b16 %v7380
    %v8772 = vunpack.c.l.b16 %v7381
    %v8773 = vunpack.c.h.b16 %v7381
    %v8774 = vunpack.c.l.b16 %v7382
    %v8775 = vunpack.c.h.b16 %v7382
    %v8776 = vunpack.c.l.b16 %v7383
    %v8777 = vunpack.c.h.b16 %v7383
    %v8778 = vunpack.c.l.b16 %v7384
    %v8779 = vunpack.c.h.b16 %v7384
    %v8780 = vunpack.c.l.b16 %v7385
    %v8781 = vunpack.c.h.b16 %v7385
    %v8782 = vunpack.c.l.b16 %v7386
    %v8783 = vunpack.c.h.b16 %v7386
    %v8784 = vunpack.c.l.b16 %v7387
    %v8785 = vunpack.c.h.b16 %v7387
    %v8786 = vunpack.c.l.b16 %v7388
    %v8787 = vunpack.c.h.b16 %v7388
    %v8788 = vunpack.c.l.b16 %v7389
    %v8789 = vunpack.c.h.b16 %v7389
    %v8790 = vunpack.c.l.b16 %v7390
    %v8791 = vunpack.c.h.b16 %v7390
    %v8792 = vunpack.c.l.b16 %v7391
    %v8793 = vunpack.c.h.b16 %v7391
    %v8794 = vunpack.c.l.b16 %v7392
    %v8795 = vunpack.c.h.b16 %v7392
    %v8796 = vunpack.c.l.b16 %v7393
    %v8797 = vunpack.c.h.b16 %v7393
    %v8798 = vunpack.c.l.b16 %v7394
    %v8799 = vunpack.c.h.b16 %v7394
    %v8800 = vunpack.c.l.b16 %v7395
    %v8801 = vunpack.c.h.b16 %v7395
    %v8802 = vunpack.c.l.b16 %v7396
    %v8803 = vunpack.c.h.b16 %v7396
    %v8804 = vunpack.c.l.b16 %v7397
    %v8805 = vunpack.c.h.b16 %v7397
    %v8806 = vunpack.c.l.b16 %v7398
    %v8807 = vunpack.c.h.b16 %v7398
    %v8808 = vunpack.c.l.b16 %v7399
    %v8809 = vunpack.c.h.b16 %v7399
    %v8810 = vunpack.c.l.b16 %v7400
    %v8811 = vunpack.c.h.b16 %v7400
    %v8812 = vunpack.c.l.b16 %v7401
    %v8813 = vunpack.c.h.b16 %v7401
    %v8814 = vunpack.c.l.b16 %v7402
    %v8815 = vunpack.c.h.b16 %v7402
    %v8816 = vunpack.c.l.b16 %v7403
    %v8817 = vunpack.c.h.b16 %v7403
    %v8818 = vunpack.c.l.b16 %v7404
    %v8819 = vunpack.c.h.b16 %v7404
    %v8820 = vunpack.c.l.b16 %v7405
    %v8821 = vunpack.c.h.b16 %v7405
    %v8822 = vunpack.c.l.b16 %v7406
    %v8823 = vunpack.c.h.b16 %v7406
    %v8824 = vunpack.c.l.b16 %v7407
    %v8825 = vunpack.c.h.b16 %v7407
    %v8826 = vunpack.c.l.b16 %v7408
    %v8827 = vunpack.c.h.b16 %v7408
    %v8828 = vunpack.c.l.b16 %v7409
    %v8829 = vunpack.c.h.b16 %v7409
    %v8830 = vunpack.c.l.b16 %v7410
    %v8831 = vunpack.c.h.b16 %v7410
    %v8832 = vunpack.c.l.b16 %v7411
    %v8833 = vunpack.c.h.b16 %v7411
    %v8834 = vunpack.c.l.b16 %v7412
    %v8835 = vunpack.c.h.b16 %v7412
    %v8836 = vunpack.c.l.b16 %v7413
    %v8837 = vunpack.c.h.b16 %v7413
    %v8838 = vunpack.c.l.b16 %v7414
    %v8839 = vunpack.c.h.b16 %v7414
    %v8840 = vunpack.c.l.b16 %v7415
    %v8841 = vunpack.c.h.b16 %v7415
    %v8842 = vunpack.c.l.b16 %v7416
    %v8843 = vunpack.c.h.b16 %v7416
    %v8844 = vunpack.c.l.b16 %v7417
    %v8845 = vunpack.c.h.b16 %v7417
    %v8846 = vunpack.c.l.b16 %v7418
    %v8847 = vunpack.c.h.b16 %v7418
    %v8848 = vunpack.c.l.b16 %v7419
    %v8849 = vunpack.c.h.b16 %v7419
    %v8850 = vunpack.c.l.b16 %v7420
    %v8851 = vunpack.c.h.b16 %v7420
    %v8852 = vunpack.c.l.b16 %v7421
    %v8853 = vunpack.c.h.b16 %v7421
    %v8854 = vunpack.c.l.b16 %v7422
    %v8855 = vunpack.c.h.b16 %v7422
    %v8856 = vunpack.c.l.b16 %v7423
    %v8857 = vunpack.c.h.b16 %v7423
    %v8858 = vunpack.c.l.b16 %v7424
    %v8859 = vunpack.c.h.b16 %v7424
    %v8860 = vunpack.c.l.b16 %v7425
    %v8861 = vunpack.c.h.b16 %v7425
    %v8862 = vunpack.c.l.b16 %v7426
    %v8863 = vunpack.c.h.b16 %v7426
    %v8864 = vunpack.c.l.b16 %v7427
    %v8865 = vunpack.c.h.b16 %v7427
    %v8866 = vunpack.c.l.b16 %v7428
    %v8867 = vunpack.c.h.b16 %v7428
    %v8868 = vunpack.c.l.b16 %v7429
    %v8869 = vunpack.c.h.b16 %v7429
    %v8870 = vunpack.c.l.b16 %v7430
    %v8871 = vunpack.c.h.b16 %v7430
    %v8872 = vunpack.c.l.b16 %v7431
    %v8873 = vunpack.c.h.b16 %v7431
    %v8874 = vunpack.c.l.b16 %v7432
    %v8875 = vunpack.c.h.b16 %v7432
    %v8876 = vunpack.c.l.b16 %v7433
    %v8877 = vunpack.c.h.b16 %v7433
    %v8878 = vunpack.c.l.b16 %v7434
    %v8879 = vunpack.c.h.b16 %v7434
    %v8880 = vunpack.c.l.b16 %v7435
    %v8881 = vunpack.c.h.b16 %v7435
    %v8882 = vunpack.c.l.b16 %v7436
    %v8883 = vunpack.c.h.b16 %v7436
    %v8884 = vunpack.c.l.b16 %v7437
    %v8885 = vunpack.c.h.b16 %v7437
    %v8886 = vunpack.c.l.b16 %v7438
    %v8887 = vunpack.c.h.b16 %v7438
    %v8888 = vunpack.c.l.b16 %v7439
    %v8889 = vunpack.c.h.b16 %v7439
    %v8890 = vunpack.c.l.b16 %v7440
    %v8891 = vunpack.c.h.b16 %v7440
    %v8892 = vunpack.c.l.b16 %v7441
    %v8893 = vunpack.c.h.b16 %v7441
    %v8894 = vunpack.c.l.b16 %v7442
    %v8895 = vunpack.c.h.b16 %v7442
    %v8896 = vunpack.c.l.b16 %v7443
    %v8897 = vunpack.c.h.b16 %v7443
    %v8898 = vunpack.c.l.b16 %v7444
    %v8899 = vunpack.c.h.b16 %v7444
    %v8900 = vunpack.c.l.b16 %v7445
    %v8901 = vunpack.c.h.b16 %v7445
    %v8902 = vunpack.c.l.b16 %v7446
    %v8903 = vunpack.c.h.b16 %v7446
    %v8904 = vunpack.c.l.b16 %v7447
    %v8905 = vunpack.c.h.b16 %v7447
    %v8906 = vunpack.c.l.b16 %v7448
    %v8907 = vunpack.c.h.b16 %v7448
    %v8908 = vunpack.c.l.b16 %v7449
    %v8909 = vunpack.c.h.b16 %v7449
    %v8910 = vunpack.c.l.b16 %v7450
    %v8911 = vunpack.c.h.b16 %v7450
    %v8912 = vunpack.c.l.b16 %v7451
    %v8913 = vunpack.c.h.b16 %v7451
    %v8914 = vunpack.c.l.b16 %v7452
    %v8915 = vunpack.c.h.b16 %v7452
    %v8916 = vunpack.c.l.b16 %v7453
    %v8917 = vunpack.c.h.b16 %v7453
    %v8918 = vunpack.c.l.b16 %v7454
    %v8919 = vunpack.c.h.b16 %v7454
    %v8920 = vunpack.c.l.b16 %v7455
    %v8921 = vunpack.c.h.b16 %v7455
    %v8922 = vunpack.c.l.b16 %v7456
    %v8923 = vunpack.c.h.b16 %v7456
    %v8924 = vunpack.c.l.b16 %v7457
    %v8925 = vunpack.c.h.b16 %v7457
    %v8926 = vunpack.c.l.b16 %v7458
    %v8927 = vunpack.c.h.b16 %v7458
    %v8928 = vunpack.c.l.b16 %v7459
    %v8929 = vunpack.c.h.b16 %v7459
    %v8930 = vunpack.c.l.b16 %v7460
    %v8931 = vunpack.c.h.b16 %v7460
    %v8932 = vunpack.c.l.b16 %v7461
    %v8933 = vunpack.c.h.b16 %v7461
    %v8934 = vunpack.c.l.b16 %v7462
    %v8935 = vunpack.c.h.b16 %v7462
    %v8936 = vunpack.c.l.b16 %v7463
    %v8937 = vunpack.c.h.b16 %v7463
    %v8938 = vunpack.c.l.b16 %v7464
    %v8939 = vunpack.c.h.b16 %v7464
    %v8940 = vunpack.c.l.b16 %v7465
    %v8941 = vunpack.c.h.b16 %v7465
    %v8942 = vunpack.c.l.b16 %v7466
    %v8943 = vunpack.c.h.b16 %v7466
    %v8944 = vunpack.c.l.b16 %v7467
    %v8945 = vunpack.c.h.b16 %v7467
    %v8946 = vunpack.c.l.b16 %v7468
    %v8947 = vunpack.c.h.b16 %v7468
    %v8948 = vunpack.c.l.b16 %v7469
    %v8949 = vunpack.c.h.b16 %v7469
    %v8950 = vunpack.c.l.b16 %v7470
    %v8951 = vunpack.c.h.b16 %v7470
    %v8952 = vunpack.c.l.b16 %v7471
    %v8953 = vunpack.c.h.b16 %v7471
    %v8954 = vunpack.c.l.b16 %v7472
    %v8955 = vunpack.c.h.b16 %v7472
    %v8956 = vunpack.c.l.b16 %v7473
    %v8957 = vunpack.c.h.b16 %v7473
    %v8958 = vunpack.c.l.b16 %v7474
    %v8959 = vunpack.c.h.b16 %v7474
    %v8960 = vunpack.c.l.b16 %v7475
    %v8961 = vunpack.c.h.b16 %v7475
    %v8962 = vunpack.c.l.b16 %v7476
    %v8963 = vunpack.c.h.b16 %v7476
    %v8964 = vunpack.c.l.b16 %v7477
    %v8965 = vunpack.c.h.b16 %v7477
    %v8966 = vunpack.c.l.b16 %v7478
    %v8967 = vunpack.c.h.b16 %v7478
    %v8968 = vunpack.c.l.b16 %v7479
    %v8969 = vunpack.c.h.b16 %v7479
    %v8970 = vunpack.c.l.b16 %v7480
    %v8971 = vunpack.c.h.b16 %v7480
    %v8972 = vunpack.c.l.b16 %v7481
    %v8973 = vunpack.c.h.b16 %v7481
    %v8974 = vunpack.c.l.b16 %v7482
    %v8975 = vunpack.c.h.b16 %v7482
    %v8976 = vunpack.c.l.b16 %v7483
    %v8977 = vunpack.c.h.b16 %v7483
    %v8978 = vunpack.c.l.b16 %v7484
    %v8979 = vunpack.c.h.b16 %v7484
    %v8980 = vunpack.c.l.b16 %v7485
    %v8981 = vunpack.c.h.b16 %v7485
    %v8982 = vunpack.c.l.b16 %v7486
    %v8983 = vunpack.c.h.b16 %v7486
    %v8984 = vunpack.c.l.b16 %v7487
    %v8985 = vunpack.c.h.b16 %v7487
    %v8986 = vunpack.c.l.b16 %v7488
    %v8987 = vunpack.c.h.b16 %v7488
    %v8988 = vunpack.c.l.b16 %v7489
    %v8989 = vunpack.c.h.b16 %v7489
    %v8990 = vunpack.c.l.b16 %v7490
    %v8991 = vunpack.c.h.b16 %v7490
    %v8992 = vunpack.c.l.b16 %v7491
    %v8993 = vunpack.c.h.b16 %v7491
    %v8994 = vunpack.c.l.b16 %v7492
    %v8995 = vunpack.c.h.b16 %v7492
    %v8996 = vunpack.c.l.b16 %v7493
    %v8997 = vunpack.c.h.b16 %v7493
    %v8998 = vunpack.c.l.b16 %v7494
    %v8999 = vunpack.c.h.b16 %v7494
    %v9000 = vunpack.c.l.b16 %v7495
    %v9001 = vunpack.c.h.b16 %v7495
    %v9002 = vunpack.c.l.b16 %v7496
    %v9003 = vunpack.c.h.b16 %v7496
    %v9004 = vunpack.c.l.b16 %v7497
    %v9005 = vunpack.c.h.b16 %v7497
    %v9006 = vunpack.c.l.b16 %v7498
    %v9007 = vunpack.c.h.b16 %v7498
    %v9008 = vunpack.c.l.b16 %v7499
    %v9009 = vunpack.c.h.b16 %v7499
    %v9010 = vunpack.c.l.b16 %v7500
    %v9011 = vunpack.c.h.b16 %v7500
    %v9012 = vunpack.c.l.b16 %v7501
    %v9013 = vunpack.c.h.b16 %v7501
    %v9014 = vunpack.c.l.b16 %v7502
    %v9015 = vunpack.c.h.b16 %v7502
    %v9016 = vunpack.c.l.b16 %v7503
    %v9017 = vunpack.c.h.b16 %v7503
    %v9018 = vunpack.c.l.b16 %v7504
    %v9019 = vunpack.c.h.b16 %v7504
    %v9020 = vunpack.c.l.b16 %v7505
    %v9021 = vunpack.c.h.b16 %v7505
    %v9022 = vunpack.c.l.b16 %v7506
    %v9023 = vunpack.c.h.b16 %v7506
    %v9024 = vunpack.c.l.b16 %v7507
    %v9025 = vunpack.c.h.b16 %v7507
    %v9026 = vunpack.c.l.b16 %v7508
    %v9027 = vunpack.c.h.b16 %v7508
    %v9028 = vunpack.c.l.b16 %v7509
    %v9029 = vunpack.c.h.b16 %v7509
    %v9030 = vunpack.c.l.b16 %v7510
    %v9031 = vunpack.c.h.b16 %v7510
    %v9032 = vunpack.c.l.b16 %v7511
    %v9033 = vunpack.c.h.b16 %v7511
    %v9034 = vunpack.c.l.b16 %v7512
    %v9035 = vunpack.c.h.b16 %v7512
    %v9036 = vunpack.c.l.b16 %v7513
    %v9037 = vunpack.c.h.b16 %v7513
    %v9038 = vunpack.c.l.b16 %v7514
    %v9039 = vunpack.c.h.b16 %v7514
    %v9040 = vunpack.c.l.b16 %v7515
    %v9041 = vunpack.c.h.b16 %v7515
    %v9042 = vunpack.c.l.b16 %v7516
    %v9043 = vunpack.c.h.b16 %v7516
    %v9044 = vunpack.c.l.b16 %v7517
    %v9045 = vunpack.c.h.b16 %v7517
    %v9046 = vunpack.c.l.b16 %v7518
    %v9047 = vunpack.c.h.b16 %v7518
    %v9048 = vunpack.c.l.b16 %v7519
    %v9049 = vunpack.c.h.b16 %v7519
    %v9050 = vunpack.c.l.b16 %v7520
    %v9051 = vunpack.c.h.b16 %v7520
    %v9052 = vunpack.c.l.b16 %v7521
    %v9053 = vunpack.c.h.b16 %v7521
    %v9054 = vunpack.c.l.b16 %v7522
    %v9055 = vunpack.c.h.b16 %v7522
    %v9056 = vunpack.c.l.b16 %v7523
    %v9057 = vunpack.c.h.b16 %v7523
    %v9058 = vunpack.c.l.b16 %v7524
    %v9059 = vunpack.c.h.b16 %v7524
    %v9060 = vunpack.c.l.b16 %v7525
    %v9061 = vunpack.c.h.b16 %v7525
    %v9062 = vunpack.c.l.b16 %v7526
    %v9063 = vunpack.c.h.b16 %v7526
    %v9064 = vunpack.c.l.b16 %v7527
    %v9065 = vunpack.c.h.b16 %v7527
    %v9066 = vunpack.c.l.b16 %v7528
    %v9067 = vunpack.c.h.b16 %v7528
    %v9068 = vunpack.c.l.b16 %v7529
    %v9069 = vunpack.c.h.b16 %v7529
    %v9070 = vunpack.c.l.b16 %v7530
    %v9071 = vunpack.c.h.b16 %v7530
    %v9072 = vunpack.c.l.b16 %v7531
    %v9073 = vunpack.c.h.b16 %v7531
    %v9074 = vunpack.c.l.b16 %v7532
    %v9075 = vunpack.c.h.b16 %v7532
    %v9076 = vunpack.c.l.b16 %v7533
    %v9077 = vunpack.c.h.b16 %v7533
    %v9078 = vunpack.c.l.b16 %v7534
    %v9079 = vunpack.c.h.b16 %v7534
    %v9080 = vunpack.c.l.b16 %v7535
    %v9081 = vunpack.c.h.b16 %v7535
    %v9082 = vunpack.c.l.b16 %v7536
    %v9083 = vunpack.c.h.b16 %v7536
    %v9084 = vunpack.c.l.b16 %v7537
    %v9085 = vunpack.c.h.b16 %v7537
    %v9086 = vunpack.c.l.b16 %v7538
    %v9087 = vunpack.c.h.b16 %v7538
    %v9088 = vunpack.c.l.b16 %v7539
    %v9089 = vunpack.c.h.b16 %v7539
    %v9090 = vunpack.c.l.b16 %v7540
    %v9091 = vunpack.c.h.b16 %v7540
    %v9092 = vunpack.c.l.b16 %v7541
    %v9093 = vunpack.c.h.b16 %v7541
    %v9094 = vunpack.c.l.b16 %v7542
    %v9095 = vunpack.c.h.b16 %v7542
    %v9096 = vunpack.c.l.b16 %v7543
    %v9097 = vunpack.c.h.b16 %v7543
    %v9098 = vunpack.c.l.b16 %v7544
    %v9099 = vunpack.c.h.b16 %v7544
    %v9100 = vunpack.c.l.b16 %v7545
    %v9101 = vunpack.c.h.b16 %v7545
    %v9102 = vunpack.c.l.b16 %v7546
    %v9103 = vunpack.c.h.b16 %v7546
    %v9104 = vunpack.c.l.b16 %v7547
    %v9105 = vunpack.c.h.b16 %v7547
    %v9106 = vunpack.c.l.b16 %v7548
    %v9107 = vunpack.c.h.b16 %v7548
    %v9108 = vunpack.c.l.b16 %v7549
    %v9109 = vunpack.c.h.b16 %v7549
    %v9110 = vunpack.c.l.b16 %v7550
    %v9111 = vunpack.c.h.b16 %v7550
    %v9112 = vunpack.c.l.b16 %v7551
    %v9113 = vunpack.c.h.b16 %v7551
    %v9114 = vunpack.c.l.b16 %v7552
    %v9115 = vunpack.c.h.b16 %v7552
    %v9116 = vunpack.c.l.b16 %v7553
    %v9117 = vunpack.c.h.b16 %v7553
    %v9118 = vunpack.c.l.b16 %v7554
    %v9119 = vunpack.c.h.b16 %v7554
    %v9120 = vunpack.c.l.b16 %v7555
    %v9121 = vunpack.c.h.b16 %v7555
    %v9122 = vunpack.c.l.b16 %v7556
    %v9123 = vunpack.c.h.b16 %v7556
    %v9124 = vunpack.c.l.b16 %v7557
    %v9125 = vunpack.c.h.b16 %v7557
    %v9126 = vunpack.c.l.b16 %v7558
    %v9127 = vunpack.c.h.b16 %v7558
    %v9128 = vunpack.c.l.b16 %v7559
    %v9129 = vunpack.c.h.b16 %v7559
    %v9130 = vunpack.c.l.b16 %v7560
    %v9131 = vunpack.c.h.b16 %v7560
    %v9132 = vunpack.c.l.b16 %v7561
    %v9133 = vunpack.c.h.b16 %v7561
    %v9134 = vunpack.c.l.b16 %v7562
    %v9135 = vunpack.c.h.b16 %v7562
    %v9136 = vunpack.c.l.b16 %v7563
    %v9137 = vunpack.c.h.b16 %v7563
    %v9138 = vunpack.c.l.b16 %v7564
    %v9139 = vunpack.c.h.b16 %v7564
    %v9140 = vunpack.c.l.b16 %v7565
    %v9141 = vunpack.c.h.b16 %v7565
    %v9142 = vunpack.c.l.b16 %v7566
    %v9143 = vunpack.c.h.b16 %v7566
    %v9144 = vunpack.c.l.b16 %v7567
    %v9145 = vunpack.c.h.b16 %v7567
    %v9146 = vpack.c.b16 %v8130, %v8122
    %v9147 = vpack.c.b16 %v8131, %v8123
    %v9148 = vpack.c.b16 %v8132, %v8124
    %v9149 = vpack.c.b16 %v8133, %v8125
    %v9150 = vpack.c.b16 %v8134, %v8126
    %v9151 = vpack.c.b16 %v8135, %v8127
    %v9152 = vpack.c.b16 %v8136, %v8128
    %v9153 = vpack.c.b16 %v8137, %v8129
    %v9154 = vpack.c.b16 %v8146, %v8138
    %v9155 = vpack.c.b16 %v8147, %v8139
    %v9156 = vpack.c.b16 %v8148, %v8140
    %v9157 = vpack.c.b16 %v8149, %v8141
    %v9158 = vpack.c.b16 %v8150, %v8142
    %v9159 = vpack.c.b16 %v8151, %v8143
    %v9160 = vpack.c.b16 %v8152, %v8144
    %v9161 = vpack.c.b16 %v8153, %v8145
    %v9162 = vpack.c.b16 %v8162, %v8154
    %v9163 = vpack.c.b16 %v8163, %v8155
    %v9164 = vpack.c.b16 %v8164, %v8156
    %v9165 = vpack.c.b16 %v8165, %v8157
    %v9166 = vpack.c.b16 %v8166, %v8158
    %v9167 = vpack.c.b16 %v8167, %v8159
    %v9168 = vpack.c.b16 %v8168, %v8160
    %v9169 = vpack.c.b16 %v8169, %v8161
    %v9170 = vpack.c.b16 %v8178, %v8170
    %v9171 = vpack.c.b16 %v8179, %v8171
    %v9172 = vpack.c.b16 %v8180, %v8172
    %v9173 = vpack.c.b16 %v8181, %v8173
    %v9174 = vpack.c.b16 %v8182, %v8174
    %v9175 = vpack.c.b16 %v8183, %v8175
    %v9176 = vpack.c.b16 %v8184, %v8176
    %v9177 = vpack.c.b16 %v8185, %v8177
    %v9178 = vpack.c.b16 %v8194, %v8186
    %v9179 = vpack.c.b16 %v8195, %v8187
    %v9180 = vpack.c.b16 %v8196, %v8188
    %v9181 = vpack.c.b16 %v8197, %v8189
    %v9182 = vpack.c.b16 %v8198, %v8190
    %v9183 = vpack.c.b16 %v8199, %v8191
    %v9184 = vpack.c.b16 %v8200, %v8192
    %v9185 = vpack.c.b16 %v8201, %v8193
    %v9186 = vpack.c.b16 %v8210, %v8202
    %v9187 = vpack.c.b16 %v8211, %v8203
    %v9188 = vpack.c.b16 %v8212, %v8204
    %v9189 = vpack.c.b16 %v8213, %v8205
    %v9190 = vpack.c.b16 %v8214, %v8206
    %v9191 = vpack.c.b16 %v8215, %v8207
    %v9192 = vpack.c.b16 %v8216, %v8208
    %v9193 = vpack.c.b16 %v8217, %v8209
    %v9194 = vpack.c.b16 %v8226, %v8218
    %v9195 = vpack.c.b16 %v8227, %v8219
    %v9196 = vpack.c.b16 %v8228, %v8220
    %v9197 = vpack.c.b16 %v8229, %v8221
    %v9198 = vpack.c.b16 %v8230, %v8222
    %v9199 = vpack.c.b16 %v8231, %v8223
    %v9200 = vpack.c.b16 %v8232, %v8224
    %v9201 = vpack.c.b16 %v8233, %v8225
    %v9202 = vpack.c.b16 %v8242, %v8234
    %v9203 = vpack.c.b16 %v8243, %v8235
    %v9204 = vpack.c.b16 %v8244, %v8236
    %v9205 = vpack.c.b16 %v8245, %v8237
    %v9206 = vpack.c.b16 %v8246, %v8238
    %v9207 = vpack.c.b16 %v8247, %v8239
    %v9208 = vpack.c.b16 %v8248, %v8240
    %v9209 = vpack.c.b16 %v8249, %v8241
    %v9210 = vpack.c.b16 %v8258, %v8250
    %v9211 = vpack.c.b16 %v8259, %v8251
    %v9212 = vpack.c.b16 %v8260, %v8252
    %v9213 = vpack.c.b16 %v8261, %v8253
    %v9214 = vpack.c.b16 %v8262, %v8254
    %v9215 = vpack.c.b16 %v8263, %v8255
    %v9216 = vpack.c.b16 %v8264, %v8256
    %v9217 = vpack.c.b16 %v8265, %v8257
    %v9218 = vpack.c.b16 %v8274, %v8266
    %v9219 = vpack.c.b16 %v8275, %v8267
    %v9220 = vpack.c.b16 %v8276, %v8268
    %v9221 = vpack.c.b16 %v8277, %v8269
    %v9222 = vpack.c.b16 %v8278, %v8270
    %v9223 = vpack.c.b16 %v8279, %v8271
    %v9224 = vpack.c.b16 %v8280, %v8272
    %v9225 = vpack.c.b16 %v8281, %v8273
    %v9226 = vpack.c.b16 %v8290, %v8282
    %v9227 = vpack.c.b16 %v8291, %v8283
    %v9228 = vpack.c.b16 %v8292, %v8284
    %v9229 = vpack.c.b16 %v8293, %v8285
    %v9230 = vpack.c.b16 %v8294, %v8286
    %v9231 = vpack.c.b16 %v8295, %v8287
    %v9232 = vpack.c.b16 %v8296, %v8288
    %v9233 = vpack.c.b16 %v8297, %v8289
    %v9234 = vpack.c.b16 %v8306, %v8298
    %v9235 = vpack.c.b16 %v8307, %v8299
    %v9236 = vpack.c.b16 %v8308, %v8300
    %v9237 = vpack.c.b16 %v8309, %v8301
    %v9238 = vpack.c.b16 %v8310, %v8302
    %v9239 = vpack.c.b16 %v8311, %v8303
    %v9240 = vpack.c.b16 %v8312, %v8304
    %v9241 = vpack.c.b16 %v8313, %v8305
    %v9242 = vpack.c.b16 %v8322, %v8314
    %v9243 = vpack.c.b16 %v8323, %v8315
    %v9244 = vpack.c.b16 %v8324, %v8316
    %v9245 = vpack.c.b16 %v8325, %v8317
    %v9246 = vpack.c.b16 %v8326, %v8318
    %v9247 = vpack.c.b16 %v8327, %v8319
    %v9248 = vpack.c.b16 %v8328, %v8320
    %v9249 = vpack.c.b16 %v8329, %v8321
    %v9250 = vpack.c.b16 %v8338, %v8330
    %v9251 = vpack.c.b16 %v8339, %v8331
    %v9252 = vpack.c.b16 %v8340, %v8332
    %v9253 = vpack.c.b16 %v8341, %v8333
    %v9254 = vpack.c.b16 %v8342, %v8334
    %v9255 = vpack.c.b16 %v8343, %v8335
    %v9256 = vpack.c.b16 %v8344, %v8336
    %v9257 = vpack.c.b16 %v8345, %v8337
    %v9258 = vpack.c.b16 %v8354, %v8346
    %v9259 = vpack.c.b16 %v8355, %v8347
    %v9260 = vpack.c.b16 %v8356, %v8348
    %v9261 = vpack.c.b16 %v8357, %v8349
    %v9262 = vpack.c.b16 %v8358, %v8350
    %v9263 = vpack.c.b16 %v8359, %v8351
    %v9264 = vpack.c.b16 %v8360, %v8352
    %v9265 = vpack.c.b16 %v8361, %v8353
    %v9266 = vpack.c.b16 %v8370, %v8362
    %v9267 = vpack.c.b16 %v8371, %v8363
    %v9268 = vpack.c.b16 %v8372, %v8364
    %v9269 = vpack.c.b16 %v8373, %v8365
    %v9270 = vpack.c.b16 %v8374, %v8366
    %v9271 = vpack.c.b16 %v8375, %v8367
    %v9272 = vpack.c.b16 %v8376, %v8368
    %v9273 = vpack.c.b16 %v8377, %v8369
    %v9274 = vpack.c.b16 %v8386, %v8378
    %v9275 = vpack.c.b16 %v8387, %v8379
    %v9276 = vpack.c.b16 %v8388, %v8380
    %v9277 = vpack.c.b16 %v8389, %v8381
    %v9278 = vpack.c.b16 %v8390, %v8382
    %v9279 = vpack.c.b16 %v8391, %v8383
    %v9280 = vpack.c.b16 %v8392, %v8384
    %v9281 = vpack.c.b16 %v8393, %v8385
    %v9282 = vpack.c.b16 %v8402, %v8394
    %v9283 = vpack.c.b16 %v8403, %v8395
    %v9284 = vpack.c.b16 %v8404, %v8396
    %v9285 = vpack.c.b16 %v8405, %v8397
    %v9286 = vpack.c.b16 %v8406, %v8398
    %v9287 = vpack.c.b16 %v8407, %v8399
    %v9288 = vpack.c.b16 %v8408, %v8400
    %v9289 = vpack.c.b16 %v8409, %v8401
    %v9290 = vpack.c.b16 %v8418, %v8410
    %v9291 = vpack.c.b16 %v8419, %v8411
    %v9292 = vpack.c.b16 %v8420, %v8412
    %v9293 = vpack.c.b16 %v8421, %v8413
    %v9294 = vpack.c.b16 %v8422, %v8414
    %v9295 = vpack.c.b16 %v8423, %v8415
    %v9296 = vpack.c.b16 %v8424, %v8416
    %v9297 = vpack.c.b16 %v8425, %v8417
    %v9298 = vpack.c.b16 %v8434, %v8426
    %v9299 = vpack.c.b16 %v8435, %v8427
    %v9300 = vpack.c.b16 %v8436, %v8428
    %v9301 = vpack.c.b16 %v8437, %v8429
    %v9302 = vpack.c.b16 %v8438, %v8430
    %v9303 = vpack.c.b16 %v8439, %v8431
    %v9304 = vpack.c.b16 %v8440, %v8432
    %v9305 = vpack.c.b16 %v8441, %v8433
    %v9306 = vpack.c.b16 %v8450, %v8442
    %v9307 = vpack.c.b16 %v8451, %v8443
    %v9308 = vpack.c.b16 %v8452, %v8444
    %v9309 = vpack.c.b16 %v8453, %v8445
    %v9310 = vpack.c.b16 %v8454, %v8446
    %v9311 = vpack.c.b16 %v8455, %v8447
    %v9312 = vpack.c.b16 %v8456, %v8448
    %v9313 = vpack.c.b16 %v8457, %v8449
    %v9314 = vpack.c.b16 %v8466, %v8458
    %v9315 = vpack.c.b16 %v8467, %v8459
    %v9316 = vpack.c.b16 %v8468, %v8460
    %v9317 = vpack.c.b16 %v8469, %v8461
    %v9318 = vpack.c.b16 %v8470, %v8462
    %v9319 = vpack.c.b16 %v8471, %v8463
    %v9320 = vpack.c.b16 %v8472, %v8464
    %v9321 = vpack.c.b16 %v8473, %v8465
    %v9322 = vpack.c.b16 %v8482, %v8474
    %v9323 = vpack.c.b16 %v8483, %v8475
    %v9324 = vpack.c.b16 %v8484, %v8476
    %v9325 = vpack.c.b16 %v8485, %v8477
    %v9326 = vpack.c.b16 %v8486, %v8478
    %v9327 = vpack.c.b16 %v8487, %v8479
    %v9328 = vpack.c.b16 %v8488, %v8480
    %v9329 = vpack.c.b16 %v8489, %v8481
    %v9330 = vpack.c.b16 %v8498, %v8490
    %v9331 = vpack.c.b16 %v8499, %v8491
    %v9332 = vpack.c.b16 %v8500, %v8492
    %v9333 = vpack.c.b16 %v8501, %v8493
    %v9334 = vpack.c.b16 %v8502, %v8494
    %v9335 = vpack.c.b16 %v8503, %v8495
    %v9336 = vpack.c.b16 %v8504, %v8496
    %v9337 = vpack.c.b16 %v8505, %v8497
    %v9338 = vpack.c.b16 %v8514, %v8506
    %v9339 = vpack.c.b16 %v8515, %v8507
    %v9340 = vpack.c.b16 %v8516, %v8508
    %v9341 = vpack.c.b16 %v8517, %v8509
    %v9342 = vpack.c.b16 %v8518, %v8510
    %v9343 = vpack.c.b16 %v8519, %v8511
    %v9344 = vpack.c.b16 %v8520, %v8512
    %v9345 = vpack.c.b16 %v8521, %v8513
    %v9346 = vpack.c.b16 %v8530, %v8522
    %v9347 = vpack.c.b16 %v8531, %v8523
    %v9348 = vpack.c.b16 %v8532, %v8524
    %v9349 = vpack.c.b16 %v8533, %v8525
    %v9350 = vpack.c.b16 %v8534, %v8526
    %v9351 = vpack.c.b16 %v8535, %v8527
    %v9352 = vpack.c.b16 %v8536, %v8528
    %v9353 = vpack.c.b16 %v8537, %v8529
    %v9354 = vpack.c.b16 %v8546, %v8538
    %v9355 = vpack.c.b16 %v8547, %v8539
    %v9356 = vpack.c.b16 %v8548, %v8540
    %v9357 = vpack.c.b16 %v8549, %v8541
    %v9358 = vpack.c.b16 %v8550, %v8542
    %v9359 = vpack.c.b16 %v8551, %v8543
    %v9360 = vpack.c.b16 %v8552, %v8544
    %v9361 = vpack.c.b16 %v8553, %v8545
    %v9362 = vpack.c.b16 %v8562, %v8554
    %v9363 = vpack.c.b16 %v8563, %v8555
    %v9364 = vpack.c.b16 %v8564, %v8556
    %v9365 = vpack.c.b16 %v8565, %v8557
    %v9366 = vpack.c.b16 %v8566, %v8558
    %v9367 = vpack.c.b16 %v8567, %v8559
    %v9368 = vpack.c.b16 %v8568, %v8560
    %v9369 = vpack.c.b16 %v8569, %v8561
    %v9370 = vpack.c.b16 %v8578, %v8570
    %v9371 = vpack.c.b16 %v8579, %v8571
    %v9372 = vpack.c.b16 %v8580, %v8572
    %v9373 = vpack.c.b16 %v8581, %v8573
    %v9374 = vpack.c.b16 %v8582, %v8574
    %v9375 = vpack.c.b16 %v8583, %v8575
    %v9376 = vpack.c.b16 %v8584, %v8576
    %v9377 = vpack.c.b16 %v8585, %v8577
    %v9378 = vpack.c.b16 %v8594, %v8586
    %v9379 = vpack.c.b16 %v8595, %v8587
    %v9380 = vpack.c.b16 %v8596, %v8588
    %v9381 = vpack.c.b16 %v8597, %v8589
    %v9382 = vpack.c.b16 %v8598, %v8590
    %v9383 = vpack.c.b16 %v8599, %v8591
    %v9384 = vpack.c.b16 %v8600, %v8592
    %v9385 = vpack.c.b16 %v8601, %v8593
    %v9386 = vpack.c.b16 %v8610, %v8602
    %v9387 = vpack.c.b16 %v8611, %v8603
    %v9388 = vpack.c.b16 %v8612, %v8604
    %v9389 = vpack.c.b16 %v8613, %v8605
    %v9390 = vpack.c.b16 %v8614, %v8606
    %v9391 = vpack.c.b16 %v8615, %v8607
    %v9392 = vpack.c.b16 %v8616, %v8608
    %v9393 = vpack.c.b16 %v8617, %v8609
    %v9394 = vpack.c.b16 %v8626, %v8618
    %v9395 = vpack.c.b16 %v8627, %v8619
    %v9396 = vpack.c.b16 %v8628, %v8620
    %v9397 = vpack.c.b16 %v8629, %v8621
    %v9398 = vpack.c.b16 %v8630, %v8622
    %v9399 = vpack.c.b16 %v8631, %v8623
    %v9400 = vpack.c.b16 %v8632, %v8624
    %v9401 = vpack.c.b16 %v8633, %v8625
    %v9402 = vpack.c.b16 %v8642, %v8634
    %v9403 = vpack.c.b16 %v8643, %v8635
    %v9404 = vpack.c.b16 %v8644, %v8636
    %v9405 = vpack.c.b16 %v8645, %v8637
    %v9406 = vpack.c.b16 %v8646, %v8638
    %v9407 = vpack.c.b16 %v8647, %v8639
    %v9408 = vpack.c.b16 %v8648, %v8640
    %v9409 = vpack.c.b16 %v8649, %v8641
    %v9410 = vpack.c.b16 %v8658, %v8650
    %v9411 = vpack.c.b16 %v8659, %v8651
    %v9412 = vpack.c.b16 %v8660, %v8652
    %v9413 = vpack.c.b16 %v8661, %v8653
    %v9414 = vpack.c.b16 %v8662, %v8654
    %v9415 = vpack.c.b16 %v8663, %v8655
    %v9416 = vpack.c.b16 %v8664, %v8656
    %v9417 = vpack.c.b16 %v8665, %v8657
    %v9418 = vpack.c.b16 %v8674, %v8666
    %v9419 = vpack.c.b16 %v8675, %v8667
    %v9420 = vpack.c.b16 %v8676, %v8668
    %v9421 = vpack.c.b16 %v8677, %v8669
    %v9422 = vpack.c.b16 %v8678, %v8670
    %v9423 = vpack.c.b16 %v8679, %v8671
    %v9424 = vpack.c.b16 %v8680, %v8672
    %v9425 = vpack.c.b16 %v8681, %v8673
    %v9426 = vpack.c.b16 %v8690, %v8682
    %v9427 = vpack.c.b16 %v8691, %v8683
    %v9428 = vpack.c.b16 %v8692, %v8684
    %v9429 = vpack.c.b16 %v8693, %v8685
    %v9430 = vpack.c.b16 %v8694, %v8686
    %v9431 = vpack.c.b16 %v8695, %v8687
    %v9432 = vpack.c.b16 %v8696, %v8688
    %v9433 = vpack.c.b16 %v8697, %v8689
    %v9434 = vpack.c.b16 %v8706, %v8698
    %v9435 = vpack.c.b16 %v8707, %v8699
    %v9436 = vpack.c.b16 %v8708, %v8700
    %v9437 = vpack.c.b16 %v8709, %v8701
    %v9438 = vpack.c.b16 %v8710, %v8702
    %v9439 = vpack.c.b16 %v8711, %v8703
    %v9440 = vpack.c.b16 %v8712, %v8704
    %v9441 = vpack.c.b16 %v8713, %v8705
    %v9442 = vpack.c.b16 %v8722, %v8714
    %v9443 = vpack.c.b16 %v8723, %v8715
    %v9444 = vpack.c.b16 %v8724, %v8716
    %v9445 = vpack.c.b16 %v8725, %v8717
    %v9446 = vpack.c.b16 %v8726, %v8718
    %v9447 = vpack.c.b16 %v8727, %v8719
    %v9448 = vpack.c.b16 %v8728, %v8720
    %v9449 = vpack.c.b16 %v8729, %v8721
    %v9450 = vpack.c.b16 %v8738, %v8730
    %v9451 = vpack.c.b16 %v8739, %v8731
    %v9452 = vpack.c.b16 %v8740, %v8732
    %v9453 = vpack.c.b16 %v8741, %v8733
    %v9454 = vpack.c.b16 %v8742, %v8734
    %v9455 = vpack.c.b16 %v8743, %v8735
    %v9456 = vpack.c.b16 %v8744, %v8736
    %v9457 = vpack.c.b16 %v8745, %v8737
    %v9458 = vpack.c.b16 %v8754, %v8746
    %v9459 = vpack.c.b16 %v8755, %v8747
    %v9460 = vpack.c.b16 %v8756, %v8748
    %v9461 = vpack.c.b16 %v8757, %v8749
    %v9462 = vpack.c.b16 %v8758, %v8750
    %v9463 = vpack.c.b16 %v8759, %v8751
    %v9464 = vpack.c.b16 %v8760, %v8752
    %v9465 = vpack.c.b16 %v8761, %v8753
    %v9466 = vpack.c.b16 %v8770, %v8762
    %v9467 = vpack.c.b16 %v8771, %v8763
    %v9468 = vpack.c.b16 %v8772, %v8764
    %v9469 = vpack.c.b16 %v8773, %v8765
    %v9470 = vpack.c.b16 %v8774, %v8766
    %v9471 = vpack.c.b16 %v8775, %v8767
    %v9472 = vpack.c.b16 %v8776, %v8768
    %v9473 = vpack.c.b16 %v8777, %v8769
    %v9474 = vpack.c.b16 %v8786, %v8778
    %v9475 = vpack.c.b16 %v8787, %v8779
    %v9476 = vpack.c.b16 %v8788, %v8780
    %v9477 = vpack.c.b16 %v8789, %v8781
    %v9478 = vpack.c.b16 %v8790, %v8782
    %v9479 = vpack.c.b16 %v8791, %v8783
    %v9480 = vpack.c.b16 %v8792, %v8784
    %v9481 = vpack.c.b16 %v8793, %v8785
    %v9482 = vpack.c.b16 %v8802, %v8794
    %v9483 = vpack.c.b16 %v8803, %v8795
    %v9484 = vpack.c.b16 %v8804, %v8796
    %v9485 = vpack.c.b16 %v8805, %v8797
    %v9486 = vpack.c.b16 %v8806, %v8798
    %v9487 = vpack.c.b16 %v8807, %v8799
    %v9488 = vpack.c.b16 %v8808, %v8800
    %v9489 = vpack.c.b16 %v8809, %v8801
    %v9490 = vpack.c.b16 %v8818, %v8810
    %v9491 = vpack.c.b16 %v8819, %v8811
    %v9492 = vpack.c.b16 %v8820, %v8812
    %v9493 = vpack.c.b16 %v8821, %v8813
    %v9494 = vpack.c.b16 %v8822, %v8814
    %v9495 = vpack.c.b16 %v8823, %v8815
    %v9496 = vpack.c.b16 %v8824, %v8816
    %v9497 = vpack.c.b16 %v8825, %v8817
    %v9498 = vpack.c.b16 %v8834, %v8826
    %v9499 = vpack.c.b16 %v8835, %v8827
    %v9500 = vpack.c.b16 %v8836, %v8828
    %v9501 = vpack.c.b16 %v8837, %v8829
    %v9502 = vpack.c.b16 %v8838, %v8830
    %v9503 = vpack.c.b16 %v8839, %v8831
    %v9504 = vpack.c.b16 %v8840, %v8832
    %v9505 = vpack.c.b16 %v8841, %v8833
    %v9506 = vpack.c.b16 %v8850, %v8842
    %v9507 = vpack.c.b16 %v8851, %v8843
    %v9508 = vpack.c.b16 %v8852, %v8844
    %v9509 = vpack.c.b16 %v8853, %v8845
    %v9510 = vpack.c.b16 %v8854, %v8846
    %v9511 = vpack.c.b16 %v8855, %v8847
    %v9512 = vpack.c.b16 %v8856, %v8848
    %v9513 = vpack.c.b16 %v8857, %v8849
    %v9514 = vpack.c.b16 %v8866, %v8858
    %v9515 = vpack.c.b16 %v8867, %v8859
    %v9516 = vpack.c.b16 %v8868, %v8860
    %v9517 = vpack.c.b16 %v8869, %v8861
    %v9518 = vpack.c.b16 %v8870, %v8862
    %v9519 = vpack.c.b16 %v8871, %v8863
    %v9520 = vpack.c.b16 %v8872, %v8864
    %v9521 = vpack.c.b16 %v8873, %v8865
    %v9522 = vpack.c.b16 %v8882, %v8874
    %v9523 = vpack.c.b16 %v8883, %v8875
    %v9524 = vpack.c.b16 %v8884, %v8876
    %v9525 = vpack.c.b16 %v8885, %v8877
    %v9526 = vpack.c.b16 %v8886, %v8878
    %v9527 = vpack.c.b16 %v8887, %v8879
    %v9528 = vpack.c.b16 %v8888, %v8880
    %v9529 = vpack.c.b16 %v8889, %v8881
    %v9530 = vpack.c.b16 %v8898, %v8890
    %v9531 = vpack.c.b16 %v8899, %v8891
    %v9532 = vpack.c.b16 %v8900, %v8892
    %v9533 = vpack.c.b16 %v8901, %v8893
    %v9534 = vpack.c.b16 %v8902, %v8894
    %v9535 = vpack.c.b16 %v8903, %v8895
    %v9536 = vpack.c.b16 %v8904, %v8896
    %v9537 = vpack.c.b16 %v8905, %v8897
    %v9538 = vpack.c.b16 %v8914, %v8906
    %v9539 = vpack.c.b16 %v8915, %v8907
    %v9540 = vpack.c.b16 %v8916, %v8908
    %v9541 = vpack.c.b16 %v8917, %v8909
    %v9542 = vpack.c.b16 %v8918, %v8910
    %v9543 = vpack.c.b16 %v8919, %v8911
    %v9544 = vpack.c.b16 %v8920, %v8912
    %v9545 = vpack.c.b16 %v8921, %v8913
    %v9546 = vpack.c.b16 %v8930, %v8922
    %v9547 = vpack.c.b16 %v8931, %v8923
    %v9548 = vpack.c.b16 %v8932, %v8924
    %v9549 = vpack.c.b16 %v8933, %v8925
    %v9550 = vpack.c.b16 %v8934, %v8926
    %v9551 = vpack.c.b16 %v8935, %v8927
    %v9552 = vpack.c.b16 %v8936, %v8928
    %v9553 = vpack.c.b16 %v8937, %v8929
    %v9554 = vpack.c.b16 %v8946, %v8938
    %v9555 = vpack.c.b16 %v8947, %v8939
    %v9556 = vpack.c.b16 %v8948, %v8940
    %v9557 = vpack.c.b16 %v8949, %v8941
    %v9558 = vpack.c.b16 %v8950, %v8942
    %v9559 = vpack.c.b16 %v8951, %v8943
    %v9560 = vpack.c.b16 %v8952, %v8944
    %v9561 = vpack.c.b16 %v8953, %v8945
    %v9562 = vpack.c.b16 %v8962, %v8954
    %v9563 = vpack.c.b16 %v8963, %v8955
    %v9564 = vpack.c.b16 %v8964, %v8956
    %v9565 = vpack.c.b16 %v8965, %v8957
    %v9566 = vpack.c.b16 %v8966, %v8958
    %v9567 = vpack.c.b16 %v8967, %v8959
    %v9568 = vpack.c.b16 %v8968, %v8960
    %v9569 = vpack.c.b16 %v8969, %v8961
    %v9570 = vpack.c.b16 %v8978, %v8970
    %v9571 = vpack.c.b16 %v8979, %v8971
    %v9572 = vpack.c.b16 %v8980, %v8972
    %v9573 = vpack.c.b16 %v8981, %v8973
    %v9574 = vpack.c.b16 %v8982, %v8974
    %v9575 = vpack.c.b16 %v8983, %v8975
    %v9576 = vpack.c.b16 %v8984, %v8976
    %v9577 = vpack.c.b16 %v8985, %v8977
    %v9578 = vpack.c.b16 %v8994, %v8986
    %v9579 = vpack.c.b16 %v8995, %v8987
    %v9580 = vpack.c.b16 %v8996, %v8988
    %v9581 = vpack.c.b16 %v8997, %v8989
    %v9582 = vpack.c.b16 %v8998, %v8990
    %v9583 = vpack.c.b16 %v8999, %v8991
    %v9584 = vpack.c.b16 %v9000, %v8992
    %v9585 = vpack.c.b16 %v9001, %v8993
    %v9586 = vpack.c.b16 %v9010, %v9002
    %v9587 = vpack.c.b16 %v9011, %v9003
    %v9588 = vpack.c.b16 %v9012, %v9004
    %v9589 = vpack.c.b16 %v9013, %v9005
    %v9590 = vpack.c.b16 %v9014, %v9006
    %v9591 = vpack.c.b16 %v9015, %v9007
    %v9592 = vpack.c.b16 %v9016, %v9008
    %v9593 = vpack.c.b16 %v9017, %v9009
    %v9594 = vpack.c.b16 %v9026, %v9018
    %v9595 = vpack.c.b16 %v9027, %v9019
    %v9596 = vpack.c.b16 %v9028, %v9020
    %v9597 = vpack.c.b16 %v9029, %v9021
    %v9598 = vpack.c.b16 %v9030, %v9022
    %v9599 = vpack.c.b16 %v9031, %v9023
    %v9600 = vpack.c.b16 %v9032, %v9024
    %v9601 = vpack.c.b16 %v9033, %v9025
    %v9602 = vpack.c.b16 %v9042, %v9034
    %v9603 = vpack.c.b16 %v9043, %v9035
    %v9604 = vpack.c.b16 %v9044, %v9036
    %v9605 = vpack.c.b16 %v9045, %v9037
    %v9606 = vpack.c.b16 %v9046, %v9038
    %v9607 = vpack.c.b16 %v9047, %v9039
    %v9608 = vpack.c.b16 %v9048, %v9040
    %v9609 = vpack.c.b16 %v9049, %v9041
    %v9610 = vpack.c.b16 %v9058, %v9050
    %v9611 = vpack.c.b16 %v9059, %v9051
    %v9612 = vpack.c.b16 %v9060, %v9052
    %v9613 = vpack.c.b16 %v9061, %v9053
    %v9614 = vpack.c.b16 %v9062, %v9054
    %v9615 = vpack.c.b16 %v9063, %v9055
    %v9616 = vpack.c.b16 %v9064, %v9056
    %v9617 = vpack.c.b16 %v9065, %v9057
    %v9618 = vpack.c.b16 %v9074, %v9066
    %v9619 = vpack.c.b16 %v9075, %v9067
    %v9620 = vpack.c.b16 %v9076, %v9068
    %v9621 = vpack.c.b16 %v9077, %v9069
    %v9622 = vpack.c.b16 %v9078, %v9070
    %v9623 = vpack.c.b16 %v9079, %v9071
    %v9624 = vpack.c.b16 %v9080, %v9072
    %v9625 = vpack.c.b16 %v9081, %v9073
    %v9626 = vpack.c.b16 %v9090, %v9082
    %v9627 = vpack.c.b16 %v9091, %v9083
    %v9628 = vpack.c.b16 %v9092, %v9084
    %v9629 = vpack.c.b16 %v9093, %v9085
    %v9630 = vpack.c.b16 %v9094, %v9086
    %v9631 = vpack.c.b16 %v9095, %v9087
    %v9632 = vpack.c.b16 %v9096, %v9088
    %v9633 = vpack.c.b16 %v9097, %v9089
    %v9634 = vpack.c.b16 %v9106, %v9098
    %v9635 = vpack.c.b16 %v9107, %v9099
    %v9636 = vpack.c.b16 %v9108, %v9100
    %v9637 = vpack.c.b16 %v9109, %v9101
    %v9638 = vpack.c.b16 %v9110, %v9102
    %v9639 = vpack.c.b16 %v9111, %v9103
    %v9640 = vpack.c.b16 %v9112, %v9104
    %v9641 = vpack.c.b16 %v9113, %v9105
    %v9642 = vpack.c.b16 %v9122, %v9114
    %v9643 = vpack.c.b16 %v9123, %v9115
    %v9644 = vpack.c.b16 %v9124, %v9116
    %v9645 = vpack.c.b16 %v9125, %v9117
    %v9646 = vpack.c.b16 %v9126, %v9118
    %v9647 = vpack.c.b16 %v9127, %v9119
    %v9648 = vpack.c.b16 %v9128, %v9120
    %v9649 = vpack.c.b16 %v9129, %v9121
    %v9650 = vpack.c.b16 %v9138, %v9130
    %v9651 = vpack.c.b16 %v9139, %v9131
    %v9652 = vpack.c.b16 %v9140, %v9132
    %v9653 = vpack.c.b16 %v9141, %v9133
    %v9654 = vpack.c.b16 %v9142, %v9134
    %v9655 = vpack.c.b16 %v9143, %v9135
    %v9656 = vpack.c.b16 %v9144, %v9136
    %v9657 = vpack.c.b16 %v9145, %v9137
    %10170 = vmatprep.subr.bf16.mxu0 %v9147
    %10171 = vmatpush1.bf16.msra.mxu0 %v9146
    %10172 = vmatprep.subr.bf16.mxu0 %v9155
    %10173 = vmatpush1.bf16.msra.mxu0 %v9154
    %10174 = vmatprep.subr.bf16.mxu0 %v9163
    %10175 = vmatpush1.bf16.msra.mxu0 %v9162
    %10176 = vmatprep.subr.bf16.mxu0 %v9171
    %10177 = vmatpush1.bf16.msra.mxu0 %v9170
    %10178 = vmatprep.subr.bf16.mxu0 %v9179
    %10179 = vmatpush1.bf16.msra.mxu0 %v9178
    %10180 = vmatprep.subr.bf16.mxu0 %v9187
    %10181 = vmatpush1.bf16.msra.mxu0 %v9186
    %10182 = vmatprep.subr.bf16.mxu0 %v9195
    %10183 = vmatpush1.bf16.msra.mxu0 %v9194
    %10184 = vmatprep.subr.bf16.mxu0 %v9203
    %10185 = vmatpush1.bf16.msra.mxu0 %v9202
    %10186 = vmatprep.subr.bf16.mxu0 %v9211
    %10187 = vmatpush1.bf16.msra.mxu0 %v9210
    %10188 = vmatprep.subr.bf16.mxu0 %v9219
    %10189 = vmatpush1.bf16.msra.mxu0 %v9218
    %10190 = vmatprep.subr.bf16.mxu0 %v9227
    %10191 = vmatpush1.bf16.msra.mxu0 %v9226
    %10192 = vmatprep.subr.bf16.mxu0 %v9235
    %10193 = vmatpush1.bf16.msra.mxu0 %v9234
    %10194 = vmatprep.subr.bf16.mxu0 %v9243
    %10195 = vmatpush1.bf16.msra.mxu0 %v9242
    %10196 = vmatprep.subr.bf16.mxu0 %v9251
    %10197 = vmatpush1.bf16.msra.mxu0 %v9250
    %10198 = vmatprep.subr.bf16.mxu0 %v9259
    %10199 = vmatpush1.bf16.msra.mxu0 %v9258
    %10200 = vmatprep.subr.bf16.mxu0 %v9267
    %10201 = vmatpush1.bf16.msra.mxu0 %v9266
    %10202 = vmatprep.mubr.bf16.mxu0 %v7049
    %10203 = vmatmul.mubr.bf16.gmra.mrb[0].mxu0 %v7048
    %v10204 = vpop.f32.mrb[0].mxu0
    %v10205 = vadd.f32 %v7573, %v10204
    %v10206 = vpop.f32.mrb[0].mxu0
    %v10207 = vadd.f32 %v7577, %v10206
    %v10208 = vpop.f32.mrb[0].mxu0
    %v10209 = vpop.f32.mrb[0].mxu0
    %10210 = vdwg.mxu0
    %10211 = vmatprep.subr.bf16.mxu0 %v9275
    %10212 = vmatpush1.bf16.msra.mxu0 %v9274
    %10213 = vmatprep.subr.bf16.mxu0 %v9283
    %10214 = vmatpush1.bf16.msra.mxu0 %v9282
    %10215 = vmatprep.subr.bf16.mxu0 %v9291
    %10216 = vmatpush1.bf16.msra.mxu0 %v9290
    %10217 = vmatprep.subr.bf16.mxu0 %v9299
    %10218 = vmatpush1.bf16.msra.mxu0 %v9298
    %10219 = vmatprep.subr.bf16.mxu0 %v9307
    %10220 = vmatpush1.bf16.msra.mxu0 %v9306
    %10221 = vmatprep.subr.bf16.mxu0 %v9315
    %10222 = vmatpush1.bf16.msra.mxu0 %v9314
    %10223 = vmatprep.subr.bf16.mxu0 %v9323
    %10224 = vmatpush1.bf16.msra.mxu0 %v9322
    %10225 = vmatprep.subr.bf16.mxu0 %v9331
    %10226 = vmatpush1.bf16.msra.mxu0 %v9330
    %10227 = vmatprep.subr.bf16.mxu0 %v9339
    %10228 = vmatpush1.bf16.msra.mxu0 %v9338
    %10229 = vmatprep.subr.bf16.mxu0 %v9347
    %10230 = vmatpush1.bf16.msra.mxu0 %v9346
    %10231 = vmatprep.subr.bf16.mxu0 %v9355
    %10232 = vmatpush1.bf16.msra.mxu0 %v9354
    %10233 = vmatprep.subr.bf16.mxu0 %v9363
    %10234 = vmatpush1.bf16.msra.mxu0 %v9362
    %10235 = vmatprep.subr.bf16.mxu0 %v9371
    %10236 = vmatpush1.bf16.msra.mxu0 %v9370
    %10237 = vmatprep.subr.bf16.mxu0 %v9379
    %10238 = vmatpush1.bf16.msra.mxu0 %v9378
    %10239 = vmatprep.subr.bf16.mxu0 %v9387
    %10240 = vmatpush1.bf16.msra.mxu0 %v9386
    %10241 = vmatprep.subr.bf16.mxu0 %v9395
    %10242 = vmatpush1.bf16.msra.mxu0 %v9394
    %10243 = vmatprep.mubr.bf16.mxu0 %v7051
    %10244 = vmatmul.mubr.bf16.gmra.mrb[0].mxu0 %v7050
    %v10245 = vpop.f32.mrb[0].mxu0
    %v10246 = vadd.f32 %v10205, %v10245
    %v10247 = vpop.f32.mrb[0].mxu0
    %v10248 = vadd.f32 %v10207, %v10247
    %v10249 = vpop.f32.mrb[0].mxu0
    %v10250 = vpop.f32.mrb[0].mxu0
    %10251 = vdwg.mxu0
    %10252 = vmatprep.subr.bf16.mxu0 %v9403
    %10253 = vmatpush1.bf16.msra.mxu0 %v9402
    %10254 = vmatprep.subr.bf16.mxu0 %v9411
    %10255 = vmatpush1.bf16.msra.mxu0 %v9410
    %10256 = vmatprep.subr.bf16.mxu0 %v9419
    %10257 = vmatpush1.bf16.msra.mxu0 %v9418
    %10258 = vmatprep.subr.bf16.mxu0 %v9427
    %10259 = vmatpush1.bf16.msra.mxu0 %v9426
    %10260 = vmatprep.subr.bf16.mxu0 %v9435
    %10261 = vmatpush1.bf16.msra.mxu0 %v9434
    %10262 = vmatprep.subr.bf16.mxu0 %v9443
    %10263 = vmatpush1.bf16.msra.mxu0 %v9442
    %10264 = vmatprep.subr.bf16.mxu0 %v9451
    %10265 = vmatpush1.bf16.msra.mxu0 %v9450
    %10266 = vmatprep.subr.bf16.mxu0 %v9459
    %10267 = vmatpush1.bf16.msra.mxu0 %v9458
    %10268 = vmatprep.subr.bf16.mxu0 %v9467
    %10269 = vmatpush1.bf16.msra.mxu0 %v9466
    %10270 = vmatprep.subr.bf16.mxu0 %v9475
    %10271 = vmatpush1.bf16.msra.mxu0 %v9474
    %10272 = vmatprep.subr.bf16.mxu0 %v9483
    %10273 = vmatpush1.bf16.msra.mxu0 %v9482
    %10274 = vmatprep.subr.bf16.mxu0 %v9491
    %10275 = vmatpush1.bf16.msra.mxu0 %v9490
    %10276 = vmatprep.subr.bf16.mxu0 %v9499
    %10277 = vmatpush1.bf16.msra.mxu0 %v9498
    %10278 = vmatprep.subr.bf16.mxu0 %v9507
    %10279 = vmatpush1.bf16.msra.mxu0 %v9506
    %10280 = vmatprep.subr.bf16.mxu0 %v9515
    %10281 = vmatpush1.bf16.msra.mxu0 %v9514
    %10282 = vmatprep.subr.bf16.mxu0 %v9523
    %10283 = vmatpush1.bf16.msra.mxu0 %v9522
    %10284 = vmatprep.mubr.bf16.mxu0 %v7053
    %10285 = vmatmul.mubr.bf16.gmra.mrb[0].mxu0 %v7052
    %v10286 = vpop.f32.mrb[0].mxu0
    %v10287 = vadd.f32 %v10246, %v10286
    %v10288 = vpop.f32.mrb[0].mxu0
    %v10289 = vadd.f32 %v10248, %v10288
    %v10290 = vpop.f32.mrb[0].mxu0
    %v10291 = vpop.f32.mrb[0].mxu0
    %10292 = vdwg.mxu0
    %10293 = vmatprep.subr.bf16.mxu0 %v9531
    %10294 = vmatpush1.bf16.msra.mxu0 %v9530
    %10295 = vmatprep.subr.bf16.mxu0 %v9539
    %10296 = vmatpush1.bf16.msra.mxu0 %v9538
    %10297 = vmatprep.subr.bf16.mxu0 %v9547
    %10298 = vmatpush1.bf16.msra.mxu0 %v9546
    %10299 = vmatprep.subr.bf16.mxu0 %v9555
    %10300 = vmatpush1.bf16.msra.mxu0 %v9554
    %10301 = vmatprep.subr.bf16.mxu0 %v9563
    %10302 = vmatpush1.bf16.msra.mxu0 %v9562
    %10303 = vmatprep.subr.bf16.mxu0 %v9571
    %10304 = vmatpush1.bf16.msra.mxu0 %v9570
    %10305 = vmatprep.subr.bf16.mxu0 %v9579
    %10306 = vmatpush1.bf16.msra.mxu0 %v9578
    %10307 = vmatprep.subr.bf16.mxu0 %v9587
    %10308 = vmatpush1.bf16.msra.mxu0 %v9586
    %10309 = vmatprep.subr.bf16.mxu0 %v9595
    %10310 = vmatpush1.bf16.msra.mxu0 %v9594
    %10311 = vmatprep.subr.bf16.mxu0 %v9603
    %10312 = vmatpush1.bf16.msra.mxu0 %v9602
    %10313 = vmatprep.subr.bf16.mxu0 %v9611
    %10314 = vmatpush1.bf16.msra.mxu0 %v9610
    %10315 = vmatprep.subr.bf16.mxu0 %v9619
    %10316 = vmatpush1.bf16.msra.mxu0 %v9618
    %10317 = vmatprep.subr.bf16.mxu0 %v9627
    %10318 = vmatpush1.bf16.msra.mxu0 %v9626
    %10319 = vmatprep.subr.bf16.mxu0 %v9635
    %10320 = vmatpush1.bf16.msra.mxu0 %v9634
    %10321 = vmatprep.subr.bf16.mxu0 %v9643
    %10322 = vmatpush1.bf16.msra.mxu0 %v9642
    %10323 = vmatprep.subr.bf16.mxu0 %v9651
    %10324 = vmatpush1.bf16.msra.mxu0 %v9650
    %10325 = vmatprep.mubr.bf16.mxu0 %v7055
    %10326 = vmatmul.mubr.bf16.gmra.mrb[0].mxu0 %v7054
    %v10327 = vpop.f32.mrb[0].mxu0
    %v10328 = vadd.f32 %v10287, %v10327
    %v10329 = vpop.f32.mrb[0].mxu0
    %v10330 = vadd.f32 %v10289, %v10329
    %v10331 = vpop.f32.mrb[0].mxu0
    %v10332 = vpop.f32.mrb[0].mxu0
    %10333 = vdwg.mxu0
    %10334 = vmatprep.subr.bf16.mxu0 %v9149
    %10335 = vmatpush1.bf16.msra.mxu0 %v9148
    %10336 = vmatprep.subr.bf16.mxu0 %v9157
    %10337 = vmatpush1.bf16.msra.mxu0 %v9156
    %10338 = vmatprep.subr.bf16.mxu0 %v9165
    %10339 = vmatpush1.bf16.msra.mxu0 %v9164
    %10340 = vmatprep.subr.bf16.mxu0 %v9173
    %10341 = vmatpush1.bf16.msra.mxu0 %v9172
    %10342 = vmatprep.subr.bf16.mxu0 %v9181
    %10343 = vmatpush1.bf16.msra.mxu0 %v9180
    %10344 = vmatprep.subr.bf16.mxu0 %v9189
    %10345 = vmatpush1.bf16.msra.mxu0 %v9188
    %10346 = vmatprep.subr.bf16.mxu0 %v9197
    %10347 = vmatpush1.bf16.msra.mxu0 %v9196
    %10348 = vmatprep.subr.bf16.mxu0 %v9205
    %10349 = vmatpush1.bf16.msra.mxu0 %v9204
    %10350 = vmatprep.subr.bf16.mxu0 %v9213
    %10351 = vmatpush1.bf16.msra.mxu0 %v9212
    %10352 = vmatprep.subr.bf16.mxu0 %v9221
    %10353 = vmatpush1.bf16.msra.mxu0 %v9220
    %10354 = vmatprep.subr.bf16.mxu0 %v9229
    %10355 = vmatpush1.bf16.msra.mxu0 %v9228
    %10356 = vmatprep.subr.bf16.mxu0 %v9237
    %10357 = vmatpush1.bf16.msra.mxu0 %v9236
    %10358 = vmatprep.subr.bf16.mxu0 %v9245
    %10359 = vmatpush1.bf16.msra.mxu0 %v9244
    %10360 = vmatprep.subr.bf16.mxu0 %v9253
    %10361 = vmatpush1.bf16.msra.mxu0 %v9252
    %10362 = vmatprep.subr.bf16.mxu0 %v9261
    %10363 = vmatpush1.bf16.msra.mxu0 %v9260
    %10364 = vmatprep.subr.bf16.mxu0 %v9269
    %10365 = vmatpush1.bf16.msra.mxu0 %v9268
    %10366 = vmatprep.mubr.bf16.mxu0 %v7049
    %10367 = vmatmul.mubr.bf16.gmra.mrb[0].mxu0 %v7048
    %v10368 = vpop.f32.mrb[0].mxu0
    %v10369 = vadd.f32 %v7581, %v10368
    %v10370 = vpop.f32.mrb[0].mxu0
    %v10371 = vadd.f32 %v7585, %v10370
    %v10372 = vpop.f32.mrb[0].mxu0
    %v10373 = vpop.f32.mrb[0].mxu0
    %10374 = vdwg.mxu0
    %10375 = vmatprep.subr.bf16.mxu0 %v9277
    %10376 = vmatpush1.bf16.msra.mxu0 %v9276
    %10377 = vmatprep.subr.bf16.mxu0 %v9285
    %10378 = vmatpush1.bf16.msra.mxu0 %v9284
    %10379 = vmatprep.subr.bf16.mxu0 %v9293
    %10380 = vmatpush1.bf16.msra.mxu0 %v9292
    %10381 = vmatprep.subr.bf16.mxu0 %v9301
    %10382 = vmatpush1.bf16.msra.mxu0 %v9300
    %10383 = vmatprep.subr.bf16.mxu0 %v9309
    %10384 = vmatpush1.bf16.msra.mxu0 %v9308
    %10385 = vmatprep.subr.bf16.mxu0 %v9317
    %10386 = vmatpush1.bf16.msra.mxu0 %v9316
    %10387 = vmatprep.subr.bf16.mxu0 %v9325
    %10388 = vmatpush1.bf16.msra.mxu0 %v9324
    %10389 = vmatprep.subr.bf16.mxu0 %v9333
    %10390 = vmatpush1.bf16.msra.mxu0 %v9332
    %10391 = vmatprep.subr.bf16.mxu0 %v9341
    %10392 = vmatpush1.bf16.msra.mxu0 %v9340
    %10393 = vmatprep.subr.bf16.mxu0 %v9349
    %10394 = vmatpush1.bf16.msra.mxu0 %v9348
    %10395 = vmatprep.subr.bf16.mxu0 %v9357
    %10396 = vmatpush1.bf16.msra.mxu0 %v9356
    %10397 = vmatprep.subr.bf16.mxu0 %v9365
    %10398 = vmatpush1.bf16.msra.mxu0 %v9364
    %10399 = vmatprep.subr.bf16.mxu0 %v9373
    %10400 = vmatpush1.bf16.msra.mxu0 %v9372
    %10401 = vmatprep.subr.bf16.mxu0 %v9381
    %10402 = vmatpush1.bf16.msra.mxu0 %v9380
    %10403 = vmatprep.subr.bf16.mxu0 %v9389
    %10404 = vmatpush1.bf16.msra.mxu0 %v9388
    %10405 = vmatprep.subr.bf16.mxu0 %v9397
    %10406 = vmatpush1.bf16.msra.mxu0 %v9396
    %10407 = vmatprep.mubr.bf16.mxu0 %v7051
    %10408 = vmatmul.mubr.bf16.gmra.mrb[0].mxu0 %v7050
    %v10409 = vpop.f32.mrb[0].mxu0
    %v10410 = vadd.f32 %v10369, %v10409
    %v10411 = vpop.f32.mrb[0].mxu0
    %v10412 = vadd.f32 %v10371, %v10411
    %v10413 = vpop.f32.mrb[0].mxu0
    %v10414 = vpop.f32.mrb[0].mxu0
    %10415 = vdwg.mxu0
    %10416 = vmatprep.subr.bf16.mxu0 %v9405
    %10417 = vmatpush1.bf16.msra.mxu0 %v9404
    %10418 = vmatprep.subr.bf16.mxu0 %v9413
    %10419 = vmatpush1.bf16.msra.mxu0 %v9412
    %10420 = vmatprep.subr.bf16.mxu0 %v9421
    %10421 = vmatpush1.bf16.msra.mxu0 %v9420
    %10422 = vmatprep.subr.bf16.mxu0 %v9429
    %10423 = vmatpush1.bf16.msra.mxu0 %v9428
    %10424 = vmatprep.subr.bf16.mxu0 %v9437
    %10425 = vmatpush1.bf16.msra.mxu0 %v9436
    %10426 = vmatprep.subr.bf16.mxu0 %v9445
    %10427 = vmatpush1.bf16.msra.mxu0 %v9444
    %10428 = vmatprep.subr.bf16.mxu0 %v9453
    %10429 = vmatpush1.bf16.msra.mxu0 %v9452
    %10430 = vmatprep.subr.bf16.mxu0 %v9461
    %10431 = vmatpush1.bf16.msra.mxu0 %v9460
    %10432 = vmatprep.subr.bf16.mxu0 %v9469
    %10433 = vmatpush1.bf16.msra.mxu0 %v9468
    %10434 = vmatprep.subr.bf16.mxu0 %v9477
    %10435 = vmatpush1.bf16.msra.mxu0 %v9476
    %10436 = vmatprep.subr.bf16.mxu0 %v9485
    %10437 = vmatpush1.bf16.msra.mxu0 %v9484
    %10438 = vmatprep.subr.bf16.mxu0 %v9493
    %10439 = vmatpush1.bf16.msra.mxu0 %v9492
    %10440 = vmatprep.subr.bf16.mxu0 %v9501
    %10441 = vmatpush1.bf16.msra.mxu0 %v9500
    %10442 = vmatprep.subr.bf16.mxu0 %v9509
    %10443 = vmatpush1.bf16.msra.mxu0 %v9508
    %10444 = vmatprep.subr.bf16.mxu0 %v9517
    %10445 = vmatpush1.bf16.msra.mxu0 %v9516
    %10446 = vmatprep.subr.bf16.mxu0 %v9525
    %10447 = vmatpush1.bf16.msra.mxu0 %v9524
    %10448 = vmatprep.mubr.bf16.mxu0 %v7053
    %10449 = vmatmul.mubr.bf16.gmra.mrb[0].mxu0 %v7052
    %v10450 = vpop.f32.mrb[0].mxu0
    %v10451 = vadd.f32 %v10410, %v10450
    %v10452 = vpop.f32.mrb[0].mxu0
    %v10453 = vadd.f32 %v10412, %v10452
    %v10454 = vpop.f32.mrb[0].mxu0
    %v10455 = vpop.f32.mrb[0].mxu0
    %10456 = vdwg.mxu0
    %10457 = vmatprep.subr.bf16.mxu0 %v9533
    %10458 = vmatpush1.bf16.msra.mxu0 %v9532
    %10459 = vmatprep.subr.bf16.mxu0 %v9541
    %10460 = vmatpush1.bf16.msra.mxu0 %v9540
    %10461 = vmatprep.subr.bf16.mxu0 %v9549
    %10462 = vmatpush1.bf16.msra.mxu0 %v9548
    %10463 = vmatprep.subr.bf16.mxu0 %v9557
    %10464 = vmatpush1.bf16.msra.mxu0 %v9556
    %10465 = vmatprep.subr.bf16.mxu0 %v9565
    %10466 = vmatpush1.bf16.msra.mxu0 %v9564
    %10467 = vmatprep.subr.bf16.mxu0 %v9573
    %10468 = vmatpush1.bf16.msra.mxu0 %v9572
    %10469 = vmatprep.subr.bf16.mxu0 %v9581
    %10470 = vmatpush1.bf16.msra.mxu0 %v9580
    %10471 = vmatprep.subr.bf16.mxu0 %v9589
    %10472 = vmatpush1.bf16.msra.mxu0 %v9588
    %10473 = vmatprep.subr.bf16.mxu0 %v9597
    %10474 = vmatpush1.bf16.msra.mxu0 %v9596
    %10475 = vmatprep.subr.bf16.mxu0 %v9605
    %10476 = vmatpush1.bf16.msra.mxu0 %v9604
    %10477 = vmatprep.subr.bf16.mxu0 %v9613
    %10478 = vmatpush1.bf16.msra.mxu0 %v9612
    %10479 = vmatprep.subr.bf16.mxu0 %v9621
    %10480 = vmatpush1.bf16.msra.mxu0 %v9620
    %10481 = vmatprep.subr.bf16.mxu0 %v9629
    %10482 = vmatpush1.bf16.msra.mxu0 %v9628
    %10483 = vmatprep.subr.bf16.mxu0 %v9637
    %10484 = vmatpush1.bf16.msra.mxu0 %v9636
    %10485 = vmatprep.subr.bf16.mxu0 %v9645
    %10486 = vmatpush1.bf16.msra.mxu0 %v9644
    %10487 = vmatprep.subr.bf16.mxu0 %v9653
    %10488 = vmatpush1.bf16.msra.mxu0 %v9652
    %10489 = vmatprep.mubr.bf16.mxu0 %v7055
    %10490 = vmatmul.mubr.bf16.gmra.mrb[0].mxu0 %v7054
    %v10491 = vpop.f32.mrb[0].mxu0
    %v10492 = vadd.f32 %v10451, %v10491
    %v10493 = vpop.f32.mrb[0].mxu0
    %v10494 = vadd.f32 %v10453, %v10493
    %v10495 = vpop.f32.mrb[0].mxu0
    %v10496 = vpop.f32.mrb[0].mxu0
    %10497 = vdwg.mxu0
    %10498 = vmatprep.subr.bf16.mxu0 %v9151
    %10499 = vmatpush1.bf16.msra.mxu0 %v9150
    %10500 = vmatprep.subr.bf16.mxu0 %v9159
    %10501 = vmatpush1.bf16.msra.mxu0 %v9158
    %10502 = vmatprep.subr.bf16.mxu0 %v9167
    %10503 = vmatpush1.bf16.msra.mxu0 %v9166
    %10504 = vmatprep.subr.bf16.mxu0 %v9175
    %10505 = vmatpush1.bf16.msra.mxu0 %v9174
    %10506 = vmatprep.subr.bf16.mxu0 %v9183
    %10507 = vmatpush1.bf16.msra.mxu0 %v9182
    %10508 = vmatprep.subr.bf16.mxu0 %v9191
    %10509 = vmatpush1.bf16.msra.mxu0 %v9190
    %10510 = vmatprep.subr.bf16.mxu0 %v9199
    %10511 = vmatpush1.bf16.msra.mxu0 %v9198
    %10512 = vmatprep.subr.bf16.mxu0 %v9207
    %10513 = vmatpush1.bf16.msra.mxu0 %v9206
    %10514 = vmatprep.subr.bf16.mxu0 %v9215
    %10515 = vmatpush1.bf16.msra.mxu0 %v9214
    %10516 = vmatprep.subr.bf16.mxu0 %v9223
    %10517 = vmatpush1.bf16.msra.mxu0 %v9222
    %10518 = vmatprep.subr.bf16.mxu0 %v9231
    %10519 = vmatpush1.bf16.msra.mxu0 %v9230
    %10520 = vmatprep.subr.bf16.mxu0 %v9239
    %10521 = vmatpush1.bf16.msra.mxu0 %v9238
    %10522 = vmatprep.subr.bf16.mxu0 %v9247
    %10523 = vmatpush1.bf16.msra.mxu0 %v9246
    %10524 = vmatprep.subr.bf16.mxu0 %v9255
    %10525 = vmatpush1.bf16.msra.mxu0 %v9254
    %10526 = vmatprep.subr.bf16.mxu0 %v9263
    %10527 = vmatpush1.bf16.msra.mxu0 %v9262
    %10528 = vmatprep.subr.bf16.mxu0 %v9271
    %10529 = vmatpush1.bf16.msra.mxu0 %v9270
    %10530 = vmatprep.mubr.bf16.mxu0 %v7049
    %10531 = vmatmul.mubr.bf16.gmra.mrb[0].mxu0 %v7048
    %v10532 = vpop.f32.mrb[0].mxu0
    %v10533 = vadd.f32 %v7589, %v10532
    %v10534 = vpop.f32.mrb[0].mxu0
    %v10535 = vadd.f32 %v7593, %v10534
    %v10536 = vpop.f32.mrb[0].mxu0
    %v10537 = vpop.f32.mrb[0].mxu0
    %10538 = vdwg.mxu0
    %10539 = vmatprep.subr.bf16.mxu0 %v9279
    %10540 = vmatpush1.bf16.msra.mxu0 %v9278
    %10541 = vmatprep.subr.bf16.mxu0 %v9287
    %10542 = vmatpush1.bf16.msra.mxu0 %v9286
    %10543 = vmatprep.subr.bf16.mxu0 %v9295
    %10544 = vmatpush1.bf16.msra.mxu0 %v9294
    %10545 = vmatprep.subr.bf16.mxu0 %v9303
    %10546 = vmatpush1.bf16.msra.mxu0 %v9302
    %10547 = vmatprep.subr.bf16.mxu0 %v9311
    %10548 = vmatpush1.bf16.msra.mxu0 %v9310
    %10549 = vmatprep.subr.bf16.mxu0 %v9319
    %10550 = vmatpush1.bf16.msra.mxu0 %v9318
    %10551 = vmatprep.subr.bf16.mxu0 %v9327
    %10552 = vmatpush1.bf16.msra.mxu0 %v9326
    %10553 = vmatprep.subr.bf16.mxu0 %v9335
    %10554 = vmatpush1.bf16.msra.mxu0 %v9334
    %10555 = vmatprep.subr.bf16.mxu0 %v9343
    %10556 = vmatpush1.bf16.msra.mxu0 %v9342
    %10557 = vmatprep.subr.bf16.mxu0 %v9351
    %10558 = vmatpush1.bf16.msra.mxu0 %v9350
    %10559 = vmatprep.subr.bf16.mxu0 %v9359
    %10560 = vmatpush1.bf16.msra.mxu0 %v9358
    %10561 = vmatprep.subr.bf16.mxu0 %v9367
    %10562 = vmatpush1.bf16.msra.mxu0 %v9366
    %10563 = vmatprep.subr.bf16.mxu0 %v9375
    %10564 = vmatpush1.bf16.msra.mxu0 %v9374
    %10565 = vmatprep.subr.bf16.mxu0 %v9383
    %10566 = vmatpush1.bf16.msra.mxu0 %v9382
    %10567 = vmatprep.subr.bf16.mxu0 %v9391
    %10568 = vmatpush1.bf16.msra.mxu0 %v9390
    %10569 = vmatprep.subr.bf16.mxu0 %v9399
    %10570 = vmatpush1.bf16.msra.mxu0 %v9398
    %10571 = vmatprep.mubr.bf16.mxu0 %v7051
    %10572 = vmatmul.mubr.bf16.gmra.mrb[0].mxu0 %v7050
    %v10573 = vpop.f32.mrb[0].mxu0
    %v10574 = vadd.f32 %v10533, %v10573
    %v10575 = vpop.f32.mrb[0].mxu0
    %v10576 = vadd.f32 %v10535, %v10575
    %v10577 = vpop.f32.mrb[0].mxu0
    %v10578 = vpop.f32.mrb[0].mxu0
    %10579 = vdwg.mxu0
    %10580 = vmatprep.subr.bf16.mxu0 %v9407
    %10581 = vmatpush1.bf16.msra.mxu0 %v9406
    %10582 = vmatprep.subr.bf16.mxu0 %v9415
    %10583 = vmatpush1.bf16.msra.mxu0 %v9414
    %10584 = vmatprep.subr.bf16.mxu0 %v9423
    %10585 = vmatpush1.bf16.msra.mxu0 %v9422
    %10586 = vmatprep.subr.bf16.mxu0 %v9431
    %10587 = vmatpush1.bf16.msra.mxu0 %v9430
    %10588 = vmatprep.subr.bf16.mxu0 %v9439
    %10589 = vmatpush1.bf16.msra.mxu0 %v9438
    %10590 = vmatprep.subr.bf16.mxu0 %v9447
    %10591 = vmatpush1.bf16.msra.mxu0 %v9446
    %10592 = vmatprep.subr.bf16.mxu0 %v9455
    %10593 = vmatpush1.bf16.msra.mxu0 %v9454
    %10594 = vmatprep.subr.bf16.mxu0 %v9463
    %10595 = vmatpush1.bf16.msra.mxu0 %v9462
    %10596 = vmatprep.subr.bf16.mxu0 %v9471
    %10597 = vmatpush1.bf16.msra.mxu0 %v9470
    %10598 = vmatprep.subr.bf16.mxu0 %v9479
    %10599 = vmatpush1.bf16.msra.mxu0 %v9478
    %10600 = vmatprep.subr.bf16.mxu0 %v9487
    %10601 = vmatpush1.bf16.msra.mxu0 %v9486
    %10602 = vmatprep.subr.bf16.mxu0 %v9495
    %10603 = vmatpush1.bf16.msra.mxu0 %v9494
    %10604 = vmatprep.subr.bf16.mxu0 %v9503
    %10605 = vmatpush1.bf16.msra.mxu0 %v9502
    %10606 = vmatprep.subr.bf16.mxu0 %v9511
    %10607 = vmatpush1.bf16.msra.mxu0 %v9510
    %10608 = vmatprep.subr.bf16.mxu0 %v9519
    %10609 = vmatpush1.bf16.msra.mxu0 %v9518
    %10610 = vmatprep.subr.bf16.mxu0 %v9527
    %10611 = vmatpush1.bf16.msra.mxu0 %v9526
    %10612 = vmatprep.mubr.bf16.mxu0 %v7053
    %10613 = vmatmul.mubr.bf16.gmra.mrb[0].mxu0 %v7052
    %v10614 = vpop.f32.mrb[0].mxu0
    %v10615 = vadd.f32 %v10574, %v10614
    %v10616 = vpop.f32.mrb[0].mxu0
    %v10617 = vadd.f32 %v10576, %v10616
    %v10618 = vpop.f32.mrb[0].mxu0
    %v10619 = vpop.f32.mrb[0].mxu0
    %10620 = vdwg.mxu0
    %10621 = vmatprep.subr.bf16.mxu0 %v9535
    %10622 = vmatpush1.bf16.msra.mxu0 %v9534
    %10623 = vmatprep.subr.bf16.mxu0 %v9543
    %10624 = vmatpush1.bf16.msra.mxu0 %v9542
    %10625 = vmatprep.subr.bf16.mxu0 %v9551
    %10626 = vmatpush1.bf16.msra.mxu0 %v9550
    %10627 = vmatprep.subr.bf16.mxu0 %v9559
    %10628 = vmatpush1.bf16.msra.mxu0 %v9558
    %10629 = vmatprep.subr.bf16.mxu0 %v9567
    %10630 = vmatpush1.bf16.msra.mxu0 %v9566
    %10631 = vmatprep.subr.bf16.mxu0 %v9575
    %10632 = vmatpush1.bf16.msra.mxu0 %v9574
    %10633 = vmatprep.subr.bf16.mxu0 %v9583
    %10634 = vmatpush1.bf16.msra.mxu0 %v9582
    %10635 = vmatprep.subr.bf16.mxu0 %v9591
    %10636 = vmatpush1.bf16.msra.mxu0 %v9590
    %10637 = vmatprep.subr.bf16.mxu0 %v9599
    %10638 = vmatpush1.bf16.msra.mxu0 %v9598
    %10639 = vmatprep.subr.bf16.mxu0 %v9607
    %10640 = vmatpush1.bf16.msra.mxu0 %v9606
    %10641 = vmatprep.subr.bf16.mxu0 %v9615
    %10642 = vmatpush1.bf16.msra.mxu0 %v9614
    %10643 = vmatprep.subr.bf16.mxu0 %v9623
    %10644 = vmatpush1.bf16.msra.mxu0 %v9622
    %10645 = vmatprep.subr.bf16.mxu0 %v9631
    %10646 = vmatpush1.bf16.msra.mxu0 %v9630
    %10647 = vmatprep.subr.bf16.mxu0 %v9639
    %10648 = vmatpush1.bf16.msra.mxu0 %v9638
    %10649 = vmatprep.subr.bf16.mxu0 %v9647
    %10650 = vmatpush1.bf16.msra.mxu0 %v9646
    %10651 = vmatprep.subr.bf16.mxu0 %v9655
    %10652 = vmatpush1.bf16.msra.mxu0 %v9654
    %10653 = vmatprep.mubr.bf16.mxu0 %v7055
    %10654 = vmatmul.mubr.bf16.gmra.mrb[0].mxu0 %v7054
    %v10655 = vpop.f32.mrb[0].mxu0
    %v10656 = vadd.f32 %v10615, %v10655
    %v10657 = vpop.f32.mrb[0].mxu0
    %v10658 = vadd.f32 %v10617, %v10657
    %v10659 = vpop.f32.mrb[0].mxu0
    %v10660 = vpop.f32.mrb[0].mxu0
    %10661 = vdwg.mxu0
    %10662 = vmatprep.subr.bf16.mxu0 %v9153
    %10663 = vmatpush1.bf16.msra.mxu0 %v9152
    %10664 = vmatprep.subr.bf16.mxu0 %v9161
    %10665 = vmatpush1.bf16.msra.mxu0 %v9160
    %10666 = vmatprep.subr.bf16.mxu0 %v9169
    %10667 = vmatpush1.bf16.msra.mxu0 %v9168
    %10668 = vmatprep.subr.bf16.mxu0 %v9177
    %10669 = vmatpush1.bf16.msra.mxu0 %v9176
    %10670 = vmatprep.subr.bf16.mxu0 %v9185
    %10671 = vmatpush1.bf16.msra.mxu0 %v9184
    %10672 = vmatprep.subr.bf16.mxu0 %v9193
    %10673 = vmatpush1.bf16.msra.mxu0 %v9192
    %10674 = vmatprep.subr.bf16.mxu0 %v9201
    %10675 = vmatpush1.bf16.msra.mxu0 %v9200
    %10676 = vmatprep.subr.bf16.mxu0 %v9209
    %10677 = vmatpush1.bf16.msra.mxu0 %v9208
    %10678 = vmatprep.subr.bf16.mxu0 %v9217
    %10679 = vmatpush1.bf16.msra.mxu0 %v9216
    %10680 = vmatprep.subr.bf16.mxu0 %v9225
    %10681 = vmatpush1.bf16.msra.mxu0 %v9224
    %10682 = vmatprep.subr.bf16.mxu0 %v9233
    %10683 = vmatpush1.bf16.msra.mxu0 %v9232
    %10684 = vmatprep.subr.bf16.mxu0 %v9241
    %10685 = vmatpush1.bf16.msra.mxu0 %v9240
    %10686 = vmatprep.subr.bf16.mxu0 %v9249
    %10687 = vmatpush1.bf16.msra.mxu0 %v9248
    %10688 = vmatprep.subr.bf16.mxu0 %v9257
    %10689 = vmatpush1.bf16.msra.mxu0 %v9256
    %10690 = vmatprep.subr.bf16.mxu0 %v9265
    %10691 = vmatpush1.bf16.msra.mxu0 %v9264
    %10692 = vmatprep.subr.bf16.mxu0 %v9273
    %10693 = vmatpush1.bf16.msra.mxu0 %v9272
    %10694 = vmatprep.mubr.bf16.mxu0 %v7049
    %10695 = vmatmul.mubr.bf16.gmra.mrb[0].mxu0 %v7048
    %v10696 = vpop.f32.mrb[0].mxu0
    %v10697 = vadd.f32 %v7597, %v10696
    %v10698 = vpop.f32.mrb[0].mxu0
    %v10699 = vadd.f32 %v7601, %v10698
    %v10700 = vpop.f32.mrb[0].mxu0
    %v10701 = vpop.f32.mrb[0].mxu0
    %10702 = vdwg.mxu0
    %10703 = vmatprep.subr.bf16.mxu0 %v9281
    %10704 = vmatpush1.bf16.msra.mxu0 %v9280
    %10705 = vmatprep.subr.bf16.mxu0 %v9289
    %10706 = vmatpush1.bf16.msra.mxu0 %v9288
    %10707 = vmatprep.subr.bf16.mxu0 %v9297
    %10708 = vmatpush1.bf16.msra.mxu0 %v9296
    %10709 = vmatprep.subr.bf16.mxu0 %v9305
    %10710 = vmatpush1.bf16.msra.mxu0 %v9304
    %10711 = vmatprep.subr.bf16.mxu0 %v9313
    %10712 = vmatpush1.bf16.msra.mxu0 %v9312
    %10713 = vmatprep.subr.bf16.mxu0 %v9321
    %10714 = vmatpush1.bf16.msra.mxu0 %v9320
    %10715 = vmatprep.subr.bf16.mxu0 %v9329
    %10716 = vmatpush1.bf16.msra.mxu0 %v9328
    %10717 = vmatprep.subr.bf16.mxu0 %v9337
    %10718 = vmatpush1.bf16.msra.mxu0 %v9336
    %10719 = vmatprep.subr.bf16.mxu0 %v9345
    %10720 = vmatpush1.bf16.msra.mxu0 %v9344
    %10721 = vmatprep.subr.bf16.mxu0 %v9353
    %10722 = vmatpush1.bf16.msra.mxu0 %v9352
    %10723 = vmatprep.subr.bf16.mxu0 %v9361
    %10724 = vmatpush1.bf16.msra.mxu0 %v9360
    %10725 = vmatprep.subr.bf16.mxu0 %v9369
    %10726 = vmatpush1.bf16.msra.mxu0 %v9368
    %10727 = vmatprep.subr.bf16.mxu0 %v9377
    %10728 = vmatpush1.bf16.msra.mxu0 %v9376
    %10729 = vmatprep.subr.bf16.mxu0 %v9385
    %10730 = vmatpush1.bf16.msra.mxu0 %v9384
    %10731 = vmatprep.subr.bf16.mxu0 %v9393
    %10732 = vmatpush1.bf16.msra.mxu0 %v9392
    %10733 = vmatprep.subr.bf16.mxu0 %v9401
    %10734 = vmatpush1.bf16.msra.mxu0 %v9400
    %10735 = vmatprep.mubr.bf16.mxu0 %v7051
    %10736 = vmatmul.mubr.bf16.gmra.mrb[0].mxu0 %v7050
    %v10737 = vpop.f32.mrb[0].mxu0
    %v10738 = vadd.f32 %v10697, %v10737
    %v10739 = vpop.f32.mrb[0].mxu0
    %v10740 = vadd.f32 %v10699, %v10739
    %v10741 = vpop.f32.mrb[0].mxu0
    %v10742 = vpop.f32.mrb[0].mxu0
    %10743 = vdwg.mxu0
    %10744 = vmatprep.subr.bf16.mxu0 %v9409
    %10745 = vmatpush1.bf16.msra.mxu0 %v9408
    %10746 = vmatprep.subr.bf16.mxu0 %v9417
    %10747 = vmatpush1.bf16.msra.mxu0 %v9416
    %10748 = vmatprep.subr.bf16.mxu0 %v9425
    %10749 = vmatpush1.bf16.msra.mxu0 %v9424
    %10750 = vmatprep.subr.bf16.mxu0 %v9433
    %10751 = vmatpush1.bf16.msra.mxu0 %v9432
    %10752 = vmatprep.subr.bf16.mxu0 %v9441
    %10753 = vmatpush1.bf16.msra.mxu0 %v9440
    %10754 = vmatprep.subr.bf16.mxu0 %v9449
    %10755 = vmatpush1.bf16.msra.mxu0 %v9448
    %10756 = vmatprep.subr.bf16.mxu0 %v9457
    %10757 = vmatpush1.bf16.msra.mxu0 %v9456
    %10758 = vmatprep.subr.bf16.mxu0 %v9465
    %10759 = vmatpush1.bf16.msra.mxu0 %v9464
    %10760 = vmatprep.subr.bf16.mxu0 %v9473
    %10761 = vmatpush1.bf16.msra.mxu0 %v9472
    %10762 = vmatprep.subr.bf16.mxu0 %v9481
    %10763 = vmatpush1.bf16.msra.mxu0 %v9480
    %10764 = vmatprep.subr.bf16.mxu0 %v9489
    %10765 = vmatpush1.bf16.msra.mxu0 %v9488
    %10766 = vmatprep.subr.bf16.mxu0 %v9497
    %10767 = vmatpush1.bf16.msra.mxu0 %v9496
    %10768 = vmatprep.subr.bf16.mxu0 %v9505
    %10769 = vmatpush1.bf16.msra.mxu0 %v9504
    %10770 = vmatprep.subr.bf16.mxu0 %v9513
    %10771 = vmatpush1.bf16.msra.mxu0 %v9512
    %10772 = vmatprep.subr.bf16.mxu0 %v9521
    %10773 = vmatpush1.bf16.msra.mxu0 %v9520
    %10774 = vmatprep.subr.bf16.mxu0 %v9529
    %10775 = vmatpush1.bf16.msra.mxu0 %v9528
    %10776 = vmatprep.mubr.bf16.mxu0 %v7053
    %10777 = vmatmul.mubr.bf16.gmra.mrb[0].mxu0 %v7052
    %v10778 = vpop.f32.mrb[0].mxu0
    %v10779 = vadd.f32 %v10738, %v10778
    %v10780 = vpop.f32.mrb[0].mxu0
    %v10781 = vadd.f32 %v10740, %v10780
    %v10782 = vpop.f32.mrb[0].mxu0
    %v10783 = vpop.f32.mrb[0].mxu0
    %10784 = vdwg.mxu0
    %10785 = vmatprep.subr.bf16.mxu0 %v9537
    %10786 = vmatpush1.bf16.msra.mxu0 %v9536
    %10787 = vmatprep.subr.bf16.mxu0 %v9545
    %10788 = vmatpush1.bf16.msra.mxu0 %v9544
    %10789 = vmatprep.subr.bf16.mxu0 %v9553
    %10790 = vmatpush1.bf16.msra.mxu0 %v9552
    %10791 = vmatprep.subr.bf16.mxu0 %v9561
    %10792 = vmatpush1.bf16.msra.mxu0 %v9560
    %10793 = vmatprep.subr.bf16.mxu0 %v9569
    %10794 = vmatpush1.bf16.msra.mxu0 %v9568
    %10795 = vmatprep.subr.bf16.mxu0 %v9577
    %10796 = vmatpush1.bf16.msra.mxu0 %v9576
    %10797 = vmatprep.subr.bf16.mxu0 %v9585
    %10798 = vmatpush1.bf16.msra.mxu0 %v9584
    %10799 = vmatprep.subr.bf16.mxu0 %v9593
    %10800 = vmatpush1.bf16.msra.mxu0 %v9592
    %10801 = vmatprep.subr.bf16.mxu0 %v9601
    %10802 = vmatpush1.bf16.msra.mxu0 %v9600
    %10803 = vmatprep.subr.bf16.mxu0 %v9609
    %10804 = vmatpush1.bf16.msra.mxu0 %v9608
    %10805 = vmatprep.subr.bf16.mxu0 %v9617
    %10806 = vmatpush1.bf16.msra.mxu0 %v9616
    %10807 = vmatprep.subr.bf16.mxu0 %v9625
    %10808 = vmatpush1.bf16.msra.mxu0 %v9624
    %10809 = vmatprep.subr.bf16.mxu0 %v9633
    %10810 = vmatpush1.bf16.msra.mxu0 %v9632
    %10811 = vmatprep.subr.bf16.mxu0 %v9641
    %10812 = vmatpush1.bf16.msra.mxu0 %v9640
    %10813 = vmatprep.subr.bf16.mxu0 %v9649
    %10814 = vmatpush1.bf16.msra.mxu0 %v9648
    %10815 = vmatprep.subr.bf16.mxu0 %v9657
    %10816 = vmatpush1.bf16.msra.mxu0 %v9656
    %10817 = vmatprep.mubr.bf16.mxu0 %v7055
    %10818 = vmatmul.mubr.bf16.gmra.mrb[0].mxu0 %v7054
    %v10819 = vpop.f32.mrb[0].mxu0
    %v10820 = vadd.f32 %v10779, %v10819
    %v10821 = vpop.f32.mrb[0].mxu0
    %v10822 = vadd.f32 %v10781, %v10821
    %v10823 = vpop.f32.mrb[0].mxu0
    %v10824 = vpop.f32.mrb[0].mxu0
    %10825 = vdwg.mxu0
    %v10826 = vsel %vm6860, %v10328, 0.0
    %v10827 = vsel %vm6860, %v10330, 0.0
    %v10828 = vadd.f32 %v10826, %v10827
    %v10829 = vsel %vm6860, %v10492, 0.0
    %v10830 = vadd.f32 %v10828, %v10829
    %v10831 = vsel %vm6860, %v10494, 0.0
    %v10832 = vadd.f32 %v10830, %v10831
    %v10833 = vsel %vm6860, %v10656, 0.0
    %v10834 = vadd.f32 %v10832, %v10833
    %v10835 = vsel %vm6860, %v10658, 0.0
    %v10836 = vadd.f32 %v10834, %v10835
    %v10837 = vsel %vm6860, %v10820, 0.0
    %v10838 = vadd.f32 %v10836, %v10837
    %v10839 = vsel %vm6860, %v10822, 0.0
    %v10840 = vadd.f32 %v10838, %v10839
    %10841 = vadd.xlane.f32.xlu0 %v10840
    %v10842 = vpop.xlane.xlu0 %10841
    %v10843 = vmul.f32 %v10842, %v6878
    %v10844 = vsub.f32 %v10328, %v10843
    %v10845 = vsub.f32 %v10330, %v10843
    %v10846 = vsub.f32 %v10492, %v10843
    %v10847 = vsub.f32 %v10494, %v10843
    %v10848 = vsub.f32 %v10656, %v10843
    %v10849 = vsub.f32 %v10658, %v10843
    %v10850 = vsub.f32 %v10820, %v10843
    %v10851 = vsub.f32 %v10822, %v10843
    %v10852 = vmul.f32 %v10844, %v10844
    %v10853 = vmul.f32 %v10845, %v10845
    %v10854 = vmul.f32 %v10846, %v10846
    %v10855 = vmul.f32 %v10847, %v10847
    %v10856 = vmul.f32 %v10848, %v10848
    %v10857 = vmul.f32 %v10849, %v10849
    %v10858 = vmul.f32 %v10850, %v10850
    %v10859 = vmul.f32 %v10851, %v10851
    %v10860 = vsel %vm6860, %v10852, 0.0
    %v10861 = vsel %vm6860, %v10853, 0.0
    %v10862 = vadd.f32 %v10860, %v10861
    %v10863 = vsel %vm6860, %v10854, 0.0
    %v10864 = vadd.f32 %v10862, %v10863
    %v10865 = vsel %vm6860, %v10855, 0.0
    %v10866 = vadd.f32 %v10864, %v10865
    %v10867 = vsel %vm6860, %v10856, 0.0
    %v10868 = vadd.f32 %v10866, %v10867
    %v10869 = vsel %vm6860, %v10857, 0.0
    %v10870 = vadd.f32 %v10868, %v10869
    %v10871 = vsel %vm6860, %v10858, 0.0
    %v10872 = vadd.f32 %v10870, %v10871
    %v10873 = vsel %vm6860, %v10859, 0.0
    %v10874 = vadd.f32 %v10872, %v10873
    %10875 = vadd.xlane.f32.xlu0 %v10874
    %v10876 = vpop.xlane.xlu0 %10875
    %v10877 = vmul.f32 %v10876, %v6878
    %v10878 = vadd.f32 %v10877, 1e-05
    %v10879 = vrsqrt.pop %v10878
    %v10880 = vmul.f32 %v10844, %v10879
    %v10881 = vmul.f32 %v10845, %v10879
    %v10882 = vmul.f32 %v10846, %v10879
    %v10883 = vmul.f32 %v10847, %v10879
    %v10884 = vmul.f32 %v10848, %v10879
    %v10885 = vmul.f32 %v10849, %v10879
    %v10886 = vmul.f32 %v10850, %v10879
    %v10887 = vmul.f32 %v10851, %v10879
    %v10888 = vld [vmem:[#allocation16] sm:$0xff]
    %v10890 = vlaneseq
    %v10891 = vshrl.u32 %v10890, 7
    %v10892 = vsub.s32 0, %v10891
    %v10893 = vrot.slane %v10888, %v10892
    %v10894 = vlaneseq
    %v10895 = vshrl.u32 %v10894, 7
    %v10896 = vsub.s32 1, %v10895
    %v10897 = vrot.slane %v10888, %v10896
    %v10898 = vlaneseq
    %v10899 = vshrl.u32 %v10898, 7
    %v10900 = vsub.s32 2, %v10899
    %v10901 = vrot.slane %v10888, %v10900
    %v10902 = vlaneseq
    %v10903 = vshrl.u32 %v10902, 7
    %v10904 = vsub.s32 3, %v10903
    %v10905 = vrot.slane %v10888, %v10904
    %v10906 = vlaneseq
    %v10907 = vshrl.u32 %v10906, 7
    %v10908 = vsub.s32 4, %v10907
    %v10909 = vrot.slane %v10888, %v10908
    %v10910 = vlaneseq
    %v10911 = vshrl.u32 %v10910, 7
    %v10912 = vsub.s32 5, %v10911
    %v10913 = vrot.slane %v10888, %v10912
    %v10914 = vlaneseq
    %v10915 = vshrl.u32 %v10914, 7
    %v10916 = vsub.s32 6, %v10915
    %v10917 = vrot.slane %v10888, %v10916
    %v10918 = vlaneseq
    %v10919 = vshrl.u32 %v10918, 7
    %v10920 = vsub.s32 7, %v10919
    %v10921 = vrot.slane %v10888, %v10920
    %v10930 = vmul.f32 %v10880, %v10893
    %v10931 = vmul.f32 %v10881, %v10897
    %v10932 = vmul.f32 %v10882, %v10901
    %v10933 = vmul.f32 %v10883, %v10905
    %v10934 = vmul.f32 %v10884, %v10909
    %v10935 = vmul.f32 %v10885, %v10913
    %v10936 = vmul.f32 %v10886, %v10917
    %v10937 = vmul.f32 %v10887, %v10921
    %v10938 = vld [vmem:[#allocation17] sm:$0xff]
    %v10940 = vlaneseq
    %v10941 = vshrl.u32 %v10940, 7
    %v10942 = vsub.s32 0, %v10941
    %v10943 = vrot.slane %v10938, %v10942
    %v10944 = vlaneseq
    %v10945 = vshrl.u32 %v10944, 7
    %v10946 = vsub.s32 1, %v10945
    %v10947 = vrot.slane %v10938, %v10946
    %v10948 = vlaneseq
    %v10949 = vshrl.u32 %v10948, 7
    %v10950 = vsub.s32 2, %v10949
    %v10951 = vrot.slane %v10938, %v10950
    %v10952 = vlaneseq
    %v10953 = vshrl.u32 %v10952, 7
    %v10954 = vsub.s32 3, %v10953
    %v10955 = vrot.slane %v10938, %v10954
    %v10956 = vlaneseq
    %v10957 = vshrl.u32 %v10956, 7
    %v10958 = vsub.s32 4, %v10957
    %v10959 = vrot.slane %v10938, %v10958
    %v10960 = vlaneseq
    %v10961 = vshrl.u32 %v10960, 7
    %v10962 = vsub.s32 5, %v10961
    %v10963 = vrot.slane %v10938, %v10962
    %v10964 = vlaneseq
    %v10965 = vshrl.u32 %v10964, 7
    %v10966 = vsub.s32 6, %v10965
    %v10967 = vrot.slane %v10938, %v10966
    %v10968 = vlaneseq
    %v10969 = vshrl.u32 %v10968, 7
    %v10970 = vsub.s32 7, %v10969
    %v10971 = vrot.slane %v10938, %v10970
    %v10980 = vadd.f32 %v10930, %v10943
    %v10981 = vadd.f32 %v10931, %v10947
    %v10982 = vadd.f32 %v10932, %v10951
    %v10983 = vadd.f32 %v10933, %v10955
    %v10984 = vadd.f32 %v10934, %v10959
    %v10985 = vadd.f32 %v10935, %v10963
    %v10986 = vadd.f32 %v10936, %v10967
    %v10987 = vadd.f32 %v10937, %v10971
    %vm10988 = vcmp.ge.f32.partialorder %v10980, 0.0
    %vm10989 = vcmp.ge.f32.partialorder %v10981, 0.0
    %vm10990 = vcmp.ge.f32.partialorder %v10982, 0.0
    %vm10991 = vcmp.ge.f32.partialorder %v10983, 0.0
    %vm10992 = vcmp.ge.f32.partialorder %v10984, 0.0
    %vm10993 = vcmp.ge.f32.partialorder %v10985, 0.0
    %vm10994 = vcmp.ge.f32.partialorder %v10986, 0.0
    %vm10995 = vcmp.ge.f32.partialorder %v10987, 0.0
    %v10996 = vmul.f32 %v10980, 0.2
    %v10997 = vmul.f32 %v10981, 0.2
    %v10998 = vmul.f32 %v10982, 0.2
    %v10999 = vmul.f32 %v10983, 0.2
    %v11000 = vmul.f32 %v10984, 0.2
    %v11001 = vmul.f32 %v10985, 0.2
    %v11002 = vmul.f32 %v10986, 0.2
    %v11003 = vmul.f32 %v10987, 0.2
    %v11004 = vsel %vm10988, %v10980, %v10996
    %v11005 = vsel %vm10989, %v10981, %v10997
    %v11006 = vsel %vm10990, %v10982, %v10998
    %v11007 = vsel %vm10991, %v10983, %v10999
    %v11008 = vsel %vm10992, %v10984, %v11000
    %v11009 = vsel %vm10993, %v10985, %v11001
    %v11010 = vsel %vm10994, %v10986, %v11002
    %v11011 = vsel %vm10995, %v10987, %v11003
    %v11012 = vld [vmem:[#allocation19] sm:$0xff]
    %v11014 = vlaneseq
    %v11015 = vshrl.u32 %v11014, 7
    %v11016 = vsub.s32 0, %v11015
    %v11017 = vrot.slane %v11012, %v11016
    %v11018 = vlaneseq
    %v11019 = vshrl.u32 %v11018, 7
    %v11020 = vsub.s32 1, %v11019
    %v11021 = vrot.slane %v11012, %v11020
    %v11022 = vlaneseq
    %v11023 = vshrl.u32 %v11022, 7
    %v11024 = vsub.s32 2, %v11023
    %v11025 = vrot.slane %v11012, %v11024
    %v11026 = vlaneseq
    %v11027 = vshrl.u32 %v11026, 7
    %v11028 = vsub.s32 3, %v11027
    %v11029 = vrot.slane %v11012, %v11028
    %v11030 = vlaneseq
    %v11031 = vshrl.u32 %v11030, 7
    %v11032 = vsub.s32 4, %v11031
    %v11033 = vrot.slane %v11012, %v11032
    %v11034 = vlaneseq
    %v11035 = vshrl.u32 %v11034, 7
    %v11036 = vsub.s32 5, %v11035
    %v11037 = vrot.slane %v11012, %v11036
    %v11038 = vlaneseq
    %v11039 = vshrl.u32 %v11038, 7
    %v11040 = vsub.s32 6, %v11039
    %v11041 = vrot.slane %v11012, %v11040
    %v11042 = vlaneseq
    %v11043 = vshrl.u32 %v11042, 7
    %v11044 = vsub.s32 7, %v11043
    %v11045 = vrot.slane %v11012, %v11044
    %v11054 = vmul.f32 %v11004, %v11017
    %v11055 = vmul.f32 %v11005, %v11021
    %v11056 = vmul.f32 %v11006, %v11025
    %v11057 = vmul.f32 %v11007, %v11029
    %v11058 = vmul.f32 %v11008, %v11033
    %v11059 = vmul.f32 %v11009, %v11037
    %v11060 = vmul.f32 %v11010, %v11041
    %v11061 = vmul.f32 %v11011, %v11045
    %v11062 = vsel %vm6860, %v11054, 0.0
    %v11063 = vsel %vm6860, %v11055, 0.0
    %v11064 = vadd.f32 %v11062, %v11063
    %v11065 = vsel %vm6860, %v11056, 0.0
    %v11066 = vadd.f32 %v11064, %v11065
    %v11067 = vsel %vm6860, %v11057, 0.0
    %v11068 = vadd.f32 %v11066, %v11067
    %v11069 = vsel %vm6860, %v11058, 0.0
    %v11070 = vadd.f32 %v11068, %v11069
    %v11071 = vsel %vm6860, %v11059, 0.0
    %v11072 = vadd.f32 %v11070, %v11071
    %v11073 = vsel %vm6860, %v11060, 0.0
    %v11074 = vadd.f32 %v11072, %v11073
    %v11075 = vsel %vm6860, %v11061, 0.0
    %v11076 = vadd.f32 %v11074, %v11075
    %11077 = vadd.xlane.f32.xlu0 %v11076
    %v11078 = vpop.xlane.xlu0 %11077
    %v11079 = vld [vmem:[#allocation2] sm:$0x1]
    %v11081 = vlaneseq
    %v11082 = vshrl.u32 %v11081, 7
    %v11083 = vsub.s32 0, %v11082
    %v11084 = vrot.slane %v11079, %v11083
    %v11086 = vadd.f32 %v11078, %v11084
    %vm11087 = vcmask 1024
    %11088 = vst.msk [vmem:[%s13] sm:$0x3] %vm11087, %v11086
    // Predicated region
    $region98: #{wgan_discriminator_forward.1} parent=1 // pred_check
      _
    $region99: #{wgan_discriminator_forward.1} parent=1 // pred_check_branch
      %11090 = sbr.rel (0) target = $region101
    $region100: #{wgan_discriminator_forward.1} parent=1 // pred_region
      _
    $region101: #{wgan_discriminator_forward.1} parent=1 // pred_fallthru
      _
    // Predicated region
    $region102: #{wgan_discriminator_forward.1} parent=1 // pred_check
      _
    $region103: #{wgan_discriminator_forward.1} parent=1 // pred_check_branch
      %11092 = sbr.rel (0) target = $region105
    $region104: #{wgan_discriminator_forward.1} parent=1 // pred_region
      _
    $region105: #{wgan_discriminator_forward.1} parent=1 // pred_fallthru
      _
    %11093 = vsyncpa [#allocation4], 1
    %11094 = vsyncpa [#allocation6], 1
    %11095 = vsyncpa [#allocation9], 1
    %11096 = vsyncpa [#allocation12], 1
    %11097 = vsyncpa [#allocation15], 1
    %11098 = vsyncpa [#allocation18], 1

</llo_original>
